<compile_context>
chip_gen: v7x
topology: tpu7x:2x2x1
jax: 0.10.0
libtpu: 0.0.40
codegen_flags: <defaults>
</compile_context>

<pallas_src>
import functools

import jax
import jax.numpy as jnp
from jax import lax
from jax.experimental import pallas as pl
from jax.experimental.pallas import tpu as pltpu

# -----------------------------------------------------------------------------
# MobileNetV2 architecture constants (torchvision defaults)
# -----------------------------------------------------------------------------
INVERTED_RESIDUAL_SETTING = [
    # t (expand), c (out ch), n (repeats), s (stride of first block)
    (1, 16, 1, 1),
    (6, 24, 2, 2),
    (6, 32, 3, 2),
    (6, 64, 4, 2),
    (6, 96, 3, 1),
    (6, 160, 3, 2),
    (6, 320, 1, 1),
]
LAST_CHANNEL = 1280  # models.mobilenet_v2().last_channel

# Explicit VMEM budget: worst-case double-buffered tiles (TM=1024, cin<=960 bf16
# activations + 256-wide weight/output tiles) stay well under 8 MiB, so 32 MiB is
# ample headroom on v5e/v6e (128 MiB) and v7x (64 MiB).
_VMEM_LIMIT_BYTES = 32 * 1024 * 1024

# Below this flattened-spatial size the pallas_call fixed overhead dominates the
# sub-microsecond matmul -> use a plain XLA dot that fuses with adjacent convs.
_PALLAS_MIN_M = 256


# -----------------------------------------------------------------------------
# Pallas kernels
# -----------------------------------------------------------------------------
def _pw_kernel(x_ref, w_ref, b_ref, o_ref, *, relu6):
    # x: [TM, Cin] bf16   w: [Cin, TN] bf16 (BN scale pre-folded)   b: [1, TN] f32
    y = jnp.dot(x_ref[...], w_ref[...], preferred_element_type=jnp.float32)
    y = y + b_ref[...]
    if relu6:
        y = jnp.clip(y, 0.0, 6.0)
    o_ref[...] = y.astype(o_ref.dtype)


def _pw_res_kernel(x_ref, w_ref, b_ref, r_ref, o_ref):
    # Project (linear bottleneck) pointwise conv with the residual add fused in.
    y = jnp.dot(x_ref[...], w_ref[...], preferred_element_type=jnp.float32)
    y = y + b_ref[...] + r_ref[...].astype(jnp.float32)
    o_ref[...] = y.astype(o_ref.dtype)


def _fused_head_kernel(f_ref, pm_ref, wc_ref, bc_ref, wh_ref, bh_ref, o_ref):
    # 1x1 head conv 320->1280 (BN folded) + ReLU6, entirely in VMEM.
    y = jnp.dot(f_ref[...], wc_ref[...], preferred_element_type=jnp.float32)
    y = jnp.clip(y + bc_ref[...], 0.0, 6.0)
    # AdaptiveAvgPool2d((1,1)) + flatten == per-sample spatial mean, expressed as a
    # tiny matmul with a precomputed pooling matrix (avoids in-kernel reshapes).
    pooled = jnp.dot(pm_ref[...], y, preferred_element_type=jnp.float32)
    # Dropout(p=0.2) is identity in eval mode.
    # All three heads as one lane-dense (128-padded) bf16 matmul, unmasked stores.
    o_ref[...] = jnp.dot(pooled.astype(jnp.bfloat16), wh_ref[...],
                         preferred_element_type=jnp.float32) + bh_ref[...]


# -----------------------------------------------------------------------------
# Tiling helpers
# -----------------------------------------------------------------------------
def _pick_tile_m(m):
    """Largest tile (multiple of 16 for bf16 sublane packing, <= 1024) dividing M."""
    for tm in (1024, 512, 256, 128, 64, 32, 16):
        if m % tm == 0:
            return tm
    return m  # fallback: single full-extent tile (always legal)


def _pick_tile_n(cout):
    """Lane-dense cout tile so wide layers get a second (parallel) grid axis."""
    if cout >= 512 and cout % 256 == 0:
        return 256
    if cout >= 256 and cout % 128 == 0:
        return 128
    return cout  # full extent, no split


# -----------------------------------------------------------------------------
# Pointwise (1x1) conv: Pallas for large M, plain XLA dot for tiny M
# -----------------------------------------------------------------------------
def _pointwise_xla(x_nhwc, w, bias, relu6, residual=None):
    """Tiny-M fallback: plain jnp.dot so XLA fuses the epilogue with the adjacent
    depthwise conv instead of paying per-pallas_call launch overhead."""
    n, h, wd, cin = x_nhwc.shape
    cout = w.shape[1]
    y = jnp.dot(x_nhwc.reshape(-1, cin), w,
                preferred_element_type=jnp.float32) + bias
    if relu6:
        y = jnp.clip(y, 0.0, 6.0)
    if residual is not None:
        y = y + residual.reshape(-1, cout).astype(jnp.float32)
    return y.astype(jnp.bfloat16).reshape(n, h, wd, cout)


def pointwise_conv(x_nhwc, w, bias, relu6, residual=None):
    """1x1 conv (+ folded BN bias, optional ReLU6, optional fused residual)."""
    n, h, wd, cin = x_nhwc.shape
    cout = w.shape[1]
    m = n * h * wd

    if m < _PALLAS_MIN_M:
        return _pointwise_xla(x_nhwc, w, bias, relu6, residual)

    xm = x_nhwc.reshape(m, cin)
    tm = _pick_tile_m(m)
    tn = _pick_tile_n(cout)
    grid = (m // tm, cout // tn)

    in_specs = [
        pl.BlockSpec((tm, cin), lambda i, j: (i, 0)),   # activation tile (pipelined)
        pl.BlockSpec((cin, tn), lambda i, j: (0, j)),   # weight column tile
        pl.BlockSpec((1, tn), lambda i, j: (0, j)),     # bias column tile
    ]
    args = [xm, w, bias]
    bytes_accessed = m * cin * 2 + cin * cout * 2 + cout * 4 + m * cout * 2

    if residual is not None:
        in_specs.append(pl.BlockSpec((tm, tn), lambda i, j: (i, j)))
        args.append(residual.reshape(m, cout))
        bytes_accessed += m * cout * 2
        kernel = _pw_res_kernel
    else:
        kernel = functools.partial(_pw_kernel, relu6=relu6)

    out = pl.pallas_call(
        kernel,
        out_shape=jax.ShapeDtypeStruct((m, cout), jnp.bfloat16),
        grid=grid,
        in_specs=in_specs,
        out_specs=pl.BlockSpec((tm, tn), lambda i, j: (i, j)),
        compiler_params=pltpu.CompilerParams(
            dimension_semantics=("parallel", "parallel"),  # both axes independent
            vmem_limit_bytes=_VMEM_LIMIT_BYTES),
        cost_estimate=pl.CostEstimate(
            flops=2 * m * cin * cout,
            transcendentals=0,
            bytes_accessed=int(bytes_accessed)),
    )(*args)
    return out.reshape(n, h, wd, cout)


# -----------------------------------------------------------------------------
# Fused head-conv + global-average-pool + 3 linear heads (one Pallas kernel)
# -----------------------------------------------------------------------------
def fused_head(feats_nhwc, hc, hp):
    n, h, w, c = feats_nhwc.shape
    hw = h * w
    f2 = feats_nhwc.reshape(n * hw, c)
    # pool_mat[i, i*hw:(i+1)*hw] = 1/hw  ->  pooled = pool_mat @ conv_out
    pool_mat = jnp.repeat(jnp.eye(n, dtype=jnp.float32), hw, axis=1) / float(hw)

    wc, bc = hc['w'], hc['b']            # (320, 1280) bf16, (1, 1280) f32
    wh, bh = hp['w'], hp['b']            # (1280, cout_pad) bf16, (1, cout_pad) f32
    cmid = wc.shape[1]
    cout_pad = wh.shape[1]

    out = pl.pallas_call(
        _fused_head_kernel,
        out_shape=jax.ShapeDtypeStruct((n, cout_pad), jnp.float32),
        in_specs=[pl.BlockSpec(memory_space=pltpu.MemorySpace.VMEM)] * 6,
        out_specs=pl.BlockSpec(memory_space=pltpu.MemorySpace.VMEM),
        compiler_params=pltpu.CompilerParams(
            vmem_limit_bytes=_VMEM_LIMIT_BYTES),
        cost_estimate=pl.CostEstimate(
            flops=2 * n * hw * c * cmid + 2 * n * n * hw * cmid
                  + 2 * n * cmid * cout_pad,
            transcendentals=0,
            bytes_accessed=int(n * hw * c * 2 + c * cmid * 2 + cmid * 4
                               + cmid * cout_pad * 2 + cout_pad * 4
                               + n * cout_pad * 4)),
    )(f2, pool_mat, wc, bc, wh, bh)

    ncol, ngen, nart = hp['splits']
    return (out[:, :ncol],
            out[:, ncol:ncol + ngen],
            out[:, ncol + ngen:ncol + ngen + nart])


# -----------------------------------------------------------------------------
# Non-Pallas pieces of the backbone (3x3 convolutions)
# -----------------------------------------------------------------------------
def conv3x3_bn_relu6(x, p, groups):
    # TODO(synk): 3x3 stem / depthwise convs stay in XLA (lax.conv); no clean
    #             small-shape Pallas equivalent worth hand-rolling here.
    y = lax.conv_general_dilated(
        x, p['w'],
        window_strides=(p['stride'], p['stride']),
        padding=((1, 1), (1, 1)),
        dimension_numbers=('NHWC', 'HWIO', 'NHWC'),
        feature_group_count=groups,
        preferred_element_type=jnp.float32)
    y = jnp.clip(y + p['b'], 0.0, 6.0)            # BN scale already folded into w
    return y.astype(jnp.bfloat16)


def inverted_residual(x, blk):
    y = x
    if 'expand' in blk:
        e = blk['expand']
        y = pointwise_conv(y, e['w'], e['b'], relu6=True)
    y = conv3x3_bn_relu6(y, blk['dw'], groups=y.shape[-1])           # depthwise
    pr = blk['project']
    y = pointwise_conv(y, pr['w'], pr['b'], relu6=False,             # linear bottleneck
                       residual=x if blk['use_res'] else None)       # fused skip add
    return y


# -----------------------------------------------------------------------------
# Deterministic parameter initialization (synthetic; shapes match torchvision)
# -----------------------------------------------------------------------------
def _he_normal(key, shape, fan_in):
    return jax.random.normal(key, shape, jnp.float32) * jnp.sqrt(2.0 / fan_in)


def _bn_fold(key, cout):
    kg, kb, km, kv = jax.random.split(key, 4)
    gamma = 1.0 + 0.1 * jax.random.normal(kg, (cout,), jnp.float32)
    beta = 0.05 * jax.random.normal(kb, (cout,), jnp.float32)
    mean = 0.05 * jax.random.normal(km, (cout,), jnp.float32)
    var = 1.0 + 0.1 * jax.random.uniform(kv, (cout,), jnp.float32)
    scale = gamma / jnp.sqrt(var + 1e-5)
    bias = beta - mean * scale
    return scale, bias


def _conv3x3_params(kw, kbn, kshape, fan_in, stride):
    w = _he_normal(kw, kshape, fan_in)
    scale, bias = _bn_fold(kbn, kshape[-1])
    w = (w * scale).astype(jnp.bfloat16)          # fold BN scale into weights
    return {'w': w, 'b': bias.reshape(1, 1, 1, -1), 'stride': stride}


def _pw_params(kw, kbn, cin, cout):
    w = _he_normal(kw, (cin, cout), cin)
    scale, bias = _bn_fold(kbn, cout)
    w = (w * scale[None, :]).astype(jnp.bfloat16)  # fold BN scale into weights
    return {'w': w, 'b': bias.reshape(1, cout)}


def _linear_init(key, cin, cout):
    kw, kb = jax.random.split(key)
    bound = 1.0 / jnp.sqrt(cin)
    w = jax.random.uniform(kw, (cin, cout), jnp.float32, -bound, bound)
    b = jax.random.uniform(kb, (cout,), jnp.float32, -bound, bound)
    return w, b


def init_backbone(key):
    keys = iter(jax.random.split(key, 256))
    nk = lambda: next(keys)

    stem = _conv3x3_params(nk(), nk(), (3, 3, 3, 32), 27, stride=2)

    blocks = []
    cin = 32
    for t, c, n, s in INVERTED_RESIDUAL_SETTING:
        for i in range(n):
            stride = s if i == 0 else 1
            hidden = cin * t
            blk = {'use_res': (stride == 1 and cin == c)}
            if t != 1:
                blk['expand'] = _pw_params(nk(), nk(), cin, hidden)
            blk['dw'] = _conv3x3_params(nk(), nk(), (3, 3, 1, hidden), 9, stride)
            blk['project'] = _pw_params(nk(), nk(), hidden, c)
            blocks.append(blk)
            cin = c

    head_conv = _pw_params(nk(), nk(), 320, LAST_CHANNEL)
    return {'stem': stem, 'blocks': blocks, 'head_conv': head_conv}


def init_params(key, n_color, n_gender, n_article):
    kb, kc, kg, ka = jax.random.split(key, 4)
    wc, bc = _linear_init(kc, LAST_CHANNEL, n_color)
    wg, bg = _linear_init(kg, LAST_CHANNEL, n_gender)
    wa, ba = _linear_init(ka, LAST_CHANNEL, n_article)

    # Concatenate the three heads into one lane-dense (padded to 128) matrix.
    total = n_color + n_gender + n_article
    cout_pad = max(128, ((total + 127) // 128) * 128)
    w_all = jnp.zeros((LAST_CHANNEL, cout_pad), jnp.float32)
    w_all = w_all.at[:, :n_color].set(wc)
    w_all = w_all.at[:, n_color:n_color + n_gender].set(wg)
    w_all = w_all.at[:, n_color + n_gender:total].set(wa)
    w_all = w_all.astype(jnp.bfloat16)           # native MXU rate, half the DMA
    b_all = jnp.zeros((1, cout_pad), jnp.float32)
    b_all = b_all.at[0, :n_color].set(bc)
    b_all = b_all.at[0, n_color:n_color + n_gender].set(bg)
    b_all = b_all.at[0, n_color + n_gender:total].set(ba)

    return {'backbone': init_backbone(kb),
            'heads': {'w': w_all, 'b': b_all,
                      'splits': (n_color, n_gender, n_article)}}


# -----------------------------------------------------------------------------
# Forward pass (== MultiOutputModel.forward, eval mode)
# NOTE: activations / weights are bf16 (f32 accumulate), so outputs will drift
#       slightly from an f32 PyTorch reference (~1e-2 relative tolerance).
# -----------------------------------------------------------------------------
def multi_output_forward(params, x_nchw):
    x = jnp.transpose(x_nchw, (0, 2, 3, 1)).astype(jnp.bfloat16)   # NCHW -> NHWC bf16
    bb = params['backbone']
    x = conv3x3_bn_relu6(x, bb['stem'], groups=1)                  # features[0]
    for blk in bb['blocks']:                                       # features[1:18]
        x = inverted_residual(x, blk)
    # features[18] (head conv) + pool + flatten + dropout(eval) + 3 heads, fused.
    color, gender, article = fused_head(x, bb['head_conv'], params['heads'])
    return {'color': color, 'gender': gender, 'article': article}


# -----------------------------------------------------------------------------
if __name__ == "__main__":
    key = jax.random.PRNGKey(0)
    pkey, xkey = jax.random.split(key)

    n_color, n_gender, n_article = 7, 3, 11
    params = init_params(pkey, n_color, n_gender, n_article)

    # Small input: batch=2, RGB, 64x64 (final feature map 2x2x320, pool is real).
    x = jax.random.normal(xkey, (2, 3, 64, 64), dtype=jnp.float32)

    fwd = jax.jit(lambda xx: multi_output_forward(params, xx))
    out = fwd(x)
    jax.block_until_ready(out)

    assert out['color'].shape == (2, n_color)
    assert out['gender'].shape == (2, n_gender)
    assert out['article'].shape == (2, n_article)
    assert all(bool(jnp.all(jnp.isfinite(v))) for v in out.values())
    print("KERNEL_OK")
</pallas_src>

<mosaic_0001>
module attributes {stable_mosaic.version = 11 : i64} {
  func.func @_pw_kernel(%arg0: i32, %arg1: i32, %arg2: memref<1024x32xbf16, #tpu.memory_space<vmem>>, %arg3: memref<32x16xbf16, #tpu.memory_space<vmem>>, %arg4: memref<1x16xf32, #tpu.memory_space<vmem>>, %arg5: memref<1024x16xbf16, #tpu.memory_space<vmem>>) attributes {dimension_semantics = [#tpu.dimension_semantics<parallel>, #tpu.dimension_semantics<parallel>], iteration_bounds = array<i64: 2, 1>, scalar_prefetch = 0 : i64, scratch_operands = 0 : i64, tpu.core_type = #tpu.core_type<tc>, window_params = [{transform_indices = @transform_0, window_bounds = array<i64: 1024, 32>}, {transform_indices = @transform_1, window_bounds = array<i64: 32, 16>}, {transform_indices = @transform_2, window_bounds = array<i64: 1, 16>}, {transform_indices = @transform_3, window_bounds = array<i64: 1024, 16>}]} {
    %c0 = arith.constant 0 : index
    %c0_0 = arith.constant 0 : index
    %0 = vector.load %arg2[%c0, %c0_0] : memref<1024x32xbf16, #tpu.memory_space<vmem>>, vector<1024x32xbf16>
    %c0_1 = arith.constant 0 : index
    %c0_2 = arith.constant 0 : index
    %1 = vector.load %arg3[%c0_1, %c0_2] : memref<32x16xbf16, #tpu.memory_space<vmem>>, vector<32x16xbf16>
    %cst = arith.constant dense<0.000000e+00> : vector<1024x16xf32>
    %2 = tpu.matmul %0, %1, %cst {dimension_numbers = #tpu.dot_dimension_numbers<[1], [0], [0], [1], [0, 0, 1, 1], [], []>} : vector<1024x32xbf16>, vector<32x16xbf16>, vector<1024x16xf32> -> vector<1024x16xf32>
    %c0_3 = arith.constant 0 : index
    %c0_4 = arith.constant 0 : index
    %3 = vector.load %arg4[%c0_3, %c0_4] : memref<1x16xf32, #tpu.memory_space<vmem>>, vector<1x16xf32>
    %4 = vector.broadcast %3 : vector<1x16xf32> to vector<1024x16xf32>
    %5 = arith.addf %2, %4 : vector<1024x16xf32>
    %6 = arith.truncf %5 : vector<1024x16xf32> to vector<1024x16xbf16>
    %c0_5 = arith.constant 0 : index
    %c0_6 = arith.constant 0 : index
    %7 = vector.load %arg5[%c0_5, %c0_6] : memref<1024x16xbf16, #tpu.memory_space<vmem>>, vector<1024x16xbf16>
    tpu.vector_store %arg5[%c0_5, %c0_6], %6 {strides = array<i32>} : memref<1024x16xbf16, #tpu.memory_space<vmem>>, vector<1024x16xbf16>,
    return
  }
  func.func @transform_0(%arg0: i32, %arg1: i32) -> (i32, i32) {
    %c0_i32 = arith.constant 0 : i32
    %c0_i32_0 = arith.constant 0 : i32
    return %arg0, %c0_i32 : i32, i32
  }
  func.func @transform_1(%arg0: i32, %arg1: i32) -> (i32, i32) {
    %c0_i32 = arith.constant 0 : i32
    %c0_i32_0 = arith.constant 0 : i32
    return %c0_i32, %arg1 : i32, i32
  }
  func.func @transform_2(%arg0: i32, %arg1: i32) -> (i32, i32) {
    %c0_i32 = arith.constant 0 : i32
    %c0_i32_0 = arith.constant 0 : i32
    return %c0_i32, %arg1 : i32, i32
  }
  func.func @transform_3(%arg0: i32, %arg1: i32) -> (i32, i32) {
    %c0_i32 = arith.constant 0 : i32
    return %arg0, %arg1 : i32, i32
  }
}

module attributes {stable_mosaic.version = 11 : i64} {
  func.func @_pw_kernel(%arg0: i32, %arg1: i32, %arg2: memref<1024x16xbf16, #tpu.memory_space<vmem>>, %arg3: memref<16x96xbf16, #tpu.memory_space<vmem>>, %arg4: memref<1x96xf32, #tpu.memory_space<vmem>>, %arg5: memref<1024x96xbf16, #tpu.memory_space<vmem>>) attributes {dimension_semantics = [#tpu.dimension_semantics<parallel>, #tpu.dimension_semantics<parallel>], iteration_bounds = array<i64: 2, 1>, scalar_prefetch = 0 : i64, scratch_operands = 0 : i64, tpu.core_type = #tpu.core_type<tc>, window_params = [{transform_indices = @transform_0, window_bounds = array<i64: 1024, 16>}, {transform_indices = @transform_1, window_bounds = array<i64: 16, 96>}, {transform_indices = @transform_2, window_bounds = array<i64: 1, 96>}, {transform_indices = @transform_3, window_bounds = array<i64: 1024, 96>}]} {
    %c0 = arith.constant 0 : index
    %c0_0 = arith.constant 0 : index
    %0 = vector.load %arg2[%c0, %c0_0] : memref<1024x16xbf16, #tpu.memory_space<vmem>>, vector<1024x16xbf16>
    %c0_1 = arith.constant 0 : index
    %c0_2 = arith.constant 0 : index
    %1 = vector.load %arg3[%c0_1, %c0_2] : memref<16x96xbf16, #tpu.memory_space<vmem>>, vector<16x96xbf16>
    %cst = arith.constant dense<0.000000e+00> : vector<1024x96xf32>
    %2 = tpu.matmul %0, %1, %cst {dimension_numbers = #tpu.dot_dimension_numbers<[1], [0], [0], [1], [0, 0, 1, 1], [], []>} : vector<1024x16xbf16>, vector<16x96xbf16>, vector<1024x96xf32> -> vector<1024x96xf32>
    %c0_3 = arith.constant 0 : index
    %c0_4 = arith.constant 0 : index
    %3 = vector.load %arg4[%c0_3, %c0_4] : memref<1x96xf32, #tpu.memory_space<vmem>>, vector<1x96xf32>
    %4 = vector.broadcast %3 : vector<1x96xf32> to vector<1024x96xf32>
    %5 = arith.addf %2, %4 : vector<1024x96xf32>
    %cst_5 = arith.constant 0.000000e+00 : f32
    %cst_6 = arith.constant 6.000000e+00 : f32
    %6 = vector.broadcast %cst_5 : f32 to vector<1024x96xf32>
    %7 = arith.maximumf %6, %5 : vector<1024x96xf32>
    %8 = vector.broadcast %cst_6 : f32 to vector<1024x96xf32>
    %9 = arith.minimumf %8, %7 : vector<1024x96xf32>
    %10 = arith.truncf %9 : vector<1024x96xf32> to vector<1024x96xbf16>
    %c0_7 = arith.constant 0 : index
    %c0_8 = arith.constant 0 : index
    %11 = vector.load %arg5[%c0_7, %c0_8] : memref<1024x96xbf16, #tpu.memory_space<vmem>>, vector<1024x96xbf16>
    tpu.vector_store %arg5[%c0_7, %c0_8], %10 {strides = array<i32>} : memref<1024x96xbf16, #tpu.memory_space<vmem>>, vector<1024x96xbf16>,
    return
  }
  func.func @transform_0(%arg0: i32, %arg1: i32) -> (i32, i32) {
    %c0_i32 = arith.constant 0 : i32
    %c0_i32_0 = arith.constant 0 : i32
    return %arg0, %c0_i32 : i32, i32
  }
  func.func @transform_1(%arg0: i32, %arg1: i32) -> (i32, i32) {
    %c0_i32 = arith.constant 0 : i32
    %c0_i32_0 = arith.constant 0 : i32
    return %c0_i32, %arg1 : i32, i32
  }
  func.func @transform_2(%arg0: i32, %arg1: i32) -> (i32, i32) {
    %c0_i32 = arith.constant 0 : i32
    %c0_i32_0 = arith.constant 0 : i32
    return %c0_i32, %arg1 : i32, i32
  }
  func.func @transform_3(%arg0: i32, %arg1: i32) -> (i32, i32) {
    %c0_i32 = arith.constant 0 : i32
    return %arg0, %arg1 : i32, i32
  }
}

module attributes {stable_mosaic.version = 11 : i64} {
  func.func @_pw_kernel(%arg0: i32, %arg1: i32, %arg2: memref<512x96xbf16, #tpu.memory_space<vmem>>, %arg3: memref<96x24xbf16, #tpu.memory_space<vmem>>, %arg4: memref<1x24xf32, #tpu.memory_space<vmem>>, %arg5: memref<512x24xbf16, #tpu.memory_space<vmem>>) attributes {dimension_semantics = [#tpu.dimension_semantics<parallel>, #tpu.dimension_semantics<parallel>], iteration_bounds = array<i64: 1, 1>, scalar_prefetch = 0 : i64, scratch_operands = 0 : i64, tpu.core_type = #tpu.core_type<tc>, window_params = [{transform_indices = @transform_0, window_bounds = array<i64: 512, 96>}, {transform_indices = @transform_1, window_bounds = array<i64: 96, 24>}, {transform_indices = @transform_2, window_bounds = array<i64: 1, 24>}, {transform_indices = @transform_3, window_bounds = array<i64: 512, 24>}]} {
    %c0 = arith.constant 0 : index
    %c0_0 = arith.constant 0 : index
    %0 = vector.load %arg2[%c0, %c0_0] : memref<512x96xbf16, #tpu.memory_space<vmem>>, vector<512x96xbf16>
    %c0_1 = arith.constant 0 : index
    %c0_2 = arith.constant 0 : index
    %1 = vector.load %arg3[%c0_1, %c0_2] : memref<96x24xbf16, #tpu.memory_space<vmem>>, vector<96x24xbf16>
    %cst = arith.constant dense<0.000000e+00> : vector<512x24xf32>
    %2 = tpu.matmul %0, %1, %cst {dimension_numbers = #tpu.dot_dimension_numbers<[1], [0], [0], [1], [0, 0, 1, 1], [], []>} : vector<512x96xbf16>, vector<96x24xbf16>, vector<512x24xf32> -> vector<512x24xf32>
    %c0_3 = arith.constant 0 : index
    %c0_4 = arith.constant 0 : index
    %3 = vector.load %arg4[%c0_3, %c0_4] : memref<1x24xf32, #tpu.memory_space<vmem>>, vector<1x24xf32>
    %4 = vector.broadcast %3 : vector<1x24xf32> to vector<512x24xf32>
    %5 = arith.addf %2, %4 : vector<512x24xf32>
    %6 = arith.truncf %5 : vector<512x24xf32> to vector<512x24xbf16>
    %c0_5 = arith.constant 0 : index
    %c0_6 = arith.constant 0 : index
    %7 = vector.load %arg5[%c0_5, %c0_6] : memref<512x24xbf16, #tpu.memory_space<vmem>>, vector<512x24xbf16>
    tpu.vector_store %arg5[%c0_5, %c0_6], %6 {strides = array<i32>} : memref<512x24xbf16, #tpu.memory_space<vmem>>, vector<512x24xbf16>,
    return
  }
  func.func @transform_0(%arg0: i32, %arg1: i32) -> (i32, i32) {
    %c0_i32 = arith.constant 0 : i32
    %c0_i32_0 = arith.constant 0 : i32
    return %arg0, %c0_i32 : i32, i32
  }
  func.func @transform_1(%arg0: i32, %arg1: i32) -> (i32, i32) {
    %c0_i32 = arith.constant 0 : i32
    %c0_i32_0 = arith.constant 0 : i32
    return %c0_i32, %arg1 : i32, i32
  }
  func.func @transform_2(%arg0: i32, %arg1: i32) -> (i32, i32) {
    %c0_i32 = arith.constant 0 : i32
    %c0_i32_0 = arith.constant 0 : i32
    return %c0_i32, %arg1 : i32, i32
  }
  func.func @transform_3(%arg0: i32, %arg1: i32) -> (i32, i32) {
    %c0_i32 = arith.constant 0 : i32
    return %arg0, %arg1 : i32, i32
  }
}

module attributes {stable_mosaic.version = 11 : i64} {
  func.func @_pw_kernel(%arg0: i32, %arg1: i32, %arg2: memref<512x24xbf16, #tpu.memory_space<vmem>>, %arg3: memref<24x144xbf16, #tpu.memory_space<vmem>>, %arg4: memref<1x144xf32, #tpu.memory_space<vmem>>, %arg5: memref<512x144xbf16, #tpu.memory_space<vmem>>) attributes {dimension_semantics = [#tpu.dimension_semantics<parallel>, #tpu.dimension_semantics<parallel>], iteration_bounds = array<i64: 1, 1>, scalar_prefetch = 0 : i64, scratch_operands = 0 : i64, tpu.core_type = #tpu.core_type<tc>, window_params = [{transform_indices = @transform_0, window_bounds = array<i64: 512, 24>}, {transform_indices = @transform_1, window_bounds = array<i64: 24, 144>}, {transform_indices = @transform_2, window_bounds = array<i64: 1, 144>}, {transform_indices = @transform_3, window_bounds = array<i64: 512, 144>}]} {
    %c0 = arith.constant 0 : index
    %c0_0 = arith.constant 0 : index
    %0 = vector.load %arg2[%c0, %c0_0] : memref<512x24xbf16, #tpu.memory_space<vmem>>, vector<512x24xbf16>
    %c0_1 = arith.constant 0 : index
    %c0_2 = arith.constant 0 : index
    %1 = vector.load %arg3[%c0_1, %c0_2] : memref<24x144xbf16, #tpu.memory_space<vmem>>, vector<24x144xbf16>
    %cst = arith.constant dense<0.000000e+00> : vector<512x144xf32>
    %2 = tpu.matmul %0, %1, %cst {dimension_numbers = #tpu.dot_dimension_numbers<[1], [0], [0], [1], [0, 0, 1, 1], [], []>} : vector<512x24xbf16>, vector<24x144xbf16>, vector<512x144xf32> -> vector<512x144xf32>
    %c0_3 = arith.constant 0 : index
    %c0_4 = arith.constant 0 : index
    %3 = vector.load %arg4[%c0_3, %c0_4] : memref<1x144xf32, #tpu.memory_space<vmem>>, vector<1x144xf32>
    %4 = vector.broadcast %3 : vector<1x144xf32> to vector<512x144xf32>
    %5 = arith.addf %2, %4 : vector<512x144xf32>
    %cst_5 = arith.constant 0.000000e+00 : f32
    %cst_6 = arith.constant 6.000000e+00 : f32
    %6 = vector.broadcast %cst_5 : f32 to vector<512x144xf32>
    %7 = arith.maximumf %6, %5 : vector<512x144xf32>
    %8 = vector.broadcast %cst_6 : f32 to vector<512x144xf32>
    %9 = arith.minimumf %8, %7 : vector<512x144xf32>
    %10 = arith.truncf %9 : vector<512x144xf32> to vector<512x144xbf16>
    %c0_7 = arith.constant 0 : index
    %c0_8 = arith.constant 0 : index
    %11 = vector.load %arg5[%c0_7, %c0_8] : memref<512x144xbf16, #tpu.memory_space<vmem>>, vector<512x144xbf16>
    tpu.vector_store %arg5[%c0_7, %c0_8], %10 {strides = array<i32>} : memref<512x144xbf16, #tpu.memory_space<vmem>>, vector<512x144xbf16>,
    return
  }
  func.func @transform_0(%arg0: i32, %arg1: i32) -> (i32, i32) {
    %c0_i32 = arith.constant 0 : i32
    %c0_i32_0 = arith.constant 0 : i32
    return %arg0, %c0_i32 : i32, i32
  }
  func.func @transform_1(%arg0: i32, %arg1: i32) -> (i32, i32) {
    %c0_i32 = arith.constant 0 : i32
    %c0_i32_0 = arith.constant 0 : i32
    return %c0_i32, %arg1 : i32, i32
  }
  func.func @transform_2(%arg0: i32, %arg1: i32) -> (i32, i32) {
    %c0_i32 = arith.constant 0 : i32
    %c0_i32_0 = arith.constant 0 : i32
    return %c0_i32, %arg1 : i32, i32
  }
  func.func @transform_3(%arg0: i32, %arg1: i32) -> (i32, i32) {
    %c0_i32 = arith.constant 0 : i32
    return %arg0, %arg1 : i32, i32
  }
}

module attributes {stable_mosaic.version = 11 : i64} {
  func.func @_pw_res_kernel(%arg0: i32, %arg1: i32, %arg2: memref<512x144xbf16, #tpu.memory_space<vmem>>, %arg3: memref<144x24xbf16, #tpu.memory_space<vmem>>, %arg4: memref<1x24xf32, #tpu.memory_space<vmem>>, %arg5: memref<512x24xbf16, #tpu.memory_space<vmem>>, %arg6: memref<512x24xbf16, #tpu.memory_space<vmem>>) attributes {dimension_semantics = [#tpu.dimension_semantics<parallel>, #tpu.dimension_semantics<parallel>], iteration_bounds = array<i64: 1, 1>, scalar_prefetch = 0 : i64, scratch_operands = 0 : i64, tpu.core_type = #tpu.core_type<tc>, window_params = [{transform_indices = @transform_0, window_bounds = array<i64: 512, 144>}, {transform_indices = @transform_1, window_bounds = array<i64: 144, 24>}, {transform_indices = @transform_2, window_bounds = array<i64: 1, 24>}, {transform_indices = @transform_3, window_bounds = array<i64: 512, 24>}, {transform_indices = @transform_4, window_bounds = array<i64: 512, 24>}]} {
    %c0 = arith.constant 0 : index
    %c0_0 = arith.constant 0 : index
    %0 = vector.load %arg2[%c0, %c0_0] : memref<512x144xbf16, #tpu.memory_space<vmem>>, vector<512x144xbf16>
    %c0_1 = arith.constant 0 : index
    %c0_2 = arith.constant 0 : index
    %1 = vector.load %arg3[%c0_1, %c0_2] : memref<144x24xbf16, #tpu.memory_space<vmem>>, vector<144x24xbf16>
    %cst = arith.constant dense<0.000000e+00> : vector<512x24xf32>
    %2 = tpu.matmul %0, %1, %cst {dimension_numbers = #tpu.dot_dimension_numbers<[1], [0], [0], [1], [0, 0, 1, 1], [], []>} : vector<512x144xbf16>, vector<144x24xbf16>, vector<512x24xf32> -> vector<512x24xf32>
    %c0_3 = arith.constant 0 : index
    %c0_4 = arith.constant 0 : index
    %3 = vector.load %arg4[%c0_3, %c0_4] : memref<1x24xf32, #tpu.memory_space<vmem>>, vector<1x24xf32>
    %4 = vector.broadcast %3 : vector<1x24xf32> to vector<512x24xf32>
    %5 = arith.addf %2, %4 : vector<512x24xf32>
    %c0_5 = arith.constant 0 : index
    %c0_6 = arith.constant 0 : index
    %6 = vector.load %arg5[%c0_5, %c0_6] : memref<512x24xbf16, #tpu.memory_space<vmem>>, vector<512x24xbf16>
    %7 = arith.extf %6 : vector<512x24xbf16> to vector<512x24xf32>
    %8 = arith.addf %5, %7 : vector<512x24xf32>
    %9 = arith.truncf %8 : vector<512x24xf32> to vector<512x24xbf16>
    %c0_7 = arith.constant 0 : index
    %c0_8 = arith.constant 0 : index
    %10 = vector.load %arg6[%c0_7, %c0_8] : memref<512x24xbf16, #tpu.memory_space<vmem>>, vector<512x24xbf16>
    tpu.vector_store %arg6[%c0_7, %c0_8], %9 {strides = array<i32>} : memref<512x24xbf16, #tpu.memory_space<vmem>>, vector<512x24xbf16>,
    return
  }
  func.func @transform_0(%arg0: i32, %arg1: i32) -> (i32, i32) {
    %c0_i32 = arith.constant 0 : i32
    %c0_i32_0 = arith.constant 0 : i32
    return %arg0, %c0_i32 : i32, i32
  }
  func.func @transform_1(%arg0: i32, %arg1: i32) -> (i32, i32) {
    %c0_i32 = arith.constant 0 : i32
    %c0_i32_0 = arith.constant 0 : i32
    return %c0_i32, %arg1 : i32, i32
  }
  func.func @transform_2(%arg0: i32, %arg1: i32) -> (i32, i32) {
    %c0_i32 = arith.constant 0 : i32
    %c0_i32_0 = arith.constant 0 : i32
    return %c0_i32, %arg1 : i32, i32
  }
  func.func @transform_3(%arg0: i32, %arg1: i32) -> (i32, i32) {
    %c0_i32 = arith.constant 0 : i32
    return %arg0, %arg1 : i32, i32
  }
  func.func @transform_4(%arg0: i32, %arg1: i32) -> (i32, i32) {
    %c0_i32 = arith.constant 0 : i32
    return %arg0, %arg1 : i32, i32
  }
}

module attributes {stable_mosaic.version = 11 : i64} {
  func.func @_fused_head_kernel(%arg0: memref<8x320xbf16, #tpu.memory_space<vmem>>, %arg1: memref<2x8xf32, #tpu.memory_space<vmem>>, %arg2: memref<320x1280xbf16, #tpu.memory_space<vmem>>, %arg3: memref<1x1280xf32, #tpu.memory_space<vmem>>, %arg4: memref<1280x128xbf16, #tpu.memory_space<vmem>>, %arg5: memref<1x128xf32, #tpu.memory_space<vmem>>, %arg6: memref<2x128xf32, #tpu.memory_space<vmem>>) attributes {dimension_semantics = [], scalar_prefetch = 0 : i64, scratch_operands = 0 : i64, tpu.core_type = #tpu.core_type<tc>} {
    %c0 = arith.constant 0 : index
    %c0_0 = arith.constant 0 : index
    %0 = vector.load %arg0[%c0, %c0_0] : memref<8x320xbf16, #tpu.memory_space<vmem>>, vector<8x320xbf16>
    %c0_1 = arith.constant 0 : index
    %c0_2 = arith.constant 0 : index
    %1 = vector.load %arg2[%c0_1, %c0_2] : memref<320x1280xbf16, #tpu.memory_space<vmem>>, vector<320x1280xbf16>
    %cst = arith.constant dense<0.000000e+00> : vector<8x1280xf32>
    %2 = tpu.matmul %0, %1, %cst {dimension_numbers = #tpu.dot_dimension_numbers<[1], [0], [0], [1], [0, 0, 1, 1], [], []>} : vector<8x320xbf16>, vector<320x1280xbf16>, vector<8x1280xf32> -> vector<8x1280xf32>
    %c0_3 = arith.constant 0 : index
    %c0_4 = arith.constant 0 : index
    %3 = vector.load %arg3[%c0_3, %c0_4] : memref<1x1280xf32, #tpu.memory_space<vmem>>, vector<1x1280xf32>
    %4 = vector.broadcast %3 : vector<1x1280xf32> to vector<8x1280xf32>
    %5 = arith.addf %2, %4 : vector<8x1280xf32>
    %cst_5 = arith.constant 0.000000e+00 : f32
    %cst_6 = arith.constant 6.000000e+00 : f32
    %6 = vector.broadcast %cst_5 : f32 to vector<8x1280xf32>
    %7 = arith.maximumf %6, %5 : vector<8x1280xf32>
    %8 = vector.broadcast %cst_6 : f32 to vector<8x1280xf32>
    %9 = arith.minimumf %8, %7 : vector<8x1280xf32>
    %c0_7 = arith.constant 0 : index
    %c0_8 = arith.constant 0 : index
    %10 = vector.load %arg1[%c0_7, %c0_8] : memref<2x8xf32, #tpu.memory_space<vmem>>, vector<2x8xf32>
    %cst_9 = arith.constant dense<0.000000e+00> : vector<2x1280xf32>
    %11 = tpu.matmul %10, %9, %cst_9 {dimension_numbers = #tpu.dot_dimension_numbers<[1], [0], [0], [1], [0, 0, 1, 1], [], []>} : vector<2x8xf32>, vector<8x1280xf32>, vector<2x1280xf32> -> vector<2x1280xf32>
    %12 = arith.truncf %11 : vector<2x1280xf32> to vector<2x1280xbf16>
    %c0_10 = arith.constant 0 : index
    %c0_11 = arith.constant 0 : index
    %13 = vector.load %arg4[%c0_10, %c0_11] : memref<1280x128xbf16, #tpu.memory_space<vmem>>, vector<1280x128xbf16>
    %cst_12 = arith.constant dense<0.000000e+00> : vector<2x128xf32>
    %14 = tpu.matmul %12, %13, %cst_12 {dimension_numbers = #tpu.dot_dimension_numbers<[1], [0], [0], [1], [0, 0, 1, 1], [], []>} : vector<2x1280xbf16>, vector<1280x128xbf16>, vector<2x128xf32> -> vector<2x128xf32>
    %c0_13 = arith.constant 0 : index
    %c0_14 = arith.constant 0 : index
    %15 = vector.load %arg5[%c0_13, %c0_14] : memref<1x128xf32, #tpu.memory_space<vmem>>, vector<1x128xf32>
    %16 = vector.broadcast %15 : vector<1x128xf32> to vector<2x128xf32>
    %17 = arith.addf %14, %16 : vector<2x128xf32>
    %c0_15 = arith.constant 0 : index
    %c0_16 = arith.constant 0 : index
    %18 = vector.load %arg6[%c0_15, %c0_16] : memref<2x128xf32, #tpu.memory_space<vmem>>, vector<2x128xf32>
    tpu.vector_store %arg6[%c0_15, %c0_16], %17 {strides = array<i32>} : memref<2x128xf32, #tpu.memory_space<vmem>>, vector<2x128xf32>,
    return
  }
}

</mosaic_0001>

<llo_original>
// kernel: _lambda_.7
$region0: #{_lambda_.7}
  #allocation0 [shape = 'u32[]', space=smem, size = 0x4, offset = 0x4, fixed_abs, tag = 'smem constant byte address 0x4 - core index']
  #allocation1 [shape = 'u32[144,128]{1,0:T(1,128)}', space=vmem, size = 0x12000, scoped, tag = 'internal scratch']
  %s0 = inlined_call_operand.vmem [shape: bf16[2048,32], index: 0, kind: input, shape index: {}]
  %s1 = inlined_call_operand.vmem [shape: bf16[32,16], index: 1, kind: input, shape index: {}]
  %s2 = inlined_call_operand.vmem [shape: f32[1,16], index: 2, kind: input, shape index: {}]
  %s3 = inlined_call_operand.vmem [shape: bf16[2048,16], index: 3, kind: output, shape index: {}]
  %s4 = sld [smem:[#allocation0]]
  $region45: #{_lambda_.7} parent=0
    _
  %s6 = ssub.s32 1, %s4
  %s7 = scalar_select 0, %s6, %s4
  loop: start=0, step=1, limit=4
  $region2: #{_lambda_.7} parent=0 // loop_pre_header
    _
  $region3: #{_lambda_.7} parent=0 // loop_header
    %s9 = sphi 0, %s13
    %p10 = scmp.ge.s32.totalorder %s9, 4
    %s16 = sphi 0, %s28
    %s17 = sphi 0, %s24
    %s18 = sphi 0, %s16
    %s19 = sphi 0, %s17
    %s20 = sphi 0, %s18
    %s21 = sphi 0, %s19
    %s31 = sphi 0, %s33
    %s34 = sphi 0, %s31
    %s35 = sphi 0, %s34
    %s51 = sphi 0, %s35
    %s57 = sphi 0, %s59
    %s60 = sphi 0, %s57
    %s61 = sphi 0, %s60
    %s77 = sphi 0, %s61
    %s83 = sphi 0, %s85
    %s86 = sphi 0, %s83
    %s87 = sphi 0, %s86
    %s103 = sphi 0, %s87
    %s111 = sphi 0, %s113
    %s114 = sphi 0, %s111
    %s115 = sphi 0, %s114
    %s131 = sphi 0, %s115
  $region4: #{_lambda_.7} parent=0 // loop_header_branch
    %12 = sbr.rel (%p10) target = $region8
  $region5: #{_lambda_.7} parent=0 // loop_body
    %s14 = ssub.s32 %s9, 1
    %s15 = ssub.s32 %s9, 2
    %s22 = sadd.s32 1, %s17
    %p23 = scmp.ge.s32.totalorder %s22, 1
    %s24 = scalar_select %p23, 0, %s22
    %s25 = sadd.s32 1, %s16
    %s26 = scalar_select %p23, %s25, %s16
    %p27 = scmp.ge.s32.totalorder %s26, 2
    %s28 = scalar_select %p27, 0, %s26
    %s29 = ssub.s32 %s16, %s28
    %p30 = scmp.eq.s32.totalorder %s29, 0
    %s32 = sadd.s32 %s31, 1
    %s33 = scalar_select %p30, %s31, %s32
    %p36 = pneg %p30
    %p37 = scmp.eq.s32.totalorder %s9, 1
    %p38 = por %p36, %p37
    %p39 = scmp.ne.s32.totalorder %s31, %s34
    %p40 = scmp.eq.s32.totalorder %s9, 0
    %p41 = por %p39, %p40
    %p42 = scmp.ne.s32.totalorder %s31, %s34
    %p43 = scmp.eq.s32.totalorder %s14, 1
    %p44 = por %p42, %p43
    %p45 = scmp.ne.s32.totalorder %s34, %s35
    %p46 = scmp.eq.s32.totalorder %s14, 0
    %p47 = por %p45, %p46
    %p48 = scmp.ne.s32.totalorder %s34, %s35
    %p49 = scmp.eq.s32.totalorder %s15, 1
    %p50 = por %p48, %p49
    %p52 = scmp.ne.s32.totalorder %s35, %s51
    %p53 = scmp.eq.s32.totalorder %s15, 0
    %p54 = por %p52, %p53
    %s55 = ssub.s32 %s17, %s24
    %p56 = scmp.eq.s32.totalorder %s55, 0
    %s58 = sadd.s32 %s57, 1
    %s59 = scalar_select %p56, %s57, %s58
    %p62 = pneg %p56
    %p63 = scmp.eq.s32.totalorder %s9, 1
    %p64 = por %p62, %p63
    %p65 = scmp.ne.s32.totalorder %s57, %s60
    %p66 = scmp.eq.s32.totalorder %s9, 0
    %p67 = por %p65, %p66
    %p68 = scmp.ne.s32.totalorder %s57, %s60
    %p69 = scmp.eq.s32.totalorder %s14, 1
    %p70 = por %p68, %p69
    %p71 = scmp.ne.s32.totalorder %s60, %s61
    %p72 = scmp.eq.s32.totalorder %s14, 0
    %p73 = por %p71, %p72
    %p74 = scmp.ne.s32.totalorder %s60, %s61
    %p75 = scmp.eq.s32.totalorder %s15, 1
    %p76 = por %p74, %p75
    %p78 = scmp.ne.s32.totalorder %s61, %s77
    %p79 = scmp.eq.s32.totalorder %s15, 0
    %p80 = por %p78, %p79
    %s81 = ssub.s32 %s17, %s24
    %p82 = scmp.eq.s32.totalorder %s81, 0
    %s84 = sadd.s32 %s83, 1
    %s85 = scalar_select %p82, %s83, %s84
    %p88 = pneg %p82
    %p89 = scmp.eq.s32.totalorder %s9, 1
    %p90 = por %p88, %p89
    %p91 = scmp.ne.s32.totalorder %s83, %s86
    %p92 = scmp.eq.s32.totalorder %s9, 0
    %p93 = por %p91, %p92
    %p94 = scmp.ne.s32.totalorder %s83, %s86
    %p95 = scmp.eq.s32.totalorder %s14, 1
    %p96 = por %p94, %p95
    %p97 = scmp.ne.s32.totalorder %s86, %s87
    %p98 = scmp.eq.s32.totalorder %s14, 0
    %p99 = por %p97, %p98
    %p100 = scmp.ne.s32.totalorder %s86, %s87
    %p101 = scmp.eq.s32.totalorder %s15, 1
    %p102 = por %p100, %p101
    %p104 = scmp.ne.s32.totalorder %s87, %s103
    %p105 = scmp.eq.s32.totalorder %s15, 0
    %p106 = por %p104, %p105
    %s107 = ssub.s32 %s16, %s28
    %s108 = ssub.s32 %s17, %s24
    %s109 = sor.u32 %s107, %s108
    %p110 = scmp.eq.s32.totalorder %s109, 0
    %s112 = sadd.s32 %s111, 1
    %s113 = scalar_select %p110, %s111, %s112
    %p116 = pneg %p110
    %p117 = scmp.eq.s32.totalorder %s9, 1
    %p118 = por %p116, %p117
    %p119 = scmp.ne.s32.totalorder %s111, %s114
    %p120 = scmp.eq.s32.totalorder %s9, 0
    %p121 = por %p119, %p120
    %p122 = scmp.ne.s32.totalorder %s111, %s114
    %p123 = scmp.eq.s32.totalorder %s14, 1
    %p124 = por %p122, %p123
    %p125 = scmp.ne.s32.totalorder %s114, %s115
    %p126 = scmp.eq.s32.totalorder %s14, 0
    %p127 = por %p125, %p126
    %p128 = scmp.ne.s32.totalorder %s114, %s115
    %p129 = scmp.eq.s32.totalorder %s15, 1
    %p130 = por %p128, %p129
    %p132 = scmp.ne.s32.totalorder %s115, %s131
    %p133 = scmp.eq.s32.totalorder %s15, 0
    %p134 = por %p132, %p133
    %p135 = scmp.le.s32.totalorder 1, %s9
    %p136 = scmp.lt.s32.totalorder %s9, 3
    %p137 = pnand %p135, %p136
    %p138 = pneg %p137
    // Predicated region
    $region9: #{_lambda_.7} parent=5 // pred_check
      _
    $region10: #{_lambda_.7} parent=5 // pred_check_branch
      %140 = sbr.rel (%p137) target = $region12
    $region11: #{_lambda_.7} parent=5 // pred_region
      %s141 = ssub.s32 %s9, 1
      // Predicated region
      $region13: #{_lambda_.7} parent=11 // pred_check
        %p142 = pneg %p73
      $region14: #{_lambda_.7} parent=11 // pred_check_branch
        %144 = sbr.rel (%p142) target = $region16
      $region15: #{_lambda_.7} parent=11 // pred_region
        %p145 = scmp.lt.s32.totalorder %s19, 0
        %s146 = scalar_select %p145, %s19, 0
        %s147 = smul.addr %s146, 4
        %s148 = scalar_lea.vmem %s1, %s147
      $region16: #{_lambda_.7} parent=11 // pred_fallthru
        _
      // Predicated region
      $region17: #{_lambda_.7} parent=11 // pred_check
        %p149 = pneg %p99
      $region18: #{_lambda_.7} parent=11 // pred_check_branch
        %151 = sbr.rel (%p149) target = $region20
      $region19: #{_lambda_.7} parent=11 // pred_region
        %p152 = scmp.lt.s32.totalorder %s19, 0
        %s153 = scalar_select %p152, %s19, 0
        %s154 = scalar_lea.vmem %s2, %s153
      $region20: #{_lambda_.7} parent=11 // pred_fallthru
        _
    $region12: #{_lambda_.7} parent=5 // pred_fallthru
      _
    %p155 = scmp.lt.s32.totalorder %s9, 2
    // Predicated region
    $region21: #{_lambda_.7} parent=5 // pred_check
      %p156 = pneg %p155
    $region22: #{_lambda_.7} parent=5 // pred_check_branch
      %158 = sbr.rel (%p156) target = $region24
    $region23: #{_lambda_.7} parent=5 // pred_region
      // Predicated region
      $region25: #{_lambda_.7} parent=23 // pred_check
        %p159 = pneg %p41
      $region26: #{_lambda_.7} parent=23 // pred_check_branch
        %161 = sbr.rel (%p159) target = $region28
      $region27: #{_lambda_.7} parent=23 // pred_region
        %s162 = smul.u32 128, %s16
        %p163 = scmp.lt.s32.totalorder %s162, 255
        %s164 = scalar_select %p163, %s162, 255
        %s165 = smul.addr %s164, 4
        %s166 = scalar_lea.vmem %s0, %s165
        %s167 = smul.u32 128, %s16
      $region28: #{_lambda_.7} parent=23 // pred_fallthru
        _
    $region24: #{_lambda_.7} parent=5 // pred_fallthru
      _
    %p168 = scmp.le.s32.totalorder 1, %s9
    %p169 = scmp.lt.s32.totalorder %s9, 3
    %p170 = pnand %p168, %p169
    %p171 = pneg %p170
    // Predicated region
    $region29: #{_lambda_.7} parent=5 // pred_check
      _
    $region30: #{_lambda_.7} parent=5 // pred_check_branch
      %173 = sbr.rel (%p170) target = $region32
    $region31: #{_lambda_.7} parent=5 // pred_region
      %s174 = ssub.s32 %s9, 1
      %s175 = smul.u32 128, %s18
      %p176 = scmp.lt.s32.totalorder %s175, 255
      %s177 = scalar_select %p176, %s175, 255
      %s178 = smul.addr %s177, 4
      %s179 = scalar_lea.vmem %s0, %s178
      %p180 = pneg %p47
      %p181 = pneg %p44
      %p182 = scmp.lt.s32.totalorder %s19, 0
      %s183 = scalar_select %p182, %s19, 0
      %s184 = smul.addr %s183, 4
      %s185 = scalar_lea.vmem %s1, %s184
      %p186 = pneg %p73
      %p187 = pneg %p70
      %p188 = scmp.lt.s32.totalorder %s19, 0
      %s189 = scalar_select %p188, %s19, 0
      %s190 = scalar_lea.vmem %s2, %s189
      %p191 = pneg %p99
      %p192 = pneg %p96
      %p193 = pneg %p127
      %p194 = pneg %p124
      %s195 = smul.u32 128, %s18
      %p196 = scmp.lt.s32.totalorder %s195, 255
      %s197 = scalar_select %p196, %s195, 255
      %p198 = scmp.lt.s32.totalorder %s19, 0
      %s199 = scalar_select %p198, %s19, 0
      %s200 = sadd.s32 %s199, %s197
      %s201 = smul.addr %s200, 4
      %s202 = scalar_lea.vmem %s3, %s201
      %s203 = smul.u32 128, %s18
      %p204 = scmp.lt.s32.totalorder %s203, 255
      %s205 = scalar_select %p204, %s203, 255
      %s206 = smul.addr %s205, 4
      %s207 = scalar_lea.vmem %s0, %s206
      %s208 = smul.u32 128, %s18
      %p209 = scmp.lt.s32.totalorder %s19, 0
      %s210 = scalar_select %p209, %s19, 0
      %s211 = smul.addr %s210, 4
      %s212 = scalar_lea.vmem %s1, %s211
      %p213 = scmp.lt.s32.totalorder %s19, 0
      %s214 = scalar_select %p213, %s19, 0
      %s215 = scalar_lea.vmem %s2, %s214
      %s216 = smul.u32 128, %s18
      %p217 = scmp.lt.s32.totalorder %s216, 255
      %s218 = scalar_select %p217, %s216, 255
      %p219 = scmp.lt.s32.totalorder %s19, 0
      %s220 = scalar_select %p219, %s19, 0
      %s221 = sadd.s32 %s220, %s218
      %s222 = smul.addr %s221, 4
      %s223 = scalar_lea.vmem %s3, %s222
      %s224 = smul.u32 128, %s18
      %v226 = vld [vmem:[%s207] sm:$0xf]
      %v227 = vld [vmem:[%s207 + $0x4] sm:$0xf]
      %v228 = vld [vmem:[%s207 + $0x8] sm:$0xf]
      %v229 = vld [vmem:[%s207 + $0xc] sm:$0xf]
      %v230 = vld [vmem:[%s207 + $0x10] sm:$0xf]
      %v231 = vld [vmem:[%s207 + $0x14] sm:$0xf]
      %v232 = vld [vmem:[%s207 + $0x18] sm:$0xf]
      %v233 = vld [vmem:[%s207 + $0x1c] sm:$0xf]
      %v234 = vld [vmem:[%s207 + $0x20] sm:$0xf]
      %v235 = vld [vmem:[%s207 + $0x24] sm:$0xf]
      %v236 = vld [vmem:[%s207 + $0x28] sm:$0xf]
      %v237 = vld [vmem:[%s207 + $0x2c] sm:$0xf]
      %v238 = vld [vmem:[%s207 + $0x30] sm:$0xf]
      %v239 = vld [vmem:[%s207 + $0x34] sm:$0xf]
      %v240 = vld [vmem:[%s207 + $0x38] sm:$0xf]
      %v241 = vld [vmem:[%s207 + $0x3c] sm:$0xf]
      %v242 = vld [vmem:[%s207 + $0x40] sm:$0xf]
      %v243 = vld [vmem:[%s207 + $0x44] sm:$0xf]
      %v244 = vld [vmem:[%s207 + $0x48] sm:$0xf]
      %v245 = vld [vmem:[%s207 + $0x4c] sm:$0xf]
      %v246 = vld [vmem:[%s207 + $0x50] sm:$0xf]
      %v247 = vld [vmem:[%s207 + $0x54] sm:$0xf]
      %v248 = vld [vmem:[%s207 + $0x58] sm:$0xf]
      %v249 = vld [vmem:[%s207 + $0x5c] sm:$0xf]
      %v250 = vld [vmem:[%s207 + $0x60] sm:$0xf]
      %v251 = vld [vmem:[%s207 + $0x64] sm:$0xf]
      %v252 = vld [vmem:[%s207 + $0x68] sm:$0xf]
      %v253 = vld [vmem:[%s207 + $0x6c] sm:$0xf]
      %v254 = vld [vmem:[%s207 + $0x70] sm:$0xf]
      %v255 = vld [vmem:[%s207 + $0x74] sm:$0xf]
      %v256 = vld [vmem:[%s207 + $0x78] sm:$0xf]
      %v257 = vld [vmem:[%s207 + $0x7c] sm:$0xf]
      %v258 = vld [vmem:[%s207 + $0x80] sm:$0xf]
      %v259 = vld [vmem:[%s207 + $0x84] sm:$0xf]
      %v260 = vld [vmem:[%s207 + $0x88] sm:$0xf]
      %v261 = vld [vmem:[%s207 + $0x8c] sm:$0xf]
      %v262 = vld [vmem:[%s207 + $0x90] sm:$0xf]
      %v263 = vld [vmem:[%s207 + $0x94] sm:$0xf]
      %v264 = vld [vmem:[%s207 + $0x98] sm:$0xf]
      %v265 = vld [vmem:[%s207 + $0x9c] sm:$0xf]
      %v266 = vld [vmem:[%s207 + $0xa0] sm:$0xf]
      %v267 = vld [vmem:[%s207 + $0xa4] sm:$0xf]
      %v268 = vld [vmem:[%s207 + $0xa8] sm:$0xf]
      %v269 = vld [vmem:[%s207 + $0xac] sm:$0xf]
      %v270 = vld [vmem:[%s207 + $0xb0] sm:$0xf]
      %v271 = vld [vmem:[%s207 + $0xb4] sm:$0xf]
      %v272 = vld [vmem:[%s207 + $0xb8] sm:$0xf]
      %v273 = vld [vmem:[%s207 + $0xbc] sm:$0xf]
      %v274 = vld [vmem:[%s207 + $0xc0] sm:$0xf]
      %v275 = vld [vmem:[%s207 + $0xc4] sm:$0xf]
      %v276 = vld [vmem:[%s207 + $0xc8] sm:$0xf]
      %v277 = vld [vmem:[%s207 + $0xcc] sm:$0xf]
      %v278 = vld [vmem:[%s207 + $0xd0] sm:$0xf]
      %v279 = vld [vmem:[%s207 + $0xd4] sm:$0xf]
      %v280 = vld [vmem:[%s207 + $0xd8] sm:$0xf]
      %v281 = vld [vmem:[%s207 + $0xdc] sm:$0xf]
      %v282 = vld [vmem:[%s207 + $0xe0] sm:$0xf]
      %v283 = vld [vmem:[%s207 + $0xe4] sm:$0xf]
      %v284 = vld [vmem:[%s207 + $0xe8] sm:$0xf]
      %v285 = vld [vmem:[%s207 + $0xec] sm:$0xf]
      %v286 = vld [vmem:[%s207 + $0xf0] sm:$0xf]
      %v287 = vld [vmem:[%s207 + $0xf4] sm:$0xf]
      %v288 = vld [vmem:[%s207 + $0xf8] sm:$0xf]
      %v289 = vld [vmem:[%s207 + $0xfc] sm:$0xf]
      %v290 = vld [vmem:[%s207 + $0x100] sm:$0xf]
      %v291 = vld [vmem:[%s207 + $0x104] sm:$0xf]
      %v292 = vld [vmem:[%s207 + $0x108] sm:$0xf]
      %v293 = vld [vmem:[%s207 + $0x10c] sm:$0xf]
      %v294 = vld [vmem:[%s207 + $0x110] sm:$0xf]
      %v295 = vld [vmem:[%s207 + $0x114] sm:$0xf]
      %v296 = vld [vmem:[%s207 + $0x118] sm:$0xf]
      %v297 = vld [vmem:[%s207 + $0x11c] sm:$0xf]
      %v298 = vld [vmem:[%s207 + $0x120] sm:$0xf]
      %v299 = vld [vmem:[%s207 + $0x124] sm:$0xf]
      %v300 = vld [vmem:[%s207 + $0x128] sm:$0xf]
      %v301 = vld [vmem:[%s207 + $0x12c] sm:$0xf]
      %v302 = vld [vmem:[%s207 + $0x130] sm:$0xf]
      %v303 = vld [vmem:[%s207 + $0x134] sm:$0xf]
      %v304 = vld [vmem:[%s207 + $0x138] sm:$0xf]
      %v305 = vld [vmem:[%s207 + $0x13c] sm:$0xf]
      %v306 = vld [vmem:[%s207 + $0x140] sm:$0xf]
      %v307 = vld [vmem:[%s207 + $0x144] sm:$0xf]
      %v308 = vld [vmem:[%s207 + $0x148] sm:$0xf]
      %v309 = vld [vmem:[%s207 + $0x14c] sm:$0xf]
      %v310 = vld [vmem:[%s207 + $0x150] sm:$0xf]
      %v311 = vld [vmem:[%s207 + $0x154] sm:$0xf]
      %v312 = vld [vmem:[%s207 + $0x158] sm:$0xf]
      %v313 = vld [vmem:[%s207 + $0x15c] sm:$0xf]
      %v314 = vld [vmem:[%s207 + $0x160] sm:$0xf]
      %v315 = vld [vmem:[%s207 + $0x164] sm:$0xf]
      %v316 = vld [vmem:[%s207 + $0x168] sm:$0xf]
      %v317 = vld [vmem:[%s207 + $0x16c] sm:$0xf]
      %v318 = vld [vmem:[%s207 + $0x170] sm:$0xf]
      %v319 = vld [vmem:[%s207 + $0x174] sm:$0xf]
      %v320 = vld [vmem:[%s207 + $0x178] sm:$0xf]
      %v321 = vld [vmem:[%s207 + $0x17c] sm:$0xf]
      %v322 = vld [vmem:[%s207 + $0x180] sm:$0xf]
      %v323 = vld [vmem:[%s207 + $0x184] sm:$0xf]
      %v324 = vld [vmem:[%s207 + $0x188] sm:$0xf]
      %v325 = vld [vmem:[%s207 + $0x18c] sm:$0xf]
      %v326 = vld [vmem:[%s207 + $0x190] sm:$0xf]
      %v327 = vld [vmem:[%s207 + $0x194] sm:$0xf]
      %v328 = vld [vmem:[%s207 + $0x198] sm:$0xf]
      %v329 = vld [vmem:[%s207 + $0x19c] sm:$0xf]
      %v330 = vld [vmem:[%s207 + $0x1a0] sm:$0xf]
      %v331 = vld [vmem:[%s207 + $0x1a4] sm:$0xf]
      %v332 = vld [vmem:[%s207 + $0x1a8] sm:$0xf]
      %v333 = vld [vmem:[%s207 + $0x1ac] sm:$0xf]
      %v334 = vld [vmem:[%s207 + $0x1b0] sm:$0xf]
      %v335 = vld [vmem:[%s207 + $0x1b4] sm:$0xf]
      %v336 = vld [vmem:[%s207 + $0x1b8] sm:$0xf]
      %v337 = vld [vmem:[%s207 + $0x1bc] sm:$0xf]
      %v338 = vld [vmem:[%s207 + $0x1c0] sm:$0xf]
      %v339 = vld [vmem:[%s207 + $0x1c4] sm:$0xf]
      %v340 = vld [vmem:[%s207 + $0x1c8] sm:$0xf]
      %v341 = vld [vmem:[%s207 + $0x1cc] sm:$0xf]
      %v342 = vld [vmem:[%s207 + $0x1d0] sm:$0xf]
      %v343 = vld [vmem:[%s207 + $0x1d4] sm:$0xf]
      %v344 = vld [vmem:[%s207 + $0x1d8] sm:$0xf]
      %v345 = vld [vmem:[%s207 + $0x1dc] sm:$0xf]
      %v346 = vld [vmem:[%s207 + $0x1e0] sm:$0xf]
      %v347 = vld [vmem:[%s207 + $0x1e4] sm:$0xf]
      %v348 = vld [vmem:[%s207 + $0x1e8] sm:$0xf]
      %v349 = vld [vmem:[%s207 + $0x1ec] sm:$0xf]
      %v350 = vld [vmem:[%s207 + $0x1f0] sm:$0xf]
      %v351 = vld [vmem:[%s207 + $0x1f4] sm:$0xf]
      %v352 = vld [vmem:[%s207 + $0x1f8] sm:$0xf]
      %v353 = vld [vmem:[%s207 + $0x1fc] sm:$0xf]
      %v354 = vld [vmem:[%s212] sm:$0xf]
      %v355 = vld [vmem:[%s212 + $0x4] sm:$0xf]
      %v356 = vld [vmem:[%s212 + $0x8] sm:$0xf]
      %v357 = vld [vmem:[%s212 + $0xc] sm:$0xf]
      %v358 = vld [vmem:[%s215] sm:$0x1]
      %v360 = vlaneseq
      %v361 = vshrl.u32 %v360, 7
      %v362 = vsub.s32 0, %v361
      %v363 = vrot.slane %v358, %v362
      %v493 = vunpack.c.l.b16 %v226
      %v494 = vunpack.c.l.b16 %v227
      %v495 = vunpack.c.l.b16 %v228
      %v496 = vunpack.c.l.b16 %v229
      %v497 = vunpack.c.l.b16 %v230
      %v498 = vunpack.c.l.b16 %v231
      %v499 = vunpack.c.l.b16 %v232
      %v500 = vunpack.c.l.b16 %v233
      %v501 = vunpack.c.l.b16 %v234
      %v502 = vunpack.c.l.b16 %v235
      %v503 = vunpack.c.l.b16 %v236
      %v504 = vunpack.c.l.b16 %v237
      %v505 = vunpack.c.l.b16 %v238
      %v506 = vunpack.c.l.b16 %v239
      %v507 = vunpack.c.l.b16 %v240
      %v508 = vunpack.c.l.b16 %v241
      %v509 = vunpack.c.l.b16 %v242
      %v510 = vunpack.c.l.b16 %v243
      %v511 = vunpack.c.l.b16 %v244
      %v512 = vunpack.c.l.b16 %v245
      %v513 = vunpack.c.l.b16 %v246
      %v514 = vunpack.c.l.b16 %v247
      %v515 = vunpack.c.l.b16 %v248
      %v516 = vunpack.c.l.b16 %v249
      %v517 = vunpack.c.l.b16 %v250
      %v518 = vunpack.c.l.b16 %v251
      %v519 = vunpack.c.l.b16 %v252
      %v520 = vunpack.c.l.b16 %v253
      %v521 = vunpack.c.l.b16 %v254
      %v522 = vunpack.c.l.b16 %v255
      %v523 = vunpack.c.l.b16 %v256
      %v524 = vunpack.c.l.b16 %v257
      %v525 = vunpack.c.l.b16 %v258
      %v526 = vunpack.c.l.b16 %v259
      %v527 = vunpack.c.l.b16 %v260
      %v528 = vunpack.c.l.b16 %v261
      %v529 = vunpack.c.l.b16 %v262
      %v530 = vunpack.c.l.b16 %v263
      %v531 = vunpack.c.l.b16 %v264
      %v532 = vunpack.c.l.b16 %v265
      %v533 = vunpack.c.l.b16 %v266
      %v534 = vunpack.c.l.b16 %v267
      %v535 = vunpack.c.l.b16 %v268
      %v536 = vunpack.c.l.b16 %v269
      %v537 = vunpack.c.l.b16 %v270
      %v538 = vunpack.c.l.b16 %v271
      %v539 = vunpack.c.l.b16 %v272
      %v540 = vunpack.c.l.b16 %v273
      %v541 = vunpack.c.l.b16 %v274
      %v542 = vunpack.c.l.b16 %v275
      %v543 = vunpack.c.l.b16 %v276
      %v544 = vunpack.c.l.b16 %v277
      %v545 = vunpack.c.l.b16 %v278
      %v546 = vunpack.c.l.b16 %v279
      %v547 = vunpack.c.l.b16 %v280
      %v548 = vunpack.c.l.b16 %v281
      %v549 = vunpack.c.l.b16 %v282
      %v550 = vunpack.c.l.b16 %v283
      %v551 = vunpack.c.l.b16 %v284
      %v552 = vunpack.c.l.b16 %v285
      %v553 = vunpack.c.l.b16 %v286
      %v554 = vunpack.c.l.b16 %v287
      %v555 = vunpack.c.l.b16 %v288
      %v556 = vunpack.c.l.b16 %v289
      %v557 = vunpack.c.l.b16 %v290
      %v558 = vunpack.c.l.b16 %v291
      %v559 = vunpack.c.l.b16 %v292
      %v560 = vunpack.c.l.b16 %v293
      %v561 = vunpack.c.l.b16 %v294
      %v562 = vunpack.c.l.b16 %v295
      %v563 = vunpack.c.l.b16 %v296
      %v564 = vunpack.c.l.b16 %v297
      %v565 = vunpack.c.l.b16 %v298
      %v566 = vunpack.c.l.b16 %v299
      %v567 = vunpack.c.l.b16 %v300
      %v568 = vunpack.c.l.b16 %v301
      %v569 = vunpack.c.l.b16 %v302
      %v570 = vunpack.c.l.b16 %v303
      %v571 = vunpack.c.l.b16 %v304
      %v572 = vunpack.c.l.b16 %v305
      %v573 = vunpack.c.l.b16 %v306
      %v574 = vunpack.c.l.b16 %v307
      %v575 = vunpack.c.l.b16 %v308
      %v576 = vunpack.c.l.b16 %v309
      %v577 = vunpack.c.l.b16 %v310
      %v578 = vunpack.c.l.b16 %v311
      %v579 = vunpack.c.l.b16 %v312
      %v580 = vunpack.c.l.b16 %v313
      %v581 = vunpack.c.l.b16 %v314
      %v582 = vunpack.c.l.b16 %v315
      %v583 = vunpack.c.l.b16 %v316
      %v584 = vunpack.c.l.b16 %v317
      %v585 = vunpack.c.l.b16 %v318
      %v586 = vunpack.c.l.b16 %v319
      %v587 = vunpack.c.l.b16 %v320
      %v588 = vunpack.c.l.b16 %v321
      %v589 = vunpack.c.l.b16 %v322
      %v590 = vunpack.c.l.b16 %v323
      %v591 = vunpack.c.l.b16 %v324
      %v592 = vunpack.c.l.b16 %v325
      %v593 = vunpack.c.l.b16 %v326
      %v594 = vunpack.c.l.b16 %v327
      %v595 = vunpack.c.l.b16 %v328
      %v596 = vunpack.c.l.b16 %v329
      %v597 = vunpack.c.l.b16 %v330
      %v598 = vunpack.c.l.b16 %v331
      %v599 = vunpack.c.l.b16 %v332
      %v600 = vunpack.c.l.b16 %v333
      %v601 = vunpack.c.l.b16 %v334
      %v602 = vunpack.c.l.b16 %v335
      %v603 = vunpack.c.l.b16 %v336
      %v604 = vunpack.c.l.b16 %v337
      %v605 = vunpack.c.l.b16 %v338
      %v606 = vunpack.c.l.b16 %v339
      %v607 = vunpack.c.l.b16 %v340
      %v608 = vunpack.c.l.b16 %v341
      %v609 = vunpack.c.l.b16 %v342
      %v610 = vunpack.c.l.b16 %v343
      %v611 = vunpack.c.l.b16 %v344
      %v612 = vunpack.c.l.b16 %v345
      %v613 = vunpack.c.l.b16 %v346
      %v614 = vunpack.c.l.b16 %v347
      %v615 = vunpack.c.l.b16 %v348
      %v616 = vunpack.c.l.b16 %v349
      %v617 = vunpack.c.l.b16 %v350
      %v618 = vunpack.c.l.b16 %v351
      %v619 = vunpack.c.l.b16 %v352
      %v620 = vunpack.c.l.b16 %v353
      %v621 = vpack.c.b16 %v494, %v493
      %v622 = vpack.c.b16 %v496, %v495
      %v623 = vpack.c.b16 %v498, %v497
      %v624 = vpack.c.b16 %v500, %v499
      %v625 = vpack.c.b16 %v502, %v501
      %v626 = vpack.c.b16 %v504, %v503
      %v627 = vpack.c.b16 %v506, %v505
      %v628 = vpack.c.b16 %v508, %v507
      %v629 = vpack.c.b16 %v510, %v509
      %v630 = vpack.c.b16 %v512, %v511
      %v631 = vpack.c.b16 %v514, %v513
      %v632 = vpack.c.b16 %v516, %v515
      %v633 = vpack.c.b16 %v518, %v517
      %v634 = vpack.c.b16 %v520, %v519
      %v635 = vpack.c.b16 %v522, %v521
      %v636 = vpack.c.b16 %v524, %v523
      %v637 = vpack.c.b16 %v526, %v525
      %v638 = vpack.c.b16 %v528, %v527
      %v639 = vpack.c.b16 %v530, %v529
      %v640 = vpack.c.b16 %v532, %v531
      %v641 = vpack.c.b16 %v534, %v533
      %v642 = vpack.c.b16 %v536, %v535
      %v643 = vpack.c.b16 %v538, %v537
      %v644 = vpack.c.b16 %v540, %v539
      %v645 = vpack.c.b16 %v542, %v541
      %v646 = vpack.c.b16 %v544, %v543
      %v647 = vpack.c.b16 %v546, %v545
      %v648 = vpack.c.b16 %v548, %v547
      %v649 = vpack.c.b16 %v550, %v549
      %v650 = vpack.c.b16 %v552, %v551
      %v651 = vpack.c.b16 %v554, %v553
      %v652 = vpack.c.b16 %v556, %v555
      %v653 = vpack.c.b16 %v558, %v557
      %v654 = vpack.c.b16 %v560, %v559
      %v655 = vpack.c.b16 %v562, %v561
      %v656 = vpack.c.b16 %v564, %v563
      %v657 = vpack.c.b16 %v566, %v565
      %v658 = vpack.c.b16 %v568, %v567
      %v659 = vpack.c.b16 %v570, %v569
      %v660 = vpack.c.b16 %v572, %v571
      %v661 = vpack.c.b16 %v574, %v573
      %v662 = vpack.c.b16 %v576, %v575
      %v663 = vpack.c.b16 %v578, %v577
      %v664 = vpack.c.b16 %v580, %v579
      %v665 = vpack.c.b16 %v582, %v581
      %v666 = vpack.c.b16 %v584, %v583
      %v667 = vpack.c.b16 %v586, %v585
      %v668 = vpack.c.b16 %v588, %v587
      %v669 = vpack.c.b16 %v590, %v589
      %v670 = vpack.c.b16 %v592, %v591
      %v671 = vpack.c.b16 %v594, %v593
      %v672 = vpack.c.b16 %v596, %v595
      %v673 = vpack.c.b16 %v598, %v597
      %v674 = vpack.c.b16 %v600, %v599
      %v675 = vpack.c.b16 %v602, %v601
      %v676 = vpack.c.b16 %v604, %v603
      %v677 = vpack.c.b16 %v606, %v605
      %v678 = vpack.c.b16 %v608, %v607
      %v679 = vpack.c.b16 %v610, %v609
      %v680 = vpack.c.b16 %v612, %v611
      %v681 = vpack.c.b16 %v614, %v613
      %v682 = vpack.c.b16 %v616, %v615
      %v683 = vpack.c.b16 %v618, %v617
      %v684 = vpack.c.b16 %v620, %v619
      %v689 = vunpack.c.l.b16 %v354
      %v690 = vunpack.c.l.b16 %v355
      %v691 = vunpack.c.l.b16 %v356
      %v692 = vunpack.c.l.b16 %v357
      %v693 = vpack.c.b16 %v690, %v689
      %v694 = vpack.c.b16 %v692, %v691
      %vm697 = vcmask 261120
      %v699 = vsel %vm697, %v621, 0
      %v702 = vsel %vm697, %v622, 0
      %v705 = vsel %vm697, %v623, 0
      %v708 = vsel %vm697, %v624, 0
      %v711 = vsel %vm697, %v625, 0
      %v714 = vsel %vm697, %v626, 0
      %v717 = vsel %vm697, %v627, 0
      %v720 = vsel %vm697, %v628, 0
      %v723 = vsel %vm697, %v629, 0
      %v726 = vsel %vm697, %v630, 0
      %v729 = vsel %vm697, %v631, 0
      %v732 = vsel %vm697, %v632, 0
      %v735 = vsel %vm697, %v633, 0
      %v738 = vsel %vm697, %v634, 0
      %v741 = vsel %vm697, %v635, 0
      %v744 = vsel %vm697, %v636, 0
      %v747 = vsel %vm697, %v637, 0
      %v750 = vsel %vm697, %v638, 0
      %v753 = vsel %vm697, %v639, 0
      %v756 = vsel %vm697, %v640, 0
      %v759 = vsel %vm697, %v641, 0
      %v762 = vsel %vm697, %v642, 0
      %v765 = vsel %vm697, %v643, 0
      %v768 = vsel %vm697, %v644, 0
      %v771 = vsel %vm697, %v645, 0
      %v774 = vsel %vm697, %v646, 0
      %v777 = vsel %vm697, %v647, 0
      %v780 = vsel %vm697, %v648, 0
      %v783 = vsel %vm697, %v649, 0
      %v786 = vsel %vm697, %v650, 0
      %v789 = vsel %vm697, %v651, 0
      %v792 = vsel %vm697, %v652, 0
      %v795 = vsel %vm697, %v653, 0
      %v798 = vsel %vm697, %v654, 0
      %v801 = vsel %vm697, %v655, 0
      %v804 = vsel %vm697, %v656, 0
      %v807 = vsel %vm697, %v657, 0
      %v810 = vsel %vm697, %v658, 0
      %v813 = vsel %vm697, %v659, 0
      %v816 = vsel %vm697, %v660, 0
      %v819 = vsel %vm697, %v661, 0
      %v822 = vsel %vm697, %v662, 0
      %v825 = vsel %vm697, %v663, 0
      %v828 = vsel %vm697, %v664, 0
      %v831 = vsel %vm697, %v665, 0
      %v834 = vsel %vm697, %v666, 0
      %v837 = vsel %vm697, %v667, 0
      %v840 = vsel %vm697, %v668, 0
      %v843 = vsel %vm697, %v669, 0
      %v846 = vsel %vm697, %v670, 0
      %v849 = vsel %vm697, %v671, 0
      %v852 = vsel %vm697, %v672, 0
      %v855 = vsel %vm697, %v673, 0
      %v858 = vsel %vm697, %v674, 0
      %v861 = vsel %vm697, %v675, 0
      %v864 = vsel %vm697, %v676, 0
      %v867 = vsel %vm697, %v677, 0
      %v870 = vsel %vm697, %v678, 0
      %v873 = vsel %vm697, %v679, 0
      %v876 = vsel %vm697, %v680, 0
      %v879 = vsel %vm697, %v681, 0
      %v882 = vsel %vm697, %v682, 0
      %v885 = vsel %vm697, %v683, 0
      %v888 = vsel %vm697, %v684, 0
      %890 = vmatprep.subr.bf16.mxu0 0
      %891 = vmatpush1.bf16.msra.mxu0 %v693
      %892 = vmatprep.subr.bf16.mxu0 0
      %893 = vmatpush1.bf16.msra.mxu0 %v694
      %894 = vmatprep.subr.bf16.mxu0 0
      %895 = vmatpush1.bf16.msra.mxu0 0
      %896 = vmatprep.subr.bf16.mxu0 0
      %897 = vmatpush1.bf16.msra.mxu0 0
      %898 = vmatprep.subr.bf16.mxu0 0
      %899 = vmatpush1.bf16.msra.mxu0 0
      %900 = vmatprep.subr.bf16.mxu0 0
      %901 = vmatpush1.bf16.msra.mxu0 0
      %902 = vmatprep.subr.bf16.mxu0 0
      %903 = vmatpush1.bf16.msra.mxu0 0
      %904 = vmatprep.subr.bf16.mxu0 0
      %905 = vmatpush1.bf16.msra.mxu0 0
      %906 = vmatprep.subr.bf16.mxu0 0
      %907 = vmatpush1.bf16.msra.mxu0 0
      %908 = vmatprep.subr.bf16.mxu0 0
      %909 = vmatpush1.bf16.msra.mxu0 0
      %910 = vmatprep.subr.bf16.mxu0 0
      %911 = vmatpush1.bf16.msra.mxu0 0
      %912 = vmatprep.subr.bf16.mxu0 0
      %913 = vmatpush1.bf16.msra.mxu0 0
      %914 = vmatprep.subr.bf16.mxu0 0
      %915 = vmatpush1.bf16.msra.mxu0 0
      %916 = vmatprep.subr.bf16.mxu0 0
      %917 = vmatpush1.bf16.msra.mxu0 0
      %918 = vmatprep.subr.bf16.mxu0 0
      %919 = vmatpush1.bf16.msra.mxu0 0
      %920 = vmatprep.subr.bf16.mxu0 0
      %921 = vmatpush1.bf16.msra.mxu0 0
      %922 = vmatprep.mubr.bf16.mxu0 0
      %923 = vmatmul.mubr.bf16.gmra.mrb[0].mxu0 %v699
      %v924 = vpop.f32.mrb[0].mxu0
      %v925 = vadd.f32 %v363, %v924
      %v926 = vpop.f32.mrb[0].mxu0
      %v927 = vpop.f32.mrb[0].mxu0
      %v928 = vadd.f32 %v363, %v927
      %v929 = vpop.f32.mrb[0].mxu0
      %930 = vmatprep.mubr.bf16.mxu0 0
      %931 = vmatmul.mubr.bf16.gmra.mrb[0].mxu0 %v702
      %v932 = vpop.f32.mrb[0].mxu0
      %v933 = vadd.f32 %v363, %v932
      %v934 = vpop.f32.mrb[0].mxu0
      %v935 = vpop.f32.mrb[0].mxu0
      %v936 = vadd.f32 %v363, %v935
      %v937 = vpop.f32.mrb[0].mxu0
      %938 = vmatprep.mubr.bf16.mxu0 0
      %939 = vmatmul.mubr.bf16.gmra.mrb[0].mxu0 %v705
      %v940 = vpop.f32.mrb[0].mxu0
      %v941 = vadd.f32 %v363, %v940
      %v942 = vpop.f32.mrb[0].mxu0
      %v943 = vpop.f32.mrb[0].mxu0
      %v944 = vadd.f32 %v363, %v943
      %v945 = vpop.f32.mrb[0].mxu0
      %946 = vmatprep.mubr.bf16.mxu0 0
      %947 = vmatmul.mubr.bf16.gmra.mrb[0].mxu0 %v708
      %v948 = vpop.f32.mrb[0].mxu0
      %v949 = vadd.f32 %v363, %v948
      %v950 = vpop.f32.mrb[0].mxu0
      %v951 = vpop.f32.mrb[0].mxu0
      %v952 = vadd.f32 %v363, %v951
      %v953 = vpop.f32.mrb[0].mxu0
      %954 = vmatprep.mubr.bf16.mxu0 0
      %955 = vmatmul.mubr.bf16.gmra.mrb[0].mxu0 %v711
      %v956 = vpop.f32.mrb[0].mxu0
      %v957 = vadd.f32 %v363, %v956
      %v958 = vpop.f32.mrb[0].mxu0
      %v959 = vpop.f32.mrb[0].mxu0
      %v960 = vadd.f32 %v363, %v959
      %v961 = vpop.f32.mrb[0].mxu0
      %962 = vmatprep.mubr.bf16.mxu0 0
      %963 = vmatmul.mubr.bf16.gmra.mrb[0].mxu0 %v714
      %v964 = vpop.f32.mrb[0].mxu0
      %v965 = vadd.f32 %v363, %v964
      %v966 = vpop.f32.mrb[0].mxu0
      %v967 = vpop.f32.mrb[0].mxu0
      %v968 = vadd.f32 %v363, %v967
      %v969 = vpop.f32.mrb[0].mxu0
      %970 = vmatprep.mubr.bf16.mxu0 0
      %971 = vmatmul.mubr.bf16.gmra.mrb[0].mxu0 %v717
      %v972 = vpop.f32.mrb[0].mxu0
      %v973 = vadd.f32 %v363, %v972
      %v974 = vpop.f32.mrb[0].mxu0
      %v975 = vpop.f32.mrb[0].mxu0
      %v976 = vadd.f32 %v363, %v975
      %v977 = vpop.f32.mrb[0].mxu0
      %978 = vmatprep.mubr.bf16.mxu0 0
      %979 = vmatmul.mubr.bf16.gmra.mrb[0].mxu0 %v720
      %v980 = vpop.f32.mrb[0].mxu0
      %v981 = vadd.f32 %v363, %v980
      %v982 = vpop.f32.mrb[0].mxu0
      %v983 = vpop.f32.mrb[0].mxu0
      %v984 = vadd.f32 %v363, %v983
      %v985 = vpop.f32.mrb[0].mxu0
      %986 = vmatprep.mubr.bf16.mxu0 0
      %987 = vmatmul.mubr.bf16.gmra.mrb[0].mxu0 %v723
      %v988 = vpop.f32.mrb[0].mxu0
      %v989 = vadd.f32 %v363, %v988
      %v990 = vpop.f32.mrb[0].mxu0
      %v991 = vpop.f32.mrb[0].mxu0
      %v992 = vadd.f32 %v363, %v991
      %v993 = vpop.f32.mrb[0].mxu0
      %994 = vmatprep.mubr.bf16.mxu0 0
      %995 = vmatmul.mubr.bf16.gmra.mrb[0].mxu0 %v726
      %v996 = vpop.f32.mrb[0].mxu0
      %v997 = vadd.f32 %v363, %v996
      %v998 = vpop.f32.mrb[0].mxu0
      %v999 = vpop.f32.mrb[0].mxu0
      %v1000 = vadd.f32 %v363, %v999
      %v1001 = vpop.f32.mrb[0].mxu0
      %1002 = vmatprep.mubr.bf16.mxu0 0
      %1003 = vmatmul.mubr.bf16.gmra.mrb[0].mxu0 %v729
      %v1004 = vpop.f32.mrb[0].mxu0
      %v1005 = vadd.f32 %v363, %v1004
      %v1006 = vpop.f32.mrb[0].mxu0
      %v1007 = vpop.f32.mrb[0].mxu0
      %v1008 = vadd.f32 %v363, %v1007
      %v1009 = vpop.f32.mrb[0].mxu0
      %1010 = vmatprep.mubr.bf16.mxu0 0
      %1011 = vmatmul.mubr.bf16.gmra.mrb[0].mxu0 %v732
      %v1012 = vpop.f32.mrb[0].mxu0
      %v1013 = vadd.f32 %v363, %v1012
      %v1014 = vpop.f32.mrb[0].mxu0
      %v1015 = vpop.f32.mrb[0].mxu0
      %v1016 = vadd.f32 %v363, %v1015
      %v1017 = vpop.f32.mrb[0].mxu0
      %1018 = vmatprep.mubr.bf16.mxu0 0
      %1019 = vmatmul.mubr.bf16.gmra.mrb[0].mxu0 %v735
      %v1020 = vpop.f32.mrb[0].mxu0
      %v1021 = vadd.f32 %v363, %v1020
      %v1022 = vpop.f32.mrb[0].mxu0
      %v1023 = vpop.f32.mrb[0].mxu0
      %v1024 = vadd.f32 %v363, %v1023
      %v1025 = vpop.f32.mrb[0].mxu0
      %1026 = vmatprep.mubr.bf16.mxu0 0
      %1027 = vmatmul.mubr.bf16.gmra.mrb[0].mxu0 %v738
      %v1028 = vpop.f32.mrb[0].mxu0
      %v1029 = vadd.f32 %v363, %v1028
      %v1030 = vpop.f32.mrb[0].mxu0
      %v1031 = vpop.f32.mrb[0].mxu0
      %v1032 = vadd.f32 %v363, %v1031
      %v1033 = vpop.f32.mrb[0].mxu0
      %1034 = vmatprep.mubr.bf16.mxu0 0
      %1035 = vmatmul.mubr.bf16.gmra.mrb[0].mxu0 %v741
      %v1036 = vpop.f32.mrb[0].mxu0
      %v1037 = vadd.f32 %v363, %v1036
      %v1038 = vpop.f32.mrb[0].mxu0
      %v1039 = vpop.f32.mrb[0].mxu0
      %v1040 = vadd.f32 %v363, %v1039
      %v1041 = vpop.f32.mrb[0].mxu0
      %1042 = vmatprep.mubr.bf16.mxu0 0
      %1043 = vmatmul.mubr.bf16.gmra.mrb[0].mxu0 %v744
      %v1044 = vpop.f32.mrb[0].mxu0
      %v1045 = vadd.f32 %v363, %v1044
      %v1046 = vpop.f32.mrb[0].mxu0
      %v1047 = vpop.f32.mrb[0].mxu0
      %v1048 = vadd.f32 %v363, %v1047
      %v1049 = vpop.f32.mrb[0].mxu0
      %1050 = vmatprep.mubr.bf16.mxu0 0
      %1051 = vmatmul.mubr.bf16.gmra.mrb[0].mxu0 %v747
      %v1052 = vpop.f32.mrb[0].mxu0
      %v1053 = vadd.f32 %v363, %v1052
      %v1054 = vpop.f32.mrb[0].mxu0
      %v1055 = vpop.f32.mrb[0].mxu0
      %v1056 = vadd.f32 %v363, %v1055
      %v1057 = vpop.f32.mrb[0].mxu0
      %1058 = vmatprep.mubr.bf16.mxu0 0
      %1059 = vmatmul.mubr.bf16.gmra.mrb[0].mxu0 %v750
      %v1060 = vpop.f32.mrb[0].mxu0
      %v1061 = vadd.f32 %v363, %v1060
      %v1062 = vpop.f32.mrb[0].mxu0
      %v1063 = vpop.f32.mrb[0].mxu0
      %v1064 = vadd.f32 %v363, %v1063
      %v1065 = vpop.f32.mrb[0].mxu0
      %1066 = vmatprep.mubr.bf16.mxu0 0
      %1067 = vmatmul.mubr.bf16.gmra.mrb[0].mxu0 %v753
      %v1068 = vpop.f32.mrb[0].mxu0
      %v1069 = vadd.f32 %v363, %v1068
      %v1070 = vpop.f32.mrb[0].mxu0
      %v1071 = vpop.f32.mrb[0].mxu0
      %v1072 = vadd.f32 %v363, %v1071
      %v1073 = vpop.f32.mrb[0].mxu0
      %1074 = vmatprep.mubr.bf16.mxu0 0
      %1075 = vmatmul.mubr.bf16.gmra.mrb[0].mxu0 %v756
      %v1076 = vpop.f32.mrb[0].mxu0
      %v1077 = vadd.f32 %v363, %v1076
      %v1078 = vpop.f32.mrb[0].mxu0
      %v1079 = vpop.f32.mrb[0].mxu0
      %v1080 = vadd.f32 %v363, %v1079
      %v1081 = vpop.f32.mrb[0].mxu0
      %1082 = vmatprep.mubr.bf16.mxu0 0
      %1083 = vmatmul.mubr.bf16.gmra.mrb[0].mxu0 %v759
      %v1084 = vpop.f32.mrb[0].mxu0
      %v1085 = vadd.f32 %v363, %v1084
      %v1086 = vpop.f32.mrb[0].mxu0
      %v1087 = vpop.f32.mrb[0].mxu0
      %v1088 = vadd.f32 %v363, %v1087
      %v1089 = vpop.f32.mrb[0].mxu0
      %1090 = vmatprep.mubr.bf16.mxu0 0
      %1091 = vmatmul.mubr.bf16.gmra.mrb[0].mxu0 %v762
      %v1092 = vpop.f32.mrb[0].mxu0
      %v1093 = vadd.f32 %v363, %v1092
      %v1094 = vpop.f32.mrb[0].mxu0
      %v1095 = vpop.f32.mrb[0].mxu0
      %v1096 = vadd.f32 %v363, %v1095
      %v1097 = vpop.f32.mrb[0].mxu0
      %1098 = vmatprep.mubr.bf16.mxu0 0
      %1099 = vmatmul.mubr.bf16.gmra.mrb[0].mxu0 %v765
      %v1100 = vpop.f32.mrb[0].mxu0
      %v1101 = vadd.f32 %v363, %v1100
      %v1102 = vpop.f32.mrb[0].mxu0
      %v1103 = vpop.f32.mrb[0].mxu0
      %v1104 = vadd.f32 %v363, %v1103
      %v1105 = vpop.f32.mrb[0].mxu0
      %1106 = vmatprep.mubr.bf16.mxu0 0
      %1107 = vmatmul.mubr.bf16.gmra.mrb[0].mxu0 %v768
      %v1108 = vpop.f32.mrb[0].mxu0
      %v1109 = vadd.f32 %v363, %v1108
      %v1110 = vpop.f32.mrb[0].mxu0
      %v1111 = vpop.f32.mrb[0].mxu0
      %v1112 = vadd.f32 %v363, %v1111
      %v1113 = vpop.f32.mrb[0].mxu0
      %1114 = vmatprep.mubr.bf16.mxu0 0
      %1115 = vmatmul.mubr.bf16.gmra.mrb[0].mxu0 %v771
      %v1116 = vpop.f32.mrb[0].mxu0
      %v1117 = vadd.f32 %v363, %v1116
      %v1118 = vpop.f32.mrb[0].mxu0
      %v1119 = vpop.f32.mrb[0].mxu0
      %v1120 = vadd.f32 %v363, %v1119
      %v1121 = vpop.f32.mrb[0].mxu0
      %1122 = vmatprep.mubr.bf16.mxu0 0
      %1123 = vmatmul.mubr.bf16.gmra.mrb[0].mxu0 %v774
      %v1124 = vpop.f32.mrb[0].mxu0
      %v1125 = vadd.f32 %v363, %v1124
      %v1126 = vpop.f32.mrb[0].mxu0
      %v1127 = vpop.f32.mrb[0].mxu0
      %v1128 = vadd.f32 %v363, %v1127
      %v1129 = vpop.f32.mrb[0].mxu0
      %1130 = vmatprep.mubr.bf16.mxu0 0
      %1131 = vmatmul.mubr.bf16.gmra.mrb[0].mxu0 %v777
      %v1132 = vpop.f32.mrb[0].mxu0
      %v1133 = vadd.f32 %v363, %v1132
      %v1134 = vpop.f32.mrb[0].mxu0
      %v1135 = vpop.f32.mrb[0].mxu0
      %v1136 = vadd.f32 %v363, %v1135
      %v1137 = vpop.f32.mrb[0].mxu0
      %1138 = vmatprep.mubr.bf16.mxu0 0
      %1139 = vmatmul.mubr.bf16.gmra.mrb[0].mxu0 %v780
      %v1140 = vpop.f32.mrb[0].mxu0
      %v1141 = vadd.f32 %v363, %v1140
      %v1142 = vpop.f32.mrb[0].mxu0
      %v1143 = vpop.f32.mrb[0].mxu0
      %v1144 = vadd.f32 %v363, %v1143
      %v1145 = vpop.f32.mrb[0].mxu0
      %1146 = vmatprep.mubr.bf16.mxu0 0
      %1147 = vmatmul.mubr.bf16.gmra.mrb[0].mxu0 %v783
      %v1148 = vpop.f32.mrb[0].mxu0
      %v1149 = vadd.f32 %v363, %v1148
      %v1150 = vpop.f32.mrb[0].mxu0
      %v1151 = vpop.f32.mrb[0].mxu0
      %v1152 = vadd.f32 %v363, %v1151
      %v1153 = vpop.f32.mrb[0].mxu0
      %1154 = vmatprep.mubr.bf16.mxu0 0
      %1155 = vmatmul.mubr.bf16.gmra.mrb[0].mxu0 %v786
      %v1156 = vpop.f32.mrb[0].mxu0
      %v1157 = vadd.f32 %v363, %v1156
      %v1158 = vpop.f32.mrb[0].mxu0
      %v1159 = vpop.f32.mrb[0].mxu0
      %v1160 = vadd.f32 %v363, %v1159
      %v1161 = vpop.f32.mrb[0].mxu0
      %1162 = vmatprep.mubr.bf16.mxu0 0
      %1163 = vmatmul.mubr.bf16.gmra.mrb[0].mxu0 %v789
      %v1164 = vpop.f32.mrb[0].mxu0
      %v1165 = vadd.f32 %v363, %v1164
      %v1166 = vpop.f32.mrb[0].mxu0
      %v1167 = vpop.f32.mrb[0].mxu0
      %v1168 = vadd.f32 %v363, %v1167
      %v1169 = vpop.f32.mrb[0].mxu0
      %1170 = vmatprep.mubr.bf16.mxu0 0
      %1171 = vmatmul.mubr.bf16.gmra.mrb[0].mxu0 %v792
      %v1172 = vpop.f32.mrb[0].mxu0
      %v1173 = vadd.f32 %v363, %v1172
      %v1174 = vpop.f32.mrb[0].mxu0
      %v1175 = vpop.f32.mrb[0].mxu0
      %v1176 = vadd.f32 %v363, %v1175
      %v1177 = vpop.f32.mrb[0].mxu0
      %1178 = vmatprep.mubr.bf16.mxu0 0
      %1179 = vmatmul.mubr.bf16.gmra.mrb[0].mxu0 %v795
      %v1180 = vpop.f32.mrb[0].mxu0
      %v1181 = vadd.f32 %v363, %v1180
      %v1182 = vpop.f32.mrb[0].mxu0
      %v1183 = vpop.f32.mrb[0].mxu0
      %v1184 = vadd.f32 %v363, %v1183
      %v1185 = vpop.f32.mrb[0].mxu0
      %1186 = vmatprep.mubr.bf16.mxu0 0
      %1187 = vmatmul.mubr.bf16.gmra.mrb[0].mxu0 %v798
      %v1188 = vpop.f32.mrb[0].mxu0
      %v1189 = vadd.f32 %v363, %v1188
      %v1190 = vpop.f32.mrb[0].mxu0
      %v1191 = vpop.f32.mrb[0].mxu0
      %v1192 = vadd.f32 %v363, %v1191
      %v1193 = vpop.f32.mrb[0].mxu0
      %1194 = vmatprep.mubr.bf16.mxu0 0
      %1195 = vmatmul.mubr.bf16.gmra.mrb[0].mxu0 %v801
      %v1196 = vpop.f32.mrb[0].mxu0
      %v1197 = vadd.f32 %v363, %v1196
      %v1198 = vpop.f32.mrb[0].mxu0
      %v1199 = vpop.f32.mrb[0].mxu0
      %v1200 = vadd.f32 %v363, %v1199
      %v1201 = vpop.f32.mrb[0].mxu0
      %1202 = vmatprep.mubr.bf16.mxu0 0
      %1203 = vmatmul.mubr.bf16.gmra.mrb[0].mxu0 %v804
      %v1204 = vpop.f32.mrb[0].mxu0
      %v1205 = vadd.f32 %v363, %v1204
      %v1206 = vpop.f32.mrb[0].mxu0
      %v1207 = vpop.f32.mrb[0].mxu0
      %v1208 = vadd.f32 %v363, %v1207
      %v1209 = vpop.f32.mrb[0].mxu0
      %1210 = vmatprep.mubr.bf16.mxu0 0
      %1211 = vmatmul.mubr.bf16.gmra.mrb[0].mxu0 %v807
      %v1212 = vpop.f32.mrb[0].mxu0
      %v1213 = vadd.f32 %v363, %v1212
      %v1214 = vpop.f32.mrb[0].mxu0
      %v1215 = vpop.f32.mrb[0].mxu0
      %v1216 = vadd.f32 %v363, %v1215
      %v1217 = vpop.f32.mrb[0].mxu0
      %1218 = vmatprep.mubr.bf16.mxu0 0
      %1219 = vmatmul.mubr.bf16.gmra.mrb[0].mxu0 %v810
      %v1220 = vpop.f32.mrb[0].mxu0
      %v1221 = vadd.f32 %v363, %v1220
      %v1222 = vpop.f32.mrb[0].mxu0
      %v1223 = vpop.f32.mrb[0].mxu0
      %v1224 = vadd.f32 %v363, %v1223
      %v1225 = vpop.f32.mrb[0].mxu0
      %1226 = vmatprep.mubr.bf16.mxu0 0
      %1227 = vmatmul.mubr.bf16.gmra.mrb[0].mxu0 %v813
      %v1228 = vpop.f32.mrb[0].mxu0
      %v1229 = vadd.f32 %v363, %v1228
      %v1230 = vpop.f32.mrb[0].mxu0
      %v1231 = vpop.f32.mrb[0].mxu0
      %v1232 = vadd.f32 %v363, %v1231
      %v1233 = vpop.f32.mrb[0].mxu0
      %1234 = vmatprep.mubr.bf16.mxu0 0
      %1235 = vmatmul.mubr.bf16.gmra.mrb[0].mxu0 %v816
      %v1236 = vpop.f32.mrb[0].mxu0
      %v1237 = vadd.f32 %v363, %v1236
      %v1238 = vpop.f32.mrb[0].mxu0
      %v1239 = vpop.f32.mrb[0].mxu0
      %v1240 = vadd.f32 %v363, %v1239
      %v1241 = vpop.f32.mrb[0].mxu0
      %1242 = vmatprep.mubr.bf16.mxu0 0
      %1243 = vmatmul.mubr.bf16.gmra.mrb[0].mxu0 %v819
      %v1244 = vpop.f32.mrb[0].mxu0
      %v1245 = vadd.f32 %v363, %v1244
      %v1246 = vpop.f32.mrb[0].mxu0
      %v1247 = vpop.f32.mrb[0].mxu0
      %v1248 = vadd.f32 %v363, %v1247
      %v1249 = vpop.f32.mrb[0].mxu0
      %1250 = vmatprep.mubr.bf16.mxu0 0
      %1251 = vmatmul.mubr.bf16.gmra.mrb[0].mxu0 %v822
      %v1252 = vpop.f32.mrb[0].mxu0
      %v1253 = vadd.f32 %v363, %v1252
      %v1254 = vpop.f32.mrb[0].mxu0
      %v1255 = vpop.f32.mrb[0].mxu0
      %v1256 = vadd.f32 %v363, %v1255
      %v1257 = vpop.f32.mrb[0].mxu0
      %1258 = vmatprep.mubr.bf16.mxu0 0
      %1259 = vmatmul.mubr.bf16.gmra.mrb[0].mxu0 %v825
      %v1260 = vpop.f32.mrb[0].mxu0
      %v1261 = vadd.f32 %v363, %v1260
      %v1262 = vpop.f32.mrb[0].mxu0
      %v1263 = vpop.f32.mrb[0].mxu0
      %v1264 = vadd.f32 %v363, %v1263
      %v1265 = vpop.f32.mrb[0].mxu0
      %1266 = vmatprep.mubr.bf16.mxu0 0
      %1267 = vmatmul.mubr.bf16.gmra.mrb[0].mxu0 %v828
      %v1268 = vpop.f32.mrb[0].mxu0
      %v1269 = vadd.f32 %v363, %v1268
      %v1270 = vpop.f32.mrb[0].mxu0
      %v1271 = vpop.f32.mrb[0].mxu0
      %v1272 = vadd.f32 %v363, %v1271
      %v1273 = vpop.f32.mrb[0].mxu0
      %1274 = vmatprep.mubr.bf16.mxu0 0
      %1275 = vmatmul.mubr.bf16.gmra.mrb[0].mxu0 %v831
      %v1276 = vpop.f32.mrb[0].mxu0
      %v1277 = vadd.f32 %v363, %v1276
      %v1278 = vpop.f32.mrb[0].mxu0
      %v1279 = vpop.f32.mrb[0].mxu0
      %v1280 = vadd.f32 %v363, %v1279
      %v1281 = vpop.f32.mrb[0].mxu0
      %1282 = vmatprep.mubr.bf16.mxu0 0
      %1283 = vmatmul.mubr.bf16.gmra.mrb[0].mxu0 %v834
      %v1284 = vpop.f32.mrb[0].mxu0
      %v1285 = vadd.f32 %v363, %v1284
      %v1286 = vpop.f32.mrb[0].mxu0
      %v1287 = vpop.f32.mrb[0].mxu0
      %v1288 = vadd.f32 %v363, %v1287
      %v1289 = vpop.f32.mrb[0].mxu0
      %1290 = vmatprep.mubr.bf16.mxu0 0
      %1291 = vmatmul.mubr.bf16.gmra.mrb[0].mxu0 %v837
      %v1292 = vpop.f32.mrb[0].mxu0
      %v1293 = vadd.f32 %v363, %v1292
      %v1294 = vpop.f32.mrb[0].mxu0
      %v1295 = vpop.f32.mrb[0].mxu0
      %v1296 = vadd.f32 %v363, %v1295
      %v1297 = vpop.f32.mrb[0].mxu0
      %1298 = vmatprep.mubr.bf16.mxu0 0
      %1299 = vmatmul.mubr.bf16.gmra.mrb[0].mxu0 %v840
      %v1300 = vpop.f32.mrb[0].mxu0
      %v1301 = vadd.f32 %v363, %v1300
      %v1302 = vpop.f32.mrb[0].mxu0
      %v1303 = vpop.f32.mrb[0].mxu0
      %v1304 = vadd.f32 %v363, %v1303
      %v1305 = vpop.f32.mrb[0].mxu0
      %1306 = vmatprep.mubr.bf16.mxu0 0
      %1307 = vmatmul.mubr.bf16.gmra.mrb[0].mxu0 %v843
      %v1308 = vpop.f32.mrb[0].mxu0
      %v1309 = vadd.f32 %v363, %v1308
      %v1310 = vpop.f32.mrb[0].mxu0
      %v1311 = vpop.f32.mrb[0].mxu0
      %v1312 = vadd.f32 %v363, %v1311
      %v1313 = vpop.f32.mrb[0].mxu0
      %1314 = vmatprep.mubr.bf16.mxu0 0
      %1315 = vmatmul.mubr.bf16.gmra.mrb[0].mxu0 %v846
      %v1316 = vpop.f32.mrb[0].mxu0
      %v1317 = vadd.f32 %v363, %v1316
      %v1318 = vpop.f32.mrb[0].mxu0
      %v1319 = vpop.f32.mrb[0].mxu0
      %v1320 = vadd.f32 %v363, %v1319
      %v1321 = vpop.f32.mrb[0].mxu0
      %1322 = vmatprep.mubr.bf16.mxu0 0
      %1323 = vmatmul.mubr.bf16.gmra.mrb[0].mxu0 %v849
      %v1324 = vpop.f32.mrb[0].mxu0
      %v1325 = vadd.f32 %v363, %v1324
      %v1326 = vpop.f32.mrb[0].mxu0
      %v1327 = vpop.f32.mrb[0].mxu0
      %v1328 = vadd.f32 %v363, %v1327
      %v1329 = vpop.f32.mrb[0].mxu0
      %1330 = vmatprep.mubr.bf16.mxu0 0
      %1331 = vmatmul.mubr.bf16.gmra.mrb[0].mxu0 %v852
      %v1332 = vpop.f32.mrb[0].mxu0
      %v1333 = vadd.f32 %v363, %v1332
      %v1334 = vpop.f32.mrb[0].mxu0
      %v1335 = vpop.f32.mrb[0].mxu0
      %v1336 = vadd.f32 %v363, %v1335
      %v1337 = vpop.f32.mrb[0].mxu0
      %1338 = vmatprep.mubr.bf16.mxu0 0
      %1339 = vmatmul.mubr.bf16.gmra.mrb[0].mxu0 %v855
      %v1340 = vpop.f32.mrb[0].mxu0
      %v1341 = vadd.f32 %v363, %v1340
      %v1342 = vpop.f32.mrb[0].mxu0
      %v1343 = vpop.f32.mrb[0].mxu0
      %v1344 = vadd.f32 %v363, %v1343
      %v1345 = vpop.f32.mrb[0].mxu0
      %1346 = vmatprep.mubr.bf16.mxu0 0
      %1347 = vmatmul.mubr.bf16.gmra.mrb[0].mxu0 %v858
      %v1348 = vpop.f32.mrb[0].mxu0
      %v1349 = vadd.f32 %v363, %v1348
      %v1350 = vpop.f32.mrb[0].mxu0
      %v1351 = vpop.f32.mrb[0].mxu0
      %v1352 = vadd.f32 %v363, %v1351
      %v1353 = vpop.f32.mrb[0].mxu0
      %1354 = vmatprep.mubr.bf16.mxu0 0
      %1355 = vmatmul.mubr.bf16.gmra.mrb[0].mxu0 %v861
      %v1356 = vpop.f32.mrb[0].mxu0
      %v1357 = vadd.f32 %v363, %v1356
      %v1358 = vpop.f32.mrb[0].mxu0
      %v1359 = vpop.f32.mrb[0].mxu0
      %v1360 = vadd.f32 %v363, %v1359
      %v1361 = vpop.f32.mrb[0].mxu0
      %1362 = vmatprep.mubr.bf16.mxu0 0
      %1363 = vmatmul.mubr.bf16.gmra.mrb[0].mxu0 %v864
      %v1364 = vpop.f32.mrb[0].mxu0
      %v1365 = vadd.f32 %v363, %v1364
      %v1366 = vpop.f32.mrb[0].mxu0
      %v1367 = vpop.f32.mrb[0].mxu0
      %v1368 = vadd.f32 %v363, %v1367
      %v1369 = vpop.f32.mrb[0].mxu0
      %1370 = vmatprep.mubr.bf16.mxu0 0
      %1371 = vmatmul.mubr.bf16.gmra.mrb[0].mxu0 %v867
      %v1372 = vpop.f32.mrb[0].mxu0
      %v1373 = vadd.f32 %v363, %v1372
      %v1374 = vpop.f32.mrb[0].mxu0
      %v1375 = vpop.f32.mrb[0].mxu0
      %v1376 = vadd.f32 %v363, %v1375
      %v1377 = vpop.f32.mrb[0].mxu0
      %1378 = vmatprep.mubr.bf16.mxu0 0
      %1379 = vmatmul.mubr.bf16.gmra.mrb[0].mxu0 %v870
      %v1380 = vpop.f32.mrb[0].mxu0
      %v1381 = vadd.f32 %v363, %v1380
      %v1382 = vpop.f32.mrb[0].mxu0
      %v1383 = vpop.f32.mrb[0].mxu0
      %v1384 = vadd.f32 %v363, %v1383
      %v1385 = vpop.f32.mrb[0].mxu0
      %1386 = vmatprep.mubr.bf16.mxu0 0
      %1387 = vmatmul.mubr.bf16.gmra.mrb[0].mxu0 %v873
      %v1388 = vpop.f32.mrb[0].mxu0
      %v1389 = vadd.f32 %v363, %v1388
      %v1390 = vpop.f32.mrb[0].mxu0
      %v1391 = vpop.f32.mrb[0].mxu0
      %v1392 = vadd.f32 %v363, %v1391
      %v1393 = vpop.f32.mrb[0].mxu0
      %1394 = vmatprep.mubr.bf16.mxu0 0
      %1395 = vmatmul.mubr.bf16.gmra.mrb[0].mxu0 %v876
      %v1396 = vpop.f32.mrb[0].mxu0
      %v1397 = vadd.f32 %v363, %v1396
      %v1398 = vpop.f32.mrb[0].mxu0
      %v1399 = vpop.f32.mrb[0].mxu0
      %v1400 = vadd.f32 %v363, %v1399
      %v1401 = vpop.f32.mrb[0].mxu0
      %1402 = vmatprep.mubr.bf16.mxu0 0
      %1403 = vmatmul.mubr.bf16.gmra.mrb[0].mxu0 %v879
      %v1404 = vpop.f32.mrb[0].mxu0
      %v1405 = vadd.f32 %v363, %v1404
      %v1406 = vpop.f32.mrb[0].mxu0
      %v1407 = vpop.f32.mrb[0].mxu0
      %v1408 = vadd.f32 %v363, %v1407
      %v1409 = vpop.f32.mrb[0].mxu0
      %1410 = vmatprep.mubr.bf16.mxu0 0
      %1411 = vmatmul.mubr.bf16.gmra.mrb[0].mxu0 %v882
      %v1412 = vpop.f32.mrb[0].mxu0
      %v1413 = vadd.f32 %v363, %v1412
      %v1414 = vpop.f32.mrb[0].mxu0
      %v1415 = vpop.f32.mrb[0].mxu0
      %v1416 = vadd.f32 %v363, %v1415
      %v1417 = vpop.f32.mrb[0].mxu0
      %1418 = vmatprep.mubr.bf16.mxu0 0
      %1419 = vmatmul.mubr.bf16.gmra.mrb[0].mxu0 %v885
      %v1420 = vpop.f32.mrb[0].mxu0
      %v1421 = vadd.f32 %v363, %v1420
      %v1422 = vpop.f32.mrb[0].mxu0
      %v1423 = vpop.f32.mrb[0].mxu0
      %v1424 = vadd.f32 %v363, %v1423
      %v1425 = vpop.f32.mrb[0].mxu0
      %1426 = vmatprep.mubr.bf16.mxu0 0
      %1427 = vmatmul.mubr.bf16.gmra.mrb[0].mxu0 %v888
      %v1428 = vpop.f32.mrb[0].mxu0
      %v1429 = vadd.f32 %v363, %v1428
      %v1430 = vpop.f32.mrb[0].mxu0
      %v1431 = vpop.f32.mrb[0].mxu0
      %v1432 = vadd.f32 %v363, %v1431
      %v1433 = vpop.f32.mrb[0].mxu0
      %1434 = vdwg.mxu0
      %v1435 = vpack.c.bf16 %v928, %v925
      %v1436 = vpack.c.bf16 %v936, %v933
      %v1437 = vpack.c.bf16 %v944, %v941
      %v1438 = vpack.c.bf16 %v952, %v949
      %v1439 = vpack.c.bf16 %v960, %v957
      %v1440 = vpack.c.bf16 %v968, %v965
      %v1441 = vpack.c.bf16 %v976, %v973
      %v1442 = vpack.c.bf16 %v984, %v981
      %v1443 = vpack.c.bf16 %v992, %v989
      %v1444 = vpack.c.bf16 %v1000, %v997
      %v1445 = vpack.c.bf16 %v1008, %v1005
      %v1446 = vpack.c.bf16 %v1016, %v1013
      %v1447 = vpack.c.bf16 %v1024, %v1021
      %v1448 = vpack.c.bf16 %v1032, %v1029
      %v1449 = vpack.c.bf16 %v1040, %v1037
      %v1450 = vpack.c.bf16 %v1048, %v1045
      %v1451 = vpack.c.bf16 %v1056, %v1053
      %v1452 = vpack.c.bf16 %v1064, %v1061
      %v1453 = vpack.c.bf16 %v1072, %v1069
      %v1454 = vpack.c.bf16 %v1080, %v1077
      %v1455 = vpack.c.bf16 %v1088, %v1085
      %v1456 = vpack.c.bf16 %v1096, %v1093
      %v1457 = vpack.c.bf16 %v1104, %v1101
      %v1458 = vpack.c.bf16 %v1112, %v1109
      %v1459 = vpack.c.bf16 %v1120, %v1117
      %v1460 = vpack.c.bf16 %v1128, %v1125
      %v1461 = vpack.c.bf16 %v1136, %v1133
      %v1462 = vpack.c.bf16 %v1144, %v1141
      %v1463 = vpack.c.bf16 %v1152, %v1149
      %v1464 = vpack.c.bf16 %v1160, %v1157
      %v1465 = vpack.c.bf16 %v1168, %v1165
      %v1466 = vpack.c.bf16 %v1176, %v1173
      %v1467 = vpack.c.bf16 %v1184, %v1181
      %v1468 = vpack.c.bf16 %v1192, %v1189
      %v1469 = vpack.c.bf16 %v1200, %v1197
      %v1470 = vpack.c.bf16 %v1208, %v1205
      %v1471 = vpack.c.bf16 %v1216, %v1213
      %v1472 = vpack.c.bf16 %v1224, %v1221
      %v1473 = vpack.c.bf16 %v1232, %v1229
      %v1474 = vpack.c.bf16 %v1240, %v1237
      %v1475 = vpack.c.bf16 %v1248, %v1245
      %v1476 = vpack.c.bf16 %v1256, %v1253
      %v1477 = vpack.c.bf16 %v1264, %v1261
      %v1478 = vpack.c.bf16 %v1272, %v1269
      %v1479 = vpack.c.bf16 %v1280, %v1277
      %v1480 = vpack.c.bf16 %v1288, %v1285
      %v1481 = vpack.c.bf16 %v1296, %v1293
      %v1482 = vpack.c.bf16 %v1304, %v1301
      %v1483 = vpack.c.bf16 %v1312, %v1309
      %v1484 = vpack.c.bf16 %v1320, %v1317
      %v1485 = vpack.c.bf16 %v1328, %v1325
      %v1486 = vpack.c.bf16 %v1336, %v1333
      %v1487 = vpack.c.bf16 %v1344, %v1341
      %v1488 = vpack.c.bf16 %v1352, %v1349
      %v1489 = vpack.c.bf16 %v1360, %v1357
      %v1490 = vpack.c.bf16 %v1368, %v1365
      %v1491 = vpack.c.bf16 %v1376, %v1373
      %v1492 = vpack.c.bf16 %v1384, %v1381
      %v1493 = vpack.c.bf16 %v1392, %v1389
      %v1494 = vpack.c.bf16 %v1400, %v1397
      %v1495 = vpack.c.bf16 %v1408, %v1405
      %v1496 = vpack.c.bf16 %v1416, %v1413
      %v1497 = vpack.c.bf16 %v1424, %v1421
      %v1498 = vpack.c.bf16 %v1432, %v1429
      %v1563 = vunpack.c.l.b16 %v1435
      %v1564 = vunpack.c.h.b16 %v1435
      %v1565 = vunpack.c.l.b16 %v1436
      %v1566 = vunpack.c.h.b16 %v1436
      %v1567 = vunpack.c.l.b16 %v1437
      %v1568 = vunpack.c.h.b16 %v1437
      %v1569 = vunpack.c.l.b16 %v1438
      %v1570 = vunpack.c.h.b16 %v1438
      %v1571 = vunpack.c.l.b16 %v1439
      %v1572 = vunpack.c.h.b16 %v1439
      %v1573 = vunpack.c.l.b16 %v1440
      %v1574 = vunpack.c.h.b16 %v1440
      %v1575 = vunpack.c.l.b16 %v1441
      %v1576 = vunpack.c.h.b16 %v1441
      %v1577 = vunpack.c.l.b16 %v1442
      %v1578 = vunpack.c.h.b16 %v1442
      %v1579 = vunpack.c.l.b16 %v1443
      %v1580 = vunpack.c.h.b16 %v1443
      %v1581 = vunpack.c.l.b16 %v1444
      %v1582 = vunpack.c.h.b16 %v1444
      %v1583 = vunpack.c.l.b16 %v1445
      %v1584 = vunpack.c.h.b16 %v1445
      %v1585 = vunpack.c.l.b16 %v1446
      %v1586 = vunpack.c.h.b16 %v1446
      %v1587 = vunpack.c.l.b16 %v1447
      %v1588 = vunpack.c.h.b16 %v1447
      %v1589 = vunpack.c.l.b16 %v1448
      %v1590 = vunpack.c.h.b16 %v1448
      %v1591 = vunpack.c.l.b16 %v1449
      %v1592 = vunpack.c.h.b16 %v1449
      %v1593 = vunpack.c.l.b16 %v1450
      %v1594 = vunpack.c.h.b16 %v1450
      %v1595 = vunpack.c.l.b16 %v1451
      %v1596 = vunpack.c.h.b16 %v1451
      %v1597 = vunpack.c.l.b16 %v1452
      %v1598 = vunpack.c.h.b16 %v1452
      %v1599 = vunpack.c.l.b16 %v1453
      %v1600 = vunpack.c.h.b16 %v1453
      %v1601 = vunpack.c.l.b16 %v1454
      %v1602 = vunpack.c.h.b16 %v1454
      %v1603 = vunpack.c.l.b16 %v1455
      %v1604 = vunpack.c.h.b16 %v1455
      %v1605 = vunpack.c.l.b16 %v1456
      %v1606 = vunpack.c.h.b16 %v1456
      %v1607 = vunpack.c.l.b16 %v1457
      %v1608 = vunpack.c.h.b16 %v1457
      %v1609 = vunpack.c.l.b16 %v1458
      %v1610 = vunpack.c.h.b16 %v1458
      %v1611 = vunpack.c.l.b16 %v1459
      %v1612 = vunpack.c.h.b16 %v1459
      %v1613 = vunpack.c.l.b16 %v1460
      %v1614 = vunpack.c.h.b16 %v1460
      %v1615 = vunpack.c.l.b16 %v1461
      %v1616 = vunpack.c.h.b16 %v1461
      %v1617 = vunpack.c.l.b16 %v1462
      %v1618 = vunpack.c.h.b16 %v1462
      %v1619 = vunpack.c.l.b16 %v1463
      %v1620 = vunpack.c.h.b16 %v1463
      %v1621 = vunpack.c.l.b16 %v1464
      %v1622 = vunpack.c.h.b16 %v1464
      %v1623 = vunpack.c.l.b16 %v1465
      %v1624 = vunpack.c.h.b16 %v1465
      %v1625 = vunpack.c.l.b16 %v1466
      %v1626 = vunpack.c.h.b16 %v1466
      %v1627 = vunpack.c.l.b16 %v1467
      %v1628 = vunpack.c.h.b16 %v1467
      %v1629 = vunpack.c.l.b16 %v1468
      %v1630 = vunpack.c.h.b16 %v1468
      %v1631 = vunpack.c.l.b16 %v1469
      %v1632 = vunpack.c.h.b16 %v1469
      %v1633 = vunpack.c.l.b16 %v1470
      %v1634 = vunpack.c.h.b16 %v1470
      %v1635 = vunpack.c.l.b16 %v1471
      %v1636 = vunpack.c.h.b16 %v1471
      %v1637 = vunpack.c.l.b16 %v1472
      %v1638 = vunpack.c.h.b16 %v1472
      %v1639 = vunpack.c.l.b16 %v1473
      %v1640 = vunpack.c.h.b16 %v1473
      %v1641 = vunpack.c.l.b16 %v1474
      %v1642 = vunpack.c.h.b16 %v1474
      %v1643 = vunpack.c.l.b16 %v1475
      %v1644 = vunpack.c.h.b16 %v1475
      %v1645 = vunpack.c.l.b16 %v1476
      %v1646 = vunpack.c.h.b16 %v1476
      %v1647 = vunpack.c.l.b16 %v1477
      %v1648 = vunpack.c.h.b16 %v1477
      %v1649 = vunpack.c.l.b16 %v1478
      %v1650 = vunpack.c.h.b16 %v1478
      %v1651 = vunpack.c.l.b16 %v1479
      %v1652 = vunpack.c.h.b16 %v1479
      %v1653 = vunpack.c.l.b16 %v1480
      %v1654 = vunpack.c.h.b16 %v1480
      %v1655 = vunpack.c.l.b16 %v1481
      %v1656 = vunpack.c.h.b16 %v1481
      %v1657 = vunpack.c.l.b16 %v1482
      %v1658 = vunpack.c.h.b16 %v1482
      %v1659 = vunpack.c.l.b16 %v1483
      %v1660 = vunpack.c.h.b16 %v1483
      %v1661 = vunpack.c.l.b16 %v1484
      %v1662 = vunpack.c.h.b16 %v1484
      %v1663 = vunpack.c.l.b16 %v1485
      %v1664 = vunpack.c.h.b16 %v1485
      %v1665 = vunpack.c.l.b16 %v1486
      %v1666 = vunpack.c.h.b16 %v1486
      %v1667 = vunpack.c.l.b16 %v1487
      %v1668 = vunpack.c.h.b16 %v1487
      %v1669 = vunpack.c.l.b16 %v1488
      %v1670 = vunpack.c.h.b16 %v1488
      %v1671 = vunpack.c.l.b16 %v1489
      %v1672 = vunpack.c.h.b16 %v1489
      %v1673 = vunpack.c.l.b16 %v1490
      %v1674 = vunpack.c.h.b16 %v1490
      %v1675 = vunpack.c.l.b16 %v1491
      %v1676 = vunpack.c.h.b16 %v1491
      %v1677 = vunpack.c.l.b16 %v1492
      %v1678 = vunpack.c.h.b16 %v1492
      %v1679 = vunpack.c.l.b16 %v1493
      %v1680 = vunpack.c.h.b16 %v1493
      %v1681 = vunpack.c.l.b16 %v1494
      %v1682 = vunpack.c.h.b16 %v1494
      %v1683 = vunpack.c.l.b16 %v1495
      %v1684 = vunpack.c.h.b16 %v1495
      %v1685 = vunpack.c.l.b16 %v1496
      %v1686 = vunpack.c.h.b16 %v1496
      %v1687 = vunpack.c.l.b16 %v1497
      %v1688 = vunpack.c.h.b16 %v1497
      %v1689 = vunpack.c.l.b16 %v1498
      %v1690 = vunpack.c.h.b16 %v1498
      %v1691 = vpack.c.b16 %v1563, %v1563
      %v1692 = vpack.c.b16 %v1564, %v1564
      %v1693 = vpack.c.b16 %v1565, %v1565
      %v1694 = vpack.c.b16 %v1566, %v1566
      %v1695 = vpack.c.b16 %v1567, %v1567
      %v1696 = vpack.c.b16 %v1568, %v1568
      %v1697 = vpack.c.b16 %v1569, %v1569
      %v1698 = vpack.c.b16 %v1570, %v1570
      %v1699 = vpack.c.b16 %v1571, %v1571
      %v1700 = vpack.c.b16 %v1572, %v1572
      %v1701 = vpack.c.b16 %v1573, %v1573
      %v1702 = vpack.c.b16 %v1574, %v1574
      %v1703 = vpack.c.b16 %v1575, %v1575
      %v1704 = vpack.c.b16 %v1576, %v1576
      %v1705 = vpack.c.b16 %v1577, %v1577
      %v1706 = vpack.c.b16 %v1578, %v1578
      %v1707 = vpack.c.b16 %v1579, %v1579
      %v1708 = vpack.c.b16 %v1580, %v1580
      %v1709 = vpack.c.b16 %v1581, %v1581
      %v1710 = vpack.c.b16 %v1582, %v1582
      %v1711 = vpack.c.b16 %v1583, %v1583
      %v1712 = vpack.c.b16 %v1584, %v1584
      %v1713 = vpack.c.b16 %v1585, %v1585
      %v1714 = vpack.c.b16 %v1586, %v1586
      %v1715 = vpack.c.b16 %v1587, %v1587
      %v1716 = vpack.c.b16 %v1588, %v1588
      %v1717 = vpack.c.b16 %v1589, %v1589
      %v1718 = vpack.c.b16 %v1590, %v1590
      %v1719 = vpack.c.b16 %v1591, %v1591
      %v1720 = vpack.c.b16 %v1592, %v1592
      %v1721 = vpack.c.b16 %v1593, %v1593
      %v1722 = vpack.c.b16 %v1594, %v1594
      %v1723 = vpack.c.b16 %v1595, %v1595
      %v1724 = vpack.c.b16 %v1596, %v1596
      %v1725 = vpack.c.b16 %v1597, %v1597
      %v1726 = vpack.c.b16 %v1598, %v1598
      %v1727 = vpack.c.b16 %v1599, %v1599
      %v1728 = vpack.c.b16 %v1600, %v1600
      %v1729 = vpack.c.b16 %v1601, %v1601
      %v1730 = vpack.c.b16 %v1602, %v1602
      %v1731 = vpack.c.b16 %v1603, %v1603
      %v1732 = vpack.c.b16 %v1604, %v1604
      %v1733 = vpack.c.b16 %v1605, %v1605
      %v1734 = vpack.c.b16 %v1606, %v1606
      %v1735 = vpack.c.b16 %v1607, %v1607
      %v1736 = vpack.c.b16 %v1608, %v1608
      %v1737 = vpack.c.b16 %v1609, %v1609
      %v1738 = vpack.c.b16 %v1610, %v1610
      %v1739 = vpack.c.b16 %v1611, %v1611
      %v1740 = vpack.c.b16 %v1612, %v1612
      %v1741 = vpack.c.b16 %v1613, %v1613
      %v1742 = vpack.c.b16 %v1614, %v1614
      %v1743 = vpack.c.b16 %v1615, %v1615
      %v1744 = vpack.c.b16 %v1616, %v1616
      %v1745 = vpack.c.b16 %v1617, %v1617
      %v1746 = vpack.c.b16 %v1618, %v1618
      %v1747 = vpack.c.b16 %v1619, %v1619
      %v1748 = vpack.c.b16 %v1620, %v1620
      %v1749 = vpack.c.b16 %v1621, %v1621
      %v1750 = vpack.c.b16 %v1622, %v1622
      %v1751 = vpack.c.b16 %v1623, %v1623
      %v1752 = vpack.c.b16 %v1624, %v1624
      %v1753 = vpack.c.b16 %v1625, %v1625
      %v1754 = vpack.c.b16 %v1626, %v1626
      %v1755 = vpack.c.b16 %v1627, %v1627
      %v1756 = vpack.c.b16 %v1628, %v1628
      %v1757 = vpack.c.b16 %v1629, %v1629
      %v1758 = vpack.c.b16 %v1630, %v1630
      %v1759 = vpack.c.b16 %v1631, %v1631
      %v1760 = vpack.c.b16 %v1632, %v1632
      %v1761 = vpack.c.b16 %v1633, %v1633
      %v1762 = vpack.c.b16 %v1634, %v1634
      %v1763 = vpack.c.b16 %v1635, %v1635
      %v1764 = vpack.c.b16 %v1636, %v1636
      %v1765 = vpack.c.b16 %v1637, %v1637
      %v1766 = vpack.c.b16 %v1638, %v1638
      %v1767 = vpack.c.b16 %v1639, %v1639
      %v1768 = vpack.c.b16 %v1640, %v1640
      %v1769 = vpack.c.b16 %v1641, %v1641
      %v1770 = vpack.c.b16 %v1642, %v1642
      %v1771 = vpack.c.b16 %v1643, %v1643
      %v1772 = vpack.c.b16 %v1644, %v1644
      %v1773 = vpack.c.b16 %v1645, %v1645
      %v1774 = vpack.c.b16 %v1646, %v1646
      %v1775 = vpack.c.b16 %v1647, %v1647
      %v1776 = vpack.c.b16 %v1648, %v1648
      %v1777 = vpack.c.b16 %v1649, %v1649
      %v1778 = vpack.c.b16 %v1650, %v1650
      %v1779 = vpack.c.b16 %v1651, %v1651
      %v1780 = vpack.c.b16 %v1652, %v1652
      %v1781 = vpack.c.b16 %v1653, %v1653
      %v1782 = vpack.c.b16 %v1654, %v1654
      %v1783 = vpack.c.b16 %v1655, %v1655
      %v1784 = vpack.c.b16 %v1656, %v1656
      %v1785 = vpack.c.b16 %v1657, %v1657
      %v1786 = vpack.c.b16 %v1658, %v1658
      %v1787 = vpack.c.b16 %v1659, %v1659
      %v1788 = vpack.c.b16 %v1660, %v1660
      %v1789 = vpack.c.b16 %v1661, %v1661
      %v1790 = vpack.c.b16 %v1662, %v1662
      %v1791 = vpack.c.b16 %v1663, %v1663
      %v1792 = vpack.c.b16 %v1664, %v1664
      %v1793 = vpack.c.b16 %v1665, %v1665
      %v1794 = vpack.c.b16 %v1666, %v1666
      %v1795 = vpack.c.b16 %v1667, %v1667
      %v1796 = vpack.c.b16 %v1668, %v1668
      %v1797 = vpack.c.b16 %v1669, %v1669
      %v1798 = vpack.c.b16 %v1670, %v1670
      %v1799 = vpack.c.b16 %v1671, %v1671
      %v1800 = vpack.c.b16 %v1672, %v1672
      %v1801 = vpack.c.b16 %v1673, %v1673
      %v1802 = vpack.c.b16 %v1674, %v1674
      %v1803 = vpack.c.b16 %v1675, %v1675
      %v1804 = vpack.c.b16 %v1676, %v1676
      %v1805 = vpack.c.b16 %v1677, %v1677
      %v1806 = vpack.c.b16 %v1678, %v1678
      %v1807 = vpack.c.b16 %v1679, %v1679
      %v1808 = vpack.c.b16 %v1680, %v1680
      %v1809 = vpack.c.b16 %v1681, %v1681
      %v1810 = vpack.c.b16 %v1682, %v1682
      %v1811 = vpack.c.b16 %v1683, %v1683
      %v1812 = vpack.c.b16 %v1684, %v1684
      %v1813 = vpack.c.b16 %v1685, %v1685
      %v1814 = vpack.c.b16 %v1686, %v1686
      %v1815 = vpack.c.b16 %v1687, %v1687
      %v1816 = vpack.c.b16 %v1688, %v1688
      %v1817 = vpack.c.b16 %v1689, %v1689
      %v1818 = vpack.c.b16 %v1690, %v1690
      %vm1947 = vcmask 125952
      %1948 = vst.msk [vmem:[%s223] sm:$0xf] %vm1947, %v1691
      %1949 = vst.msk [vmem:[%s223 + $0x4] sm:$0xf] %vm1947, %v1692
      %1950 = vst.msk [vmem:[%s223 + $0x8] sm:$0xf] %vm1947, %v1693
      %1951 = vst.msk [vmem:[%s223 + $0xc] sm:$0xf] %vm1947, %v1694
      %1952 = vst.msk [vmem:[%s223 + $0x10] sm:$0xf] %vm1947, %v1695
      %1953 = vst.msk [vmem:[%s223 + $0x14] sm:$0xf] %vm1947, %v1696
      %1954 = vst.msk [vmem:[%s223 + $0x18] sm:$0xf] %vm1947, %v1697
      %1955 = vst.msk [vmem:[%s223 + $0x1c] sm:$0xf] %vm1947, %v1698
      %1956 = vst.msk [vmem:[%s223 + $0x20] sm:$0xf] %vm1947, %v1699
      %1957 = vst.msk [vmem:[%s223 + $0x24] sm:$0xf] %vm1947, %v1700
      %1958 = vst.msk [vmem:[%s223 + $0x28] sm:$0xf] %vm1947, %v1701
      %1959 = vst.msk [vmem:[%s223 + $0x2c] sm:$0xf] %vm1947, %v1702
      %1960 = vst.msk [vmem:[%s223 + $0x30] sm:$0xf] %vm1947, %v1703
      %1961 = vst.msk [vmem:[%s223 + $0x34] sm:$0xf] %vm1947, %v1704
      %1962 = vst.msk [vmem:[%s223 + $0x38] sm:$0xf] %vm1947, %v1705
      %1963 = vst.msk [vmem:[%s223 + $0x3c] sm:$0xf] %vm1947, %v1706
      %1964 = vst.msk [vmem:[%s223 + $0x40] sm:$0xf] %vm1947, %v1707
      %1965 = vst.msk [vmem:[%s223 + $0x44] sm:$0xf] %vm1947, %v1708
      %1966 = vst.msk [vmem:[%s223 + $0x48] sm:$0xf] %vm1947, %v1709
      %1967 = vst.msk [vmem:[%s223 + $0x4c] sm:$0xf] %vm1947, %v1710
      %1968 = vst.msk [vmem:[%s223 + $0x50] sm:$0xf] %vm1947, %v1711
      %1969 = vst.msk [vmem:[%s223 + $0x54] sm:$0xf] %vm1947, %v1712
      %1970 = vst.msk [vmem:[%s223 + $0x58] sm:$0xf] %vm1947, %v1713
      %1971 = vst.msk [vmem:[%s223 + $0x5c] sm:$0xf] %vm1947, %v1714
      %1972 = vst.msk [vmem:[%s223 + $0x60] sm:$0xf] %vm1947, %v1715
      %1973 = vst.msk [vmem:[%s223 + $0x64] sm:$0xf] %vm1947, %v1716
      %1974 = vst.msk [vmem:[%s223 + $0x68] sm:$0xf] %vm1947, %v1717
      %1975 = vst.msk [vmem:[%s223 + $0x6c] sm:$0xf] %vm1947, %v1718
      %1976 = vst.msk [vmem:[%s223 + $0x70] sm:$0xf] %vm1947, %v1719
      %1977 = vst.msk [vmem:[%s223 + $0x74] sm:$0xf] %vm1947, %v1720
      %1978 = vst.msk [vmem:[%s223 + $0x78] sm:$0xf] %vm1947, %v1721
      %1979 = vst.msk [vmem:[%s223 + $0x7c] sm:$0xf] %vm1947, %v1722
      %1980 = vst.msk [vmem:[%s223 + $0x80] sm:$0xf] %vm1947, %v1723
      %1981 = vst.msk [vmem:[%s223 + $0x84] sm:$0xf] %vm1947, %v1724
      %1982 = vst.msk [vmem:[%s223 + $0x88] sm:$0xf] %vm1947, %v1725
      %1983 = vst.msk [vmem:[%s223 + $0x8c] sm:$0xf] %vm1947, %v1726
      %1984 = vst.msk [vmem:[%s223 + $0x90] sm:$0xf] %vm1947, %v1727
      %1985 = vst.msk [vmem:[%s223 + $0x94] sm:$0xf] %vm1947, %v1728
      %1986 = vst.msk [vmem:[%s223 + $0x98] sm:$0xf] %vm1947, %v1729
      %1987 = vst.msk [vmem:[%s223 + $0x9c] sm:$0xf] %vm1947, %v1730
      %1988 = vst.msk [vmem:[%s223 + $0xa0] sm:$0xf] %vm1947, %v1731
      %1989 = vst.msk [vmem:[%s223 + $0xa4] sm:$0xf] %vm1947, %v1732
      %1990 = vst.msk [vmem:[%s223 + $0xa8] sm:$0xf] %vm1947, %v1733
      %1991 = vst.msk [vmem:[%s223 + $0xac] sm:$0xf] %vm1947, %v1734
      %1992 = vst.msk [vmem:[%s223 + $0xb0] sm:$0xf] %vm1947, %v1735
      %1993 = vst.msk [vmem:[%s223 + $0xb4] sm:$0xf] %vm1947, %v1736
      %1994 = vst.msk [vmem:[%s223 + $0xb8] sm:$0xf] %vm1947, %v1737
      %1995 = vst.msk [vmem:[%s223 + $0xbc] sm:$0xf] %vm1947, %v1738
      %1996 = vst.msk [vmem:[%s223 + $0xc0] sm:$0xf] %vm1947, %v1739
      %1997 = vst.msk [vmem:[%s223 + $0xc4] sm:$0xf] %vm1947, %v1740
      %1998 = vst.msk [vmem:[%s223 + $0xc8] sm:$0xf] %vm1947, %v1741
      %1999 = vst.msk [vmem:[%s223 + $0xcc] sm:$0xf] %vm1947, %v1742
      %2000 = vst.msk [vmem:[%s223 + $0xd0] sm:$0xf] %vm1947, %v1743
      %2001 = vst.msk [vmem:[%s223 + $0xd4] sm:$0xf] %vm1947, %v1744
      %2002 = vst.msk [vmem:[%s223 + $0xd8] sm:$0xf] %vm1947, %v1745
      %2003 = vst.msk [vmem:[%s223 + $0xdc] sm:$0xf] %vm1947, %v1746
      %2004 = vst.msk [vmem:[%s223 + $0xe0] sm:$0xf] %vm1947, %v1747
      %2005 = vst.msk [vmem:[%s223 + $0xe4] sm:$0xf] %vm1947, %v1748
      %2006 = vst.msk [vmem:[%s223 + $0xe8] sm:$0xf] %vm1947, %v1749
      %2007 = vst.msk [vmem:[%s223 + $0xec] sm:$0xf] %vm1947, %v1750
      %2008 = vst.msk [vmem:[%s223 + $0xf0] sm:$0xf] %vm1947, %v1751
      %2009 = vst.msk [vmem:[%s223 + $0xf4] sm:$0xf] %vm1947, %v1752
      %2010 = vst.msk [vmem:[%s223 + $0xf8] sm:$0xf] %vm1947, %v1753
      %2011 = vst.msk [vmem:[%s223 + $0xfc] sm:$0xf] %vm1947, %v1754
      %2012 = vst.msk [vmem:[%s223 + $0x100] sm:$0xf] %vm1947, %v1755
      %2013 = vst.msk [vmem:[%s223 + $0x104] sm:$0xf] %vm1947, %v1756
      %2014 = vst.msk [vmem:[%s223 + $0x108] sm:$0xf] %vm1947, %v1757
      %2015 = vst.msk [vmem:[%s223 + $0x10c] sm:$0xf] %vm1947, %v1758
      %2016 = vst.msk [vmem:[%s223 + $0x110] sm:$0xf] %vm1947, %v1759
      %2017 = vst.msk [vmem:[%s223 + $0x114] sm:$0xf] %vm1947, %v1760
      %2018 = vst.msk [vmem:[%s223 + $0x118] sm:$0xf] %vm1947, %v1761
      %2019 = vst.msk [vmem:[%s223 + $0x11c] sm:$0xf] %vm1947, %v1762
      %2020 = vst.msk [vmem:[%s223 + $0x120] sm:$0xf] %vm1947, %v1763
      %2021 = vst.msk [vmem:[%s223 + $0x124] sm:$0xf] %vm1947, %v1764
      %2022 = vst.msk [vmem:[%s223 + $0x128] sm:$0xf] %vm1947, %v1765
      %2023 = vst.msk [vmem:[%s223 + $0x12c] sm:$0xf] %vm1947, %v1766
      %2024 = vst.msk [vmem:[%s223 + $0x130] sm:$0xf] %vm1947, %v1767
      %2025 = vst.msk [vmem:[%s223 + $0x134] sm:$0xf] %vm1947, %v1768
      %2026 = vst.msk [vmem:[%s223 + $0x138] sm:$0xf] %vm1947, %v1769
      %2027 = vst.msk [vmem:[%s223 + $0x13c] sm:$0xf] %vm1947, %v1770
      %2028 = vst.msk [vmem:[%s223 + $0x140] sm:$0xf] %vm1947, %v1771
      %2029 = vst.msk [vmem:[%s223 + $0x144] sm:$0xf] %vm1947, %v1772
      %2030 = vst.msk [vmem:[%s223 + $0x148] sm:$0xf] %vm1947, %v1773
      %2031 = vst.msk [vmem:[%s223 + $0x14c] sm:$0xf] %vm1947, %v1774
      %2032 = vst.msk [vmem:[%s223 + $0x150] sm:$0xf] %vm1947, %v1775
      %2033 = vst.msk [vmem:[%s223 + $0x154] sm:$0xf] %vm1947, %v1776
      %2034 = vst.msk [vmem:[%s223 + $0x158] sm:$0xf] %vm1947, %v1777
      %2035 = vst.msk [vmem:[%s223 + $0x15c] sm:$0xf] %vm1947, %v1778
      %2036 = vst.msk [vmem:[%s223 + $0x160] sm:$0xf] %vm1947, %v1779
      %2037 = vst.msk [vmem:[%s223 + $0x164] sm:$0xf] %vm1947, %v1780
      %2038 = vst.msk [vmem:[%s223 + $0x168] sm:$0xf] %vm1947, %v1781
      %2039 = vst.msk [vmem:[%s223 + $0x16c] sm:$0xf] %vm1947, %v1782
      %2040 = vst.msk [vmem:[%s223 + $0x170] sm:$0xf] %vm1947, %v1783
      %2041 = vst.msk [vmem:[%s223 + $0x174] sm:$0xf] %vm1947, %v1784
      %2042 = vst.msk [vmem:[%s223 + $0x178] sm:$0xf] %vm1947, %v1785
      %2043 = vst.msk [vmem:[%s223 + $0x17c] sm:$0xf] %vm1947, %v1786
      %2044 = vst.msk [vmem:[%s223 + $0x180] sm:$0xf] %vm1947, %v1787
      %2045 = vst.msk [vmem:[%s223 + $0x184] sm:$0xf] %vm1947, %v1788
      %2046 = vst.msk [vmem:[%s223 + $0x188] sm:$0xf] %vm1947, %v1789
      %2047 = vst.msk [vmem:[%s223 + $0x18c] sm:$0xf] %vm1947, %v1790
      %2048 = vst.msk [vmem:[%s223 + $0x190] sm:$0xf] %vm1947, %v1791
      %2049 = vst.msk [vmem:[%s223 + $0x194] sm:$0xf] %vm1947, %v1792
      %2050 = vst.msk [vmem:[%s223 + $0x198] sm:$0xf] %vm1947, %v1793
      %2051 = vst.msk [vmem:[%s223 + $0x19c] sm:$0xf] %vm1947, %v1794
      %2052 = vst.msk [vmem:[%s223 + $0x1a0] sm:$0xf] %vm1947, %v1795
      %2053 = vst.msk [vmem:[%s223 + $0x1a4] sm:$0xf] %vm1947, %v1796
      %2054 = vst.msk [vmem:[%s223 + $0x1a8] sm:$0xf] %vm1947, %v1797
      %2055 = vst.msk [vmem:[%s223 + $0x1ac] sm:$0xf] %vm1947, %v1798
      %2056 = vst.msk [vmem:[%s223 + $0x1b0] sm:$0xf] %vm1947, %v1799
      %2057 = vst.msk [vmem:[%s223 + $0x1b4] sm:$0xf] %vm1947, %v1800
      %2058 = vst.msk [vmem:[%s223 + $0x1b8] sm:$0xf] %vm1947, %v1801
      %2059 = vst.msk [vmem:[%s223 + $0x1bc] sm:$0xf] %vm1947, %v1802
      %2060 = vst.msk [vmem:[%s223 + $0x1c0] sm:$0xf] %vm1947, %v1803
      %2061 = vst.msk [vmem:[%s223 + $0x1c4] sm:$0xf] %vm1947, %v1804
      %2062 = vst.msk [vmem:[%s223 + $0x1c8] sm:$0xf] %vm1947, %v1805
      %2063 = vst.msk [vmem:[%s223 + $0x1cc] sm:$0xf] %vm1947, %v1806
      %2064 = vst.msk [vmem:[%s223 + $0x1d0] sm:$0xf] %vm1947, %v1807
      %2065 = vst.msk [vmem:[%s223 + $0x1d4] sm:$0xf] %vm1947, %v1808
      %2066 = vst.msk [vmem:[%s223 + $0x1d8] sm:$0xf] %vm1947, %v1809
      %2067 = vst.msk [vmem:[%s223 + $0x1dc] sm:$0xf] %vm1947, %v1810
      %2068 = vst.msk [vmem:[%s223 + $0x1e0] sm:$0xf] %vm1947, %v1811
      %2069 = vst.msk [vmem:[%s223 + $0x1e4] sm:$0xf] %vm1947, %v1812
      %2070 = vst.msk [vmem:[%s223 + $0x1e8] sm:$0xf] %vm1947, %v1813
      %2071 = vst.msk [vmem:[%s223 + $0x1ec] sm:$0xf] %vm1947, %v1814
      %2072 = vst.msk [vmem:[%s223 + $0x1f0] sm:$0xf] %vm1947, %v1815
      %2073 = vst.msk [vmem:[%s223 + $0x1f4] sm:$0xf] %vm1947, %v1816
      %2074 = vst.msk [vmem:[%s223 + $0x1f8] sm:$0xf] %vm1947, %v1817
      %2075 = vst.msk [vmem:[%s223 + $0x1fc] sm:$0xf] %vm1947, %v1818
      %s2076 = smul.u32 128, %s18
      %p2077 = scmp.lt.s32.totalorder %s2076, 255
      %s2078 = scalar_select %p2077, %s2076, 255
      %p2079 = scmp.lt.s32.totalorder %s19, 0
      %s2080 = scalar_select %p2079, %s19, 0
      %s2081 = sadd.s32 %s2080, %s2078
      %s2082 = smul.addr %s2081, 4
      %s2083 = scalar_lea.vmem %s3, %s2082
      // Predicated region
      $region33: #{_lambda_.7} parent=31 // pred_check
        %p2084 = pneg %p124
      $region34: #{_lambda_.7} parent=31 // pred_check_branch
        %2086 = sbr.rel (%p2084) target = $region36
      $region35: #{_lambda_.7} parent=31 // pred_region
        %s2087 = smul.u32 128, %s18
      $region36: #{_lambda_.7} parent=31 // pred_fallthru
        _
    $region32: #{_lambda_.7} parent=5 // pred_fallthru
      _
    %p2088 = scmp.le.s32.totalorder 2, %s9
    // Predicated region
    $region37: #{_lambda_.7} parent=5 // pred_check
      %p2089 = pneg %p2088
    $region38: #{_lambda_.7} parent=5 // pred_check_branch
      %2091 = sbr.rel (%p2089) target = $region40
    $region39: #{_lambda_.7} parent=5 // pred_region
      %s2092 = ssub.s32 %s9, 2
      // Predicated region
      $region41: #{_lambda_.7} parent=39 // pred_check
        %p2093 = pneg %p130
      $region42: #{_lambda_.7} parent=39 // pred_check_branch
        %2095 = sbr.rel (%p2093) target = $region44
      $region43: #{_lambda_.7} parent=39 // pred_region
        %s2096 = smul.u32 128, %s20
        %p2097 = scmp.lt.s32.totalorder %s2096, 255
        %s2098 = scalar_select %p2097, %s2096, 255
        %p2099 = scmp.lt.s32.totalorder %s21, 0
        %s2100 = scalar_select %p2099, %s21, 0
        %s2101 = sadd.s32 %s2100, %s2098
        %s2102 = smul.addr %s2101, 4
        %s2103 = scalar_lea.vmem %s3, %s2102
      $region44: #{_lambda_.7} parent=39 // pred_fallthru
        _
    $region40: #{_lambda_.7} parent=5 // pred_fallthru
      _
  $region6: #{_lambda_.7} parent=0 // loop_footer
    %s13 = sadd.s32 1, %s9
  $region7: #{_lambda_.7} parent=0 // loop_footer_branch
    %8 = sbr.rel target = $region3
  $region8: #{_lambda_.7} parent=0 // loop_exit
    _

// kernel: _lambda_.8
$region0: #{_lambda_.8}
  #allocation0 [shape = 'u32[]', space=smem, size = 0x4, offset = 0x4, fixed_abs, tag = 'smem constant byte address 0x4 - core index']
  #allocation1 [shape = 'u32[144,128]{1,0:T(1,128)}', space=vmem, size = 0x12000, scoped, tag = 'internal scratch']
  %s0 = inlined_call_operand.vmem [shape: bf16[2048,16], index: 0, kind: input, shape index: {}]
  %s1 = inlined_call_operand.vmem [shape: bf16[16,96], index: 1, kind: input, shape index: {}]
  %s2 = inlined_call_operand.vmem [shape: f32[1,96], index: 2, kind: input, shape index: {}]
  %s3 = inlined_call_operand.vmem [shape: bf16[2048,96], index: 3, kind: output, shape index: {}]
  %s4 = sld [smem:[#allocation0]]
  $region45: #{_lambda_.8} parent=0
    _
  %s6 = ssub.s32 1, %s4
  %s7 = scalar_select 0, %s6, %s4
  loop: start=0, step=1, limit=4
  $region2: #{_lambda_.8} parent=0 // loop_pre_header
    _
  $region3: #{_lambda_.8} parent=0 // loop_header
    %s9 = sphi 0, %s13
    %p10 = scmp.ge.s32.totalorder %s9, 4
    %s16 = sphi 0, %s28
    %s17 = sphi 0, %s24
    %s18 = sphi 0, %s16
    %s19 = sphi 0, %s17
    %s20 = sphi 0, %s18
    %s21 = sphi 0, %s19
    %s31 = sphi 0, %s33
    %s34 = sphi 0, %s31
    %s35 = sphi 0, %s34
    %s51 = sphi 0, %s35
    %s57 = sphi 0, %s59
    %s60 = sphi 0, %s57
    %s61 = sphi 0, %s60
    %s77 = sphi 0, %s61
    %s83 = sphi 0, %s85
    %s86 = sphi 0, %s83
    %s87 = sphi 0, %s86
    %s103 = sphi 0, %s87
    %s111 = sphi 0, %s113
    %s114 = sphi 0, %s111
    %s115 = sphi 0, %s114
    %s131 = sphi 0, %s115
  $region4: #{_lambda_.8} parent=0 // loop_header_branch
    %12 = sbr.rel (%p10) target = $region8
  $region5: #{_lambda_.8} parent=0 // loop_body
    %s14 = ssub.s32 %s9, 1
    %s15 = ssub.s32 %s9, 2
    %s22 = sadd.s32 1, %s17
    %p23 = scmp.ge.s32.totalorder %s22, 1
    %s24 = scalar_select %p23, 0, %s22
    %s25 = sadd.s32 1, %s16
    %s26 = scalar_select %p23, %s25, %s16
    %p27 = scmp.ge.s32.totalorder %s26, 2
    %s28 = scalar_select %p27, 0, %s26
    %s29 = ssub.s32 %s16, %s28
    %p30 = scmp.eq.s32.totalorder %s29, 0
    %s32 = sadd.s32 %s31, 1
    %s33 = scalar_select %p30, %s31, %s32
    %p36 = pneg %p30
    %p37 = scmp.eq.s32.totalorder %s9, 1
    %p38 = por %p36, %p37
    %p39 = scmp.ne.s32.totalorder %s31, %s34
    %p40 = scmp.eq.s32.totalorder %s9, 0
    %p41 = por %p39, %p40
    %p42 = scmp.ne.s32.totalorder %s31, %s34
    %p43 = scmp.eq.s32.totalorder %s14, 1
    %p44 = por %p42, %p43
    %p45 = scmp.ne.s32.totalorder %s34, %s35
    %p46 = scmp.eq.s32.totalorder %s14, 0
    %p47 = por %p45, %p46
    %p48 = scmp.ne.s32.totalorder %s34, %s35
    %p49 = scmp.eq.s32.totalorder %s15, 1
    %p50 = por %p48, %p49
    %p52 = scmp.ne.s32.totalorder %s35, %s51
    %p53 = scmp.eq.s32.totalorder %s15, 0
    %p54 = por %p52, %p53
    %s55 = ssub.s32 %s17, %s24
    %p56 = scmp.eq.s32.totalorder %s55, 0
    %s58 = sadd.s32 %s57, 1
    %s59 = scalar_select %p56, %s57, %s58
    %p62 = pneg %p56
    %p63 = scmp.eq.s32.totalorder %s9, 1
    %p64 = por %p62, %p63
    %p65 = scmp.ne.s32.totalorder %s57, %s60
    %p66 = scmp.eq.s32.totalorder %s9, 0
    %p67 = por %p65, %p66
    %p68 = scmp.ne.s32.totalorder %s57, %s60
    %p69 = scmp.eq.s32.totalorder %s14, 1
    %p70 = por %p68, %p69
    %p71 = scmp.ne.s32.totalorder %s60, %s61
    %p72 = scmp.eq.s32.totalorder %s14, 0
    %p73 = por %p71, %p72
    %p74 = scmp.ne.s32.totalorder %s60, %s61
    %p75 = scmp.eq.s32.totalorder %s15, 1
    %p76 = por %p74, %p75
    %p78 = scmp.ne.s32.totalorder %s61, %s77
    %p79 = scmp.eq.s32.totalorder %s15, 0
    %p80 = por %p78, %p79
    %s81 = ssub.s32 %s17, %s24
    %p82 = scmp.eq.s32.totalorder %s81, 0
    %s84 = sadd.s32 %s83, 1
    %s85 = scalar_select %p82, %s83, %s84
    %p88 = pneg %p82
    %p89 = scmp.eq.s32.totalorder %s9, 1
    %p90 = por %p88, %p89
    %p91 = scmp.ne.s32.totalorder %s83, %s86
    %p92 = scmp.eq.s32.totalorder %s9, 0
    %p93 = por %p91, %p92
    %p94 = scmp.ne.s32.totalorder %s83, %s86
    %p95 = scmp.eq.s32.totalorder %s14, 1
    %p96 = por %p94, %p95
    %p97 = scmp.ne.s32.totalorder %s86, %s87
    %p98 = scmp.eq.s32.totalorder %s14, 0
    %p99 = por %p97, %p98
    %p100 = scmp.ne.s32.totalorder %s86, %s87
    %p101 = scmp.eq.s32.totalorder %s15, 1
    %p102 = por %p100, %p101
    %p104 = scmp.ne.s32.totalorder %s87, %s103
    %p105 = scmp.eq.s32.totalorder %s15, 0
    %p106 = por %p104, %p105
    %s107 = ssub.s32 %s16, %s28
    %s108 = ssub.s32 %s17, %s24
    %s109 = sor.u32 %s107, %s108
    %p110 = scmp.eq.s32.totalorder %s109, 0
    %s112 = sadd.s32 %s111, 1
    %s113 = scalar_select %p110, %s111, %s112
    %p116 = pneg %p110
    %p117 = scmp.eq.s32.totalorder %s9, 1
    %p118 = por %p116, %p117
    %p119 = scmp.ne.s32.totalorder %s111, %s114
    %p120 = scmp.eq.s32.totalorder %s9, 0
    %p121 = por %p119, %p120
    %p122 = scmp.ne.s32.totalorder %s111, %s114
    %p123 = scmp.eq.s32.totalorder %s14, 1
    %p124 = por %p122, %p123
    %p125 = scmp.ne.s32.totalorder %s114, %s115
    %p126 = scmp.eq.s32.totalorder %s14, 0
    %p127 = por %p125, %p126
    %p128 = scmp.ne.s32.totalorder %s114, %s115
    %p129 = scmp.eq.s32.totalorder %s15, 1
    %p130 = por %p128, %p129
    %p132 = scmp.ne.s32.totalorder %s115, %s131
    %p133 = scmp.eq.s32.totalorder %s15, 0
    %p134 = por %p132, %p133
    %p135 = scmp.le.s32.totalorder 1, %s9
    %p136 = scmp.lt.s32.totalorder %s9, 3
    %p137 = pnand %p135, %p136
    %p138 = pneg %p137
    // Predicated region
    $region9: #{_lambda_.8} parent=5 // pred_check
      _
    $region10: #{_lambda_.8} parent=5 // pred_check_branch
      %140 = sbr.rel (%p137) target = $region12
    $region11: #{_lambda_.8} parent=5 // pred_region
      %s141 = ssub.s32 %s9, 1
      // Predicated region
      $region13: #{_lambda_.8} parent=11 // pred_check
        %p142 = pneg %p73
      $region14: #{_lambda_.8} parent=11 // pred_check_branch
        %144 = sbr.rel (%p142) target = $region16
      $region15: #{_lambda_.8} parent=11 // pred_region
        %p145 = scmp.lt.s32.totalorder %s19, 0
        %s146 = scalar_select %p145, %s19, 0
        %s147 = smul.addr %s146, 4
        %s148 = scalar_lea.vmem %s1, %s147
      $region16: #{_lambda_.8} parent=11 // pred_fallthru
        _
      // Predicated region
      $region17: #{_lambda_.8} parent=11 // pred_check
        %p149 = pneg %p99
      $region18: #{_lambda_.8} parent=11 // pred_check_branch
        %151 = sbr.rel (%p149) target = $region20
      $region19: #{_lambda_.8} parent=11 // pred_region
        %p152 = scmp.lt.s32.totalorder %s19, 0
        %s153 = scalar_select %p152, %s19, 0
        %s154 = scalar_lea.vmem %s2, %s153
      $region20: #{_lambda_.8} parent=11 // pred_fallthru
        _
    $region12: #{_lambda_.8} parent=5 // pred_fallthru
      _
    %p155 = scmp.lt.s32.totalorder %s9, 2
    // Predicated region
    $region21: #{_lambda_.8} parent=5 // pred_check
      %p156 = pneg %p155
    $region22: #{_lambda_.8} parent=5 // pred_check_branch
      %158 = sbr.rel (%p156) target = $region24
    $region23: #{_lambda_.8} parent=5 // pred_region
      // Predicated region
      $region25: #{_lambda_.8} parent=23 // pred_check
        %p159 = pneg %p41
      $region26: #{_lambda_.8} parent=23 // pred_check_branch
        %161 = sbr.rel (%p159) target = $region28
      $region27: #{_lambda_.8} parent=23 // pred_region
        %s162 = smul.u32 128, %s16
        %p163 = scmp.lt.s32.totalorder %s162, 255
        %s164 = scalar_select %p163, %s162, 255
        %s165 = smul.addr %s164, 4
        %s166 = scalar_lea.vmem %s0, %s165
        %s167 = smul.u32 128, %s16
      $region28: #{_lambda_.8} parent=23 // pred_fallthru
        _
    $region24: #{_lambda_.8} parent=5 // pred_fallthru
      _
    %p168 = scmp.le.s32.totalorder 1, %s9
    %p169 = scmp.lt.s32.totalorder %s9, 3
    %p170 = pnand %p168, %p169
    %p171 = pneg %p170
    // Predicated region
    $region29: #{_lambda_.8} parent=5 // pred_check
      _
    $region30: #{_lambda_.8} parent=5 // pred_check_branch
      %173 = sbr.rel (%p170) target = $region32
    $region31: #{_lambda_.8} parent=5 // pred_region
      %s174 = ssub.s32 %s9, 1
      %s175 = smul.u32 128, %s18
      %p176 = scmp.lt.s32.totalorder %s175, 255
      %s177 = scalar_select %p176, %s175, 255
      %s178 = smul.addr %s177, 4
      %s179 = scalar_lea.vmem %s0, %s178
      %p180 = pneg %p47
      %p181 = pneg %p44
      %p182 = scmp.lt.s32.totalorder %s19, 0
      %s183 = scalar_select %p182, %s19, 0
      %s184 = smul.addr %s183, 4
      %s185 = scalar_lea.vmem %s1, %s184
      %p186 = pneg %p73
      %p187 = pneg %p70
      %p188 = scmp.lt.s32.totalorder %s19, 0
      %s189 = scalar_select %p188, %s19, 0
      %s190 = scalar_lea.vmem %s2, %s189
      %p191 = pneg %p99
      %p192 = pneg %p96
      %p193 = pneg %p127
      %p194 = pneg %p124
      %s195 = smul.u32 128, %s18
      %p196 = scmp.lt.s32.totalorder %s195, 255
      %s197 = scalar_select %p196, %s195, 255
      %p198 = scmp.lt.s32.totalorder %s19, 0
      %s199 = scalar_select %p198, %s19, 0
      %s200 = sadd.s32 %s199, %s197
      %s201 = smul.addr %s200, 4
      %s202 = scalar_lea.vmem %s3, %s201
      %s203 = smul.u32 128, %s18
      %p204 = scmp.lt.s32.totalorder %s203, 255
      %s205 = scalar_select %p204, %s203, 255
      %s206 = smul.addr %s205, 4
      %s207 = scalar_lea.vmem %s0, %s206
      %s208 = smul.u32 128, %s18
      %p209 = scmp.lt.s32.totalorder %s19, 0
      %s210 = scalar_select %p209, %s19, 0
      %s211 = smul.addr %s210, 4
      %s212 = scalar_lea.vmem %s1, %s211
      %p213 = scmp.lt.s32.totalorder %s19, 0
      %s214 = scalar_select %p213, %s19, 0
      %s215 = scalar_lea.vmem %s2, %s214
      %s216 = smul.u32 128, %s18
      %p217 = scmp.lt.s32.totalorder %s216, 255
      %s218 = scalar_select %p217, %s216, 255
      %p219 = scmp.lt.s32.totalorder %s19, 0
      %s220 = scalar_select %p219, %s19, 0
      %s221 = sadd.s32 %s220, %s218
      %s222 = smul.addr %s221, 4
      %s223 = scalar_lea.vmem %s3, %s222
      %s224 = smul.u32 128, %s18
      %v226 = vld [vmem:[%s207] sm:$0xf]
      %v227 = vld [vmem:[%s207 + $0x4] sm:$0xf]
      %v228 = vld [vmem:[%s207 + $0x8] sm:$0xf]
      %v229 = vld [vmem:[%s207 + $0xc] sm:$0xf]
      %v230 = vld [vmem:[%s207 + $0x10] sm:$0xf]
      %v231 = vld [vmem:[%s207 + $0x14] sm:$0xf]
      %v232 = vld [vmem:[%s207 + $0x18] sm:$0xf]
      %v233 = vld [vmem:[%s207 + $0x1c] sm:$0xf]
      %v234 = vld [vmem:[%s207 + $0x20] sm:$0xf]
      %v235 = vld [vmem:[%s207 + $0x24] sm:$0xf]
      %v236 = vld [vmem:[%s207 + $0x28] sm:$0xf]
      %v237 = vld [vmem:[%s207 + $0x2c] sm:$0xf]
      %v238 = vld [vmem:[%s207 + $0x30] sm:$0xf]
      %v239 = vld [vmem:[%s207 + $0x34] sm:$0xf]
      %v240 = vld [vmem:[%s207 + $0x38] sm:$0xf]
      %v241 = vld [vmem:[%s207 + $0x3c] sm:$0xf]
      %v242 = vld [vmem:[%s207 + $0x40] sm:$0xf]
      %v243 = vld [vmem:[%s207 + $0x44] sm:$0xf]
      %v244 = vld [vmem:[%s207 + $0x48] sm:$0xf]
      %v245 = vld [vmem:[%s207 + $0x4c] sm:$0xf]
      %v246 = vld [vmem:[%s207 + $0x50] sm:$0xf]
      %v247 = vld [vmem:[%s207 + $0x54] sm:$0xf]
      %v248 = vld [vmem:[%s207 + $0x58] sm:$0xf]
      %v249 = vld [vmem:[%s207 + $0x5c] sm:$0xf]
      %v250 = vld [vmem:[%s207 + $0x60] sm:$0xf]
      %v251 = vld [vmem:[%s207 + $0x64] sm:$0xf]
      %v252 = vld [vmem:[%s207 + $0x68] sm:$0xf]
      %v253 = vld [vmem:[%s207 + $0x6c] sm:$0xf]
      %v254 = vld [vmem:[%s207 + $0x70] sm:$0xf]
      %v255 = vld [vmem:[%s207 + $0x74] sm:$0xf]
      %v256 = vld [vmem:[%s207 + $0x78] sm:$0xf]
      %v257 = vld [vmem:[%s207 + $0x7c] sm:$0xf]
      %v258 = vld [vmem:[%s207 + $0x80] sm:$0xf]
      %v259 = vld [vmem:[%s207 + $0x84] sm:$0xf]
      %v260 = vld [vmem:[%s207 + $0x88] sm:$0xf]
      %v261 = vld [vmem:[%s207 + $0x8c] sm:$0xf]
      %v262 = vld [vmem:[%s207 + $0x90] sm:$0xf]
      %v263 = vld [vmem:[%s207 + $0x94] sm:$0xf]
      %v264 = vld [vmem:[%s207 + $0x98] sm:$0xf]
      %v265 = vld [vmem:[%s207 + $0x9c] sm:$0xf]
      %v266 = vld [vmem:[%s207 + $0xa0] sm:$0xf]
      %v267 = vld [vmem:[%s207 + $0xa4] sm:$0xf]
      %v268 = vld [vmem:[%s207 + $0xa8] sm:$0xf]
      %v269 = vld [vmem:[%s207 + $0xac] sm:$0xf]
      %v270 = vld [vmem:[%s207 + $0xb0] sm:$0xf]
      %v271 = vld [vmem:[%s207 + $0xb4] sm:$0xf]
      %v272 = vld [vmem:[%s207 + $0xb8] sm:$0xf]
      %v273 = vld [vmem:[%s207 + $0xbc] sm:$0xf]
      %v274 = vld [vmem:[%s207 + $0xc0] sm:$0xf]
      %v275 = vld [vmem:[%s207 + $0xc4] sm:$0xf]
      %v276 = vld [vmem:[%s207 + $0xc8] sm:$0xf]
      %v277 = vld [vmem:[%s207 + $0xcc] sm:$0xf]
      %v278 = vld [vmem:[%s207 + $0xd0] sm:$0xf]
      %v279 = vld [vmem:[%s207 + $0xd4] sm:$0xf]
      %v280 = vld [vmem:[%s207 + $0xd8] sm:$0xf]
      %v281 = vld [vmem:[%s207 + $0xdc] sm:$0xf]
      %v282 = vld [vmem:[%s207 + $0xe0] sm:$0xf]
      %v283 = vld [vmem:[%s207 + $0xe4] sm:$0xf]
      %v284 = vld [vmem:[%s207 + $0xe8] sm:$0xf]
      %v285 = vld [vmem:[%s207 + $0xec] sm:$0xf]
      %v286 = vld [vmem:[%s207 + $0xf0] sm:$0xf]
      %v287 = vld [vmem:[%s207 + $0xf4] sm:$0xf]
      %v288 = vld [vmem:[%s207 + $0xf8] sm:$0xf]
      %v289 = vld [vmem:[%s207 + $0xfc] sm:$0xf]
      %v290 = vld [vmem:[%s207 + $0x100] sm:$0xf]
      %v291 = vld [vmem:[%s207 + $0x104] sm:$0xf]
      %v292 = vld [vmem:[%s207 + $0x108] sm:$0xf]
      %v293 = vld [vmem:[%s207 + $0x10c] sm:$0xf]
      %v294 = vld [vmem:[%s207 + $0x110] sm:$0xf]
      %v295 = vld [vmem:[%s207 + $0x114] sm:$0xf]
      %v296 = vld [vmem:[%s207 + $0x118] sm:$0xf]
      %v297 = vld [vmem:[%s207 + $0x11c] sm:$0xf]
      %v298 = vld [vmem:[%s207 + $0x120] sm:$0xf]
      %v299 = vld [vmem:[%s207 + $0x124] sm:$0xf]
      %v300 = vld [vmem:[%s207 + $0x128] sm:$0xf]
      %v301 = vld [vmem:[%s207 + $0x12c] sm:$0xf]
      %v302 = vld [vmem:[%s207 + $0x130] sm:$0xf]
      %v303 = vld [vmem:[%s207 + $0x134] sm:$0xf]
      %v304 = vld [vmem:[%s207 + $0x138] sm:$0xf]
      %v305 = vld [vmem:[%s207 + $0x13c] sm:$0xf]
      %v306 = vld [vmem:[%s207 + $0x140] sm:$0xf]
      %v307 = vld [vmem:[%s207 + $0x144] sm:$0xf]
      %v308 = vld [vmem:[%s207 + $0x148] sm:$0xf]
      %v309 = vld [vmem:[%s207 + $0x14c] sm:$0xf]
      %v310 = vld [vmem:[%s207 + $0x150] sm:$0xf]
      %v311 = vld [vmem:[%s207 + $0x154] sm:$0xf]
      %v312 = vld [vmem:[%s207 + $0x158] sm:$0xf]
      %v313 = vld [vmem:[%s207 + $0x15c] sm:$0xf]
      %v314 = vld [vmem:[%s207 + $0x160] sm:$0xf]
      %v315 = vld [vmem:[%s207 + $0x164] sm:$0xf]
      %v316 = vld [vmem:[%s207 + $0x168] sm:$0xf]
      %v317 = vld [vmem:[%s207 + $0x16c] sm:$0xf]
      %v318 = vld [vmem:[%s207 + $0x170] sm:$0xf]
      %v319 = vld [vmem:[%s207 + $0x174] sm:$0xf]
      %v320 = vld [vmem:[%s207 + $0x178] sm:$0xf]
      %v321 = vld [vmem:[%s207 + $0x17c] sm:$0xf]
      %v322 = vld [vmem:[%s207 + $0x180] sm:$0xf]
      %v323 = vld [vmem:[%s207 + $0x184] sm:$0xf]
      %v324 = vld [vmem:[%s207 + $0x188] sm:$0xf]
      %v325 = vld [vmem:[%s207 + $0x18c] sm:$0xf]
      %v326 = vld [vmem:[%s207 + $0x190] sm:$0xf]
      %v327 = vld [vmem:[%s207 + $0x194] sm:$0xf]
      %v328 = vld [vmem:[%s207 + $0x198] sm:$0xf]
      %v329 = vld [vmem:[%s207 + $0x19c] sm:$0xf]
      %v330 = vld [vmem:[%s207 + $0x1a0] sm:$0xf]
      %v331 = vld [vmem:[%s207 + $0x1a4] sm:$0xf]
      %v332 = vld [vmem:[%s207 + $0x1a8] sm:$0xf]
      %v333 = vld [vmem:[%s207 + $0x1ac] sm:$0xf]
      %v334 = vld [vmem:[%s207 + $0x1b0] sm:$0xf]
      %v335 = vld [vmem:[%s207 + $0x1b4] sm:$0xf]
      %v336 = vld [vmem:[%s207 + $0x1b8] sm:$0xf]
      %v337 = vld [vmem:[%s207 + $0x1bc] sm:$0xf]
      %v338 = vld [vmem:[%s207 + $0x1c0] sm:$0xf]
      %v339 = vld [vmem:[%s207 + $0x1c4] sm:$0xf]
      %v340 = vld [vmem:[%s207 + $0x1c8] sm:$0xf]
      %v341 = vld [vmem:[%s207 + $0x1cc] sm:$0xf]
      %v342 = vld [vmem:[%s207 + $0x1d0] sm:$0xf]
      %v343 = vld [vmem:[%s207 + $0x1d4] sm:$0xf]
      %v344 = vld [vmem:[%s207 + $0x1d8] sm:$0xf]
      %v345 = vld [vmem:[%s207 + $0x1dc] sm:$0xf]
      %v346 = vld [vmem:[%s207 + $0x1e0] sm:$0xf]
      %v347 = vld [vmem:[%s207 + $0x1e4] sm:$0xf]
      %v348 = vld [vmem:[%s207 + $0x1e8] sm:$0xf]
      %v349 = vld [vmem:[%s207 + $0x1ec] sm:$0xf]
      %v350 = vld [vmem:[%s207 + $0x1f0] sm:$0xf]
      %v351 = vld [vmem:[%s207 + $0x1f4] sm:$0xf]
      %v352 = vld [vmem:[%s207 + $0x1f8] sm:$0xf]
      %v353 = vld [vmem:[%s207 + $0x1fc] sm:$0xf]
      %v354 = vld [vmem:[%s212] sm:$0xf]
      %v355 = vld [vmem:[%s212 + $0x4] sm:$0xf]
      %v356 = vld [vmem:[%s215] sm:$0x1]
      %v358 = vlaneseq
      %v359 = vshrl.u32 %v358, 7
      %v360 = vsub.s32 0, %v359
      %v361 = vrot.slane %v356, %v360
      %v491 = vunpack.c.l.b16 %v226
      %v492 = vunpack.c.l.b16 %v227
      %v493 = vunpack.c.l.b16 %v228
      %v494 = vunpack.c.l.b16 %v229
      %v495 = vunpack.c.l.b16 %v230
      %v496 = vunpack.c.l.b16 %v231
      %v497 = vunpack.c.l.b16 %v232
      %v498 = vunpack.c.l.b16 %v233
      %v499 = vunpack.c.l.b16 %v234
      %v500 = vunpack.c.l.b16 %v235
      %v501 = vunpack.c.l.b16 %v236
      %v502 = vunpack.c.l.b16 %v237
      %v503 = vunpack.c.l.b16 %v238
      %v504 = vunpack.c.l.b16 %v239
      %v505 = vunpack.c.l.b16 %v240
      %v506 = vunpack.c.l.b16 %v241
      %v507 = vunpack.c.l.b16 %v242
      %v508 = vunpack.c.l.b16 %v243
      %v509 = vunpack.c.l.b16 %v244
      %v510 = vunpack.c.l.b16 %v245
      %v511 = vunpack.c.l.b16 %v246
      %v512 = vunpack.c.l.b16 %v247
      %v513 = vunpack.c.l.b16 %v248
      %v514 = vunpack.c.l.b16 %v249
      %v515 = vunpack.c.l.b16 %v250
      %v516 = vunpack.c.l.b16 %v251
      %v517 = vunpack.c.l.b16 %v252
      %v518 = vunpack.c.l.b16 %v253
      %v519 = vunpack.c.l.b16 %v254
      %v520 = vunpack.c.l.b16 %v255
      %v521 = vunpack.c.l.b16 %v256
      %v522 = vunpack.c.l.b16 %v257
      %v523 = vunpack.c.l.b16 %v258
      %v524 = vunpack.c.l.b16 %v259
      %v525 = vunpack.c.l.b16 %v260
      %v526 = vunpack.c.l.b16 %v261
      %v527 = vunpack.c.l.b16 %v262
      %v528 = vunpack.c.l.b16 %v263
      %v529 = vunpack.c.l.b16 %v264
      %v530 = vunpack.c.l.b16 %v265
      %v531 = vunpack.c.l.b16 %v266
      %v532 = vunpack.c.l.b16 %v267
      %v533 = vunpack.c.l.b16 %v268
      %v534 = vunpack.c.l.b16 %v269
      %v535 = vunpack.c.l.b16 %v270
      %v536 = vunpack.c.l.b16 %v271
      %v537 = vunpack.c.l.b16 %v272
      %v538 = vunpack.c.l.b16 %v273
      %v539 = vunpack.c.l.b16 %v274
      %v540 = vunpack.c.l.b16 %v275
      %v541 = vunpack.c.l.b16 %v276
      %v542 = vunpack.c.l.b16 %v277
      %v543 = vunpack.c.l.b16 %v278
      %v544 = vunpack.c.l.b16 %v279
      %v545 = vunpack.c.l.b16 %v280
      %v546 = vunpack.c.l.b16 %v281
      %v547 = vunpack.c.l.b16 %v282
      %v548 = vunpack.c.l.b16 %v283
      %v549 = vunpack.c.l.b16 %v284
      %v550 = vunpack.c.l.b16 %v285
      %v551 = vunpack.c.l.b16 %v286
      %v552 = vunpack.c.l.b16 %v287
      %v553 = vunpack.c.l.b16 %v288
      %v554 = vunpack.c.l.b16 %v289
      %v555 = vunpack.c.l.b16 %v290
      %v556 = vunpack.c.l.b16 %v291
      %v557 = vunpack.c.l.b16 %v292
      %v558 = vunpack.c.l.b16 %v293
      %v559 = vunpack.c.l.b16 %v294
      %v560 = vunpack.c.l.b16 %v295
      %v561 = vunpack.c.l.b16 %v296
      %v562 = vunpack.c.l.b16 %v297
      %v563 = vunpack.c.l.b16 %v298
      %v564 = vunpack.c.l.b16 %v299
      %v565 = vunpack.c.l.b16 %v300
      %v566 = vunpack.c.l.b16 %v301
      %v567 = vunpack.c.l.b16 %v302
      %v568 = vunpack.c.l.b16 %v303
      %v569 = vunpack.c.l.b16 %v304
      %v570 = vunpack.c.l.b16 %v305
      %v571 = vunpack.c.l.b16 %v306
      %v572 = vunpack.c.l.b16 %v307
      %v573 = vunpack.c.l.b16 %v308
      %v574 = vunpack.c.l.b16 %v309
      %v575 = vunpack.c.l.b16 %v310
      %v576 = vunpack.c.l.b16 %v311
      %v577 = vunpack.c.l.b16 %v312
      %v578 = vunpack.c.l.b16 %v313
      %v579 = vunpack.c.l.b16 %v314
      %v580 = vunpack.c.l.b16 %v315
      %v581 = vunpack.c.l.b16 %v316
      %v582 = vunpack.c.l.b16 %v317
      %v583 = vunpack.c.l.b16 %v318
      %v584 = vunpack.c.l.b16 %v319
      %v585 = vunpack.c.l.b16 %v320
      %v586 = vunpack.c.l.b16 %v321
      %v587 = vunpack.c.l.b16 %v322
      %v588 = vunpack.c.l.b16 %v323
      %v589 = vunpack.c.l.b16 %v324
      %v590 = vunpack.c.l.b16 %v325
      %v591 = vunpack.c.l.b16 %v326
      %v592 = vunpack.c.l.b16 %v327
      %v593 = vunpack.c.l.b16 %v328
      %v594 = vunpack.c.l.b16 %v329
      %v595 = vunpack.c.l.b16 %v330
      %v596 = vunpack.c.l.b16 %v331
      %v597 = vunpack.c.l.b16 %v332
      %v598 = vunpack.c.l.b16 %v333
      %v599 = vunpack.c.l.b16 %v334
      %v600 = vunpack.c.l.b16 %v335
      %v601 = vunpack.c.l.b16 %v336
      %v602 = vunpack.c.l.b16 %v337
      %v603 = vunpack.c.l.b16 %v338
      %v604 = vunpack.c.l.b16 %v339
      %v605 = vunpack.c.l.b16 %v340
      %v606 = vunpack.c.l.b16 %v341
      %v607 = vunpack.c.l.b16 %v342
      %v608 = vunpack.c.l.b16 %v343
      %v609 = vunpack.c.l.b16 %v344
      %v610 = vunpack.c.l.b16 %v345
      %v611 = vunpack.c.l.b16 %v346
      %v612 = vunpack.c.l.b16 %v347
      %v613 = vunpack.c.l.b16 %v348
      %v614 = vunpack.c.l.b16 %v349
      %v615 = vunpack.c.l.b16 %v350
      %v616 = vunpack.c.l.b16 %v351
      %v617 = vunpack.c.l.b16 %v352
      %v618 = vunpack.c.l.b16 %v353
      %v619 = vpack.c.b16 %v492, %v491
      %v620 = vpack.c.b16 %v494, %v493
      %v621 = vpack.c.b16 %v496, %v495
      %v622 = vpack.c.b16 %v498, %v497
      %v623 = vpack.c.b16 %v500, %v499
      %v624 = vpack.c.b16 %v502, %v501
      %v625 = vpack.c.b16 %v504, %v503
      %v626 = vpack.c.b16 %v506, %v505
      %v627 = vpack.c.b16 %v508, %v507
      %v628 = vpack.c.b16 %v510, %v509
      %v629 = vpack.c.b16 %v512, %v511
      %v630 = vpack.c.b16 %v514, %v513
      %v631 = vpack.c.b16 %v516, %v515
      %v632 = vpack.c.b16 %v518, %v517
      %v633 = vpack.c.b16 %v520, %v519
      %v634 = vpack.c.b16 %v522, %v521
      %v635 = vpack.c.b16 %v524, %v523
      %v636 = vpack.c.b16 %v526, %v525
      %v637 = vpack.c.b16 %v528, %v527
      %v638 = vpack.c.b16 %v530, %v529
      %v639 = vpack.c.b16 %v532, %v531
      %v640 = vpack.c.b16 %v534, %v533
      %v641 = vpack.c.b16 %v536, %v535
      %v642 = vpack.c.b16 %v538, %v537
      %v643 = vpack.c.b16 %v540, %v539
      %v644 = vpack.c.b16 %v542, %v541
      %v645 = vpack.c.b16 %v544, %v543
      %v646 = vpack.c.b16 %v546, %v545
      %v647 = vpack.c.b16 %v548, %v547
      %v648 = vpack.c.b16 %v550, %v549
      %v649 = vpack.c.b16 %v552, %v551
      %v650 = vpack.c.b16 %v554, %v553
      %v651 = vpack.c.b16 %v556, %v555
      %v652 = vpack.c.b16 %v558, %v557
      %v653 = vpack.c.b16 %v560, %v559
      %v654 = vpack.c.b16 %v562, %v561
      %v655 = vpack.c.b16 %v564, %v563
      %v656 = vpack.c.b16 %v566, %v565
      %v657 = vpack.c.b16 %v568, %v567
      %v658 = vpack.c.b16 %v570, %v569
      %v659 = vpack.c.b16 %v572, %v571
      %v660 = vpack.c.b16 %v574, %v573
      %v661 = vpack.c.b16 %v576, %v575
      %v662 = vpack.c.b16 %v578, %v577
      %v663 = vpack.c.b16 %v580, %v579
      %v664 = vpack.c.b16 %v582, %v581
      %v665 = vpack.c.b16 %v584, %v583
      %v666 = vpack.c.b16 %v586, %v585
      %v667 = vpack.c.b16 %v588, %v587
      %v668 = vpack.c.b16 %v590, %v589
      %v669 = vpack.c.b16 %v592, %v591
      %v670 = vpack.c.b16 %v594, %v593
      %v671 = vpack.c.b16 %v596, %v595
      %v672 = vpack.c.b16 %v598, %v597
      %v673 = vpack.c.b16 %v600, %v599
      %v674 = vpack.c.b16 %v602, %v601
      %v675 = vpack.c.b16 %v604, %v603
      %v676 = vpack.c.b16 %v606, %v605
      %v677 = vpack.c.b16 %v608, %v607
      %v678 = vpack.c.b16 %v610, %v609
      %v679 = vpack.c.b16 %v612, %v611
      %v680 = vpack.c.b16 %v614, %v613
      %v681 = vpack.c.b16 %v616, %v615
      %v682 = vpack.c.b16 %v618, %v617
      %v685 = vunpack.c.l.b16 %v354
      %v686 = vunpack.c.l.b16 %v355
      %v687 = vpack.c.b16 %v686, %v685
      %vm689 = vcmask 130048
      %v691 = vsel %vm689, %v619, 0
      %v694 = vsel %vm689, %v620, 0
      %v697 = vsel %vm689, %v621, 0
      %v700 = vsel %vm689, %v622, 0
      %v703 = vsel %vm689, %v623, 0
      %v706 = vsel %vm689, %v624, 0
      %v709 = vsel %vm689, %v625, 0
      %v712 = vsel %vm689, %v626, 0
      %v715 = vsel %vm689, %v627, 0
      %v718 = vsel %vm689, %v628, 0
      %v721 = vsel %vm689, %v629, 0
      %v724 = vsel %vm689, %v630, 0
      %v727 = vsel %vm689, %v631, 0
      %v730 = vsel %vm689, %v632, 0
      %v733 = vsel %vm689, %v633, 0
      %v736 = vsel %vm689, %v634, 0
      %v739 = vsel %vm689, %v635, 0
      %v742 = vsel %vm689, %v636, 0
      %v745 = vsel %vm689, %v637, 0
      %v748 = vsel %vm689, %v638, 0
      %v751 = vsel %vm689, %v639, 0
      %v754 = vsel %vm689, %v640, 0
      %v757 = vsel %vm689, %v641, 0
      %v760 = vsel %vm689, %v642, 0
      %v763 = vsel %vm689, %v643, 0
      %v766 = vsel %vm689, %v644, 0
      %v769 = vsel %vm689, %v645, 0
      %v772 = vsel %vm689, %v646, 0
      %v775 = vsel %vm689, %v647, 0
      %v778 = vsel %vm689, %v648, 0
      %v781 = vsel %vm689, %v649, 0
      %v784 = vsel %vm689, %v650, 0
      %v787 = vsel %vm689, %v651, 0
      %v790 = vsel %vm689, %v652, 0
      %v793 = vsel %vm689, %v653, 0
      %v796 = vsel %vm689, %v654, 0
      %v799 = vsel %vm689, %v655, 0
      %v802 = vsel %vm689, %v656, 0
      %v805 = vsel %vm689, %v657, 0
      %v808 = vsel %vm689, %v658, 0
      %v811 = vsel %vm689, %v659, 0
      %v814 = vsel %vm689, %v660, 0
      %v817 = vsel %vm689, %v661, 0
      %v820 = vsel %vm689, %v662, 0
      %v823 = vsel %vm689, %v663, 0
      %v826 = vsel %vm689, %v664, 0
      %v829 = vsel %vm689, %v665, 0
      %v832 = vsel %vm689, %v666, 0
      %v835 = vsel %vm689, %v667, 0
      %v838 = vsel %vm689, %v668, 0
      %v841 = vsel %vm689, %v669, 0
      %v844 = vsel %vm689, %v670, 0
      %v847 = vsel %vm689, %v671, 0
      %v850 = vsel %vm689, %v672, 0
      %v853 = vsel %vm689, %v673, 0
      %v856 = vsel %vm689, %v674, 0
      %v859 = vsel %vm689, %v675, 0
      %v862 = vsel %vm689, %v676, 0
      %v865 = vsel %vm689, %v677, 0
      %v868 = vsel %vm689, %v678, 0
      %v871 = vsel %vm689, %v679, 0
      %v874 = vsel %vm689, %v680, 0
      %v877 = vsel %vm689, %v681, 0
      %v880 = vsel %vm689, %v682, 0
      %882 = vmatprep.subr.bf16.mxu0 0
      %883 = vmatpush1.bf16.msra.mxu0 %v687
      %884 = vmatprep.subr.bf16.mxu0 0
      %885 = vmatpush1.bf16.msra.mxu0 0
      %886 = vmatprep.subr.bf16.mxu0 0
      %887 = vmatpush1.bf16.msra.mxu0 0
      %888 = vmatprep.subr.bf16.mxu0 0
      %889 = vmatpush1.bf16.msra.mxu0 0
      %890 = vmatprep.subr.bf16.mxu0 0
      %891 = vmatpush1.bf16.msra.mxu0 0
      %892 = vmatprep.subr.bf16.mxu0 0
      %893 = vmatpush1.bf16.msra.mxu0 0
      %894 = vmatprep.subr.bf16.mxu0 0
      %895 = vmatpush1.bf16.msra.mxu0 0
      %896 = vmatprep.subr.bf16.mxu0 0
      %897 = vmatpush1.bf16.msra.mxu0 0
      %898 = vmatprep.subr.bf16.mxu0 0
      %899 = vmatpush1.bf16.msra.mxu0 0
      %900 = vmatprep.subr.bf16.mxu0 0
      %901 = vmatpush1.bf16.msra.mxu0 0
      %902 = vmatprep.subr.bf16.mxu0 0
      %903 = vmatpush1.bf16.msra.mxu0 0
      %904 = vmatprep.subr.bf16.mxu0 0
      %905 = vmatpush1.bf16.msra.mxu0 0
      %906 = vmatprep.subr.bf16.mxu0 0
      %907 = vmatpush1.bf16.msra.mxu0 0
      %908 = vmatprep.subr.bf16.mxu0 0
      %909 = vmatpush1.bf16.msra.mxu0 0
      %910 = vmatprep.subr.bf16.mxu0 0
      %911 = vmatpush1.bf16.msra.mxu0 0
      %912 = vmatprep.subr.bf16.mxu0 0
      %913 = vmatpush1.bf16.msra.mxu0 0
      %914 = vmatprep.mubr.bf16.mxu0 0
      %915 = vmatmul.mubr.bf16.gmra.mrb[0].mxu0 %v691
      %v916 = vpop.f32.mrb[0].mxu0
      %v917 = vadd.f32 %v361, %v916
      %v918 = vpop.f32.mrb[0].mxu0
      %v919 = vpop.f32.mrb[0].mxu0
      %v920 = vadd.f32 %v361, %v919
      %v921 = vpop.f32.mrb[0].mxu0
      %922 = vmatprep.mubr.bf16.mxu0 0
      %923 = vmatmul.mubr.bf16.gmra.mrb[0].mxu0 %v694
      %v924 = vpop.f32.mrb[0].mxu0
      %v925 = vadd.f32 %v361, %v924
      %v926 = vpop.f32.mrb[0].mxu0
      %v927 = vpop.f32.mrb[0].mxu0
      %v928 = vadd.f32 %v361, %v927
      %v929 = vpop.f32.mrb[0].mxu0
      %930 = vmatprep.mubr.bf16.mxu0 0
      %931 = vmatmul.mubr.bf16.gmra.mrb[0].mxu0 %v697
      %v932 = vpop.f32.mrb[0].mxu0
      %v933 = vadd.f32 %v361, %v932
      %v934 = vpop.f32.mrb[0].mxu0
      %v935 = vpop.f32.mrb[0].mxu0
      %v936 = vadd.f32 %v361, %v935
      %v937 = vpop.f32.mrb[0].mxu0
      %938 = vmatprep.mubr.bf16.mxu0 0
      %939 = vmatmul.mubr.bf16.gmra.mrb[0].mxu0 %v700
      %v940 = vpop.f32.mrb[0].mxu0
      %v941 = vadd.f32 %v361, %v940
      %v942 = vpop.f32.mrb[0].mxu0
      %v943 = vpop.f32.mrb[0].mxu0
      %v944 = vadd.f32 %v361, %v943
      %v945 = vpop.f32.mrb[0].mxu0
      %946 = vmatprep.mubr.bf16.mxu0 0
      %947 = vmatmul.mubr.bf16.gmra.mrb[0].mxu0 %v703
      %v948 = vpop.f32.mrb[0].mxu0
      %v949 = vadd.f32 %v361, %v948
      %v950 = vpop.f32.mrb[0].mxu0
      %v951 = vpop.f32.mrb[0].mxu0
      %v952 = vadd.f32 %v361, %v951
      %v953 = vpop.f32.mrb[0].mxu0
      %954 = vmatprep.mubr.bf16.mxu0 0
      %955 = vmatmul.mubr.bf16.gmra.mrb[0].mxu0 %v706
      %v956 = vpop.f32.mrb[0].mxu0
      %v957 = vadd.f32 %v361, %v956
      %v958 = vpop.f32.mrb[0].mxu0
      %v959 = vpop.f32.mrb[0].mxu0
      %v960 = vadd.f32 %v361, %v959
      %v961 = vpop.f32.mrb[0].mxu0
      %962 = vmatprep.mubr.bf16.mxu0 0
      %963 = vmatmul.mubr.bf16.gmra.mrb[0].mxu0 %v709
      %v964 = vpop.f32.mrb[0].mxu0
      %v965 = vadd.f32 %v361, %v964
      %v966 = vpop.f32.mrb[0].mxu0
      %v967 = vpop.f32.mrb[0].mxu0
      %v968 = vadd.f32 %v361, %v967
      %v969 = vpop.f32.mrb[0].mxu0
      %970 = vmatprep.mubr.bf16.mxu0 0
      %971 = vmatmul.mubr.bf16.gmra.mrb[0].mxu0 %v712
      %v972 = vpop.f32.mrb[0].mxu0
      %v973 = vadd.f32 %v361, %v972
      %v974 = vpop.f32.mrb[0].mxu0
      %v975 = vpop.f32.mrb[0].mxu0
      %v976 = vadd.f32 %v361, %v975
      %v977 = vpop.f32.mrb[0].mxu0
      %978 = vmatprep.mubr.bf16.mxu0 0
      %979 = vmatmul.mubr.bf16.gmra.mrb[0].mxu0 %v715
      %v980 = vpop.f32.mrb[0].mxu0
      %v981 = vadd.f32 %v361, %v980
      %v982 = vpop.f32.mrb[0].mxu0
      %v983 = vpop.f32.mrb[0].mxu0
      %v984 = vadd.f32 %v361, %v983
      %v985 = vpop.f32.mrb[0].mxu0
      %986 = vmatprep.mubr.bf16.mxu0 0
      %987 = vmatmul.mubr.bf16.gmra.mrb[0].mxu0 %v718
      %v988 = vpop.f32.mrb[0].mxu0
      %v989 = vadd.f32 %v361, %v988
      %v990 = vpop.f32.mrb[0].mxu0
      %v991 = vpop.f32.mrb[0].mxu0
      %v992 = vadd.f32 %v361, %v991
      %v993 = vpop.f32.mrb[0].mxu0
      %994 = vmatprep.mubr.bf16.mxu0 0
      %995 = vmatmul.mubr.bf16.gmra.mrb[0].mxu0 %v721
      %v996 = vpop.f32.mrb[0].mxu0
      %v997 = vadd.f32 %v361, %v996
      %v998 = vpop.f32.mrb[0].mxu0
      %v999 = vpop.f32.mrb[0].mxu0
      %v1000 = vadd.f32 %v361, %v999
      %v1001 = vpop.f32.mrb[0].mxu0
      %1002 = vmatprep.mubr.bf16.mxu0 0
      %1003 = vmatmul.mubr.bf16.gmra.mrb[0].mxu0 %v724
      %v1004 = vpop.f32.mrb[0].mxu0
      %v1005 = vadd.f32 %v361, %v1004
      %v1006 = vpop.f32.mrb[0].mxu0
      %v1007 = vpop.f32.mrb[0].mxu0
      %v1008 = vadd.f32 %v361, %v1007
      %v1009 = vpop.f32.mrb[0].mxu0
      %1010 = vmatprep.mubr.bf16.mxu0 0
      %1011 = vmatmul.mubr.bf16.gmra.mrb[0].mxu0 %v727
      %v1012 = vpop.f32.mrb[0].mxu0
      %v1013 = vadd.f32 %v361, %v1012
      %v1014 = vpop.f32.mrb[0].mxu0
      %v1015 = vpop.f32.mrb[0].mxu0
      %v1016 = vadd.f32 %v361, %v1015
      %v1017 = vpop.f32.mrb[0].mxu0
      %1018 = vmatprep.mubr.bf16.mxu0 0
      %1019 = vmatmul.mubr.bf16.gmra.mrb[0].mxu0 %v730
      %v1020 = vpop.f32.mrb[0].mxu0
      %v1021 = vadd.f32 %v361, %v1020
      %v1022 = vpop.f32.mrb[0].mxu0
      %v1023 = vpop.f32.mrb[0].mxu0
      %v1024 = vadd.f32 %v361, %v1023
      %v1025 = vpop.f32.mrb[0].mxu0
      %1026 = vmatprep.mubr.bf16.mxu0 0
      %1027 = vmatmul.mubr.bf16.gmra.mrb[0].mxu0 %v733
      %v1028 = vpop.f32.mrb[0].mxu0
      %v1029 = vadd.f32 %v361, %v1028
      %v1030 = vpop.f32.mrb[0].mxu0
      %v1031 = vpop.f32.mrb[0].mxu0
      %v1032 = vadd.f32 %v361, %v1031
      %v1033 = vpop.f32.mrb[0].mxu0
      %1034 = vmatprep.mubr.bf16.mxu0 0
      %1035 = vmatmul.mubr.bf16.gmra.mrb[0].mxu0 %v736
      %v1036 = vpop.f32.mrb[0].mxu0
      %v1037 = vadd.f32 %v361, %v1036
      %v1038 = vpop.f32.mrb[0].mxu0
      %v1039 = vpop.f32.mrb[0].mxu0
      %v1040 = vadd.f32 %v361, %v1039
      %v1041 = vpop.f32.mrb[0].mxu0
      %1042 = vmatprep.mubr.bf16.mxu0 0
      %1043 = vmatmul.mubr.bf16.gmra.mrb[0].mxu0 %v739
      %v1044 = vpop.f32.mrb[0].mxu0
      %v1045 = vadd.f32 %v361, %v1044
      %v1046 = vpop.f32.mrb[0].mxu0
      %v1047 = vpop.f32.mrb[0].mxu0
      %v1048 = vadd.f32 %v361, %v1047
      %v1049 = vpop.f32.mrb[0].mxu0
      %1050 = vmatprep.mubr.bf16.mxu0 0
      %1051 = vmatmul.mubr.bf16.gmra.mrb[0].mxu0 %v742
      %v1052 = vpop.f32.mrb[0].mxu0
      %v1053 = vadd.f32 %v361, %v1052
      %v1054 = vpop.f32.mrb[0].mxu0
      %v1055 = vpop.f32.mrb[0].mxu0
      %v1056 = vadd.f32 %v361, %v1055
      %v1057 = vpop.f32.mrb[0].mxu0
      %1058 = vmatprep.mubr.bf16.mxu0 0
      %1059 = vmatmul.mubr.bf16.gmra.mrb[0].mxu0 %v745
      %v1060 = vpop.f32.mrb[0].mxu0
      %v1061 = vadd.f32 %v361, %v1060
      %v1062 = vpop.f32.mrb[0].mxu0
      %v1063 = vpop.f32.mrb[0].mxu0
      %v1064 = vadd.f32 %v361, %v1063
      %v1065 = vpop.f32.mrb[0].mxu0
      %1066 = vmatprep.mubr.bf16.mxu0 0
      %1067 = vmatmul.mubr.bf16.gmra.mrb[0].mxu0 %v748
      %v1068 = vpop.f32.mrb[0].mxu0
      %v1069 = vadd.f32 %v361, %v1068
      %v1070 = vpop.f32.mrb[0].mxu0
      %v1071 = vpop.f32.mrb[0].mxu0
      %v1072 = vadd.f32 %v361, %v1071
      %v1073 = vpop.f32.mrb[0].mxu0
      %1074 = vmatprep.mubr.bf16.mxu0 0
      %1075 = vmatmul.mubr.bf16.gmra.mrb[0].mxu0 %v751
      %v1076 = vpop.f32.mrb[0].mxu0
      %v1077 = vadd.f32 %v361, %v1076
      %v1078 = vpop.f32.mrb[0].mxu0
      %v1079 = vpop.f32.mrb[0].mxu0
      %v1080 = vadd.f32 %v361, %v1079
      %v1081 = vpop.f32.mrb[0].mxu0
      %1082 = vmatprep.mubr.bf16.mxu0 0
      %1083 = vmatmul.mubr.bf16.gmra.mrb[0].mxu0 %v754
      %v1084 = vpop.f32.mrb[0].mxu0
      %v1085 = vadd.f32 %v361, %v1084
      %v1086 = vpop.f32.mrb[0].mxu0
      %v1087 = vpop.f32.mrb[0].mxu0
      %v1088 = vadd.f32 %v361, %v1087
      %v1089 = vpop.f32.mrb[0].mxu0
      %1090 = vmatprep.mubr.bf16.mxu0 0
      %1091 = vmatmul.mubr.bf16.gmra.mrb[0].mxu0 %v757
      %v1092 = vpop.f32.mrb[0].mxu0
      %v1093 = vadd.f32 %v361, %v1092
      %v1094 = vpop.f32.mrb[0].mxu0
      %v1095 = vpop.f32.mrb[0].mxu0
      %v1096 = vadd.f32 %v361, %v1095
      %v1097 = vpop.f32.mrb[0].mxu0
      %1098 = vmatprep.mubr.bf16.mxu0 0
      %1099 = vmatmul.mubr.bf16.gmra.mrb[0].mxu0 %v760
      %v1100 = vpop.f32.mrb[0].mxu0
      %v1101 = vadd.f32 %v361, %v1100
      %v1102 = vpop.f32.mrb[0].mxu0
      %v1103 = vpop.f32.mrb[0].mxu0
      %v1104 = vadd.f32 %v361, %v1103
      %v1105 = vpop.f32.mrb[0].mxu0
      %1106 = vmatprep.mubr.bf16.mxu0 0
      %1107 = vmatmul.mubr.bf16.gmra.mrb[0].mxu0 %v763
      %v1108 = vpop.f32.mrb[0].mxu0
      %v1109 = vadd.f32 %v361, %v1108
      %v1110 = vpop.f32.mrb[0].mxu0
      %v1111 = vpop.f32.mrb[0].mxu0
      %v1112 = vadd.f32 %v361, %v1111
      %v1113 = vpop.f32.mrb[0].mxu0
      %1114 = vmatprep.mubr.bf16.mxu0 0
      %1115 = vmatmul.mubr.bf16.gmra.mrb[0].mxu0 %v766
      %v1116 = vpop.f32.mrb[0].mxu0
      %v1117 = vadd.f32 %v361, %v1116
      %v1118 = vpop.f32.mrb[0].mxu0
      %v1119 = vpop.f32.mrb[0].mxu0
      %v1120 = vadd.f32 %v361, %v1119
      %v1121 = vpop.f32.mrb[0].mxu0
      %1122 = vmatprep.mubr.bf16.mxu0 0
      %1123 = vmatmul.mubr.bf16.gmra.mrb[0].mxu0 %v769
      %v1124 = vpop.f32.mrb[0].mxu0
      %v1125 = vadd.f32 %v361, %v1124
      %v1126 = vpop.f32.mrb[0].mxu0
      %v1127 = vpop.f32.mrb[0].mxu0
      %v1128 = vadd.f32 %v361, %v1127
      %v1129 = vpop.f32.mrb[0].mxu0
      %1130 = vmatprep.mubr.bf16.mxu0 0
      %1131 = vmatmul.mubr.bf16.gmra.mrb[0].mxu0 %v772
      %v1132 = vpop.f32.mrb[0].mxu0
      %v1133 = vadd.f32 %v361, %v1132
      %v1134 = vpop.f32.mrb[0].mxu0
      %v1135 = vpop.f32.mrb[0].mxu0
      %v1136 = vadd.f32 %v361, %v1135
      %v1137 = vpop.f32.mrb[0].mxu0
      %1138 = vmatprep.mubr.bf16.mxu0 0
      %1139 = vmatmul.mubr.bf16.gmra.mrb[0].mxu0 %v775
      %v1140 = vpop.f32.mrb[0].mxu0
      %v1141 = vadd.f32 %v361, %v1140
      %v1142 = vpop.f32.mrb[0].mxu0
      %v1143 = vpop.f32.mrb[0].mxu0
      %v1144 = vadd.f32 %v361, %v1143
      %v1145 = vpop.f32.mrb[0].mxu0
      %1146 = vmatprep.mubr.bf16.mxu0 0
      %1147 = vmatmul.mubr.bf16.gmra.mrb[0].mxu0 %v778
      %v1148 = vpop.f32.mrb[0].mxu0
      %v1149 = vadd.f32 %v361, %v1148
      %v1150 = vpop.f32.mrb[0].mxu0
      %v1151 = vpop.f32.mrb[0].mxu0
      %v1152 = vadd.f32 %v361, %v1151
      %v1153 = vpop.f32.mrb[0].mxu0
      %1154 = vmatprep.mubr.bf16.mxu0 0
      %1155 = vmatmul.mubr.bf16.gmra.mrb[0].mxu0 %v781
      %v1156 = vpop.f32.mrb[0].mxu0
      %v1157 = vadd.f32 %v361, %v1156
      %v1158 = vpop.f32.mrb[0].mxu0
      %v1159 = vpop.f32.mrb[0].mxu0
      %v1160 = vadd.f32 %v361, %v1159
      %v1161 = vpop.f32.mrb[0].mxu0
      %1162 = vmatprep.mubr.bf16.mxu0 0
      %1163 = vmatmul.mubr.bf16.gmra.mrb[0].mxu0 %v784
      %v1164 = vpop.f32.mrb[0].mxu0
      %v1165 = vadd.f32 %v361, %v1164
      %v1166 = vpop.f32.mrb[0].mxu0
      %v1167 = vpop.f32.mrb[0].mxu0
      %v1168 = vadd.f32 %v361, %v1167
      %v1169 = vpop.f32.mrb[0].mxu0
      %1170 = vmatprep.mubr.bf16.mxu0 0
      %1171 = vmatmul.mubr.bf16.gmra.mrb[0].mxu0 %v787
      %v1172 = vpop.f32.mrb[0].mxu0
      %v1173 = vadd.f32 %v361, %v1172
      %v1174 = vpop.f32.mrb[0].mxu0
      %v1175 = vpop.f32.mrb[0].mxu0
      %v1176 = vadd.f32 %v361, %v1175
      %v1177 = vpop.f32.mrb[0].mxu0
      %1178 = vmatprep.mubr.bf16.mxu0 0
      %1179 = vmatmul.mubr.bf16.gmra.mrb[0].mxu0 %v790
      %v1180 = vpop.f32.mrb[0].mxu0
      %v1181 = vadd.f32 %v361, %v1180
      %v1182 = vpop.f32.mrb[0].mxu0
      %v1183 = vpop.f32.mrb[0].mxu0
      %v1184 = vadd.f32 %v361, %v1183
      %v1185 = vpop.f32.mrb[0].mxu0
      %1186 = vmatprep.mubr.bf16.mxu0 0
      %1187 = vmatmul.mubr.bf16.gmra.mrb[0].mxu0 %v793
      %v1188 = vpop.f32.mrb[0].mxu0
      %v1189 = vadd.f32 %v361, %v1188
      %v1190 = vpop.f32.mrb[0].mxu0
      %v1191 = vpop.f32.mrb[0].mxu0
      %v1192 = vadd.f32 %v361, %v1191
      %v1193 = vpop.f32.mrb[0].mxu0
      %1194 = vmatprep.mubr.bf16.mxu0 0
      %1195 = vmatmul.mubr.bf16.gmra.mrb[0].mxu0 %v796
      %v1196 = vpop.f32.mrb[0].mxu0
      %v1197 = vadd.f32 %v361, %v1196
      %v1198 = vpop.f32.mrb[0].mxu0
      %v1199 = vpop.f32.mrb[0].mxu0
      %v1200 = vadd.f32 %v361, %v1199
      %v1201 = vpop.f32.mrb[0].mxu0
      %1202 = vmatprep.mubr.bf16.mxu0 0
      %1203 = vmatmul.mubr.bf16.gmra.mrb[0].mxu0 %v799
      %v1204 = vpop.f32.mrb[0].mxu0
      %v1205 = vadd.f32 %v361, %v1204
      %v1206 = vpop.f32.mrb[0].mxu0
      %v1207 = vpop.f32.mrb[0].mxu0
      %v1208 = vadd.f32 %v361, %v1207
      %v1209 = vpop.f32.mrb[0].mxu0
      %1210 = vmatprep.mubr.bf16.mxu0 0
      %1211 = vmatmul.mubr.bf16.gmra.mrb[0].mxu0 %v802
      %v1212 = vpop.f32.mrb[0].mxu0
      %v1213 = vadd.f32 %v361, %v1212
      %v1214 = vpop.f32.mrb[0].mxu0
      %v1215 = vpop.f32.mrb[0].mxu0
      %v1216 = vadd.f32 %v361, %v1215
      %v1217 = vpop.f32.mrb[0].mxu0
      %1218 = vmatprep.mubr.bf16.mxu0 0
      %1219 = vmatmul.mubr.bf16.gmra.mrb[0].mxu0 %v805
      %v1220 = vpop.f32.mrb[0].mxu0
      %v1221 = vadd.f32 %v361, %v1220
      %v1222 = vpop.f32.mrb[0].mxu0
      %v1223 = vpop.f32.mrb[0].mxu0
      %v1224 = vadd.f32 %v361, %v1223
      %v1225 = vpop.f32.mrb[0].mxu0
      %1226 = vmatprep.mubr.bf16.mxu0 0
      %1227 = vmatmul.mubr.bf16.gmra.mrb[0].mxu0 %v808
      %v1228 = vpop.f32.mrb[0].mxu0
      %v1229 = vadd.f32 %v361, %v1228
      %v1230 = vpop.f32.mrb[0].mxu0
      %v1231 = vpop.f32.mrb[0].mxu0
      %v1232 = vadd.f32 %v361, %v1231
      %v1233 = vpop.f32.mrb[0].mxu0
      %1234 = vmatprep.mubr.bf16.mxu0 0
      %1235 = vmatmul.mubr.bf16.gmra.mrb[0].mxu0 %v811
      %v1236 = vpop.f32.mrb[0].mxu0
      %v1237 = vadd.f32 %v361, %v1236
      %v1238 = vpop.f32.mrb[0].mxu0
      %v1239 = vpop.f32.mrb[0].mxu0
      %v1240 = vadd.f32 %v361, %v1239
      %v1241 = vpop.f32.mrb[0].mxu0
      %1242 = vmatprep.mubr.bf16.mxu0 0
      %1243 = vmatmul.mubr.bf16.gmra.mrb[0].mxu0 %v814
      %v1244 = vpop.f32.mrb[0].mxu0
      %v1245 = vadd.f32 %v361, %v1244
      %v1246 = vpop.f32.mrb[0].mxu0
      %v1247 = vpop.f32.mrb[0].mxu0
      %v1248 = vadd.f32 %v361, %v1247
      %v1249 = vpop.f32.mrb[0].mxu0
      %1250 = vmatprep.mubr.bf16.mxu0 0
      %1251 = vmatmul.mubr.bf16.gmra.mrb[0].mxu0 %v817
      %v1252 = vpop.f32.mrb[0].mxu0
      %v1253 = vadd.f32 %v361, %v1252
      %v1254 = vpop.f32.mrb[0].mxu0
      %v1255 = vpop.f32.mrb[0].mxu0
      %v1256 = vadd.f32 %v361, %v1255
      %v1257 = vpop.f32.mrb[0].mxu0
      %1258 = vmatprep.mubr.bf16.mxu0 0
      %1259 = vmatmul.mubr.bf16.gmra.mrb[0].mxu0 %v820
      %v1260 = vpop.f32.mrb[0].mxu0
      %v1261 = vadd.f32 %v361, %v1260
      %v1262 = vpop.f32.mrb[0].mxu0
      %v1263 = vpop.f32.mrb[0].mxu0
      %v1264 = vadd.f32 %v361, %v1263
      %v1265 = vpop.f32.mrb[0].mxu0
      %1266 = vmatprep.mubr.bf16.mxu0 0
      %1267 = vmatmul.mubr.bf16.gmra.mrb[0].mxu0 %v823
      %v1268 = vpop.f32.mrb[0].mxu0
      %v1269 = vadd.f32 %v361, %v1268
      %v1270 = vpop.f32.mrb[0].mxu0
      %v1271 = vpop.f32.mrb[0].mxu0
      %v1272 = vadd.f32 %v361, %v1271
      %v1273 = vpop.f32.mrb[0].mxu0
      %1274 = vmatprep.mubr.bf16.mxu0 0
      %1275 = vmatmul.mubr.bf16.gmra.mrb[0].mxu0 %v826
      %v1276 = vpop.f32.mrb[0].mxu0
      %v1277 = vadd.f32 %v361, %v1276
      %v1278 = vpop.f32.mrb[0].mxu0
      %v1279 = vpop.f32.mrb[0].mxu0
      %v1280 = vadd.f32 %v361, %v1279
      %v1281 = vpop.f32.mrb[0].mxu0
      %1282 = vmatprep.mubr.bf16.mxu0 0
      %1283 = vmatmul.mubr.bf16.gmra.mrb[0].mxu0 %v829
      %v1284 = vpop.f32.mrb[0].mxu0
      %v1285 = vadd.f32 %v361, %v1284
      %v1286 = vpop.f32.mrb[0].mxu0
      %v1287 = vpop.f32.mrb[0].mxu0
      %v1288 = vadd.f32 %v361, %v1287
      %v1289 = vpop.f32.mrb[0].mxu0
      %1290 = vmatprep.mubr.bf16.mxu0 0
      %1291 = vmatmul.mubr.bf16.gmra.mrb[0].mxu0 %v832
      %v1292 = vpop.f32.mrb[0].mxu0
      %v1293 = vadd.f32 %v361, %v1292
      %v1294 = vpop.f32.mrb[0].mxu0
      %v1295 = vpop.f32.mrb[0].mxu0
      %v1296 = vadd.f32 %v361, %v1295
      %v1297 = vpop.f32.mrb[0].mxu0
      %1298 = vmatprep.mubr.bf16.mxu0 0
      %1299 = vmatmul.mubr.bf16.gmra.mrb[0].mxu0 %v835
      %v1300 = vpop.f32.mrb[0].mxu0
      %v1301 = vadd.f32 %v361, %v1300
      %v1302 = vpop.f32.mrb[0].mxu0
      %v1303 = vpop.f32.mrb[0].mxu0
      %v1304 = vadd.f32 %v361, %v1303
      %v1305 = vpop.f32.mrb[0].mxu0
      %1306 = vmatprep.mubr.bf16.mxu0 0
      %1307 = vmatmul.mubr.bf16.gmra.mrb[0].mxu0 %v838
      %v1308 = vpop.f32.mrb[0].mxu0
      %v1309 = vadd.f32 %v361, %v1308
      %v1310 = vpop.f32.mrb[0].mxu0
      %v1311 = vpop.f32.mrb[0].mxu0
      %v1312 = vadd.f32 %v361, %v1311
      %v1313 = vpop.f32.mrb[0].mxu0
      %1314 = vmatprep.mubr.bf16.mxu0 0
      %1315 = vmatmul.mubr.bf16.gmra.mrb[0].mxu0 %v841
      %v1316 = vpop.f32.mrb[0].mxu0
      %v1317 = vadd.f32 %v361, %v1316
      %v1318 = vpop.f32.mrb[0].mxu0
      %v1319 = vpop.f32.mrb[0].mxu0
      %v1320 = vadd.f32 %v361, %v1319
      %v1321 = vpop.f32.mrb[0].mxu0
      %1322 = vmatprep.mubr.bf16.mxu0 0
      %1323 = vmatmul.mubr.bf16.gmra.mrb[0].mxu0 %v844
      %v1324 = vpop.f32.mrb[0].mxu0
      %v1325 = vadd.f32 %v361, %v1324
      %v1326 = vpop.f32.mrb[0].mxu0
      %v1327 = vpop.f32.mrb[0].mxu0
      %v1328 = vadd.f32 %v361, %v1327
      %v1329 = vpop.f32.mrb[0].mxu0
      %1330 = vmatprep.mubr.bf16.mxu0 0
      %1331 = vmatmul.mubr.bf16.gmra.mrb[0].mxu0 %v847
      %v1332 = vpop.f32.mrb[0].mxu0
      %v1333 = vadd.f32 %v361, %v1332
      %v1334 = vpop.f32.mrb[0].mxu0
      %v1335 = vpop.f32.mrb[0].mxu0
      %v1336 = vadd.f32 %v361, %v1335
      %v1337 = vpop.f32.mrb[0].mxu0
      %1338 = vmatprep.mubr.bf16.mxu0 0
      %1339 = vmatmul.mubr.bf16.gmra.mrb[0].mxu0 %v850
      %v1340 = vpop.f32.mrb[0].mxu0
      %v1341 = vadd.f32 %v361, %v1340
      %v1342 = vpop.f32.mrb[0].mxu0
      %v1343 = vpop.f32.mrb[0].mxu0
      %v1344 = vadd.f32 %v361, %v1343
      %v1345 = vpop.f32.mrb[0].mxu0
      %1346 = vmatprep.mubr.bf16.mxu0 0
      %1347 = vmatmul.mubr.bf16.gmra.mrb[0].mxu0 %v853
      %v1348 = vpop.f32.mrb[0].mxu0
      %v1349 = vadd.f32 %v361, %v1348
      %v1350 = vpop.f32.mrb[0].mxu0
      %v1351 = vpop.f32.mrb[0].mxu0
      %v1352 = vadd.f32 %v361, %v1351
      %v1353 = vpop.f32.mrb[0].mxu0
      %1354 = vmatprep.mubr.bf16.mxu0 0
      %1355 = vmatmul.mubr.bf16.gmra.mrb[0].mxu0 %v856
      %v1356 = vpop.f32.mrb[0].mxu0
      %v1357 = vadd.f32 %v361, %v1356
      %v1358 = vpop.f32.mrb[0].mxu0
      %v1359 = vpop.f32.mrb[0].mxu0
      %v1360 = vadd.f32 %v361, %v1359
      %v1361 = vpop.f32.mrb[0].mxu0
      %1362 = vmatprep.mubr.bf16.mxu0 0
      %1363 = vmatmul.mubr.bf16.gmra.mrb[0].mxu0 %v859
      %v1364 = vpop.f32.mrb[0].mxu0
      %v1365 = vadd.f32 %v361, %v1364
      %v1366 = vpop.f32.mrb[0].mxu0
      %v1367 = vpop.f32.mrb[0].mxu0
      %v1368 = vadd.f32 %v361, %v1367
      %v1369 = vpop.f32.mrb[0].mxu0
      %1370 = vmatprep.mubr.bf16.mxu0 0
      %1371 = vmatmul.mubr.bf16.gmra.mrb[0].mxu0 %v862
      %v1372 = vpop.f32.mrb[0].mxu0
      %v1373 = vadd.f32 %v361, %v1372
      %v1374 = vpop.f32.mrb[0].mxu0
      %v1375 = vpop.f32.mrb[0].mxu0
      %v1376 = vadd.f32 %v361, %v1375
      %v1377 = vpop.f32.mrb[0].mxu0
      %1378 = vmatprep.mubr.bf16.mxu0 0
      %1379 = vmatmul.mubr.bf16.gmra.mrb[0].mxu0 %v865
      %v1380 = vpop.f32.mrb[0].mxu0
      %v1381 = vadd.f32 %v361, %v1380
      %v1382 = vpop.f32.mrb[0].mxu0
      %v1383 = vpop.f32.mrb[0].mxu0
      %v1384 = vadd.f32 %v361, %v1383
      %v1385 = vpop.f32.mrb[0].mxu0
      %1386 = vmatprep.mubr.bf16.mxu0 0
      %1387 = vmatmul.mubr.bf16.gmra.mrb[0].mxu0 %v868
      %v1388 = vpop.f32.mrb[0].mxu0
      %v1389 = vadd.f32 %v361, %v1388
      %v1390 = vpop.f32.mrb[0].mxu0
      %v1391 = vpop.f32.mrb[0].mxu0
      %v1392 = vadd.f32 %v361, %v1391
      %v1393 = vpop.f32.mrb[0].mxu0
      %1394 = vmatprep.mubr.bf16.mxu0 0
      %1395 = vmatmul.mubr.bf16.gmra.mrb[0].mxu0 %v871
      %v1396 = vpop.f32.mrb[0].mxu0
      %v1397 = vadd.f32 %v361, %v1396
      %v1398 = vpop.f32.mrb[0].mxu0
      %v1399 = vpop.f32.mrb[0].mxu0
      %v1400 = vadd.f32 %v361, %v1399
      %v1401 = vpop.f32.mrb[0].mxu0
      %1402 = vmatprep.mubr.bf16.mxu0 0
      %1403 = vmatmul.mubr.bf16.gmra.mrb[0].mxu0 %v874
      %v1404 = vpop.f32.mrb[0].mxu0
      %v1405 = vadd.f32 %v361, %v1404
      %v1406 = vpop.f32.mrb[0].mxu0
      %v1407 = vpop.f32.mrb[0].mxu0
      %v1408 = vadd.f32 %v361, %v1407
      %v1409 = vpop.f32.mrb[0].mxu0
      %1410 = vmatprep.mubr.bf16.mxu0 0
      %1411 = vmatmul.mubr.bf16.gmra.mrb[0].mxu0 %v877
      %v1412 = vpop.f32.mrb[0].mxu0
      %v1413 = vadd.f32 %v361, %v1412
      %v1414 = vpop.f32.mrb[0].mxu0
      %v1415 = vpop.f32.mrb[0].mxu0
      %v1416 = vadd.f32 %v361, %v1415
      %v1417 = vpop.f32.mrb[0].mxu0
      %1418 = vmatprep.mubr.bf16.mxu0 0
      %1419 = vmatmul.mubr.bf16.gmra.mrb[0].mxu0 %v880
      %v1420 = vpop.f32.mrb[0].mxu0
      %v1421 = vadd.f32 %v361, %v1420
      %v1422 = vpop.f32.mrb[0].mxu0
      %v1423 = vpop.f32.mrb[0].mxu0
      %v1424 = vadd.f32 %v361, %v1423
      %v1425 = vpop.f32.mrb[0].mxu0
      %1426 = vdwg.mxu0
      %v1427 = vmax.f32 %v917, 0.0
      %v1428 = vmax.f32 %v920, 0.0
      %v1429 = vmax.f32 %v925, 0.0
      %v1430 = vmax.f32 %v928, 0.0
      %v1431 = vmax.f32 %v933, 0.0
      %v1432 = vmax.f32 %v936, 0.0
      %v1433 = vmax.f32 %v941, 0.0
      %v1434 = vmax.f32 %v944, 0.0
      %v1435 = vmax.f32 %v949, 0.0
      %v1436 = vmax.f32 %v952, 0.0
      %v1437 = vmax.f32 %v957, 0.0
      %v1438 = vmax.f32 %v960, 0.0
      %v1439 = vmax.f32 %v965, 0.0
      %v1440 = vmax.f32 %v968, 0.0
      %v1441 = vmax.f32 %v973, 0.0
      %v1442 = vmax.f32 %v976, 0.0
      %v1443 = vmax.f32 %v981, 0.0
      %v1444 = vmax.f32 %v984, 0.0
      %v1445 = vmax.f32 %v989, 0.0
      %v1446 = vmax.f32 %v992, 0.0
      %v1447 = vmax.f32 %v997, 0.0
      %v1448 = vmax.f32 %v1000, 0.0
      %v1449 = vmax.f32 %v1005, 0.0
      %v1450 = vmax.f32 %v1008, 0.0
      %v1451 = vmax.f32 %v1013, 0.0
      %v1452 = vmax.f32 %v1016, 0.0
      %v1453 = vmax.f32 %v1021, 0.0
      %v1454 = vmax.f32 %v1024, 0.0
      %v1455 = vmax.f32 %v1029, 0.0
      %v1456 = vmax.f32 %v1032, 0.0
      %v1457 = vmax.f32 %v1037, 0.0
      %v1458 = vmax.f32 %v1040, 0.0
      %v1459 = vmax.f32 %v1045, 0.0
      %v1460 = vmax.f32 %v1048, 0.0
      %v1461 = vmax.f32 %v1053, 0.0
      %v1462 = vmax.f32 %v1056, 0.0
      %v1463 = vmax.f32 %v1061, 0.0
      %v1464 = vmax.f32 %v1064, 0.0
      %v1465 = vmax.f32 %v1069, 0.0
      %v1466 = vmax.f32 %v1072, 0.0
      %v1467 = vmax.f32 %v1077, 0.0
      %v1468 = vmax.f32 %v1080, 0.0
      %v1469 = vmax.f32 %v1085, 0.0
      %v1470 = vmax.f32 %v1088, 0.0
      %v1471 = vmax.f32 %v1093, 0.0
      %v1472 = vmax.f32 %v1096, 0.0
      %v1473 = vmax.f32 %v1101, 0.0
      %v1474 = vmax.f32 %v1104, 0.0
      %v1475 = vmax.f32 %v1109, 0.0
      %v1476 = vmax.f32 %v1112, 0.0
      %v1477 = vmax.f32 %v1117, 0.0
      %v1478 = vmax.f32 %v1120, 0.0
      %v1479 = vmax.f32 %v1125, 0.0
      %v1480 = vmax.f32 %v1128, 0.0
      %v1481 = vmax.f32 %v1133, 0.0
      %v1482 = vmax.f32 %v1136, 0.0
      %v1483 = vmax.f32 %v1141, 0.0
      %v1484 = vmax.f32 %v1144, 0.0
      %v1485 = vmax.f32 %v1149, 0.0
      %v1486 = vmax.f32 %v1152, 0.0
      %v1487 = vmax.f32 %v1157, 0.0
      %v1488 = vmax.f32 %v1160, 0.0
      %v1489 = vmax.f32 %v1165, 0.0
      %v1490 = vmax.f32 %v1168, 0.0
      %v1491 = vmax.f32 %v1173, 0.0
      %v1492 = vmax.f32 %v1176, 0.0
      %v1493 = vmax.f32 %v1181, 0.0
      %v1494 = vmax.f32 %v1184, 0.0
      %v1495 = vmax.f32 %v1189, 0.0
      %v1496 = vmax.f32 %v1192, 0.0
      %v1497 = vmax.f32 %v1197, 0.0
      %v1498 = vmax.f32 %v1200, 0.0
      %v1499 = vmax.f32 %v1205, 0.0
      %v1500 = vmax.f32 %v1208, 0.0
      %v1501 = vmax.f32 %v1213, 0.0
      %v1502 = vmax.f32 %v1216, 0.0
      %v1503 = vmax.f32 %v1221, 0.0
      %v1504 = vmax.f32 %v1224, 0.0
      %v1505 = vmax.f32 %v1229, 0.0
      %v1506 = vmax.f32 %v1232, 0.0
      %v1507 = vmax.f32 %v1237, 0.0
      %v1508 = vmax.f32 %v1240, 0.0
      %v1509 = vmax.f32 %v1245, 0.0
      %v1510 = vmax.f32 %v1248, 0.0
      %v1511 = vmax.f32 %v1253, 0.0
      %v1512 = vmax.f32 %v1256, 0.0
      %v1513 = vmax.f32 %v1261, 0.0
      %v1514 = vmax.f32 %v1264, 0.0
      %v1515 = vmax.f32 %v1269, 0.0
      %v1516 = vmax.f32 %v1272, 0.0
      %v1517 = vmax.f32 %v1277, 0.0
      %v1518 = vmax.f32 %v1280, 0.0
      %v1519 = vmax.f32 %v1285, 0.0
      %v1520 = vmax.f32 %v1288, 0.0
      %v1521 = vmax.f32 %v1293, 0.0
      %v1522 = vmax.f32 %v1296, 0.0
      %v1523 = vmax.f32 %v1301, 0.0
      %v1524 = vmax.f32 %v1304, 0.0
      %v1525 = vmax.f32 %v1309, 0.0
      %v1526 = vmax.f32 %v1312, 0.0
      %v1527 = vmax.f32 %v1317, 0.0
      %v1528 = vmax.f32 %v1320, 0.0
      %v1529 = vmax.f32 %v1325, 0.0
      %v1530 = vmax.f32 %v1328, 0.0
      %v1531 = vmax.f32 %v1333, 0.0
      %v1532 = vmax.f32 %v1336, 0.0
      %v1533 = vmax.f32 %v1341, 0.0
      %v1534 = vmax.f32 %v1344, 0.0
      %v1535 = vmax.f32 %v1349, 0.0
      %v1536 = vmax.f32 %v1352, 0.0
      %v1537 = vmax.f32 %v1357, 0.0
      %v1538 = vmax.f32 %v1360, 0.0
      %v1539 = vmax.f32 %v1365, 0.0
      %v1540 = vmax.f32 %v1368, 0.0
      %v1541 = vmax.f32 %v1373, 0.0
      %v1542 = vmax.f32 %v1376, 0.0
      %v1543 = vmax.f32 %v1381, 0.0
      %v1544 = vmax.f32 %v1384, 0.0
      %v1545 = vmax.f32 %v1389, 0.0
      %v1546 = vmax.f32 %v1392, 0.0
      %v1547 = vmax.f32 %v1397, 0.0
      %v1548 = vmax.f32 %v1400, 0.0
      %v1549 = vmax.f32 %v1405, 0.0
      %v1550 = vmax.f32 %v1408, 0.0
      %v1551 = vmax.f32 %v1413, 0.0
      %v1552 = vmax.f32 %v1416, 0.0
      %v1553 = vmax.f32 %v1421, 0.0
      %v1554 = vmax.f32 %v1424, 0.0
      %v1555 = vmin.f32 %v1427, 6.0
      %v1556 = vmin.f32 %v1428, 6.0
      %v1557 = vmin.f32 %v1429, 6.0
      %v1558 = vmin.f32 %v1430, 6.0
      %v1559 = vmin.f32 %v1431, 6.0
      %v1560 = vmin.f32 %v1432, 6.0
      %v1561 = vmin.f32 %v1433, 6.0
      %v1562 = vmin.f32 %v1434, 6.0
      %v1563 = vmin.f32 %v1435, 6.0
      %v1564 = vmin.f32 %v1436, 6.0
      %v1565 = vmin.f32 %v1437, 6.0
      %v1566 = vmin.f32 %v1438, 6.0
      %v1567 = vmin.f32 %v1439, 6.0
      %v1568 = vmin.f32 %v1440, 6.0
      %v1569 = vmin.f32 %v1441, 6.0
      %v1570 = vmin.f32 %v1442, 6.0
      %v1571 = vmin.f32 %v1443, 6.0
      %v1572 = vmin.f32 %v1444, 6.0
      %v1573 = vmin.f32 %v1445, 6.0
      %v1574 = vmin.f32 %v1446, 6.0
      %v1575 = vmin.f32 %v1447, 6.0
      %v1576 = vmin.f32 %v1448, 6.0
      %v1577 = vmin.f32 %v1449, 6.0
      %v1578 = vmin.f32 %v1450, 6.0
      %v1579 = vmin.f32 %v1451, 6.0
      %v1580 = vmin.f32 %v1452, 6.0
      %v1581 = vmin.f32 %v1453, 6.0
      %v1582 = vmin.f32 %v1454, 6.0
      %v1583 = vmin.f32 %v1455, 6.0
      %v1584 = vmin.f32 %v1456, 6.0
      %v1585 = vmin.f32 %v1457, 6.0
      %v1586 = vmin.f32 %v1458, 6.0
      %v1587 = vmin.f32 %v1459, 6.0
      %v1588 = vmin.f32 %v1460, 6.0
      %v1589 = vmin.f32 %v1461, 6.0
      %v1590 = vmin.f32 %v1462, 6.0
      %v1591 = vmin.f32 %v1463, 6.0
      %v1592 = vmin.f32 %v1464, 6.0
      %v1593 = vmin.f32 %v1465, 6.0
      %v1594 = vmin.f32 %v1466, 6.0
      %v1595 = vmin.f32 %v1467, 6.0
      %v1596 = vmin.f32 %v1468, 6.0
      %v1597 = vmin.f32 %v1469, 6.0
      %v1598 = vmin.f32 %v1470, 6.0
      %v1599 = vmin.f32 %v1471, 6.0
      %v1600 = vmin.f32 %v1472, 6.0
      %v1601 = vmin.f32 %v1473, 6.0
      %v1602 = vmin.f32 %v1474, 6.0
      %v1603 = vmin.f32 %v1475, 6.0
      %v1604 = vmin.f32 %v1476, 6.0
      %v1605 = vmin.f32 %v1477, 6.0
      %v1606 = vmin.f32 %v1478, 6.0
      %v1607 = vmin.f32 %v1479, 6.0
      %v1608 = vmin.f32 %v1480, 6.0
      %v1609 = vmin.f32 %v1481, 6.0
      %v1610 = vmin.f32 %v1482, 6.0
      %v1611 = vmin.f32 %v1483, 6.0
      %v1612 = vmin.f32 %v1484, 6.0
      %v1613 = vmin.f32 %v1485, 6.0
      %v1614 = vmin.f32 %v1486, 6.0
      %v1615 = vmin.f32 %v1487, 6.0
      %v1616 = vmin.f32 %v1488, 6.0
      %v1617 = vmin.f32 %v1489, 6.0
      %v1618 = vmin.f32 %v1490, 6.0
      %v1619 = vmin.f32 %v1491, 6.0
      %v1620 = vmin.f32 %v1492, 6.0
      %v1621 = vmin.f32 %v1493, 6.0
      %v1622 = vmin.f32 %v1494, 6.0
      %v1623 = vmin.f32 %v1495, 6.0
      %v1624 = vmin.f32 %v1496, 6.0
      %v1625 = vmin.f32 %v1497, 6.0
      %v1626 = vmin.f32 %v1498, 6.0
      %v1627 = vmin.f32 %v1499, 6.0
      %v1628 = vmin.f32 %v1500, 6.0
      %v1629 = vmin.f32 %v1501, 6.0
      %v1630 = vmin.f32 %v1502, 6.0
      %v1631 = vmin.f32 %v1503, 6.0
      %v1632 = vmin.f32 %v1504, 6.0
      %v1633 = vmin.f32 %v1505, 6.0
      %v1634 = vmin.f32 %v1506, 6.0
      %v1635 = vmin.f32 %v1507, 6.0
      %v1636 = vmin.f32 %v1508, 6.0
      %v1637 = vmin.f32 %v1509, 6.0
      %v1638 = vmin.f32 %v1510, 6.0
      %v1639 = vmin.f32 %v1511, 6.0
      %v1640 = vmin.f32 %v1512, 6.0
      %v1641 = vmin.f32 %v1513, 6.0
      %v1642 = vmin.f32 %v1514, 6.0
      %v1643 = vmin.f32 %v1515, 6.0
      %v1644 = vmin.f32 %v1516, 6.0
      %v1645 = vmin.f32 %v1517, 6.0
      %v1646 = vmin.f32 %v1518, 6.0
      %v1647 = vmin.f32 %v1519, 6.0
      %v1648 = vmin.f32 %v1520, 6.0
      %v1649 = vmin.f32 %v1521, 6.0
      %v1650 = vmin.f32 %v1522, 6.0
      %v1651 = vmin.f32 %v1523, 6.0
      %v1652 = vmin.f32 %v1524, 6.0
      %v1653 = vmin.f32 %v1525, 6.0
      %v1654 = vmin.f32 %v1526, 6.0
      %v1655 = vmin.f32 %v1527, 6.0
      %v1656 = vmin.f32 %v1528, 6.0
      %v1657 = vmin.f32 %v1529, 6.0
      %v1658 = vmin.f32 %v1530, 6.0
      %v1659 = vmin.f32 %v1531, 6.0
      %v1660 = vmin.f32 %v1532, 6.0
      %v1661 = vmin.f32 %v1533, 6.0
      %v1662 = vmin.f32 %v1534, 6.0
      %v1663 = vmin.f32 %v1535, 6.0
      %v1664 = vmin.f32 %v1536, 6.0
      %v1665 = vmin.f32 %v1537, 6.0
      %v1666 = vmin.f32 %v1538, 6.0
      %v1667 = vmin.f32 %v1539, 6.0
      %v1668 = vmin.f32 %v1540, 6.0
      %v1669 = vmin.f32 %v1541, 6.0
      %v1670 = vmin.f32 %v1542, 6.0
      %v1671 = vmin.f32 %v1543, 6.0
      %v1672 = vmin.f32 %v1544, 6.0
      %v1673 = vmin.f32 %v1545, 6.0
      %v1674 = vmin.f32 %v1546, 6.0
      %v1675 = vmin.f32 %v1547, 6.0
      %v1676 = vmin.f32 %v1548, 6.0
      %v1677 = vmin.f32 %v1549, 6.0
      %v1678 = vmin.f32 %v1550, 6.0
      %v1679 = vmin.f32 %v1551, 6.0
      %v1680 = vmin.f32 %v1552, 6.0
      %v1681 = vmin.f32 %v1553, 6.0
      %v1682 = vmin.f32 %v1554, 6.0
      %v1683 = vpack.c.bf16 %v1556, %v1555
      %v1684 = vpack.c.bf16 %v1558, %v1557
      %v1685 = vpack.c.bf16 %v1560, %v1559
      %v1686 = vpack.c.bf16 %v1562, %v1561
      %v1687 = vpack.c.bf16 %v1564, %v1563
      %v1688 = vpack.c.bf16 %v1566, %v1565
      %v1689 = vpack.c.bf16 %v1568, %v1567
      %v1690 = vpack.c.bf16 %v1570, %v1569
      %v1691 = vpack.c.bf16 %v1572, %v1571
      %v1692 = vpack.c.bf16 %v1574, %v1573
      %v1693 = vpack.c.bf16 %v1576, %v1575
      %v1694 = vpack.c.bf16 %v1578, %v1577
      %v1695 = vpack.c.bf16 %v1580, %v1579
      %v1696 = vpack.c.bf16 %v1582, %v1581
      %v1697 = vpack.c.bf16 %v1584, %v1583
      %v1698 = vpack.c.bf16 %v1586, %v1585
      %v1699 = vpack.c.bf16 %v1588, %v1587
      %v1700 = vpack.c.bf16 %v1590, %v1589
      %v1701 = vpack.c.bf16 %v1592, %v1591
      %v1702 = vpack.c.bf16 %v1594, %v1593
      %v1703 = vpack.c.bf16 %v1596, %v1595
      %v1704 = vpack.c.bf16 %v1598, %v1597
      %v1705 = vpack.c.bf16 %v1600, %v1599
      %v1706 = vpack.c.bf16 %v1602, %v1601
      %v1707 = vpack.c.bf16 %v1604, %v1603
      %v1708 = vpack.c.bf16 %v1606, %v1605
      %v1709 = vpack.c.bf16 %v1608, %v1607
      %v1710 = vpack.c.bf16 %v1610, %v1609
      %v1711 = vpack.c.bf16 %v1612, %v1611
      %v1712 = vpack.c.bf16 %v1614, %v1613
      %v1713 = vpack.c.bf16 %v1616, %v1615
      %v1714 = vpack.c.bf16 %v1618, %v1617
      %v1715 = vpack.c.bf16 %v1620, %v1619
      %v1716 = vpack.c.bf16 %v1622, %v1621
      %v1717 = vpack.c.bf16 %v1624, %v1623
      %v1718 = vpack.c.bf16 %v1626, %v1625
      %v1719 = vpack.c.bf16 %v1628, %v1627
      %v1720 = vpack.c.bf16 %v1630, %v1629
      %v1721 = vpack.c.bf16 %v1632, %v1631
      %v1722 = vpack.c.bf16 %v1634, %v1633
      %v1723 = vpack.c.bf16 %v1636, %v1635
      %v1724 = vpack.c.bf16 %v1638, %v1637
      %v1725 = vpack.c.bf16 %v1640, %v1639
      %v1726 = vpack.c.bf16 %v1642, %v1641
      %v1727 = vpack.c.bf16 %v1644, %v1643
      %v1728 = vpack.c.bf16 %v1646, %v1645
      %v1729 = vpack.c.bf16 %v1648, %v1647
      %v1730 = vpack.c.bf16 %v1650, %v1649
      %v1731 = vpack.c.bf16 %v1652, %v1651
      %v1732 = vpack.c.bf16 %v1654, %v1653
      %v1733 = vpack.c.bf16 %v1656, %v1655
      %v1734 = vpack.c.bf16 %v1658, %v1657
      %v1735 = vpack.c.bf16 %v1660, %v1659
      %v1736 = vpack.c.bf16 %v1662, %v1661
      %v1737 = vpack.c.bf16 %v1664, %v1663
      %v1738 = vpack.c.bf16 %v1666, %v1665
      %v1739 = vpack.c.bf16 %v1668, %v1667
      %v1740 = vpack.c.bf16 %v1670, %v1669
      %v1741 = vpack.c.bf16 %v1672, %v1671
      %v1742 = vpack.c.bf16 %v1674, %v1673
      %v1743 = vpack.c.bf16 %v1676, %v1675
      %v1744 = vpack.c.bf16 %v1678, %v1677
      %v1745 = vpack.c.bf16 %v1680, %v1679
      %v1746 = vpack.c.bf16 %v1682, %v1681
      %v1811 = vunpack.c.l.b16 %v1683
      %v1812 = vunpack.c.h.b16 %v1683
      %v1813 = vunpack.c.l.b16 %v1684
      %v1814 = vunpack.c.h.b16 %v1684
      %v1815 = vunpack.c.l.b16 %v1685
      %v1816 = vunpack.c.h.b16 %v1685
      %v1817 = vunpack.c.l.b16 %v1686
      %v1818 = vunpack.c.h.b16 %v1686
      %v1819 = vunpack.c.l.b16 %v1687
      %v1820 = vunpack.c.h.b16 %v1687
      %v1821 = vunpack.c.l.b16 %v1688
      %v1822 = vunpack.c.h.b16 %v1688
      %v1823 = vunpack.c.l.b16 %v1689
      %v1824 = vunpack.c.h.b16 %v1689
      %v1825 = vunpack.c.l.b16 %v1690
      %v1826 = vunpack.c.h.b16 %v1690
      %v1827 = vunpack.c.l.b16 %v1691
      %v1828 = vunpack.c.h.b16 %v1691
      %v1829 = vunpack.c.l.b16 %v1692
      %v1830 = vunpack.c.h.b16 %v1692
      %v1831 = vunpack.c.l.b16 %v1693
      %v1832 = vunpack.c.h.b16 %v1693
      %v1833 = vunpack.c.l.b16 %v1694
      %v1834 = vunpack.c.h.b16 %v1694
      %v1835 = vunpack.c.l.b16 %v1695
      %v1836 = vunpack.c.h.b16 %v1695
      %v1837 = vunpack.c.l.b16 %v1696
      %v1838 = vunpack.c.h.b16 %v1696
      %v1839 = vunpack.c.l.b16 %v1697
      %v1840 = vunpack.c.h.b16 %v1697
      %v1841 = vunpack.c.l.b16 %v1698
      %v1842 = vunpack.c.h.b16 %v1698
      %v1843 = vunpack.c.l.b16 %v1699
      %v1844 = vunpack.c.h.b16 %v1699
      %v1845 = vunpack.c.l.b16 %v1700
      %v1846 = vunpack.c.h.b16 %v1700
      %v1847 = vunpack.c.l.b16 %v1701
      %v1848 = vunpack.c.h.b16 %v1701
      %v1849 = vunpack.c.l.b16 %v1702
      %v1850 = vunpack.c.h.b16 %v1702
      %v1851 = vunpack.c.l.b16 %v1703
      %v1852 = vunpack.c.h.b16 %v1703
      %v1853 = vunpack.c.l.b16 %v1704
      %v1854 = vunpack.c.h.b16 %v1704
      %v1855 = vunpack.c.l.b16 %v1705
      %v1856 = vunpack.c.h.b16 %v1705
      %v1857 = vunpack.c.l.b16 %v1706
      %v1858 = vunpack.c.h.b16 %v1706
      %v1859 = vunpack.c.l.b16 %v1707
      %v1860 = vunpack.c.h.b16 %v1707
      %v1861 = vunpack.c.l.b16 %v1708
      %v1862 = vunpack.c.h.b16 %v1708
      %v1863 = vunpack.c.l.b16 %v1709
      %v1864 = vunpack.c.h.b16 %v1709
      %v1865 = vunpack.c.l.b16 %v1710
      %v1866 = vunpack.c.h.b16 %v1710
      %v1867 = vunpack.c.l.b16 %v1711
      %v1868 = vunpack.c.h.b16 %v1711
      %v1869 = vunpack.c.l.b16 %v1712
      %v1870 = vunpack.c.h.b16 %v1712
      %v1871 = vunpack.c.l.b16 %v1713
      %v1872 = vunpack.c.h.b16 %v1713
      %v1873 = vunpack.c.l.b16 %v1714
      %v1874 = vunpack.c.h.b16 %v1714
      %v1875 = vunpack.c.l.b16 %v1715
      %v1876 = vunpack.c.h.b16 %v1715
      %v1877 = vunpack.c.l.b16 %v1716
      %v1878 = vunpack.c.h.b16 %v1716
      %v1879 = vunpack.c.l.b16 %v1717
      %v1880 = vunpack.c.h.b16 %v1717
      %v1881 = vunpack.c.l.b16 %v1718
      %v1882 = vunpack.c.h.b16 %v1718
      %v1883 = vunpack.c.l.b16 %v1719
      %v1884 = vunpack.c.h.b16 %v1719
      %v1885 = vunpack.c.l.b16 %v1720
      %v1886 = vunpack.c.h.b16 %v1720
      %v1887 = vunpack.c.l.b16 %v1721
      %v1888 = vunpack.c.h.b16 %v1721
      %v1889 = vunpack.c.l.b16 %v1722
      %v1890 = vunpack.c.h.b16 %v1722
      %v1891 = vunpack.c.l.b16 %v1723
      %v1892 = vunpack.c.h.b16 %v1723
      %v1893 = vunpack.c.l.b16 %v1724
      %v1894 = vunpack.c.h.b16 %v1724
      %v1895 = vunpack.c.l.b16 %v1725
      %v1896 = vunpack.c.h.b16 %v1725
      %v1897 = vunpack.c.l.b16 %v1726
      %v1898 = vunpack.c.h.b16 %v1726
      %v1899 = vunpack.c.l.b16 %v1727
      %v1900 = vunpack.c.h.b16 %v1727
      %v1901 = vunpack.c.l.b16 %v1728
      %v1902 = vunpack.c.h.b16 %v1728
      %v1903 = vunpack.c.l.b16 %v1729
      %v1904 = vunpack.c.h.b16 %v1729
      %v1905 = vunpack.c.l.b16 %v1730
      %v1906 = vunpack.c.h.b16 %v1730
      %v1907 = vunpack.c.l.b16 %v1731
      %v1908 = vunpack.c.h.b16 %v1731
      %v1909 = vunpack.c.l.b16 %v1732
      %v1910 = vunpack.c.h.b16 %v1732
      %v1911 = vunpack.c.l.b16 %v1733
      %v1912 = vunpack.c.h.b16 %v1733
      %v1913 = vunpack.c.l.b16 %v1734
      %v1914 = vunpack.c.h.b16 %v1734
      %v1915 = vunpack.c.l.b16 %v1735
      %v1916 = vunpack.c.h.b16 %v1735
      %v1917 = vunpack.c.l.b16 %v1736
      %v1918 = vunpack.c.h.b16 %v1736
      %v1919 = vunpack.c.l.b16 %v1737
      %v1920 = vunpack.c.h.b16 %v1737
      %v1921 = vunpack.c.l.b16 %v1738
      %v1922 = vunpack.c.h.b16 %v1738
      %v1923 = vunpack.c.l.b16 %v1739
      %v1924 = vunpack.c.h.b16 %v1739
      %v1925 = vunpack.c.l.b16 %v1740
      %v1926 = vunpack.c.h.b16 %v1740
      %v1927 = vunpack.c.l.b16 %v1741
      %v1928 = vunpack.c.h.b16 %v1741
      %v1929 = vunpack.c.l.b16 %v1742
      %v1930 = vunpack.c.h.b16 %v1742
      %v1931 = vunpack.c.l.b16 %v1743
      %v1932 = vunpack.c.h.b16 %v1743
      %v1933 = vunpack.c.l.b16 %v1744
      %v1934 = vunpack.c.h.b16 %v1744
      %v1935 = vunpack.c.l.b16 %v1745
      %v1936 = vunpack.c.h.b16 %v1745
      %v1937 = vunpack.c.l.b16 %v1746
      %v1938 = vunpack.c.h.b16 %v1746
      %v1939 = vpack.c.b16 %v1811, %v1811
      %v1940 = vpack.c.b16 %v1812, %v1812
      %v1941 = vpack.c.b16 %v1813, %v1813
      %v1942 = vpack.c.b16 %v1814, %v1814
      %v1943 = vpack.c.b16 %v1815, %v1815
      %v1944 = vpack.c.b16 %v1816, %v1816
      %v1945 = vpack.c.b16 %v1817, %v1817
      %v1946 = vpack.c.b16 %v1818, %v1818
      %v1947 = vpack.c.b16 %v1819, %v1819
      %v1948 = vpack.c.b16 %v1820, %v1820
      %v1949 = vpack.c.b16 %v1821, %v1821
      %v1950 = vpack.c.b16 %v1822, %v1822
      %v1951 = vpack.c.b16 %v1823, %v1823
      %v1952 = vpack.c.b16 %v1824, %v1824
      %v1953 = vpack.c.b16 %v1825, %v1825
      %v1954 = vpack.c.b16 %v1826, %v1826
      %v1955 = vpack.c.b16 %v1827, %v1827
      %v1956 = vpack.c.b16 %v1828, %v1828
      %v1957 = vpack.c.b16 %v1829, %v1829
      %v1958 = vpack.c.b16 %v1830, %v1830
      %v1959 = vpack.c.b16 %v1831, %v1831
      %v1960 = vpack.c.b16 %v1832, %v1832
      %v1961 = vpack.c.b16 %v1833, %v1833
      %v1962 = vpack.c.b16 %v1834, %v1834
      %v1963 = vpack.c.b16 %v1835, %v1835
      %v1964 = vpack.c.b16 %v1836, %v1836
      %v1965 = vpack.c.b16 %v1837, %v1837
      %v1966 = vpack.c.b16 %v1838, %v1838
      %v1967 = vpack.c.b16 %v1839, %v1839
      %v1968 = vpack.c.b16 %v1840, %v1840
      %v1969 = vpack.c.b16 %v1841, %v1841
      %v1970 = vpack.c.b16 %v1842, %v1842
      %v1971 = vpack.c.b16 %v1843, %v1843
      %v1972 = vpack.c.b16 %v1844, %v1844
      %v1973 = vpack.c.b16 %v1845, %v1845
      %v1974 = vpack.c.b16 %v1846, %v1846
      %v1975 = vpack.c.b16 %v1847, %v1847
      %v1976 = vpack.c.b16 %v1848, %v1848
      %v1977 = vpack.c.b16 %v1849, %v1849
      %v1978 = vpack.c.b16 %v1850, %v1850
      %v1979 = vpack.c.b16 %v1851, %v1851
      %v1980 = vpack.c.b16 %v1852, %v1852
      %v1981 = vpack.c.b16 %v1853, %v1853
      %v1982 = vpack.c.b16 %v1854, %v1854
      %v1983 = vpack.c.b16 %v1855, %v1855
      %v1984 = vpack.c.b16 %v1856, %v1856
      %v1985 = vpack.c.b16 %v1857, %v1857
      %v1986 = vpack.c.b16 %v1858, %v1858
      %v1987 = vpack.c.b16 %v1859, %v1859
      %v1988 = vpack.c.b16 %v1860, %v1860
      %v1989 = vpack.c.b16 %v1861, %v1861
      %v1990 = vpack.c.b16 %v1862, %v1862
      %v1991 = vpack.c.b16 %v1863, %v1863
      %v1992 = vpack.c.b16 %v1864, %v1864
      %v1993 = vpack.c.b16 %v1865, %v1865
      %v1994 = vpack.c.b16 %v1866, %v1866
      %v1995 = vpack.c.b16 %v1867, %v1867
      %v1996 = vpack.c.b16 %v1868, %v1868
      %v1997 = vpack.c.b16 %v1869, %v1869
      %v1998 = vpack.c.b16 %v1870, %v1870
      %v1999 = vpack.c.b16 %v1871, %v1871
      %v2000 = vpack.c.b16 %v1872, %v1872
      %v2001 = vpack.c.b16 %v1873, %v1873
      %v2002 = vpack.c.b16 %v1874, %v1874
      %v2003 = vpack.c.b16 %v1875, %v1875
      %v2004 = vpack.c.b16 %v1876, %v1876
      %v2005 = vpack.c.b16 %v1877, %v1877
      %v2006 = vpack.c.b16 %v1878, %v1878
      %v2007 = vpack.c.b16 %v1879, %v1879
      %v2008 = vpack.c.b16 %v1880, %v1880
      %v2009 = vpack.c.b16 %v1881, %v1881
      %v2010 = vpack.c.b16 %v1882, %v1882
      %v2011 = vpack.c.b16 %v1883, %v1883
      %v2012 = vpack.c.b16 %v1884, %v1884
      %v2013 = vpack.c.b16 %v1885, %v1885
      %v2014 = vpack.c.b16 %v1886, %v1886
      %v2015 = vpack.c.b16 %v1887, %v1887
      %v2016 = vpack.c.b16 %v1888, %v1888
      %v2017 = vpack.c.b16 %v1889, %v1889
      %v2018 = vpack.c.b16 %v1890, %v1890
      %v2019 = vpack.c.b16 %v1891, %v1891
      %v2020 = vpack.c.b16 %v1892, %v1892
      %v2021 = vpack.c.b16 %v1893, %v1893
      %v2022 = vpack.c.b16 %v1894, %v1894
      %v2023 = vpack.c.b16 %v1895, %v1895
      %v2024 = vpack.c.b16 %v1896, %v1896
      %v2025 = vpack.c.b16 %v1897, %v1897
      %v2026 = vpack.c.b16 %v1898, %v1898
      %v2027 = vpack.c.b16 %v1899, %v1899
      %v2028 = vpack.c.b16 %v1900, %v1900
      %v2029 = vpack.c.b16 %v1901, %v1901
      %v2030 = vpack.c.b16 %v1902, %v1902
      %v2031 = vpack.c.b16 %v1903, %v1903
      %v2032 = vpack.c.b16 %v1904, %v1904
      %v2033 = vpack.c.b16 %v1905, %v1905
      %v2034 = vpack.c.b16 %v1906, %v1906
      %v2035 = vpack.c.b16 %v1907, %v1907
      %v2036 = vpack.c.b16 %v1908, %v1908
      %v2037 = vpack.c.b16 %v1909, %v1909
      %v2038 = vpack.c.b16 %v1910, %v1910
      %v2039 = vpack.c.b16 %v1911, %v1911
      %v2040 = vpack.c.b16 %v1912, %v1912
      %v2041 = vpack.c.b16 %v1913, %v1913
      %v2042 = vpack.c.b16 %v1914, %v1914
      %v2043 = vpack.c.b16 %v1915, %v1915
      %v2044 = vpack.c.b16 %v1916, %v1916
      %v2045 = vpack.c.b16 %v1917, %v1917
      %v2046 = vpack.c.b16 %v1918, %v1918
      %v2047 = vpack.c.b16 %v1919, %v1919
      %v2048 = vpack.c.b16 %v1920, %v1920
      %v2049 = vpack.c.b16 %v1921, %v1921
      %v2050 = vpack.c.b16 %v1922, %v1922
      %v2051 = vpack.c.b16 %v1923, %v1923
      %v2052 = vpack.c.b16 %v1924, %v1924
      %v2053 = vpack.c.b16 %v1925, %v1925
      %v2054 = vpack.c.b16 %v1926, %v1926
      %v2055 = vpack.c.b16 %v1927, %v1927
      %v2056 = vpack.c.b16 %v1928, %v1928
      %v2057 = vpack.c.b16 %v1929, %v1929
      %v2058 = vpack.c.b16 %v1930, %v1930
      %v2059 = vpack.c.b16 %v1931, %v1931
      %v2060 = vpack.c.b16 %v1932, %v1932
      %v2061 = vpack.c.b16 %v1933, %v1933
      %v2062 = vpack.c.b16 %v1934, %v1934
      %v2063 = vpack.c.b16 %v1935, %v1935
      %v2064 = vpack.c.b16 %v1936, %v1936
      %v2065 = vpack.c.b16 %v1937, %v1937
      %v2066 = vpack.c.b16 %v1938, %v1938
      %vm2195 = vcmask 781312
      %2196 = vst.msk [vmem:[%s223] sm:$0xf] %vm2195, %v1939
      %2197 = vst.msk [vmem:[%s223 + $0x4] sm:$0xf] %vm2195, %v1940
      %2198 = vst.msk [vmem:[%s223 + $0x8] sm:$0xf] %vm2195, %v1941
      %2199 = vst.msk [vmem:[%s223 + $0xc] sm:$0xf] %vm2195, %v1942
      %2200 = vst.msk [vmem:[%s223 + $0x10] sm:$0xf] %vm2195, %v1943
      %2201 = vst.msk [vmem:[%s223 + $0x14] sm:$0xf] %vm2195, %v1944
      %2202 = vst.msk [vmem:[%s223 + $0x18] sm:$0xf] %vm2195, %v1945
      %2203 = vst.msk [vmem:[%s223 + $0x1c] sm:$0xf] %vm2195, %v1946
      %2204 = vst.msk [vmem:[%s223 + $0x20] sm:$0xf] %vm2195, %v1947
      %2205 = vst.msk [vmem:[%s223 + $0x24] sm:$0xf] %vm2195, %v1948
      %2206 = vst.msk [vmem:[%s223 + $0x28] sm:$0xf] %vm2195, %v1949
      %2207 = vst.msk [vmem:[%s223 + $0x2c] sm:$0xf] %vm2195, %v1950
      %2208 = vst.msk [vmem:[%s223 + $0x30] sm:$0xf] %vm2195, %v1951
      %2209 = vst.msk [vmem:[%s223 + $0x34] sm:$0xf] %vm2195, %v1952
      %2210 = vst.msk [vmem:[%s223 + $0x38] sm:$0xf] %vm2195, %v1953
      %2211 = vst.msk [vmem:[%s223 + $0x3c] sm:$0xf] %vm2195, %v1954
      %2212 = vst.msk [vmem:[%s223 + $0x40] sm:$0xf] %vm2195, %v1955
      %2213 = vst.msk [vmem:[%s223 + $0x44] sm:$0xf] %vm2195, %v1956
      %2214 = vst.msk [vmem:[%s223 + $0x48] sm:$0xf] %vm2195, %v1957
      %2215 = vst.msk [vmem:[%s223 + $0x4c] sm:$0xf] %vm2195, %v1958
      %2216 = vst.msk [vmem:[%s223 + $0x50] sm:$0xf] %vm2195, %v1959
      %2217 = vst.msk [vmem:[%s223 + $0x54] sm:$0xf] %vm2195, %v1960
      %2218 = vst.msk [vmem:[%s223 + $0x58] sm:$0xf] %vm2195, %v1961
      %2219 = vst.msk [vmem:[%s223 + $0x5c] sm:$0xf] %vm2195, %v1962
      %2220 = vst.msk [vmem:[%s223 + $0x60] sm:$0xf] %vm2195, %v1963
      %2221 = vst.msk [vmem:[%s223 + $0x64] sm:$0xf] %vm2195, %v1964
      %2222 = vst.msk [vmem:[%s223 + $0x68] sm:$0xf] %vm2195, %v1965
      %2223 = vst.msk [vmem:[%s223 + $0x6c] sm:$0xf] %vm2195, %v1966
      %2224 = vst.msk [vmem:[%s223 + $0x70] sm:$0xf] %vm2195, %v1967
      %2225 = vst.msk [vmem:[%s223 + $0x74] sm:$0xf] %vm2195, %v1968
      %2226 = vst.msk [vmem:[%s223 + $0x78] sm:$0xf] %vm2195, %v1969
      %2227 = vst.msk [vmem:[%s223 + $0x7c] sm:$0xf] %vm2195, %v1970
      %2228 = vst.msk [vmem:[%s223 + $0x80] sm:$0xf] %vm2195, %v1971
      %2229 = vst.msk [vmem:[%s223 + $0x84] sm:$0xf] %vm2195, %v1972
      %2230 = vst.msk [vmem:[%s223 + $0x88] sm:$0xf] %vm2195, %v1973
      %2231 = vst.msk [vmem:[%s223 + $0x8c] sm:$0xf] %vm2195, %v1974
      %2232 = vst.msk [vmem:[%s223 + $0x90] sm:$0xf] %vm2195, %v1975
      %2233 = vst.msk [vmem:[%s223 + $0x94] sm:$0xf] %vm2195, %v1976
      %2234 = vst.msk [vmem:[%s223 + $0x98] sm:$0xf] %vm2195, %v1977
      %2235 = vst.msk [vmem:[%s223 + $0x9c] sm:$0xf] %vm2195, %v1978
      %2236 = vst.msk [vmem:[%s223 + $0xa0] sm:$0xf] %vm2195, %v1979
      %2237 = vst.msk [vmem:[%s223 + $0xa4] sm:$0xf] %vm2195, %v1980
      %2238 = vst.msk [vmem:[%s223 + $0xa8] sm:$0xf] %vm2195, %v1981
      %2239 = vst.msk [vmem:[%s223 + $0xac] sm:$0xf] %vm2195, %v1982
      %2240 = vst.msk [vmem:[%s223 + $0xb0] sm:$0xf] %vm2195, %v1983
      %2241 = vst.msk [vmem:[%s223 + $0xb4] sm:$0xf] %vm2195, %v1984
      %2242 = vst.msk [vmem:[%s223 + $0xb8] sm:$0xf] %vm2195, %v1985
      %2243 = vst.msk [vmem:[%s223 + $0xbc] sm:$0xf] %vm2195, %v1986
      %2244 = vst.msk [vmem:[%s223 + $0xc0] sm:$0xf] %vm2195, %v1987
      %2245 = vst.msk [vmem:[%s223 + $0xc4] sm:$0xf] %vm2195, %v1988
      %2246 = vst.msk [vmem:[%s223 + $0xc8] sm:$0xf] %vm2195, %v1989
      %2247 = vst.msk [vmem:[%s223 + $0xcc] sm:$0xf] %vm2195, %v1990
      %2248 = vst.msk [vmem:[%s223 + $0xd0] sm:$0xf] %vm2195, %v1991
      %2249 = vst.msk [vmem:[%s223 + $0xd4] sm:$0xf] %vm2195, %v1992
      %2250 = vst.msk [vmem:[%s223 + $0xd8] sm:$0xf] %vm2195, %v1993
      %2251 = vst.msk [vmem:[%s223 + $0xdc] sm:$0xf] %vm2195, %v1994
      %2252 = vst.msk [vmem:[%s223 + $0xe0] sm:$0xf] %vm2195, %v1995
      %2253 = vst.msk [vmem:[%s223 + $0xe4] sm:$0xf] %vm2195, %v1996
      %2254 = vst.msk [vmem:[%s223 + $0xe8] sm:$0xf] %vm2195, %v1997
      %2255 = vst.msk [vmem:[%s223 + $0xec] sm:$0xf] %vm2195, %v1998
      %2256 = vst.msk [vmem:[%s223 + $0xf0] sm:$0xf] %vm2195, %v1999
      %2257 = vst.msk [vmem:[%s223 + $0xf4] sm:$0xf] %vm2195, %v2000
      %2258 = vst.msk [vmem:[%s223 + $0xf8] sm:$0xf] %vm2195, %v2001
      %2259 = vst.msk [vmem:[%s223 + $0xfc] sm:$0xf] %vm2195, %v2002
      %2260 = vst.msk [vmem:[%s223 + $0x100] sm:$0xf] %vm2195, %v2003
      %2261 = vst.msk [vmem:[%s223 + $0x104] sm:$0xf] %vm2195, %v2004
      %2262 = vst.msk [vmem:[%s223 + $0x108] sm:$0xf] %vm2195, %v2005
      %2263 = vst.msk [vmem:[%s223 + $0x10c] sm:$0xf] %vm2195, %v2006
      %2264 = vst.msk [vmem:[%s223 + $0x110] sm:$0xf] %vm2195, %v2007
      %2265 = vst.msk [vmem:[%s223 + $0x114] sm:$0xf] %vm2195, %v2008
      %2266 = vst.msk [vmem:[%s223 + $0x118] sm:$0xf] %vm2195, %v2009
      %2267 = vst.msk [vmem:[%s223 + $0x11c] sm:$0xf] %vm2195, %v2010
      %2268 = vst.msk [vmem:[%s223 + $0x120] sm:$0xf] %vm2195, %v2011
      %2269 = vst.msk [vmem:[%s223 + $0x124] sm:$0xf] %vm2195, %v2012
      %2270 = vst.msk [vmem:[%s223 + $0x128] sm:$0xf] %vm2195, %v2013
      %2271 = vst.msk [vmem:[%s223 + $0x12c] sm:$0xf] %vm2195, %v2014
      %2272 = vst.msk [vmem:[%s223 + $0x130] sm:$0xf] %vm2195, %v2015
      %2273 = vst.msk [vmem:[%s223 + $0x134] sm:$0xf] %vm2195, %v2016
      %2274 = vst.msk [vmem:[%s223 + $0x138] sm:$0xf] %vm2195, %v2017
      %2275 = vst.msk [vmem:[%s223 + $0x13c] sm:$0xf] %vm2195, %v2018
      %2276 = vst.msk [vmem:[%s223 + $0x140] sm:$0xf] %vm2195, %v2019
      %2277 = vst.msk [vmem:[%s223 + $0x144] sm:$0xf] %vm2195, %v2020
      %2278 = vst.msk [vmem:[%s223 + $0x148] sm:$0xf] %vm2195, %v2021
      %2279 = vst.msk [vmem:[%s223 + $0x14c] sm:$0xf] %vm2195, %v2022
      %2280 = vst.msk [vmem:[%s223 + $0x150] sm:$0xf] %vm2195, %v2023
      %2281 = vst.msk [vmem:[%s223 + $0x154] sm:$0xf] %vm2195, %v2024
      %2282 = vst.msk [vmem:[%s223 + $0x158] sm:$0xf] %vm2195, %v2025
      %2283 = vst.msk [vmem:[%s223 + $0x15c] sm:$0xf] %vm2195, %v2026
      %2284 = vst.msk [vmem:[%s223 + $0x160] sm:$0xf] %vm2195, %v2027
      %2285 = vst.msk [vmem:[%s223 + $0x164] sm:$0xf] %vm2195, %v2028
      %2286 = vst.msk [vmem:[%s223 + $0x168] sm:$0xf] %vm2195, %v2029
      %2287 = vst.msk [vmem:[%s223 + $0x16c] sm:$0xf] %vm2195, %v2030
      %2288 = vst.msk [vmem:[%s223 + $0x170] sm:$0xf] %vm2195, %v2031
      %2289 = vst.msk [vmem:[%s223 + $0x174] sm:$0xf] %vm2195, %v2032
      %2290 = vst.msk [vmem:[%s223 + $0x178] sm:$0xf] %vm2195, %v2033
      %2291 = vst.msk [vmem:[%s223 + $0x17c] sm:$0xf] %vm2195, %v2034
      %2292 = vst.msk [vmem:[%s223 + $0x180] sm:$0xf] %vm2195, %v2035
      %2293 = vst.msk [vmem:[%s223 + $0x184] sm:$0xf] %vm2195, %v2036
      %2294 = vst.msk [vmem:[%s223 + $0x188] sm:$0xf] %vm2195, %v2037
      %2295 = vst.msk [vmem:[%s223 + $0x18c] sm:$0xf] %vm2195, %v2038
      %2296 = vst.msk [vmem:[%s223 + $0x190] sm:$0xf] %vm2195, %v2039
      %2297 = vst.msk [vmem:[%s223 + $0x194] sm:$0xf] %vm2195, %v2040
      %2298 = vst.msk [vmem:[%s223 + $0x198] sm:$0xf] %vm2195, %v2041
      %2299 = vst.msk [vmem:[%s223 + $0x19c] sm:$0xf] %vm2195, %v2042
      %2300 = vst.msk [vmem:[%s223 + $0x1a0] sm:$0xf] %vm2195, %v2043
      %2301 = vst.msk [vmem:[%s223 + $0x1a4] sm:$0xf] %vm2195, %v2044
      %2302 = vst.msk [vmem:[%s223 + $0x1a8] sm:$0xf] %vm2195, %v2045
      %2303 = vst.msk [vmem:[%s223 + $0x1ac] sm:$0xf] %vm2195, %v2046
      %2304 = vst.msk [vmem:[%s223 + $0x1b0] sm:$0xf] %vm2195, %v2047
      %2305 = vst.msk [vmem:[%s223 + $0x1b4] sm:$0xf] %vm2195, %v2048
      %2306 = vst.msk [vmem:[%s223 + $0x1b8] sm:$0xf] %vm2195, %v2049
      %2307 = vst.msk [vmem:[%s223 + $0x1bc] sm:$0xf] %vm2195, %v2050
      %2308 = vst.msk [vmem:[%s223 + $0x1c0] sm:$0xf] %vm2195, %v2051
      %2309 = vst.msk [vmem:[%s223 + $0x1c4] sm:$0xf] %vm2195, %v2052
      %2310 = vst.msk [vmem:[%s223 + $0x1c8] sm:$0xf] %vm2195, %v2053
      %2311 = vst.msk [vmem:[%s223 + $0x1cc] sm:$0xf] %vm2195, %v2054
      %2312 = vst.msk [vmem:[%s223 + $0x1d0] sm:$0xf] %vm2195, %v2055
      %2313 = vst.msk [vmem:[%s223 + $0x1d4] sm:$0xf] %vm2195, %v2056
      %2314 = vst.msk [vmem:[%s223 + $0x1d8] sm:$0xf] %vm2195, %v2057
      %2315 = vst.msk [vmem:[%s223 + $0x1dc] sm:$0xf] %vm2195, %v2058
      %2316 = vst.msk [vmem:[%s223 + $0x1e0] sm:$0xf] %vm2195, %v2059
      %2317 = vst.msk [vmem:[%s223 + $0x1e4] sm:$0xf] %vm2195, %v2060
      %2318 = vst.msk [vmem:[%s223 + $0x1e8] sm:$0xf] %vm2195, %v2061
      %2319 = vst.msk [vmem:[%s223 + $0x1ec] sm:$0xf] %vm2195, %v2062
      %2320 = vst.msk [vmem:[%s223 + $0x1f0] sm:$0xf] %vm2195, %v2063
      %2321 = vst.msk [vmem:[%s223 + $0x1f4] sm:$0xf] %vm2195, %v2064
      %2322 = vst.msk [vmem:[%s223 + $0x1f8] sm:$0xf] %vm2195, %v2065
      %2323 = vst.msk [vmem:[%s223 + $0x1fc] sm:$0xf] %vm2195, %v2066
      %s2324 = smul.u32 128, %s18
      %p2325 = scmp.lt.s32.totalorder %s2324, 255
      %s2326 = scalar_select %p2325, %s2324, 255
      %p2327 = scmp.lt.s32.totalorder %s19, 0
      %s2328 = scalar_select %p2327, %s19, 0
      %s2329 = sadd.s32 %s2328, %s2326
      %s2330 = smul.addr %s2329, 4
      %s2331 = scalar_lea.vmem %s3, %s2330
      // Predicated region
      $region33: #{_lambda_.8} parent=31 // pred_check
        %p2332 = pneg %p124
      $region34: #{_lambda_.8} parent=31 // pred_check_branch
        %2334 = sbr.rel (%p2332) target = $region36
      $region35: #{_lambda_.8} parent=31 // pred_region
        %s2335 = smul.u32 128, %s18
      $region36: #{_lambda_.8} parent=31 // pred_fallthru
        _
    $region32: #{_lambda_.8} parent=5 // pred_fallthru
      _
    %p2336 = scmp.le.s32.totalorder 2, %s9
    // Predicated region
    $region37: #{_lambda_.8} parent=5 // pred_check
      %p2337 = pneg %p2336
    $region38: #{_lambda_.8} parent=5 // pred_check_branch
      %2339 = sbr.rel (%p2337) target = $region40
    $region39: #{_lambda_.8} parent=5 // pred_region
      %s2340 = ssub.s32 %s9, 2
      // Predicated region
      $region41: #{_lambda_.8} parent=39 // pred_check
        %p2341 = pneg %p130
      $region42: #{_lambda_.8} parent=39 // pred_check_branch
        %2343 = sbr.rel (%p2341) target = $region44
      $region43: #{_lambda_.8} parent=39 // pred_region
        %s2344 = smul.u32 128, %s20
        %p2345 = scmp.lt.s32.totalorder %s2344, 255
        %s2346 = scalar_select %p2345, %s2344, 255
        %p2347 = scmp.lt.s32.totalorder %s21, 0
        %s2348 = scalar_select %p2347, %s21, 0
        %s2349 = sadd.s32 %s2348, %s2346
        %s2350 = smul.addr %s2349, 4
        %s2351 = scalar_lea.vmem %s3, %s2350
      $region44: #{_lambda_.8} parent=39 // pred_fallthru
        _
    $region40: #{_lambda_.8} parent=5 // pred_fallthru
      _
  $region6: #{_lambda_.8} parent=0 // loop_footer
    %s13 = sadd.s32 1, %s9
  $region7: #{_lambda_.8} parent=0 // loop_footer_branch
    %8 = sbr.rel target = $region3
  $region8: #{_lambda_.8} parent=0 // loop_exit
    _

// kernel: _lambda_.9
$region0: #{_lambda_.9}
  #allocation0 [shape = 'u32[]', space=smem, size = 0x4, offset = 0x4, fixed_abs, tag = 'smem constant byte address 0x4 - core index']
  #allocation1 [shape = 'u32[144,128]{1,0:T(1,128)}', space=vmem, size = 0x12000, scoped, tag = 'internal scratch']
  %s0 = inlined_call_operand.vmem [shape: bf16[512,96], index: 0, kind: input, shape index: {}]
  %s1 = inlined_call_operand.vmem [shape: bf16[96,24], index: 1, kind: input, shape index: {}]
  %s2 = inlined_call_operand.vmem [shape: f32[1,24], index: 2, kind: input, shape index: {}]
  %s3 = inlined_call_operand.vmem [shape: bf16[512,24], index: 3, kind: output, shape index: {}]
  %s4 = sld [smem:[#allocation0]]
  $region22: #{_lambda_.9} parent=0
    _
  %s6 = ssub.s32 1, %s4
  %s7 = scalar_select 0, %s6, %s4
  // Predicated region
  $region2: #{_lambda_.9} parent=0 // pred_check
    _
  $region3: #{_lambda_.9} parent=0 // pred_check_branch
    %9 = sbr.rel (0) target = $region5
  $region4: #{_lambda_.9} parent=0 // pred_region
    _
  $region5: #{_lambda_.9} parent=0 // pred_fallthru
    _
  // Predicated region
  $region6: #{_lambda_.9} parent=0 // pred_check
    _
  $region7: #{_lambda_.9} parent=0 // pred_check_branch
    %11 = sbr.rel (0) target = $region9
  $region8: #{_lambda_.9} parent=0 // pred_region
    _
  $region9: #{_lambda_.9} parent=0 // pred_fallthru
    _
  // Predicated region
  $region10: #{_lambda_.9} parent=0 // pred_check
    _
  $region11: #{_lambda_.9} parent=0 // pred_check_branch
    %13 = sbr.rel (0) target = $region13
  $region12: #{_lambda_.9} parent=0 // pred_region
    _
  $region13: #{_lambda_.9} parent=0 // pred_fallthru
    _
  %v15 = vld [vmem:[%s0] sm:$0xf]
  %v16 = vld [vmem:[%s0 + $0x4] sm:$0xf]
  %v17 = vld [vmem:[%s0 + $0x8] sm:$0xf]
  %v18 = vld [vmem:[%s0 + $0xc] sm:$0xf]
  %v19 = vld [vmem:[%s0 + $0x10] sm:$0xf]
  %v20 = vld [vmem:[%s0 + $0x14] sm:$0xf]
  %v21 = vld [vmem:[%s0 + $0x18] sm:$0xf]
  %v22 = vld [vmem:[%s0 + $0x1c] sm:$0xf]
  %v23 = vld [vmem:[%s0 + $0x20] sm:$0xf]
  %v24 = vld [vmem:[%s0 + $0x24] sm:$0xf]
  %v25 = vld [vmem:[%s0 + $0x28] sm:$0xf]
  %v26 = vld [vmem:[%s0 + $0x2c] sm:$0xf]
  %v27 = vld [vmem:[%s0 + $0x30] sm:$0xf]
  %v28 = vld [vmem:[%s0 + $0x34] sm:$0xf]
  %v29 = vld [vmem:[%s0 + $0x38] sm:$0xf]
  %v30 = vld [vmem:[%s0 + $0x3c] sm:$0xf]
  %v31 = vld [vmem:[%s0 + $0x40] sm:$0xf]
  %v32 = vld [vmem:[%s0 + $0x44] sm:$0xf]
  %v33 = vld [vmem:[%s0 + $0x48] sm:$0xf]
  %v34 = vld [vmem:[%s0 + $0x4c] sm:$0xf]
  %v35 = vld [vmem:[%s0 + $0x50] sm:$0xf]
  %v36 = vld [vmem:[%s0 + $0x54] sm:$0xf]
  %v37 = vld [vmem:[%s0 + $0x58] sm:$0xf]
  %v38 = vld [vmem:[%s0 + $0x5c] sm:$0xf]
  %v39 = vld [vmem:[%s0 + $0x60] sm:$0xf]
  %v40 = vld [vmem:[%s0 + $0x64] sm:$0xf]
  %v41 = vld [vmem:[%s0 + $0x68] sm:$0xf]
  %v42 = vld [vmem:[%s0 + $0x6c] sm:$0xf]
  %v43 = vld [vmem:[%s0 + $0x70] sm:$0xf]
  %v44 = vld [vmem:[%s0 + $0x74] sm:$0xf]
  %v45 = vld [vmem:[%s0 + $0x78] sm:$0xf]
  %v46 = vld [vmem:[%s0 + $0x7c] sm:$0xf]
  %v47 = vld [vmem:[%s0 + $0x80] sm:$0xf]
  %v48 = vld [vmem:[%s0 + $0x84] sm:$0xf]
  %v49 = vld [vmem:[%s0 + $0x88] sm:$0xf]
  %v50 = vld [vmem:[%s0 + $0x8c] sm:$0xf]
  %v51 = vld [vmem:[%s0 + $0x90] sm:$0xf]
  %v52 = vld [vmem:[%s0 + $0x94] sm:$0xf]
  %v53 = vld [vmem:[%s0 + $0x98] sm:$0xf]
  %v54 = vld [vmem:[%s0 + $0x9c] sm:$0xf]
  %v55 = vld [vmem:[%s0 + $0xa0] sm:$0xf]
  %v56 = vld [vmem:[%s0 + $0xa4] sm:$0xf]
  %v57 = vld [vmem:[%s0 + $0xa8] sm:$0xf]
  %v58 = vld [vmem:[%s0 + $0xac] sm:$0xf]
  %v59 = vld [vmem:[%s0 + $0xb0] sm:$0xf]
  %v60 = vld [vmem:[%s0 + $0xb4] sm:$0xf]
  %v61 = vld [vmem:[%s0 + $0xb8] sm:$0xf]
  %v62 = vld [vmem:[%s0 + $0xbc] sm:$0xf]
  %v63 = vld [vmem:[%s0 + $0xc0] sm:$0xf]
  %v64 = vld [vmem:[%s0 + $0xc4] sm:$0xf]
  %v65 = vld [vmem:[%s0 + $0xc8] sm:$0xf]
  %v66 = vld [vmem:[%s0 + $0xcc] sm:$0xf]
  %v67 = vld [vmem:[%s0 + $0xd0] sm:$0xf]
  %v68 = vld [vmem:[%s0 + $0xd4] sm:$0xf]
  %v69 = vld [vmem:[%s0 + $0xd8] sm:$0xf]
  %v70 = vld [vmem:[%s0 + $0xdc] sm:$0xf]
  %v71 = vld [vmem:[%s0 + $0xe0] sm:$0xf]
  %v72 = vld [vmem:[%s0 + $0xe4] sm:$0xf]
  %v73 = vld [vmem:[%s0 + $0xe8] sm:$0xf]
  %v74 = vld [vmem:[%s0 + $0xec] sm:$0xf]
  %v75 = vld [vmem:[%s0 + $0xf0] sm:$0xf]
  %v76 = vld [vmem:[%s0 + $0xf4] sm:$0xf]
  %v77 = vld [vmem:[%s0 + $0xf8] sm:$0xf]
  %v78 = vld [vmem:[%s0 + $0xfc] sm:$0xf]
  %v79 = vld [vmem:[%s1] sm:$0xf]
  %v80 = vld [vmem:[%s1 + $0x4] sm:$0xf]
  %v81 = vld [vmem:[%s1 + $0x8] sm:$0xf]
  %v82 = vld [vmem:[%s1 + $0xc] sm:$0xf]
  %v83 = vld [vmem:[%s1 + $0x10] sm:$0xf]
  %v84 = vld [vmem:[%s1 + $0x14] sm:$0xf]
  %v85 = vld [vmem:[%s1 + $0x18] sm:$0xf]
  %v86 = vld [vmem:[%s1 + $0x1c] sm:$0xf]
  %v87 = vld [vmem:[%s1 + $0x20] sm:$0xf]
  %v88 = vld [vmem:[%s1 + $0x24] sm:$0xf]
  %v89 = vld [vmem:[%s1 + $0x28] sm:$0xf]
  %v90 = vld [vmem:[%s1 + $0x2c] sm:$0xf]
  %v91 = vld [vmem:[%s2] sm:$0x1]
  %v93 = vlaneseq
  %v94 = vshrl.u32 %v93, 7
  %v95 = vsub.s32 0, %v94
  %v96 = vrot.slane %v91, %v95
  %v162 = vunpack.c.l.b16 %v15
  %v163 = vunpack.c.l.b16 %v16
  %v164 = vunpack.c.l.b16 %v17
  %v165 = vunpack.c.l.b16 %v18
  %v166 = vunpack.c.l.b16 %v19
  %v167 = vunpack.c.l.b16 %v20
  %v168 = vunpack.c.l.b16 %v21
  %v169 = vunpack.c.l.b16 %v22
  %v170 = vunpack.c.l.b16 %v23
  %v171 = vunpack.c.l.b16 %v24
  %v172 = vunpack.c.l.b16 %v25
  %v173 = vunpack.c.l.b16 %v26
  %v174 = vunpack.c.l.b16 %v27
  %v175 = vunpack.c.l.b16 %v28
  %v176 = vunpack.c.l.b16 %v29
  %v177 = vunpack.c.l.b16 %v30
  %v178 = vunpack.c.l.b16 %v31
  %v179 = vunpack.c.l.b16 %v32
  %v180 = vunpack.c.l.b16 %v33
  %v181 = vunpack.c.l.b16 %v34
  %v182 = vunpack.c.l.b16 %v35
  %v183 = vunpack.c.l.b16 %v36
  %v184 = vunpack.c.l.b16 %v37
  %v185 = vunpack.c.l.b16 %v38
  %v186 = vunpack.c.l.b16 %v39
  %v187 = vunpack.c.l.b16 %v40
  %v188 = vunpack.c.l.b16 %v41
  %v189 = vunpack.c.l.b16 %v42
  %v190 = vunpack.c.l.b16 %v43
  %v191 = vunpack.c.l.b16 %v44
  %v192 = vunpack.c.l.b16 %v45
  %v193 = vunpack.c.l.b16 %v46
  %v194 = vunpack.c.l.b16 %v47
  %v195 = vunpack.c.l.b16 %v48
  %v196 = vunpack.c.l.b16 %v49
  %v197 = vunpack.c.l.b16 %v50
  %v198 = vunpack.c.l.b16 %v51
  %v199 = vunpack.c.l.b16 %v52
  %v200 = vunpack.c.l.b16 %v53
  %v201 = vunpack.c.l.b16 %v54
  %v202 = vunpack.c.l.b16 %v55
  %v203 = vunpack.c.l.b16 %v56
  %v204 = vunpack.c.l.b16 %v57
  %v205 = vunpack.c.l.b16 %v58
  %v206 = vunpack.c.l.b16 %v59
  %v207 = vunpack.c.l.b16 %v60
  %v208 = vunpack.c.l.b16 %v61
  %v209 = vunpack.c.l.b16 %v62
  %v210 = vunpack.c.l.b16 %v63
  %v211 = vunpack.c.l.b16 %v64
  %v212 = vunpack.c.l.b16 %v65
  %v213 = vunpack.c.l.b16 %v66
  %v214 = vunpack.c.l.b16 %v67
  %v215 = vunpack.c.l.b16 %v68
  %v216 = vunpack.c.l.b16 %v69
  %v217 = vunpack.c.l.b16 %v70
  %v218 = vunpack.c.l.b16 %v71
  %v219 = vunpack.c.l.b16 %v72
  %v220 = vunpack.c.l.b16 %v73
  %v221 = vunpack.c.l.b16 %v74
  %v222 = vunpack.c.l.b16 %v75
  %v223 = vunpack.c.l.b16 %v76
  %v224 = vunpack.c.l.b16 %v77
  %v225 = vunpack.c.l.b16 %v78
  %v226 = vpack.c.b16 %v163, %v162
  %v227 = vpack.c.b16 %v165, %v164
  %v228 = vpack.c.b16 %v167, %v166
  %v229 = vpack.c.b16 %v169, %v168
  %v230 = vpack.c.b16 %v171, %v170
  %v231 = vpack.c.b16 %v173, %v172
  %v232 = vpack.c.b16 %v175, %v174
  %v233 = vpack.c.b16 %v177, %v176
  %v234 = vpack.c.b16 %v179, %v178
  %v235 = vpack.c.b16 %v181, %v180
  %v236 = vpack.c.b16 %v183, %v182
  %v237 = vpack.c.b16 %v185, %v184
  %v238 = vpack.c.b16 %v187, %v186
  %v239 = vpack.c.b16 %v189, %v188
  %v240 = vpack.c.b16 %v191, %v190
  %v241 = vpack.c.b16 %v193, %v192
  %v242 = vpack.c.b16 %v195, %v194
  %v243 = vpack.c.b16 %v197, %v196
  %v244 = vpack.c.b16 %v199, %v198
  %v245 = vpack.c.b16 %v201, %v200
  %v246 = vpack.c.b16 %v203, %v202
  %v247 = vpack.c.b16 %v205, %v204
  %v248 = vpack.c.b16 %v207, %v206
  %v249 = vpack.c.b16 %v209, %v208
  %v250 = vpack.c.b16 %v211, %v210
  %v251 = vpack.c.b16 %v213, %v212
  %v252 = vpack.c.b16 %v215, %v214
  %v253 = vpack.c.b16 %v217, %v216
  %v254 = vpack.c.b16 %v219, %v218
  %v255 = vpack.c.b16 %v221, %v220
  %v256 = vpack.c.b16 %v223, %v222
  %v257 = vpack.c.b16 %v225, %v224
  %v270 = vunpack.c.l.b16 %v79
  %v271 = vunpack.c.l.b16 %v80
  %v272 = vunpack.c.l.b16 %v81
  %v273 = vunpack.c.l.b16 %v82
  %v274 = vunpack.c.l.b16 %v83
  %v275 = vunpack.c.l.b16 %v84
  %v276 = vunpack.c.l.b16 %v85
  %v277 = vunpack.c.l.b16 %v86
  %v278 = vunpack.c.l.b16 %v87
  %v279 = vunpack.c.l.b16 %v88
  %v280 = vunpack.c.l.b16 %v89
  %v281 = vunpack.c.l.b16 %v90
  %v282 = vpack.c.b16 %v271, %v270
  %v283 = vpack.c.b16 %v273, %v272
  %v284 = vpack.c.b16 %v275, %v274
  %v285 = vpack.c.b16 %v277, %v276
  %v286 = vpack.c.b16 %v279, %v278
  %v287 = vpack.c.b16 %v281, %v280
  %vm294 = vcmask 785408
  %v296 = vsel %vm294, %v226, 0
  %v299 = vsel %vm294, %v227, 0
  %v302 = vsel %vm294, %v228, 0
  %v305 = vsel %vm294, %v229, 0
  %v308 = vsel %vm294, %v230, 0
  %v311 = vsel %vm294, %v231, 0
  %v314 = vsel %vm294, %v232, 0
  %v317 = vsel %vm294, %v233, 0
  %v320 = vsel %vm294, %v234, 0
  %v323 = vsel %vm294, %v235, 0
  %v326 = vsel %vm294, %v236, 0
  %v329 = vsel %vm294, %v237, 0
  %v332 = vsel %vm294, %v238, 0
  %v335 = vsel %vm294, %v239, 0
  %v338 = vsel %vm294, %v240, 0
  %v341 = vsel %vm294, %v241, 0
  %v344 = vsel %vm294, %v242, 0
  %v347 = vsel %vm294, %v243, 0
  %v350 = vsel %vm294, %v244, 0
  %v353 = vsel %vm294, %v245, 0
  %v356 = vsel %vm294, %v246, 0
  %v359 = vsel %vm294, %v247, 0
  %v362 = vsel %vm294, %v248, 0
  %v365 = vsel %vm294, %v249, 0
  %v368 = vsel %vm294, %v250, 0
  %v371 = vsel %vm294, %v251, 0
  %v374 = vsel %vm294, %v252, 0
  %v377 = vsel %vm294, %v253, 0
  %v380 = vsel %vm294, %v254, 0
  %v383 = vsel %vm294, %v255, 0
  %v386 = vsel %vm294, %v256, 0
  %v389 = vsel %vm294, %v257, 0
  %391 = vmatprep.subr.bf16.mxu0 0
  %392 = vmatpush1.bf16.msra.mxu0 %v282
  %393 = vmatprep.subr.bf16.mxu0 0
  %394 = vmatpush1.bf16.msra.mxu0 %v283
  %395 = vmatprep.subr.bf16.mxu0 0
  %396 = vmatpush1.bf16.msra.mxu0 %v284
  %397 = vmatprep.subr.bf16.mxu0 0
  %398 = vmatpush1.bf16.msra.mxu0 %v285
  %399 = vmatprep.subr.bf16.mxu0 0
  %400 = vmatpush1.bf16.msra.mxu0 %v286
  %401 = vmatprep.subr.bf16.mxu0 0
  %402 = vmatpush1.bf16.msra.mxu0 %v287
  %403 = vmatprep.subr.bf16.mxu0 0
  %404 = vmatpush1.bf16.msra.mxu0 0
  %405 = vmatprep.subr.bf16.mxu0 0
  %406 = vmatpush1.bf16.msra.mxu0 0
  %407 = vmatprep.subr.bf16.mxu0 0
  %408 = vmatpush1.bf16.msra.mxu0 0
  %409 = vmatprep.subr.bf16.mxu0 0
  %410 = vmatpush1.bf16.msra.mxu0 0
  %411 = vmatprep.subr.bf16.mxu0 0
  %412 = vmatpush1.bf16.msra.mxu0 0
  %413 = vmatprep.subr.bf16.mxu0 0
  %414 = vmatpush1.bf16.msra.mxu0 0
  %415 = vmatprep.subr.bf16.mxu0 0
  %416 = vmatpush1.bf16.msra.mxu0 0
  %417 = vmatprep.subr.bf16.mxu0 0
  %418 = vmatpush1.bf16.msra.mxu0 0
  %419 = vmatprep.subr.bf16.mxu0 0
  %420 = vmatpush1.bf16.msra.mxu0 0
  %421 = vmatprep.subr.bf16.mxu0 0
  %422 = vmatpush1.bf16.msra.mxu0 0
  %423 = vmatprep.mubr.bf16.mxu0 0
  %424 = vmatmul.mubr.bf16.gmra.mrb[0].mxu0 %v296
  %v425 = vpop.f32.mrb[0].mxu0
  %v426 = vadd.f32 %v96, %v425
  %v427 = vpop.f32.mrb[0].mxu0
  %v428 = vpop.f32.mrb[0].mxu0
  %v429 = vadd.f32 %v96, %v428
  %v430 = vpop.f32.mrb[0].mxu0
  %431 = vmatprep.mubr.bf16.mxu0 0
  %432 = vmatmul.mubr.bf16.gmra.mrb[0].mxu0 %v299
  %v433 = vpop.f32.mrb[0].mxu0
  %v434 = vadd.f32 %v96, %v433
  %v435 = vpop.f32.mrb[0].mxu0
  %v436 = vpop.f32.mrb[0].mxu0
  %v437 = vadd.f32 %v96, %v436
  %v438 = vpop.f32.mrb[0].mxu0
  %439 = vmatprep.mubr.bf16.mxu0 0
  %440 = vmatmul.mubr.bf16.gmra.mrb[0].mxu0 %v302
  %v441 = vpop.f32.mrb[0].mxu0
  %v442 = vadd.f32 %v96, %v441
  %v443 = vpop.f32.mrb[0].mxu0
  %v444 = vpop.f32.mrb[0].mxu0
  %v445 = vadd.f32 %v96, %v444
  %v446 = vpop.f32.mrb[0].mxu0
  %447 = vmatprep.mubr.bf16.mxu0 0
  %448 = vmatmul.mubr.bf16.gmra.mrb[0].mxu0 %v305
  %v449 = vpop.f32.mrb[0].mxu0
  %v450 = vadd.f32 %v96, %v449
  %v451 = vpop.f32.mrb[0].mxu0
  %v452 = vpop.f32.mrb[0].mxu0
  %v453 = vadd.f32 %v96, %v452
  %v454 = vpop.f32.mrb[0].mxu0
  %455 = vmatprep.mubr.bf16.mxu0 0
  %456 = vmatmul.mubr.bf16.gmra.mrb[0].mxu0 %v308
  %v457 = vpop.f32.mrb[0].mxu0
  %v458 = vadd.f32 %v96, %v457
  %v459 = vpop.f32.mrb[0].mxu0
  %v460 = vpop.f32.mrb[0].mxu0
  %v461 = vadd.f32 %v96, %v460
  %v462 = vpop.f32.mrb[0].mxu0
  %463 = vmatprep.mubr.bf16.mxu0 0
  %464 = vmatmul.mubr.bf16.gmra.mrb[0].mxu0 %v311
  %v465 = vpop.f32.mrb[0].mxu0
  %v466 = vadd.f32 %v96, %v465
  %v467 = vpop.f32.mrb[0].mxu0
  %v468 = vpop.f32.mrb[0].mxu0
  %v469 = vadd.f32 %v96, %v468
  %v470 = vpop.f32.mrb[0].mxu0
  %471 = vmatprep.mubr.bf16.mxu0 0
  %472 = vmatmul.mubr.bf16.gmra.mrb[0].mxu0 %v314
  %v473 = vpop.f32.mrb[0].mxu0
  %v474 = vadd.f32 %v96, %v473
  %v475 = vpop.f32.mrb[0].mxu0
  %v476 = vpop.f32.mrb[0].mxu0
  %v477 = vadd.f32 %v96, %v476
  %v478 = vpop.f32.mrb[0].mxu0
  %479 = vmatprep.mubr.bf16.mxu0 0
  %480 = vmatmul.mubr.bf16.gmra.mrb[0].mxu0 %v317
  %v481 = vpop.f32.mrb[0].mxu0
  %v482 = vadd.f32 %v96, %v481
  %v483 = vpop.f32.mrb[0].mxu0
  %v484 = vpop.f32.mrb[0].mxu0
  %v485 = vadd.f32 %v96, %v484
  %v486 = vpop.f32.mrb[0].mxu0
  %487 = vmatprep.mubr.bf16.mxu0 0
  %488 = vmatmul.mubr.bf16.gmra.mrb[0].mxu0 %v320
  %v489 = vpop.f32.mrb[0].mxu0
  %v490 = vadd.f32 %v96, %v489
  %v491 = vpop.f32.mrb[0].mxu0
  %v492 = vpop.f32.mrb[0].mxu0
  %v493 = vadd.f32 %v96, %v492
  %v494 = vpop.f32.mrb[0].mxu0
  %495 = vmatprep.mubr.bf16.mxu0 0
  %496 = vmatmul.mubr.bf16.gmra.mrb[0].mxu0 %v323
  %v497 = vpop.f32.mrb[0].mxu0
  %v498 = vadd.f32 %v96, %v497
  %v499 = vpop.f32.mrb[0].mxu0
  %v500 = vpop.f32.mrb[0].mxu0
  %v501 = vadd.f32 %v96, %v500
  %v502 = vpop.f32.mrb[0].mxu0
  %503 = vmatprep.mubr.bf16.mxu0 0
  %504 = vmatmul.mubr.bf16.gmra.mrb[0].mxu0 %v326
  %v505 = vpop.f32.mrb[0].mxu0
  %v506 = vadd.f32 %v96, %v505
  %v507 = vpop.f32.mrb[0].mxu0
  %v508 = vpop.f32.mrb[0].mxu0
  %v509 = vadd.f32 %v96, %v508
  %v510 = vpop.f32.mrb[0].mxu0
  %511 = vmatprep.mubr.bf16.mxu0 0
  %512 = vmatmul.mubr.bf16.gmra.mrb[0].mxu0 %v329
  %v513 = vpop.f32.mrb[0].mxu0
  %v514 = vadd.f32 %v96, %v513
  %v515 = vpop.f32.mrb[0].mxu0
  %v516 = vpop.f32.mrb[0].mxu0
  %v517 = vadd.f32 %v96, %v516
  %v518 = vpop.f32.mrb[0].mxu0
  %519 = vmatprep.mubr.bf16.mxu0 0
  %520 = vmatmul.mubr.bf16.gmra.mrb[0].mxu0 %v332
  %v521 = vpop.f32.mrb[0].mxu0
  %v522 = vadd.f32 %v96, %v521
  %v523 = vpop.f32.mrb[0].mxu0
  %v524 = vpop.f32.mrb[0].mxu0
  %v525 = vadd.f32 %v96, %v524
  %v526 = vpop.f32.mrb[0].mxu0
  %527 = vmatprep.mubr.bf16.mxu0 0
  %528 = vmatmul.mubr.bf16.gmra.mrb[0].mxu0 %v335
  %v529 = vpop.f32.mrb[0].mxu0
  %v530 = vadd.f32 %v96, %v529
  %v531 = vpop.f32.mrb[0].mxu0
  %v532 = vpop.f32.mrb[0].mxu0
  %v533 = vadd.f32 %v96, %v532
  %v534 = vpop.f32.mrb[0].mxu0
  %535 = vmatprep.mubr.bf16.mxu0 0
  %536 = vmatmul.mubr.bf16.gmra.mrb[0].mxu0 %v338
  %v537 = vpop.f32.mrb[0].mxu0
  %v538 = vadd.f32 %v96, %v537
  %v539 = vpop.f32.mrb[0].mxu0
  %v540 = vpop.f32.mrb[0].mxu0
  %v541 = vadd.f32 %v96, %v540
  %v542 = vpop.f32.mrb[0].mxu0
  %543 = vmatprep.mubr.bf16.mxu0 0
  %544 = vmatmul.mubr.bf16.gmra.mrb[0].mxu0 %v341
  %v545 = vpop.f32.mrb[0].mxu0
  %v546 = vadd.f32 %v96, %v545
  %v547 = vpop.f32.mrb[0].mxu0
  %v548 = vpop.f32.mrb[0].mxu0
  %v549 = vadd.f32 %v96, %v548
  %v550 = vpop.f32.mrb[0].mxu0
  %551 = vmatprep.mubr.bf16.mxu0 0
  %552 = vmatmul.mubr.bf16.gmra.mrb[0].mxu0 %v344
  %v553 = vpop.f32.mrb[0].mxu0
  %v554 = vadd.f32 %v96, %v553
  %v555 = vpop.f32.mrb[0].mxu0
  %v556 = vpop.f32.mrb[0].mxu0
  %v557 = vadd.f32 %v96, %v556
  %v558 = vpop.f32.mrb[0].mxu0
  %559 = vmatprep.mubr.bf16.mxu0 0
  %560 = vmatmul.mubr.bf16.gmra.mrb[0].mxu0 %v347
  %v561 = vpop.f32.mrb[0].mxu0
  %v562 = vadd.f32 %v96, %v561
  %v563 = vpop.f32.mrb[0].mxu0
  %v564 = vpop.f32.mrb[0].mxu0
  %v565 = vadd.f32 %v96, %v564
  %v566 = vpop.f32.mrb[0].mxu0
  %567 = vmatprep.mubr.bf16.mxu0 0
  %568 = vmatmul.mubr.bf16.gmra.mrb[0].mxu0 %v350
  %v569 = vpop.f32.mrb[0].mxu0
  %v570 = vadd.f32 %v96, %v569
  %v571 = vpop.f32.mrb[0].mxu0
  %v572 = vpop.f32.mrb[0].mxu0
  %v573 = vadd.f32 %v96, %v572
  %v574 = vpop.f32.mrb[0].mxu0
  %575 = vmatprep.mubr.bf16.mxu0 0
  %576 = vmatmul.mubr.bf16.gmra.mrb[0].mxu0 %v353
  %v577 = vpop.f32.mrb[0].mxu0
  %v578 = vadd.f32 %v96, %v577
  %v579 = vpop.f32.mrb[0].mxu0
  %v580 = vpop.f32.mrb[0].mxu0
  %v581 = vadd.f32 %v96, %v580
  %v582 = vpop.f32.mrb[0].mxu0
  %583 = vmatprep.mubr.bf16.mxu0 0
  %584 = vmatmul.mubr.bf16.gmra.mrb[0].mxu0 %v356
  %v585 = vpop.f32.mrb[0].mxu0
  %v586 = vadd.f32 %v96, %v585
  %v587 = vpop.f32.mrb[0].mxu0
  %v588 = vpop.f32.mrb[0].mxu0
  %v589 = vadd.f32 %v96, %v588
  %v590 = vpop.f32.mrb[0].mxu0
  %591 = vmatprep.mubr.bf16.mxu0 0
  %592 = vmatmul.mubr.bf16.gmra.mrb[0].mxu0 %v359
  %v593 = vpop.f32.mrb[0].mxu0
  %v594 = vadd.f32 %v96, %v593
  %v595 = vpop.f32.mrb[0].mxu0
  %v596 = vpop.f32.mrb[0].mxu0
  %v597 = vadd.f32 %v96, %v596
  %v598 = vpop.f32.mrb[0].mxu0
  %599 = vmatprep.mubr.bf16.mxu0 0
  %600 = vmatmul.mubr.bf16.gmra.mrb[0].mxu0 %v362
  %v601 = vpop.f32.mrb[0].mxu0
  %v602 = vadd.f32 %v96, %v601
  %v603 = vpop.f32.mrb[0].mxu0
  %v604 = vpop.f32.mrb[0].mxu0
  %v605 = vadd.f32 %v96, %v604
  %v606 = vpop.f32.mrb[0].mxu0
  %607 = vmatprep.mubr.bf16.mxu0 0
  %608 = vmatmul.mubr.bf16.gmra.mrb[0].mxu0 %v365
  %v609 = vpop.f32.mrb[0].mxu0
  %v610 = vadd.f32 %v96, %v609
  %v611 = vpop.f32.mrb[0].mxu0
  %v612 = vpop.f32.mrb[0].mxu0
  %v613 = vadd.f32 %v96, %v612
  %v614 = vpop.f32.mrb[0].mxu0
  %615 = vmatprep.mubr.bf16.mxu0 0
  %616 = vmatmul.mubr.bf16.gmra.mrb[0].mxu0 %v368
  %v617 = vpop.f32.mrb[0].mxu0
  %v618 = vadd.f32 %v96, %v617
  %v619 = vpop.f32.mrb[0].mxu0
  %v620 = vpop.f32.mrb[0].mxu0
  %v621 = vadd.f32 %v96, %v620
  %v622 = vpop.f32.mrb[0].mxu0
  %623 = vmatprep.mubr.bf16.mxu0 0
  %624 = vmatmul.mubr.bf16.gmra.mrb[0].mxu0 %v371
  %v625 = vpop.f32.mrb[0].mxu0
  %v626 = vadd.f32 %v96, %v625
  %v627 = vpop.f32.mrb[0].mxu0
  %v628 = vpop.f32.mrb[0].mxu0
  %v629 = vadd.f32 %v96, %v628
  %v630 = vpop.f32.mrb[0].mxu0
  %631 = vmatprep.mubr.bf16.mxu0 0
  %632 = vmatmul.mubr.bf16.gmra.mrb[0].mxu0 %v374
  %v633 = vpop.f32.mrb[0].mxu0
  %v634 = vadd.f32 %v96, %v633
  %v635 = vpop.f32.mrb[0].mxu0
  %v636 = vpop.f32.mrb[0].mxu0
  %v637 = vadd.f32 %v96, %v636
  %v638 = vpop.f32.mrb[0].mxu0
  %639 = vmatprep.mubr.bf16.mxu0 0
  %640 = vmatmul.mubr.bf16.gmra.mrb[0].mxu0 %v377
  %v641 = vpop.f32.mrb[0].mxu0
  %v642 = vadd.f32 %v96, %v641
  %v643 = vpop.f32.mrb[0].mxu0
  %v644 = vpop.f32.mrb[0].mxu0
  %v645 = vadd.f32 %v96, %v644
  %v646 = vpop.f32.mrb[0].mxu0
  %647 = vmatprep.mubr.bf16.mxu0 0
  %648 = vmatmul.mubr.bf16.gmra.mrb[0].mxu0 %v380
  %v649 = vpop.f32.mrb[0].mxu0
  %v650 = vadd.f32 %v96, %v649
  %v651 = vpop.f32.mrb[0].mxu0
  %v652 = vpop.f32.mrb[0].mxu0
  %v653 = vadd.f32 %v96, %v652
  %v654 = vpop.f32.mrb[0].mxu0
  %655 = vmatprep.mubr.bf16.mxu0 0
  %656 = vmatmul.mubr.bf16.gmra.mrb[0].mxu0 %v383
  %v657 = vpop.f32.mrb[0].mxu0
  %v658 = vadd.f32 %v96, %v657
  %v659 = vpop.f32.mrb[0].mxu0
  %v660 = vpop.f32.mrb[0].mxu0
  %v661 = vadd.f32 %v96, %v660
  %v662 = vpop.f32.mrb[0].mxu0
  %663 = vmatprep.mubr.bf16.mxu0 0
  %664 = vmatmul.mubr.bf16.gmra.mrb[0].mxu0 %v386
  %v665 = vpop.f32.mrb[0].mxu0
  %v666 = vadd.f32 %v96, %v665
  %v667 = vpop.f32.mrb[0].mxu0
  %v668 = vpop.f32.mrb[0].mxu0
  %v669 = vadd.f32 %v96, %v668
  %v670 = vpop.f32.mrb[0].mxu0
  %671 = vmatprep.mubr.bf16.mxu0 0
  %672 = vmatmul.mubr.bf16.gmra.mrb[0].mxu0 %v389
  %v673 = vpop.f32.mrb[0].mxu0
  %v674 = vadd.f32 %v96, %v673
  %v675 = vpop.f32.mrb[0].mxu0
  %v676 = vpop.f32.mrb[0].mxu0
  %v677 = vadd.f32 %v96, %v676
  %v678 = vpop.f32.mrb[0].mxu0
  %679 = vdwg.mxu0
  %v680 = vpack.c.bf16 %v429, %v426
  %v681 = vpack.c.bf16 %v437, %v434
  %v682 = vpack.c.bf16 %v445, %v442
  %v683 = vpack.c.bf16 %v453, %v450
  %v684 = vpack.c.bf16 %v461, %v458
  %v685 = vpack.c.bf16 %v469, %v466
  %v686 = vpack.c.bf16 %v477, %v474
  %v687 = vpack.c.bf16 %v485, %v482
  %v688 = vpack.c.bf16 %v493, %v490
  %v689 = vpack.c.bf16 %v501, %v498
  %v690 = vpack.c.bf16 %v509, %v506
  %v691 = vpack.c.bf16 %v517, %v514
  %v692 = vpack.c.bf16 %v525, %v522
  %v693 = vpack.c.bf16 %v533, %v530
  %v694 = vpack.c.bf16 %v541, %v538
  %v695 = vpack.c.bf16 %v549, %v546
  %v696 = vpack.c.bf16 %v557, %v554
  %v697 = vpack.c.bf16 %v565, %v562
  %v698 = vpack.c.bf16 %v573, %v570
  %v699 = vpack.c.bf16 %v581, %v578
  %v700 = vpack.c.bf16 %v589, %v586
  %v701 = vpack.c.bf16 %v597, %v594
  %v702 = vpack.c.bf16 %v605, %v602
  %v703 = vpack.c.bf16 %v613, %v610
  %v704 = vpack.c.bf16 %v621, %v618
  %v705 = vpack.c.bf16 %v629, %v626
  %v706 = vpack.c.bf16 %v637, %v634
  %v707 = vpack.c.bf16 %v645, %v642
  %v708 = vpack.c.bf16 %v653, %v650
  %v709 = vpack.c.bf16 %v661, %v658
  %v710 = vpack.c.bf16 %v669, %v666
  %v711 = vpack.c.bf16 %v677, %v674
  %v744 = vunpack.c.l.b16 %v680
  %v745 = vunpack.c.h.b16 %v680
  %v746 = vunpack.c.l.b16 %v681
  %v747 = vunpack.c.h.b16 %v681
  %v748 = vunpack.c.l.b16 %v682
  %v749 = vunpack.c.h.b16 %v682
  %v750 = vunpack.c.l.b16 %v683
  %v751 = vunpack.c.h.b16 %v683
  %v752 = vunpack.c.l.b16 %v684
  %v753 = vunpack.c.h.b16 %v684
  %v754 = vunpack.c.l.b16 %v685
  %v755 = vunpack.c.h.b16 %v685
  %v756 = vunpack.c.l.b16 %v686
  %v757 = vunpack.c.h.b16 %v686
  %v758 = vunpack.c.l.b16 %v687
  %v759 = vunpack.c.h.b16 %v687
  %v760 = vunpack.c.l.b16 %v688
  %v761 = vunpack.c.h.b16 %v688
  %v762 = vunpack.c.l.b16 %v689
  %v763 = vunpack.c.h.b16 %v689
  %v764 = vunpack.c.l.b16 %v690
  %v765 = vunpack.c.h.b16 %v690
  %v766 = vunpack.c.l.b16 %v691
  %v767 = vunpack.c.h.b16 %v691
  %v768 = vunpack.c.l.b16 %v692
  %v769 = vunpack.c.h.b16 %v692
  %v770 = vunpack.c.l.b16 %v693
  %v771 = vunpack.c.h.b16 %v693
  %v772 = vunpack.c.l.b16 %v694
  %v773 = vunpack.c.h.b16 %v694
  %v774 = vunpack.c.l.b16 %v695
  %v775 = vunpack.c.h.b16 %v695
  %v776 = vunpack.c.l.b16 %v696
  %v777 = vunpack.c.h.b16 %v696
  %v778 = vunpack.c.l.b16 %v697
  %v779 = vunpack.c.h.b16 %v697
  %v780 = vunpack.c.l.b16 %v698
  %v781 = vunpack.c.h.b16 %v698
  %v782 = vunpack.c.l.b16 %v699
  %v783 = vunpack.c.h.b16 %v699
  %v784 = vunpack.c.l.b16 %v700
  %v785 = vunpack.c.h.b16 %v700
  %v786 = vunpack.c.l.b16 %v701
  %v787 = vunpack.c.h.b16 %v701
  %v788 = vunpack.c.l.b16 %v702
  %v789 = vunpack.c.h.b16 %v702
  %v790 = vunpack.c.l.b16 %v703
  %v791 = vunpack.c.h.b16 %v703
  %v792 = vunpack.c.l.b16 %v704
  %v793 = vunpack.c.h.b16 %v704
  %v794 = vunpack.c.l.b16 %v705
  %v795 = vunpack.c.h.b16 %v705
  %v796 = vunpack.c.l.b16 %v706
  %v797 = vunpack.c.h.b16 %v706
  %v798 = vunpack.c.l.b16 %v707
  %v799 = vunpack.c.h.b16 %v707
  %v800 = vunpack.c.l.b16 %v708
  %v801 = vunpack.c.h.b16 %v708
  %v802 = vunpack.c.l.b16 %v709
  %v803 = vunpack.c.h.b16 %v709
  %v804 = vunpack.c.l.b16 %v710
  %v805 = vunpack.c.h.b16 %v710
  %v806 = vunpack.c.l.b16 %v711
  %v807 = vunpack.c.h.b16 %v711
  %v808 = vpack.c.b16 %v744, %v744
  %v809 = vpack.c.b16 %v745, %v745
  %v810 = vpack.c.b16 %v746, %v746
  %v811 = vpack.c.b16 %v747, %v747
  %v812 = vpack.c.b16 %v748, %v748
  %v813 = vpack.c.b16 %v749, %v749
  %v814 = vpack.c.b16 %v750, %v750
  %v815 = vpack.c.b16 %v751, %v751
  %v816 = vpack.c.b16 %v752, %v752
  %v817 = vpack.c.b16 %v753, %v753
  %v818 = vpack.c.b16 %v754, %v754
  %v819 = vpack.c.b16 %v755, %v755
  %v820 = vpack.c.b16 %v756, %v756
  %v821 = vpack.c.b16 %v757, %v757
  %v822 = vpack.c.b16 %v758, %v758
  %v823 = vpack.c.b16 %v759, %v759
  %v824 = vpack.c.b16 %v760, %v760
  %v825 = vpack.c.b16 %v761, %v761
  %v826 = vpack.c.b16 %v762, %v762
  %v827 = vpack.c.b16 %v763, %v763
  %v828 = vpack.c.b16 %v764, %v764
  %v829 = vpack.c.b16 %v765, %v765
  %v830 = vpack.c.b16 %v766, %v766
  %v831 = vpack.c.b16 %v767, %v767
  %v832 = vpack.c.b16 %v768, %v768
  %v833 = vpack.c.b16 %v769, %v769
  %v834 = vpack.c.b16 %v770, %v770
  %v835 = vpack.c.b16 %v771, %v771
  %v836 = vpack.c.b16 %v772, %v772
  %v837 = vpack.c.b16 %v773, %v773
  %v838 = vpack.c.b16 %v774, %v774
  %v839 = vpack.c.b16 %v775, %v775
  %v840 = vpack.c.b16 %v776, %v776
  %v841 = vpack.c.b16 %v777, %v777
  %v842 = vpack.c.b16 %v778, %v778
  %v843 = vpack.c.b16 %v779, %v779
  %v844 = vpack.c.b16 %v780, %v780
  %v845 = vpack.c.b16 %v781, %v781
  %v846 = vpack.c.b16 %v782, %v782
  %v847 = vpack.c.b16 %v783, %v783
  %v848 = vpack.c.b16 %v784, %v784
  %v849 = vpack.c.b16 %v785, %v785
  %v850 = vpack.c.b16 %v786, %v786
  %v851 = vpack.c.b16 %v787, %v787
  %v852 = vpack.c.b16 %v788, %v788
  %v853 = vpack.c.b16 %v789, %v789
  %v854 = vpack.c.b16 %v790, %v790
  %v855 = vpack.c.b16 %v791, %v791
  %v856 = vpack.c.b16 %v792, %v792
  %v857 = vpack.c.b16 %v793, %v793
  %v858 = vpack.c.b16 %v794, %v794
  %v859 = vpack.c.b16 %v795, %v795
  %v860 = vpack.c.b16 %v796, %v796
  %v861 = vpack.c.b16 %v797, %v797
  %v862 = vpack.c.b16 %v798, %v798
  %v863 = vpack.c.b16 %v799, %v799
  %v864 = vpack.c.b16 %v800, %v800
  %v865 = vpack.c.b16 %v801, %v801
  %v866 = vpack.c.b16 %v802, %v802
  %v867 = vpack.c.b16 %v803, %v803
  %v868 = vpack.c.b16 %v804, %v804
  %v869 = vpack.c.b16 %v805, %v805
  %v870 = vpack.c.b16 %v806, %v806
  %v871 = vpack.c.b16 %v807, %v807
  %vm936 = vcmask 191488
  %937 = vst.msk [vmem:[%s3] sm:$0xf] %vm936, %v808
  %938 = vst.msk [vmem:[%s3 + $0x4] sm:$0xf] %vm936, %v809
  %939 = vst.msk [vmem:[%s3 + $0x8] sm:$0xf] %vm936, %v810
  %940 = vst.msk [vmem:[%s3 + $0xc] sm:$0xf] %vm936, %v811
  %941 = vst.msk [vmem:[%s3 + $0x10] sm:$0xf] %vm936, %v812
  %942 = vst.msk [vmem:[%s3 + $0x14] sm:$0xf] %vm936, %v813
  %943 = vst.msk [vmem:[%s3 + $0x18] sm:$0xf] %vm936, %v814
  %944 = vst.msk [vmem:[%s3 + $0x1c] sm:$0xf] %vm936, %v815
  %945 = vst.msk [vmem:[%s3 + $0x20] sm:$0xf] %vm936, %v816
  %946 = vst.msk [vmem:[%s3 + $0x24] sm:$0xf] %vm936, %v817
  %947 = vst.msk [vmem:[%s3 + $0x28] sm:$0xf] %vm936, %v818
  %948 = vst.msk [vmem:[%s3 + $0x2c] sm:$0xf] %vm936, %v819
  %949 = vst.msk [vmem:[%s3 + $0x30] sm:$0xf] %vm936, %v820
  %950 = vst.msk [vmem:[%s3 + $0x34] sm:$0xf] %vm936, %v821
  %951 = vst.msk [vmem:[%s3 + $0x38] sm:$0xf] %vm936, %v822
  %952 = vst.msk [vmem:[%s3 + $0x3c] sm:$0xf] %vm936, %v823
  %953 = vst.msk [vmem:[%s3 + $0x40] sm:$0xf] %vm936, %v824
  %954 = vst.msk [vmem:[%s3 + $0x44] sm:$0xf] %vm936, %v825
  %955 = vst.msk [vmem:[%s3 + $0x48] sm:$0xf] %vm936, %v826
  %956 = vst.msk [vmem:[%s3 + $0x4c] sm:$0xf] %vm936, %v827
  %957 = vst.msk [vmem:[%s3 + $0x50] sm:$0xf] %vm936, %v828
  %958 = vst.msk [vmem:[%s3 + $0x54] sm:$0xf] %vm936, %v829
  %959 = vst.msk [vmem:[%s3 + $0x58] sm:$0xf] %vm936, %v830
  %960 = vst.msk [vmem:[%s3 + $0x5c] sm:$0xf] %vm936, %v831
  %961 = vst.msk [vmem:[%s3 + $0x60] sm:$0xf] %vm936, %v832
  %962 = vst.msk [vmem:[%s3 + $0x64] sm:$0xf] %vm936, %v833
  %963 = vst.msk [vmem:[%s3 + $0x68] sm:$0xf] %vm936, %v834
  %964 = vst.msk [vmem:[%s3 + $0x6c] sm:$0xf] %vm936, %v835
  %965 = vst.msk [vmem:[%s3 + $0x70] sm:$0xf] %vm936, %v836
  %966 = vst.msk [vmem:[%s3 + $0x74] sm:$0xf] %vm936, %v837
  %967 = vst.msk [vmem:[%s3 + $0x78] sm:$0xf] %vm936, %v838
  %968 = vst.msk [vmem:[%s3 + $0x7c] sm:$0xf] %vm936, %v839
  %969 = vst.msk [vmem:[%s3 + $0x80] sm:$0xf] %vm936, %v840
  %970 = vst.msk [vmem:[%s3 + $0x84] sm:$0xf] %vm936, %v841
  %971 = vst.msk [vmem:[%s3 + $0x88] sm:$0xf] %vm936, %v842
  %972 = vst.msk [vmem:[%s3 + $0x8c] sm:$0xf] %vm936, %v843
  %973 = vst.msk [vmem:[%s3 + $0x90] sm:$0xf] %vm936, %v844
  %974 = vst.msk [vmem:[%s3 + $0x94] sm:$0xf] %vm936, %v845
  %975 = vst.msk [vmem:[%s3 + $0x98] sm:$0xf] %vm936, %v846
  %976 = vst.msk [vmem:[%s3 + $0x9c] sm:$0xf] %vm936, %v847
  %977 = vst.msk [vmem:[%s3 + $0xa0] sm:$0xf] %vm936, %v848
  %978 = vst.msk [vmem:[%s3 + $0xa4] sm:$0xf] %vm936, %v849
  %979 = vst.msk [vmem:[%s3 + $0xa8] sm:$0xf] %vm936, %v850
  %980 = vst.msk [vmem:[%s3 + $0xac] sm:$0xf] %vm936, %v851
  %981 = vst.msk [vmem:[%s3 + $0xb0] sm:$0xf] %vm936, %v852
  %982 = vst.msk [vmem:[%s3 + $0xb4] sm:$0xf] %vm936, %v853
  %983 = vst.msk [vmem:[%s3 + $0xb8] sm:$0xf] %vm936, %v854
  %984 = vst.msk [vmem:[%s3 + $0xbc] sm:$0xf] %vm936, %v855
  %985 = vst.msk [vmem:[%s3 + $0xc0] sm:$0xf] %vm936, %v856
  %986 = vst.msk [vmem:[%s3 + $0xc4] sm:$0xf] %vm936, %v857
  %987 = vst.msk [vmem:[%s3 + $0xc8] sm:$0xf] %vm936, %v858
  %988 = vst.msk [vmem:[%s3 + $0xcc] sm:$0xf] %vm936, %v859
  %989 = vst.msk [vmem:[%s3 + $0xd0] sm:$0xf] %vm936, %v860
  %990 = vst.msk [vmem:[%s3 + $0xd4] sm:$0xf] %vm936, %v861
  %991 = vst.msk [vmem:[%s3 + $0xd8] sm:$0xf] %vm936, %v862
  %992 = vst.msk [vmem:[%s3 + $0xdc] sm:$0xf] %vm936, %v863
  %993 = vst.msk [vmem:[%s3 + $0xe0] sm:$0xf] %vm936, %v864
  %994 = vst.msk [vmem:[%s3 + $0xe4] sm:$0xf] %vm936, %v865
  %995 = vst.msk [vmem:[%s3 + $0xe8] sm:$0xf] %vm936, %v866
  %996 = vst.msk [vmem:[%s3 + $0xec] sm:$0xf] %vm936, %v867
  %997 = vst.msk [vmem:[%s3 + $0xf0] sm:$0xf] %vm936, %v868
  %998 = vst.msk [vmem:[%s3 + $0xf4] sm:$0xf] %vm936, %v869
  %999 = vst.msk [vmem:[%s3 + $0xf8] sm:$0xf] %vm936, %v870
  %1000 = vst.msk [vmem:[%s3 + $0xfc] sm:$0xf] %vm936, %v871
  // Predicated region
  $region14: #{_lambda_.9} parent=0 // pred_check
    _
  $region15: #{_lambda_.9} parent=0 // pred_check_branch
    %1002 = sbr.rel (0) target = $region17
  $region16: #{_lambda_.9} parent=0 // pred_region
    _
  $region17: #{_lambda_.9} parent=0 // pred_fallthru
    _
  // Predicated region
  $region18: #{_lambda_.9} parent=0 // pred_check
    _
  $region19: #{_lambda_.9} parent=0 // pred_check_branch
    %1004 = sbr.rel (0) target = $region21
  $region20: #{_lambda_.9} parent=0 // pred_region
    _
  $region21: #{_lambda_.9} parent=0 // pred_fallthru
    _

// kernel: _lambda_.10
$region0: #{_lambda_.10}
  #allocation0 [shape = 'u32[]', space=smem, size = 0x4, offset = 0x4, fixed_abs, tag = 'smem constant byte address 0x4 - core index']
  #allocation1 [shape = 'u32[144,128]{1,0:T(1,128)}', space=vmem, size = 0x12000, scoped, tag = 'internal scratch']
  %s0 = inlined_call_operand.vmem [shape: bf16[512,24], index: 0, kind: input, shape index: {}]
  %s1 = inlined_call_operand.vmem [shape: bf16[24,144], index: 1, kind: input, shape index: {}]
  %s2 = inlined_call_operand.vmem [shape: f32[1,144], index: 2, kind: input, shape index: {}]
  %s3 = inlined_call_operand.vmem [shape: bf16[512,144], index: 3, kind: output, shape index: {}]
  %s4 = sld [smem:[#allocation0]]
  $region22: #{_lambda_.10} parent=0
    _
  %s6 = ssub.s32 1, %s4
  %s7 = scalar_select 0, %s6, %s4
  // Predicated region
  $region2: #{_lambda_.10} parent=0 // pred_check
    _
  $region3: #{_lambda_.10} parent=0 // pred_check_branch
    %9 = sbr.rel (0) target = $region5
  $region4: #{_lambda_.10} parent=0 // pred_region
    _
  $region5: #{_lambda_.10} parent=0 // pred_fallthru
    _
  // Predicated region
  $region6: #{_lambda_.10} parent=0 // pred_check
    _
  $region7: #{_lambda_.10} parent=0 // pred_check_branch
    %11 = sbr.rel (0) target = $region9
  $region8: #{_lambda_.10} parent=0 // pred_region
    _
  $region9: #{_lambda_.10} parent=0 // pred_fallthru
    _
  // Predicated region
  $region10: #{_lambda_.10} parent=0 // pred_check
    _
  $region11: #{_lambda_.10} parent=0 // pred_check_branch
    %13 = sbr.rel (0) target = $region13
  $region12: #{_lambda_.10} parent=0 // pred_region
    _
  $region13: #{_lambda_.10} parent=0 // pred_fallthru
    _
  %v15 = vld [vmem:[%s0] sm:$0xf]
  %v16 = vld [vmem:[%s0 + $0x4] sm:$0xf]
  %v17 = vld [vmem:[%s0 + $0x8] sm:$0xf]
  %v18 = vld [vmem:[%s0 + $0xc] sm:$0xf]
  %v19 = vld [vmem:[%s0 + $0x10] sm:$0xf]
  %v20 = vld [vmem:[%s0 + $0x14] sm:$0xf]
  %v21 = vld [vmem:[%s0 + $0x18] sm:$0xf]
  %v22 = vld [vmem:[%s0 + $0x1c] sm:$0xf]
  %v23 = vld [vmem:[%s0 + $0x20] sm:$0xf]
  %v24 = vld [vmem:[%s0 + $0x24] sm:$0xf]
  %v25 = vld [vmem:[%s0 + $0x28] sm:$0xf]
  %v26 = vld [vmem:[%s0 + $0x2c] sm:$0xf]
  %v27 = vld [vmem:[%s0 + $0x30] sm:$0xf]
  %v28 = vld [vmem:[%s0 + $0x34] sm:$0xf]
  %v29 = vld [vmem:[%s0 + $0x38] sm:$0xf]
  %v30 = vld [vmem:[%s0 + $0x3c] sm:$0xf]
  %v31 = vld [vmem:[%s0 + $0x40] sm:$0xf]
  %v32 = vld [vmem:[%s0 + $0x44] sm:$0xf]
  %v33 = vld [vmem:[%s0 + $0x48] sm:$0xf]
  %v34 = vld [vmem:[%s0 + $0x4c] sm:$0xf]
  %v35 = vld [vmem:[%s0 + $0x50] sm:$0xf]
  %v36 = vld [vmem:[%s0 + $0x54] sm:$0xf]
  %v37 = vld [vmem:[%s0 + $0x58] sm:$0xf]
  %v38 = vld [vmem:[%s0 + $0x5c] sm:$0xf]
  %v39 = vld [vmem:[%s0 + $0x60] sm:$0xf]
  %v40 = vld [vmem:[%s0 + $0x64] sm:$0xf]
  %v41 = vld [vmem:[%s0 + $0x68] sm:$0xf]
  %v42 = vld [vmem:[%s0 + $0x6c] sm:$0xf]
  %v43 = vld [vmem:[%s0 + $0x70] sm:$0xf]
  %v44 = vld [vmem:[%s0 + $0x74] sm:$0xf]
  %v45 = vld [vmem:[%s0 + $0x78] sm:$0xf]
  %v46 = vld [vmem:[%s0 + $0x7c] sm:$0xf]
  %v47 = vld [vmem:[%s0 + $0x80] sm:$0xf]
  %v48 = vld [vmem:[%s0 + $0x84] sm:$0xf]
  %v49 = vld [vmem:[%s0 + $0x88] sm:$0xf]
  %v50 = vld [vmem:[%s0 + $0x8c] sm:$0xf]
  %v51 = vld [vmem:[%s0 + $0x90] sm:$0xf]
  %v52 = vld [vmem:[%s0 + $0x94] sm:$0xf]
  %v53 = vld [vmem:[%s0 + $0x98] sm:$0xf]
  %v54 = vld [vmem:[%s0 + $0x9c] sm:$0xf]
  %v55 = vld [vmem:[%s0 + $0xa0] sm:$0xf]
  %v56 = vld [vmem:[%s0 + $0xa4] sm:$0xf]
  %v57 = vld [vmem:[%s0 + $0xa8] sm:$0xf]
  %v58 = vld [vmem:[%s0 + $0xac] sm:$0xf]
  %v59 = vld [vmem:[%s0 + $0xb0] sm:$0xf]
  %v60 = vld [vmem:[%s0 + $0xb4] sm:$0xf]
  %v61 = vld [vmem:[%s0 + $0xb8] sm:$0xf]
  %v62 = vld [vmem:[%s0 + $0xbc] sm:$0xf]
  %v63 = vld [vmem:[%s0 + $0xc0] sm:$0xf]
  %v64 = vld [vmem:[%s0 + $0xc4] sm:$0xf]
  %v65 = vld [vmem:[%s0 + $0xc8] sm:$0xf]
  %v66 = vld [vmem:[%s0 + $0xcc] sm:$0xf]
  %v67 = vld [vmem:[%s0 + $0xd0] sm:$0xf]
  %v68 = vld [vmem:[%s0 + $0xd4] sm:$0xf]
  %v69 = vld [vmem:[%s0 + $0xd8] sm:$0xf]
  %v70 = vld [vmem:[%s0 + $0xdc] sm:$0xf]
  %v71 = vld [vmem:[%s0 + $0xe0] sm:$0xf]
  %v72 = vld [vmem:[%s0 + $0xe4] sm:$0xf]
  %v73 = vld [vmem:[%s0 + $0xe8] sm:$0xf]
  %v74 = vld [vmem:[%s0 + $0xec] sm:$0xf]
  %v75 = vld [vmem:[%s0 + $0xf0] sm:$0xf]
  %v76 = vld [vmem:[%s0 + $0xf4] sm:$0xf]
  %v77 = vld [vmem:[%s0 + $0xf8] sm:$0xf]
  %v78 = vld [vmem:[%s0 + $0xfc] sm:$0xf]
  %v79 = vld [vmem:[%s1] sm:$0xff]
  %v80 = vld [vmem:[%s1 + $0x8] sm:$0xff]
  %v81 = vld [vmem:[%s1 + $0x10] sm:$0xff]
  %v82 = vld [vmem:[%s2] sm:$0x3]
  %v84 = vlaneseq
  %v85 = vshrl.u32 %v84, 7
  %v86 = vsub.s32 0, %v85
  %v87 = vrot.slane %v82, %v86
  %v88 = vlaneseq
  %v89 = vshrl.u32 %v88, 7
  %v90 = vsub.s32 1, %v89
  %v91 = vrot.slane %v82, %v90
  %v158 = vunpack.c.l.b16 %v15
  %v159 = vunpack.c.l.b16 %v16
  %v160 = vunpack.c.l.b16 %v17
  %v161 = vunpack.c.l.b16 %v18
  %v162 = vunpack.c.l.b16 %v19
  %v163 = vunpack.c.l.b16 %v20
  %v164 = vunpack.c.l.b16 %v21
  %v165 = vunpack.c.l.b16 %v22
  %v166 = vunpack.c.l.b16 %v23
  %v167 = vunpack.c.l.b16 %v24
  %v168 = vunpack.c.l.b16 %v25
  %v169 = vunpack.c.l.b16 %v26
  %v170 = vunpack.c.l.b16 %v27
  %v171 = vunpack.c.l.b16 %v28
  %v172 = vunpack.c.l.b16 %v29
  %v173 = vunpack.c.l.b16 %v30
  %v174 = vunpack.c.l.b16 %v31
  %v175 = vunpack.c.l.b16 %v32
  %v176 = vunpack.c.l.b16 %v33
  %v177 = vunpack.c.l.b16 %v34
  %v178 = vunpack.c.l.b16 %v35
  %v179 = vunpack.c.l.b16 %v36
  %v180 = vunpack.c.l.b16 %v37
  %v181 = vunpack.c.l.b16 %v38
  %v182 = vunpack.c.l.b16 %v39
  %v183 = vunpack.c.l.b16 %v40
  %v184 = vunpack.c.l.b16 %v41
  %v185 = vunpack.c.l.b16 %v42
  %v186 = vunpack.c.l.b16 %v43
  %v187 = vunpack.c.l.b16 %v44
  %v188 = vunpack.c.l.b16 %v45
  %v189 = vunpack.c.l.b16 %v46
  %v190 = vunpack.c.l.b16 %v47
  %v191 = vunpack.c.l.b16 %v48
  %v192 = vunpack.c.l.b16 %v49
  %v193 = vunpack.c.l.b16 %v50
  %v194 = vunpack.c.l.b16 %v51
  %v195 = vunpack.c.l.b16 %v52
  %v196 = vunpack.c.l.b16 %v53
  %v197 = vunpack.c.l.b16 %v54
  %v198 = vunpack.c.l.b16 %v55
  %v199 = vunpack.c.l.b16 %v56
  %v200 = vunpack.c.l.b16 %v57
  %v201 = vunpack.c.l.b16 %v58
  %v202 = vunpack.c.l.b16 %v59
  %v203 = vunpack.c.l.b16 %v60
  %v204 = vunpack.c.l.b16 %v61
  %v205 = vunpack.c.l.b16 %v62
  %v206 = vunpack.c.l.b16 %v63
  %v207 = vunpack.c.l.b16 %v64
  %v208 = vunpack.c.l.b16 %v65
  %v209 = vunpack.c.l.b16 %v66
  %v210 = vunpack.c.l.b16 %v67
  %v211 = vunpack.c.l.b16 %v68
  %v212 = vunpack.c.l.b16 %v69
  %v213 = vunpack.c.l.b16 %v70
  %v214 = vunpack.c.l.b16 %v71
  %v215 = vunpack.c.l.b16 %v72
  %v216 = vunpack.c.l.b16 %v73
  %v217 = vunpack.c.l.b16 %v74
  %v218 = vunpack.c.l.b16 %v75
  %v219 = vunpack.c.l.b16 %v76
  %v220 = vunpack.c.l.b16 %v77
  %v221 = vunpack.c.l.b16 %v78
  %v222 = vpack.c.b16 %v159, %v158
  %v223 = vpack.c.b16 %v161, %v160
  %v224 = vpack.c.b16 %v163, %v162
  %v225 = vpack.c.b16 %v165, %v164
  %v226 = vpack.c.b16 %v167, %v166
  %v227 = vpack.c.b16 %v169, %v168
  %v228 = vpack.c.b16 %v171, %v170
  %v229 = vpack.c.b16 %v173, %v172
  %v230 = vpack.c.b16 %v175, %v174
  %v231 = vpack.c.b16 %v177, %v176
  %v232 = vpack.c.b16 %v179, %v178
  %v233 = vpack.c.b16 %v181, %v180
  %v234 = vpack.c.b16 %v183, %v182
  %v235 = vpack.c.b16 %v185, %v184
  %v236 = vpack.c.b16 %v187, %v186
  %v237 = vpack.c.b16 %v189, %v188
  %v238 = vpack.c.b16 %v191, %v190
  %v239 = vpack.c.b16 %v193, %v192
  %v240 = vpack.c.b16 %v195, %v194
  %v241 = vpack.c.b16 %v197, %v196
  %v242 = vpack.c.b16 %v199, %v198
  %v243 = vpack.c.b16 %v201, %v200
  %v244 = vpack.c.b16 %v203, %v202
  %v245 = vpack.c.b16 %v205, %v204
  %v246 = vpack.c.b16 %v207, %v206
  %v247 = vpack.c.b16 %v209, %v208
  %v248 = vpack.c.b16 %v211, %v210
  %v249 = vpack.c.b16 %v213, %v212
  %v250 = vpack.c.b16 %v215, %v214
  %v251 = vpack.c.b16 %v217, %v216
  %v252 = vpack.c.b16 %v219, %v218
  %v253 = vpack.c.b16 %v221, %v220
  %v257 = vunpack.c.l.b16 %v79
  %v258 = vunpack.c.h.b16 %v79
  %v259 = vunpack.c.l.b16 %v80
  %v260 = vunpack.c.h.b16 %v80
  %v261 = vunpack.c.l.b16 %v81
  %v262 = vunpack.c.h.b16 %v81
  %v263 = vpack.c.b16 %v259, %v257
  %v264 = vpack.c.b16 %v260, %v258
  %v265 = vpack.c.b16 %v261, %v261
  %v266 = vpack.c.b16 %v262, %v262
  %vm269 = vcmask 195584
  %v271 = vsel %vm269, %v222, 0
  %v274 = vsel %vm269, %v223, 0
  %v277 = vsel %vm269, %v224, 0
  %v280 = vsel %vm269, %v225, 0
  %v283 = vsel %vm269, %v226, 0
  %v286 = vsel %vm269, %v227, 0
  %v289 = vsel %vm269, %v228, 0
  %v292 = vsel %vm269, %v229, 0
  %v295 = vsel %vm269, %v230, 0
  %v298 = vsel %vm269, %v231, 0
  %v301 = vsel %vm269, %v232, 0
  %v304 = vsel %vm269, %v233, 0
  %v307 = vsel %vm269, %v234, 0
  %v310 = vsel %vm269, %v235, 0
  %v313 = vsel %vm269, %v236, 0
  %v316 = vsel %vm269, %v237, 0
  %v319 = vsel %vm269, %v238, 0
  %v322 = vsel %vm269, %v239, 0
  %v325 = vsel %vm269, %v240, 0
  %v328 = vsel %vm269, %v241, 0
  %v331 = vsel %vm269, %v242, 0
  %v334 = vsel %vm269, %v243, 0
  %v337 = vsel %vm269, %v244, 0
  %v340 = vsel %vm269, %v245, 0
  %v343 = vsel %vm269, %v246, 0
  %v346 = vsel %vm269, %v247, 0
  %v349 = vsel %vm269, %v248, 0
  %v352 = vsel %vm269, %v249, 0
  %v355 = vsel %vm269, %v250, 0
  %v358 = vsel %vm269, %v251, 0
  %v361 = vsel %vm269, %v252, 0
  %v364 = vsel %vm269, %v253, 0
  %vm366 = vcmask 1043456
  %v368 = vsel %vm366, %v265, 0
  %v371 = vsel %vm366, %v266, 0
  %373 = vmatprep.subr.bf16.mxu0 %v264
  %374 = vmatpush1.bf16.msra.mxu0 %v263
  %375 = vmatprep.subr.bf16.mxu0 %v371
  %376 = vmatpush1.bf16.msra.mxu0 %v368
  %377 = vmatprep.subr.bf16.mxu0 0
  %378 = vmatpush1.bf16.msra.mxu0 0
  %379 = vmatprep.subr.bf16.mxu0 0
  %380 = vmatpush1.bf16.msra.mxu0 0
  %381 = vmatprep.subr.bf16.mxu0 0
  %382 = vmatpush1.bf16.msra.mxu0 0
  %383 = vmatprep.subr.bf16.mxu0 0
  %384 = vmatpush1.bf16.msra.mxu0 0
  %385 = vmatprep.subr.bf16.mxu0 0
  %386 = vmatpush1.bf16.msra.mxu0 0
  %387 = vmatprep.subr.bf16.mxu0 0
  %388 = vmatpush1.bf16.msra.mxu0 0
  %389 = vmatprep.subr.bf16.mxu0 0
  %390 = vmatpush1.bf16.msra.mxu0 0
  %391 = vmatprep.subr.bf16.mxu0 0
  %392 = vmatpush1.bf16.msra.mxu0 0
  %393 = vmatprep.subr.bf16.mxu0 0
  %394 = vmatpush1.bf16.msra.mxu0 0
  %395 = vmatprep.subr.bf16.mxu0 0
  %396 = vmatpush1.bf16.msra.mxu0 0
  %397 = vmatprep.subr.bf16.mxu0 0
  %398 = vmatpush1.bf16.msra.mxu0 0
  %399 = vmatprep.subr.bf16.mxu0 0
  %400 = vmatpush1.bf16.msra.mxu0 0
  %401 = vmatprep.subr.bf16.mxu0 0
  %402 = vmatpush1.bf16.msra.mxu0 0
  %403 = vmatprep.subr.bf16.mxu0 0
  %404 = vmatpush1.bf16.msra.mxu0 0
  %405 = vmatprep.mubr.bf16.mxu0 0
  %406 = vmatmul.mubr.bf16.gmra.mrb[0].mxu0 %v271
  %v407 = vpop.f32.mrb[0].mxu0
  %v408 = vadd.f32 %v87, %v407
  %v409 = vpop.f32.mrb[0].mxu0
  %v410 = vadd.f32 %v91, %v409
  %v411 = vpop.f32.mrb[0].mxu0
  %v412 = vadd.f32 %v87, %v411
  %v413 = vpop.f32.mrb[0].mxu0
  %v414 = vadd.f32 %v91, %v413
  %415 = vmatprep.mubr.bf16.mxu0 0
  %416 = vmatmul.mubr.bf16.gmra.mrb[0].mxu0 %v274
  %v417 = vpop.f32.mrb[0].mxu0
  %v418 = vadd.f32 %v87, %v417
  %v419 = vpop.f32.mrb[0].mxu0
  %v420 = vadd.f32 %v91, %v419
  %v421 = vpop.f32.mrb[0].mxu0
  %v422 = vadd.f32 %v87, %v421
  %v423 = vpop.f32.mrb[0].mxu0
  %v424 = vadd.f32 %v91, %v423
  %425 = vmatprep.mubr.bf16.mxu0 0
  %426 = vmatmul.mubr.bf16.gmra.mrb[0].mxu0 %v277
  %v427 = vpop.f32.mrb[0].mxu0
  %v428 = vadd.f32 %v87, %v427
  %v429 = vpop.f32.mrb[0].mxu0
  %v430 = vadd.f32 %v91, %v429
  %v431 = vpop.f32.mrb[0].mxu0
  %v432 = vadd.f32 %v87, %v431
  %v433 = vpop.f32.mrb[0].mxu0
  %v434 = vadd.f32 %v91, %v433
  %435 = vmatprep.mubr.bf16.mxu0 0
  %436 = vmatmul.mubr.bf16.gmra.mrb[0].mxu0 %v280
  %v437 = vpop.f32.mrb[0].mxu0
  %v438 = vadd.f32 %v87, %v437
  %v439 = vpop.f32.mrb[0].mxu0
  %v440 = vadd.f32 %v91, %v439
  %v441 = vpop.f32.mrb[0].mxu0
  %v442 = vadd.f32 %v87, %v441
  %v443 = vpop.f32.mrb[0].mxu0
  %v444 = vadd.f32 %v91, %v443
  %445 = vmatprep.mubr.bf16.mxu0 0
  %446 = vmatmul.mubr.bf16.gmra.mrb[0].mxu0 %v283
  %v447 = vpop.f32.mrb[0].mxu0
  %v448 = vadd.f32 %v87, %v447
  %v449 = vpop.f32.mrb[0].mxu0
  %v450 = vadd.f32 %v91, %v449
  %v451 = vpop.f32.mrb[0].mxu0
  %v452 = vadd.f32 %v87, %v451
  %v453 = vpop.f32.mrb[0].mxu0
  %v454 = vadd.f32 %v91, %v453
  %455 = vmatprep.mubr.bf16.mxu0 0
  %456 = vmatmul.mubr.bf16.gmra.mrb[0].mxu0 %v286
  %v457 = vpop.f32.mrb[0].mxu0
  %v458 = vadd.f32 %v87, %v457
  %v459 = vpop.f32.mrb[0].mxu0
  %v460 = vadd.f32 %v91, %v459
  %v461 = vpop.f32.mrb[0].mxu0
  %v462 = vadd.f32 %v87, %v461
  %v463 = vpop.f32.mrb[0].mxu0
  %v464 = vadd.f32 %v91, %v463
  %465 = vmatprep.mubr.bf16.mxu0 0
  %466 = vmatmul.mubr.bf16.gmra.mrb[0].mxu0 %v289
  %v467 = vpop.f32.mrb[0].mxu0
  %v468 = vadd.f32 %v87, %v467
  %v469 = vpop.f32.mrb[0].mxu0
  %v470 = vadd.f32 %v91, %v469
  %v471 = vpop.f32.mrb[0].mxu0
  %v472 = vadd.f32 %v87, %v471
  %v473 = vpop.f32.mrb[0].mxu0
  %v474 = vadd.f32 %v91, %v473
  %475 = vmatprep.mubr.bf16.mxu0 0
  %476 = vmatmul.mubr.bf16.gmra.mrb[0].mxu0 %v292
  %v477 = vpop.f32.mrb[0].mxu0
  %v478 = vadd.f32 %v87, %v477
  %v479 = vpop.f32.mrb[0].mxu0
  %v480 = vadd.f32 %v91, %v479
  %v481 = vpop.f32.mrb[0].mxu0
  %v482 = vadd.f32 %v87, %v481
  %v483 = vpop.f32.mrb[0].mxu0
  %v484 = vadd.f32 %v91, %v483
  %485 = vmatprep.mubr.bf16.mxu0 0
  %486 = vmatmul.mubr.bf16.gmra.mrb[0].mxu0 %v295
  %v487 = vpop.f32.mrb[0].mxu0
  %v488 = vadd.f32 %v87, %v487
  %v489 = vpop.f32.mrb[0].mxu0
  %v490 = vadd.f32 %v91, %v489
  %v491 = vpop.f32.mrb[0].mxu0
  %v492 = vadd.f32 %v87, %v491
  %v493 = vpop.f32.mrb[0].mxu0
  %v494 = vadd.f32 %v91, %v493
  %495 = vmatprep.mubr.bf16.mxu0 0
  %496 = vmatmul.mubr.bf16.gmra.mrb[0].mxu0 %v298
  %v497 = vpop.f32.mrb[0].mxu0
  %v498 = vadd.f32 %v87, %v497
  %v499 = vpop.f32.mrb[0].mxu0
  %v500 = vadd.f32 %v91, %v499
  %v501 = vpop.f32.mrb[0].mxu0
  %v502 = vadd.f32 %v87, %v501
  %v503 = vpop.f32.mrb[0].mxu0
  %v504 = vadd.f32 %v91, %v503
  %505 = vmatprep.mubr.bf16.mxu0 0
  %506 = vmatmul.mubr.bf16.gmra.mrb[0].mxu0 %v301
  %v507 = vpop.f32.mrb[0].mxu0
  %v508 = vadd.f32 %v87, %v507
  %v509 = vpop.f32.mrb[0].mxu0
  %v510 = vadd.f32 %v91, %v509
  %v511 = vpop.f32.mrb[0].mxu0
  %v512 = vadd.f32 %v87, %v511
  %v513 = vpop.f32.mrb[0].mxu0
  %v514 = vadd.f32 %v91, %v513
  %515 = vmatprep.mubr.bf16.mxu0 0
  %516 = vmatmul.mubr.bf16.gmra.mrb[0].mxu0 %v304
  %v517 = vpop.f32.mrb[0].mxu0
  %v518 = vadd.f32 %v87, %v517
  %v519 = vpop.f32.mrb[0].mxu0
  %v520 = vadd.f32 %v91, %v519
  %v521 = vpop.f32.mrb[0].mxu0
  %v522 = vadd.f32 %v87, %v521
  %v523 = vpop.f32.mrb[0].mxu0
  %v524 = vadd.f32 %v91, %v523
  %525 = vmatprep.mubr.bf16.mxu0 0
  %526 = vmatmul.mubr.bf16.gmra.mrb[0].mxu0 %v307
  %v527 = vpop.f32.mrb[0].mxu0
  %v528 = vadd.f32 %v87, %v527
  %v529 = vpop.f32.mrb[0].mxu0
  %v530 = vadd.f32 %v91, %v529
  %v531 = vpop.f32.mrb[0].mxu0
  %v532 = vadd.f32 %v87, %v531
  %v533 = vpop.f32.mrb[0].mxu0
  %v534 = vadd.f32 %v91, %v533
  %535 = vmatprep.mubr.bf16.mxu0 0
  %536 = vmatmul.mubr.bf16.gmra.mrb[0].mxu0 %v310
  %v537 = vpop.f32.mrb[0].mxu0
  %v538 = vadd.f32 %v87, %v537
  %v539 = vpop.f32.mrb[0].mxu0
  %v540 = vadd.f32 %v91, %v539
  %v541 = vpop.f32.mrb[0].mxu0
  %v542 = vadd.f32 %v87, %v541
  %v543 = vpop.f32.mrb[0].mxu0
  %v544 = vadd.f32 %v91, %v543
  %545 = vmatprep.mubr.bf16.mxu0 0
  %546 = vmatmul.mubr.bf16.gmra.mrb[0].mxu0 %v313
  %v547 = vpop.f32.mrb[0].mxu0
  %v548 = vadd.f32 %v87, %v547
  %v549 = vpop.f32.mrb[0].mxu0
  %v550 = vadd.f32 %v91, %v549
  %v551 = vpop.f32.mrb[0].mxu0
  %v552 = vadd.f32 %v87, %v551
  %v553 = vpop.f32.mrb[0].mxu0
  %v554 = vadd.f32 %v91, %v553
  %555 = vmatprep.mubr.bf16.mxu0 0
  %556 = vmatmul.mubr.bf16.gmra.mrb[0].mxu0 %v316
  %v557 = vpop.f32.mrb[0].mxu0
  %v558 = vadd.f32 %v87, %v557
  %v559 = vpop.f32.mrb[0].mxu0
  %v560 = vadd.f32 %v91, %v559
  %v561 = vpop.f32.mrb[0].mxu0
  %v562 = vadd.f32 %v87, %v561
  %v563 = vpop.f32.mrb[0].mxu0
  %v564 = vadd.f32 %v91, %v563
  %565 = vmatprep.mubr.bf16.mxu0 0
  %566 = vmatmul.mubr.bf16.gmra.mrb[0].mxu0 %v319
  %v567 = vpop.f32.mrb[0].mxu0
  %v568 = vadd.f32 %v87, %v567
  %v569 = vpop.f32.mrb[0].mxu0
  %v570 = vadd.f32 %v91, %v569
  %v571 = vpop.f32.mrb[0].mxu0
  %v572 = vadd.f32 %v87, %v571
  %v573 = vpop.f32.mrb[0].mxu0
  %v574 = vadd.f32 %v91, %v573
  %575 = vmatprep.mubr.bf16.mxu0 0
  %576 = vmatmul.mubr.bf16.gmra.mrb[0].mxu0 %v322
  %v577 = vpop.f32.mrb[0].mxu0
  %v578 = vadd.f32 %v87, %v577
  %v579 = vpop.f32.mrb[0].mxu0
  %v580 = vadd.f32 %v91, %v579
  %v581 = vpop.f32.mrb[0].mxu0
  %v582 = vadd.f32 %v87, %v581
  %v583 = vpop.f32.mrb[0].mxu0
  %v584 = vadd.f32 %v91, %v583
  %585 = vmatprep.mubr.bf16.mxu0 0
  %586 = vmatmul.mubr.bf16.gmra.mrb[0].mxu0 %v325
  %v587 = vpop.f32.mrb[0].mxu0
  %v588 = vadd.f32 %v87, %v587
  %v589 = vpop.f32.mrb[0].mxu0
  %v590 = vadd.f32 %v91, %v589
  %v591 = vpop.f32.mrb[0].mxu0
  %v592 = vadd.f32 %v87, %v591
  %v593 = vpop.f32.mrb[0].mxu0
  %v594 = vadd.f32 %v91, %v593
  %595 = vmatprep.mubr.bf16.mxu0 0
  %596 = vmatmul.mubr.bf16.gmra.mrb[0].mxu0 %v328
  %v597 = vpop.f32.mrb[0].mxu0
  %v598 = vadd.f32 %v87, %v597
  %v599 = vpop.f32.mrb[0].mxu0
  %v600 = vadd.f32 %v91, %v599
  %v601 = vpop.f32.mrb[0].mxu0
  %v602 = vadd.f32 %v87, %v601
  %v603 = vpop.f32.mrb[0].mxu0
  %v604 = vadd.f32 %v91, %v603
  %605 = vmatprep.mubr.bf16.mxu0 0
  %606 = vmatmul.mubr.bf16.gmra.mrb[0].mxu0 %v331
  %v607 = vpop.f32.mrb[0].mxu0
  %v608 = vadd.f32 %v87, %v607
  %v609 = vpop.f32.mrb[0].mxu0
  %v610 = vadd.f32 %v91, %v609
  %v611 = vpop.f32.mrb[0].mxu0
  %v612 = vadd.f32 %v87, %v611
  %v613 = vpop.f32.mrb[0].mxu0
  %v614 = vadd.f32 %v91, %v613
  %615 = vmatprep.mubr.bf16.mxu0 0
  %616 = vmatmul.mubr.bf16.gmra.mrb[0].mxu0 %v334
  %v617 = vpop.f32.mrb[0].mxu0
  %v618 = vadd.f32 %v87, %v617
  %v619 = vpop.f32.mrb[0].mxu0
  %v620 = vadd.f32 %v91, %v619
  %v621 = vpop.f32.mrb[0].mxu0
  %v622 = vadd.f32 %v87, %v621
  %v623 = vpop.f32.mrb[0].mxu0
  %v624 = vadd.f32 %v91, %v623
  %625 = vmatprep.mubr.bf16.mxu0 0
  %626 = vmatmul.mubr.bf16.gmra.mrb[0].mxu0 %v337
  %v627 = vpop.f32.mrb[0].mxu0
  %v628 = vadd.f32 %v87, %v627
  %v629 = vpop.f32.mrb[0].mxu0
  %v630 = vadd.f32 %v91, %v629
  %v631 = vpop.f32.mrb[0].mxu0
  %v632 = vadd.f32 %v87, %v631
  %v633 = vpop.f32.mrb[0].mxu0
  %v634 = vadd.f32 %v91, %v633
  %635 = vmatprep.mubr.bf16.mxu0 0
  %636 = vmatmul.mubr.bf16.gmra.mrb[0].mxu0 %v340
  %v637 = vpop.f32.mrb[0].mxu0
  %v638 = vadd.f32 %v87, %v637
  %v639 = vpop.f32.mrb[0].mxu0
  %v640 = vadd.f32 %v91, %v639
  %v641 = vpop.f32.mrb[0].mxu0
  %v642 = vadd.f32 %v87, %v641
  %v643 = vpop.f32.mrb[0].mxu0
  %v644 = vadd.f32 %v91, %v643
  %645 = vmatprep.mubr.bf16.mxu0 0
  %646 = vmatmul.mubr.bf16.gmra.mrb[0].mxu0 %v343
  %v647 = vpop.f32.mrb[0].mxu0
  %v648 = vadd.f32 %v87, %v647
  %v649 = vpop.f32.mrb[0].mxu0
  %v650 = vadd.f32 %v91, %v649
  %v651 = vpop.f32.mrb[0].mxu0
  %v652 = vadd.f32 %v87, %v651
  %v653 = vpop.f32.mrb[0].mxu0
  %v654 = vadd.f32 %v91, %v653
  %655 = vmatprep.mubr.bf16.mxu0 0
  %656 = vmatmul.mubr.bf16.gmra.mrb[0].mxu0 %v346
  %v657 = vpop.f32.mrb[0].mxu0
  %v658 = vadd.f32 %v87, %v657
  %v659 = vpop.f32.mrb[0].mxu0
  %v660 = vadd.f32 %v91, %v659
  %v661 = vpop.f32.mrb[0].mxu0
  %v662 = vadd.f32 %v87, %v661
  %v663 = vpop.f32.mrb[0].mxu0
  %v664 = vadd.f32 %v91, %v663
  %665 = vmatprep.mubr.bf16.mxu0 0
  %666 = vmatmul.mubr.bf16.gmra.mrb[0].mxu0 %v349
  %v667 = vpop.f32.mrb[0].mxu0
  %v668 = vadd.f32 %v87, %v667
  %v669 = vpop.f32.mrb[0].mxu0
  %v670 = vadd.f32 %v91, %v669
  %v671 = vpop.f32.mrb[0].mxu0
  %v672 = vadd.f32 %v87, %v671
  %v673 = vpop.f32.mrb[0].mxu0
  %v674 = vadd.f32 %v91, %v673
  %675 = vmatprep.mubr.bf16.mxu0 0
  %676 = vmatmul.mubr.bf16.gmra.mrb[0].mxu0 %v352
  %v677 = vpop.f32.mrb[0].mxu0
  %v678 = vadd.f32 %v87, %v677
  %v679 = vpop.f32.mrb[0].mxu0
  %v680 = vadd.f32 %v91, %v679
  %v681 = vpop.f32.mrb[0].mxu0
  %v682 = vadd.f32 %v87, %v681
  %v683 = vpop.f32.mrb[0].mxu0
  %v684 = vadd.f32 %v91, %v683
  %685 = vmatprep.mubr.bf16.mxu0 0
  %686 = vmatmul.mubr.bf16.gmra.mrb[0].mxu0 %v355
  %v687 = vpop.f32.mrb[0].mxu0
  %v688 = vadd.f32 %v87, %v687
  %v689 = vpop.f32.mrb[0].mxu0
  %v690 = vadd.f32 %v91, %v689
  %v691 = vpop.f32.mrb[0].mxu0
  %v692 = vadd.f32 %v87, %v691
  %v693 = vpop.f32.mrb[0].mxu0
  %v694 = vadd.f32 %v91, %v693
  %695 = vmatprep.mubr.bf16.mxu0 0
  %696 = vmatmul.mubr.bf16.gmra.mrb[0].mxu0 %v358
  %v697 = vpop.f32.mrb[0].mxu0
  %v698 = vadd.f32 %v87, %v697
  %v699 = vpop.f32.mrb[0].mxu0
  %v700 = vadd.f32 %v91, %v699
  %v701 = vpop.f32.mrb[0].mxu0
  %v702 = vadd.f32 %v87, %v701
  %v703 = vpop.f32.mrb[0].mxu0
  %v704 = vadd.f32 %v91, %v703
  %705 = vmatprep.mubr.bf16.mxu0 0
  %706 = vmatmul.mubr.bf16.gmra.mrb[0].mxu0 %v361
  %v707 = vpop.f32.mrb[0].mxu0
  %v708 = vadd.f32 %v87, %v707
  %v709 = vpop.f32.mrb[0].mxu0
  %v710 = vadd.f32 %v91, %v709
  %v711 = vpop.f32.mrb[0].mxu0
  %v712 = vadd.f32 %v87, %v711
  %v713 = vpop.f32.mrb[0].mxu0
  %v714 = vadd.f32 %v91, %v713
  %715 = vmatprep.mubr.bf16.mxu0 0
  %716 = vmatmul.mubr.bf16.gmra.mrb[0].mxu0 %v364
  %v717 = vpop.f32.mrb[0].mxu0
  %v718 = vadd.f32 %v87, %v717
  %v719 = vpop.f32.mrb[0].mxu0
  %v720 = vadd.f32 %v91, %v719
  %v721 = vpop.f32.mrb[0].mxu0
  %v722 = vadd.f32 %v87, %v721
  %v723 = vpop.f32.mrb[0].mxu0
  %v724 = vadd.f32 %v91, %v723
  %725 = vdwg.mxu0
  %v726 = vmax.f32 %v408, 0.0
  %v727 = vmax.f32 %v410, 0.0
  %v728 = vmax.f32 %v412, 0.0
  %v729 = vmax.f32 %v414, 0.0
  %v730 = vmax.f32 %v418, 0.0
  %v731 = vmax.f32 %v420, 0.0
  %v732 = vmax.f32 %v422, 0.0
  %v733 = vmax.f32 %v424, 0.0
  %v734 = vmax.f32 %v428, 0.0
  %v735 = vmax.f32 %v430, 0.0
  %v736 = vmax.f32 %v432, 0.0
  %v737 = vmax.f32 %v434, 0.0
  %v738 = vmax.f32 %v438, 0.0
  %v739 = vmax.f32 %v440, 0.0
  %v740 = vmax.f32 %v442, 0.0
  %v741 = vmax.f32 %v444, 0.0
  %v742 = vmax.f32 %v448, 0.0
  %v743 = vmax.f32 %v450, 0.0
  %v744 = vmax.f32 %v452, 0.0
  %v745 = vmax.f32 %v454, 0.0
  %v746 = vmax.f32 %v458, 0.0
  %v747 = vmax.f32 %v460, 0.0
  %v748 = vmax.f32 %v462, 0.0
  %v749 = vmax.f32 %v464, 0.0
  %v750 = vmax.f32 %v468, 0.0
  %v751 = vmax.f32 %v470, 0.0
  %v752 = vmax.f32 %v472, 0.0
  %v753 = vmax.f32 %v474, 0.0
  %v754 = vmax.f32 %v478, 0.0
  %v755 = vmax.f32 %v480, 0.0
  %v756 = vmax.f32 %v482, 0.0
  %v757 = vmax.f32 %v484, 0.0
  %v758 = vmax.f32 %v488, 0.0
  %v759 = vmax.f32 %v490, 0.0
  %v760 = vmax.f32 %v492, 0.0
  %v761 = vmax.f32 %v494, 0.0
  %v762 = vmax.f32 %v498, 0.0
  %v763 = vmax.f32 %v500, 0.0
  %v764 = vmax.f32 %v502, 0.0
  %v765 = vmax.f32 %v504, 0.0
  %v766 = vmax.f32 %v508, 0.0
  %v767 = vmax.f32 %v510, 0.0
  %v768 = vmax.f32 %v512, 0.0
  %v769 = vmax.f32 %v514, 0.0
  %v770 = vmax.f32 %v518, 0.0
  %v771 = vmax.f32 %v520, 0.0
  %v772 = vmax.f32 %v522, 0.0
  %v773 = vmax.f32 %v524, 0.0
  %v774 = vmax.f32 %v528, 0.0
  %v775 = vmax.f32 %v530, 0.0
  %v776 = vmax.f32 %v532, 0.0
  %v777 = vmax.f32 %v534, 0.0
  %v778 = vmax.f32 %v538, 0.0
  %v779 = vmax.f32 %v540, 0.0
  %v780 = vmax.f32 %v542, 0.0
  %v781 = vmax.f32 %v544, 0.0
  %v782 = vmax.f32 %v548, 0.0
  %v783 = vmax.f32 %v550, 0.0
  %v784 = vmax.f32 %v552, 0.0
  %v785 = vmax.f32 %v554, 0.0
  %v786 = vmax.f32 %v558, 0.0
  %v787 = vmax.f32 %v560, 0.0
  %v788 = vmax.f32 %v562, 0.0
  %v789 = vmax.f32 %v564, 0.0
  %v790 = vmax.f32 %v568, 0.0
  %v791 = vmax.f32 %v570, 0.0
  %v792 = vmax.f32 %v572, 0.0
  %v793 = vmax.f32 %v574, 0.0
  %v794 = vmax.f32 %v578, 0.0
  %v795 = vmax.f32 %v580, 0.0
  %v796 = vmax.f32 %v582, 0.0
  %v797 = vmax.f32 %v584, 0.0
  %v798 = vmax.f32 %v588, 0.0
  %v799 = vmax.f32 %v590, 0.0
  %v800 = vmax.f32 %v592, 0.0
  %v801 = vmax.f32 %v594, 0.0
  %v802 = vmax.f32 %v598, 0.0
  %v803 = vmax.f32 %v600, 0.0
  %v804 = vmax.f32 %v602, 0.0
  %v805 = vmax.f32 %v604, 0.0
  %v806 = vmax.f32 %v608, 0.0
  %v807 = vmax.f32 %v610, 0.0
  %v808 = vmax.f32 %v612, 0.0
  %v809 = vmax.f32 %v614, 0.0
  %v810 = vmax.f32 %v618, 0.0
  %v811 = vmax.f32 %v620, 0.0
  %v812 = vmax.f32 %v622, 0.0
  %v813 = vmax.f32 %v624, 0.0
  %v814 = vmax.f32 %v628, 0.0
  %v815 = vmax.f32 %v630, 0.0
  %v816 = vmax.f32 %v632, 0.0
  %v817 = vmax.f32 %v634, 0.0
  %v818 = vmax.f32 %v638, 0.0
  %v819 = vmax.f32 %v640, 0.0
  %v820 = vmax.f32 %v642, 0.0
  %v821 = vmax.f32 %v644, 0.0
  %v822 = vmax.f32 %v648, 0.0
  %v823 = vmax.f32 %v650, 0.0
  %v824 = vmax.f32 %v652, 0.0
  %v825 = vmax.f32 %v654, 0.0
  %v826 = vmax.f32 %v658, 0.0
  %v827 = vmax.f32 %v660, 0.0
  %v828 = vmax.f32 %v662, 0.0
  %v829 = vmax.f32 %v664, 0.0
  %v830 = vmax.f32 %v668, 0.0
  %v831 = vmax.f32 %v670, 0.0
  %v832 = vmax.f32 %v672, 0.0
  %v833 = vmax.f32 %v674, 0.0
  %v834 = vmax.f32 %v678, 0.0
  %v835 = vmax.f32 %v680, 0.0
  %v836 = vmax.f32 %v682, 0.0
  %v837 = vmax.f32 %v684, 0.0
  %v838 = vmax.f32 %v688, 0.0
  %v839 = vmax.f32 %v690, 0.0
  %v840 = vmax.f32 %v692, 0.0
  %v841 = vmax.f32 %v694, 0.0
  %v842 = vmax.f32 %v698, 0.0
  %v843 = vmax.f32 %v700, 0.0
  %v844 = vmax.f32 %v702, 0.0
  %v845 = vmax.f32 %v704, 0.0
  %v846 = vmax.f32 %v708, 0.0
  %v847 = vmax.f32 %v710, 0.0
  %v848 = vmax.f32 %v712, 0.0
  %v849 = vmax.f32 %v714, 0.0
  %v850 = vmax.f32 %v718, 0.0
  %v851 = vmax.f32 %v720, 0.0
  %v852 = vmax.f32 %v722, 0.0
  %v853 = vmax.f32 %v724, 0.0
  %v854 = vmin.f32 %v726, 6.0
  %v855 = vmin.f32 %v727, 6.0
  %v856 = vmin.f32 %v728, 6.0
  %v857 = vmin.f32 %v729, 6.0
  %v858 = vmin.f32 %v730, 6.0
  %v859 = vmin.f32 %v731, 6.0
  %v860 = vmin.f32 %v732, 6.0
  %v861 = vmin.f32 %v733, 6.0
  %v862 = vmin.f32 %v734, 6.0
  %v863 = vmin.f32 %v735, 6.0
  %v864 = vmin.f32 %v736, 6.0
  %v865 = vmin.f32 %v737, 6.0
  %v866 = vmin.f32 %v738, 6.0
  %v867 = vmin.f32 %v739, 6.0
  %v868 = vmin.f32 %v740, 6.0
  %v869 = vmin.f32 %v741, 6.0
  %v870 = vmin.f32 %v742, 6.0
  %v871 = vmin.f32 %v743, 6.0
  %v872 = vmin.f32 %v744, 6.0
  %v873 = vmin.f32 %v745, 6.0
  %v874 = vmin.f32 %v746, 6.0
  %v875 = vmin.f32 %v747, 6.0
  %v876 = vmin.f32 %v748, 6.0
  %v877 = vmin.f32 %v749, 6.0
  %v878 = vmin.f32 %v750, 6.0
  %v879 = vmin.f32 %v751, 6.0
  %v880 = vmin.f32 %v752, 6.0
  %v881 = vmin.f32 %v753, 6.0
  %v882 = vmin.f32 %v754, 6.0
  %v883 = vmin.f32 %v755, 6.0
  %v884 = vmin.f32 %v756, 6.0
  %v885 = vmin.f32 %v757, 6.0
  %v886 = vmin.f32 %v758, 6.0
  %v887 = vmin.f32 %v759, 6.0
  %v888 = vmin.f32 %v760, 6.0
  %v889 = vmin.f32 %v761, 6.0
  %v890 = vmin.f32 %v762, 6.0
  %v891 = vmin.f32 %v763, 6.0
  %v892 = vmin.f32 %v764, 6.0
  %v893 = vmin.f32 %v765, 6.0
  %v894 = vmin.f32 %v766, 6.0
  %v895 = vmin.f32 %v767, 6.0
  %v896 = vmin.f32 %v768, 6.0
  %v897 = vmin.f32 %v769, 6.0
  %v898 = vmin.f32 %v770, 6.0
  %v899 = vmin.f32 %v771, 6.0
  %v900 = vmin.f32 %v772, 6.0
  %v901 = vmin.f32 %v773, 6.0
  %v902 = vmin.f32 %v774, 6.0
  %v903 = vmin.f32 %v775, 6.0
  %v904 = vmin.f32 %v776, 6.0
  %v905 = vmin.f32 %v777, 6.0
  %v906 = vmin.f32 %v778, 6.0
  %v907 = vmin.f32 %v779, 6.0
  %v908 = vmin.f32 %v780, 6.0
  %v909 = vmin.f32 %v781, 6.0
  %v910 = vmin.f32 %v782, 6.0
  %v911 = vmin.f32 %v783, 6.0
  %v912 = vmin.f32 %v784, 6.0
  %v913 = vmin.f32 %v785, 6.0
  %v914 = vmin.f32 %v786, 6.0
  %v915 = vmin.f32 %v787, 6.0
  %v916 = vmin.f32 %v788, 6.0
  %v917 = vmin.f32 %v789, 6.0
  %v918 = vmin.f32 %v790, 6.0
  %v919 = vmin.f32 %v791, 6.0
  %v920 = vmin.f32 %v792, 6.0
  %v921 = vmin.f32 %v793, 6.0
  %v922 = vmin.f32 %v794, 6.0
  %v923 = vmin.f32 %v795, 6.0
  %v924 = vmin.f32 %v796, 6.0
  %v925 = vmin.f32 %v797, 6.0
  %v926 = vmin.f32 %v798, 6.0
  %v927 = vmin.f32 %v799, 6.0
  %v928 = vmin.f32 %v800, 6.0
  %v929 = vmin.f32 %v801, 6.0
  %v930 = vmin.f32 %v802, 6.0
  %v931 = vmin.f32 %v803, 6.0
  %v932 = vmin.f32 %v804, 6.0
  %v933 = vmin.f32 %v805, 6.0
  %v934 = vmin.f32 %v806, 6.0
  %v935 = vmin.f32 %v807, 6.0
  %v936 = vmin.f32 %v808, 6.0
  %v937 = vmin.f32 %v809, 6.0
  %v938 = vmin.f32 %v810, 6.0
  %v939 = vmin.f32 %v811, 6.0
  %v940 = vmin.f32 %v812, 6.0
  %v941 = vmin.f32 %v813, 6.0
  %v942 = vmin.f32 %v814, 6.0
  %v943 = vmin.f32 %v815, 6.0
  %v944 = vmin.f32 %v816, 6.0
  %v945 = vmin.f32 %v817, 6.0
  %v946 = vmin.f32 %v818, 6.0
  %v947 = vmin.f32 %v819, 6.0
  %v948 = vmin.f32 %v820, 6.0
  %v949 = vmin.f32 %v821, 6.0
  %v950 = vmin.f32 %v822, 6.0
  %v951 = vmin.f32 %v823, 6.0
  %v952 = vmin.f32 %v824, 6.0
  %v953 = vmin.f32 %v825, 6.0
  %v954 = vmin.f32 %v826, 6.0
  %v955 = vmin.f32 %v827, 6.0
  %v956 = vmin.f32 %v828, 6.0
  %v957 = vmin.f32 %v829, 6.0
  %v958 = vmin.f32 %v830, 6.0
  %v959 = vmin.f32 %v831, 6.0
  %v960 = vmin.f32 %v832, 6.0
  %v961 = vmin.f32 %v833, 6.0
  %v962 = vmin.f32 %v834, 6.0
  %v963 = vmin.f32 %v835, 6.0
  %v964 = vmin.f32 %v836, 6.0
  %v965 = vmin.f32 %v837, 6.0
  %v966 = vmin.f32 %v838, 6.0
  %v967 = vmin.f32 %v839, 6.0
  %v968 = vmin.f32 %v840, 6.0
  %v969 = vmin.f32 %v841, 6.0
  %v970 = vmin.f32 %v842, 6.0
  %v971 = vmin.f32 %v843, 6.0
  %v972 = vmin.f32 %v844, 6.0
  %v973 = vmin.f32 %v845, 6.0
  %v974 = vmin.f32 %v846, 6.0
  %v975 = vmin.f32 %v847, 6.0
  %v976 = vmin.f32 %v848, 6.0
  %v977 = vmin.f32 %v849, 6.0
  %v978 = vmin.f32 %v850, 6.0
  %v979 = vmin.f32 %v851, 6.0
  %v980 = vmin.f32 %v852, 6.0
  %v981 = vmin.f32 %v853, 6.0
  %v982 = vpack.c.bf16 %v856, %v854
  %v983 = vpack.c.bf16 %v857, %v855
  %v984 = vpack.c.bf16 %v860, %v858
  %v985 = vpack.c.bf16 %v861, %v859
  %v986 = vpack.c.bf16 %v864, %v862
  %v987 = vpack.c.bf16 %v865, %v863
  %v988 = vpack.c.bf16 %v868, %v866
  %v989 = vpack.c.bf16 %v869, %v867
  %v990 = vpack.c.bf16 %v872, %v870
  %v991 = vpack.c.bf16 %v873, %v871
  %v992 = vpack.c.bf16 %v876, %v874
  %v993 = vpack.c.bf16 %v877, %v875
  %v994 = vpack.c.bf16 %v880, %v878
  %v995 = vpack.c.bf16 %v881, %v879
  %v996 = vpack.c.bf16 %v884, %v882
  %v997 = vpack.c.bf16 %v885, %v883
  %v998 = vpack.c.bf16 %v888, %v886
  %v999 = vpack.c.bf16 %v889, %v887
  %v1000 = vpack.c.bf16 %v892, %v890
  %v1001 = vpack.c.bf16 %v893, %v891
  %v1002 = vpack.c.bf16 %v896, %v894
  %v1003 = vpack.c.bf16 %v897, %v895
  %v1004 = vpack.c.bf16 %v900, %v898
  %v1005 = vpack.c.bf16 %v901, %v899
  %v1006 = vpack.c.bf16 %v904, %v902
  %v1007 = vpack.c.bf16 %v905, %v903
  %v1008 = vpack.c.bf16 %v908, %v906
  %v1009 = vpack.c.bf16 %v909, %v907
  %v1010 = vpack.c.bf16 %v912, %v910
  %v1011 = vpack.c.bf16 %v913, %v911
  %v1012 = vpack.c.bf16 %v916, %v914
  %v1013 = vpack.c.bf16 %v917, %v915
  %v1014 = vpack.c.bf16 %v920, %v918
  %v1015 = vpack.c.bf16 %v921, %v919
  %v1016 = vpack.c.bf16 %v924, %v922
  %v1017 = vpack.c.bf16 %v925, %v923
  %v1018 = vpack.c.bf16 %v928, %v926
  %v1019 = vpack.c.bf16 %v929, %v927
  %v1020 = vpack.c.bf16 %v932, %v930
  %v1021 = vpack.c.bf16 %v933, %v931
  %v1022 = vpack.c.bf16 %v936, %v934
  %v1023 = vpack.c.bf16 %v937, %v935
  %v1024 = vpack.c.bf16 %v940, %v938
  %v1025 = vpack.c.bf16 %v941, %v939
  %v1026 = vpack.c.bf16 %v944, %v942
  %v1027 = vpack.c.bf16 %v945, %v943
  %v1028 = vpack.c.bf16 %v948, %v946
  %v1029 = vpack.c.bf16 %v949, %v947
  %v1030 = vpack.c.bf16 %v952, %v950
  %v1031 = vpack.c.bf16 %v953, %v951
  %v1032 = vpack.c.bf16 %v956, %v954
  %v1033 = vpack.c.bf16 %v957, %v955
  %v1034 = vpack.c.bf16 %v960, %v958
  %v1035 = vpack.c.bf16 %v961, %v959
  %v1036 = vpack.c.bf16 %v964, %v962
  %v1037 = vpack.c.bf16 %v965, %v963
  %v1038 = vpack.c.bf16 %v968, %v966
  %v1039 = vpack.c.bf16 %v969, %v967
  %v1040 = vpack.c.bf16 %v972, %v970
  %v1041 = vpack.c.bf16 %v973, %v971
  %v1042 = vpack.c.bf16 %v976, %v974
  %v1043 = vpack.c.bf16 %v977, %v975
  %v1044 = vpack.c.bf16 %v980, %v978
  %v1045 = vpack.c.bf16 %v981, %v979
  %v1110 = vunpack.c.l.b16 %v982
  %v1111 = vunpack.c.l.b16 %v983
  %v1112 = vunpack.c.h.b16 %v982
  %v1113 = vunpack.c.h.b16 %v983
  %v1114 = vunpack.c.l.b16 %v984
  %v1115 = vunpack.c.l.b16 %v985
  %v1116 = vunpack.c.h.b16 %v984
  %v1117 = vunpack.c.h.b16 %v985
  %v1118 = vunpack.c.l.b16 %v986
  %v1119 = vunpack.c.l.b16 %v987
  %v1120 = vunpack.c.h.b16 %v986
  %v1121 = vunpack.c.h.b16 %v987
  %v1122 = vunpack.c.l.b16 %v988
  %v1123 = vunpack.c.l.b16 %v989
  %v1124 = vunpack.c.h.b16 %v988
  %v1125 = vunpack.c.h.b16 %v989
  %v1126 = vunpack.c.l.b16 %v990
  %v1127 = vunpack.c.l.b16 %v991
  %v1128 = vunpack.c.h.b16 %v990
  %v1129 = vunpack.c.h.b16 %v991
  %v1130 = vunpack.c.l.b16 %v992
  %v1131 = vunpack.c.l.b16 %v993
  %v1132 = vunpack.c.h.b16 %v992
  %v1133 = vunpack.c.h.b16 %v993
  %v1134 = vunpack.c.l.b16 %v994
  %v1135 = vunpack.c.l.b16 %v995
  %v1136 = vunpack.c.h.b16 %v994
  %v1137 = vunpack.c.h.b16 %v995
  %v1138 = vunpack.c.l.b16 %v996
  %v1139 = vunpack.c.l.b16 %v997
  %v1140 = vunpack.c.h.b16 %v996
  %v1141 = vunpack.c.h.b16 %v997
  %v1142 = vunpack.c.l.b16 %v998
  %v1143 = vunpack.c.l.b16 %v999
  %v1144 = vunpack.c.h.b16 %v998
  %v1145 = vunpack.c.h.b16 %v999
  %v1146 = vunpack.c.l.b16 %v1000
  %v1147 = vunpack.c.l.b16 %v1001
  %v1148 = vunpack.c.h.b16 %v1000
  %v1149 = vunpack.c.h.b16 %v1001
  %v1150 = vunpack.c.l.b16 %v1002
  %v1151 = vunpack.c.l.b16 %v1003
  %v1152 = vunpack.c.h.b16 %v1002
  %v1153 = vunpack.c.h.b16 %v1003
  %v1154 = vunpack.c.l.b16 %v1004
  %v1155 = vunpack.c.l.b16 %v1005
  %v1156 = vunpack.c.h.b16 %v1004
  %v1157 = vunpack.c.h.b16 %v1005
  %v1158 = vunpack.c.l.b16 %v1006
  %v1159 = vunpack.c.l.b16 %v1007
  %v1160 = vunpack.c.h.b16 %v1006
  %v1161 = vunpack.c.h.b16 %v1007
  %v1162 = vunpack.c.l.b16 %v1008
  %v1163 = vunpack.c.l.b16 %v1009
  %v1164 = vunpack.c.h.b16 %v1008
  %v1165 = vunpack.c.h.b16 %v1009
  %v1166 = vunpack.c.l.b16 %v1010
  %v1167 = vunpack.c.l.b16 %v1011
  %v1168 = vunpack.c.h.b16 %v1010
  %v1169 = vunpack.c.h.b16 %v1011
  %v1170 = vunpack.c.l.b16 %v1012
  %v1171 = vunpack.c.l.b16 %v1013
  %v1172 = vunpack.c.h.b16 %v1012
  %v1173 = vunpack.c.h.b16 %v1013
  %v1174 = vunpack.c.l.b16 %v1014
  %v1175 = vunpack.c.l.b16 %v1015
  %v1176 = vunpack.c.h.b16 %v1014
  %v1177 = vunpack.c.h.b16 %v1015
  %v1178 = vunpack.c.l.b16 %v1016
  %v1179 = vunpack.c.l.b16 %v1017
  %v1180 = vunpack.c.h.b16 %v1016
  %v1181 = vunpack.c.h.b16 %v1017
  %v1182 = vunpack.c.l.b16 %v1018
  %v1183 = vunpack.c.l.b16 %v1019
  %v1184 = vunpack.c.h.b16 %v1018
  %v1185 = vunpack.c.h.b16 %v1019
  %v1186 = vunpack.c.l.b16 %v1020
  %v1187 = vunpack.c.l.b16 %v1021
  %v1188 = vunpack.c.h.b16 %v1020
  %v1189 = vunpack.c.h.b16 %v1021
  %v1190 = vunpack.c.l.b16 %v1022
  %v1191 = vunpack.c.l.b16 %v1023
  %v1192 = vunpack.c.h.b16 %v1022
  %v1193 = vunpack.c.h.b16 %v1023
  %v1194 = vunpack.c.l.b16 %v1024
  %v1195 = vunpack.c.l.b16 %v1025
  %v1196 = vunpack.c.h.b16 %v1024
  %v1197 = vunpack.c.h.b16 %v1025
  %v1198 = vunpack.c.l.b16 %v1026
  %v1199 = vunpack.c.l.b16 %v1027
  %v1200 = vunpack.c.h.b16 %v1026
  %v1201 = vunpack.c.h.b16 %v1027
  %v1202 = vunpack.c.l.b16 %v1028
  %v1203 = vunpack.c.l.b16 %v1029
  %v1204 = vunpack.c.h.b16 %v1028
  %v1205 = vunpack.c.h.b16 %v1029
  %v1206 = vunpack.c.l.b16 %v1030
  %v1207 = vunpack.c.l.b16 %v1031
  %v1208 = vunpack.c.h.b16 %v1030
  %v1209 = vunpack.c.h.b16 %v1031
  %v1210 = vunpack.c.l.b16 %v1032
  %v1211 = vunpack.c.l.b16 %v1033
  %v1212 = vunpack.c.h.b16 %v1032
  %v1213 = vunpack.c.h.b16 %v1033
  %v1214 = vunpack.c.l.b16 %v1034
  %v1215 = vunpack.c.l.b16 %v1035
  %v1216 = vunpack.c.h.b16 %v1034
  %v1217 = vunpack.c.h.b16 %v1035
  %v1218 = vunpack.c.l.b16 %v1036
  %v1219 = vunpack.c.l.b16 %v1037
  %v1220 = vunpack.c.h.b16 %v1036
  %v1221 = vunpack.c.h.b16 %v1037
  %v1222 = vunpack.c.l.b16 %v1038
  %v1223 = vunpack.c.l.b16 %v1039
  %v1224 = vunpack.c.h.b16 %v1038
  %v1225 = vunpack.c.h.b16 %v1039
  %v1226 = vunpack.c.l.b16 %v1040
  %v1227 = vunpack.c.l.b16 %v1041
  %v1228 = vunpack.c.h.b16 %v1040
  %v1229 = vunpack.c.h.b16 %v1041
  %v1230 = vunpack.c.l.b16 %v1042
  %v1231 = vunpack.c.l.b16 %v1043
  %v1232 = vunpack.c.h.b16 %v1042
  %v1233 = vunpack.c.h.b16 %v1043
  %v1234 = vunpack.c.l.b16 %v1044
  %v1235 = vunpack.c.l.b16 %v1045
  %v1236 = vunpack.c.h.b16 %v1044
  %v1237 = vunpack.c.h.b16 %v1045
  %v1238 = vpack.c.b16 %v1111, %v1110
  %v1239 = vpack.c.b16 %v1113, %v1112
  %v1240 = vpack.c.b16 %v1115, %v1114
  %v1241 = vpack.c.b16 %v1117, %v1116
  %v1242 = vpack.c.b16 %v1119, %v1118
  %v1243 = vpack.c.b16 %v1121, %v1120
  %v1244 = vpack.c.b16 %v1123, %v1122
  %v1245 = vpack.c.b16 %v1125, %v1124
  %v1246 = vpack.c.b16 %v1127, %v1126
  %v1247 = vpack.c.b16 %v1129, %v1128
  %v1248 = vpack.c.b16 %v1131, %v1130
  %v1249 = vpack.c.b16 %v1133, %v1132
  %v1250 = vpack.c.b16 %v1135, %v1134
  %v1251 = vpack.c.b16 %v1137, %v1136
  %v1252 = vpack.c.b16 %v1139, %v1138
  %v1253 = vpack.c.b16 %v1141, %v1140
  %v1254 = vpack.c.b16 %v1143, %v1142
  %v1255 = vpack.c.b16 %v1145, %v1144
  %v1256 = vpack.c.b16 %v1147, %v1146
  %v1257 = vpack.c.b16 %v1149, %v1148
  %v1258 = vpack.c.b16 %v1151, %v1150
  %v1259 = vpack.c.b16 %v1153, %v1152
  %v1260 = vpack.c.b16 %v1155, %v1154
  %v1261 = vpack.c.b16 %v1157, %v1156
  %v1262 = vpack.c.b16 %v1159, %v1158
  %v1263 = vpack.c.b16 %v1161, %v1160
  %v1264 = vpack.c.b16 %v1163, %v1162
  %v1265 = vpack.c.b16 %v1165, %v1164
  %v1266 = vpack.c.b16 %v1167, %v1166
  %v1267 = vpack.c.b16 %v1169, %v1168
  %v1268 = vpack.c.b16 %v1171, %v1170
  %v1269 = vpack.c.b16 %v1173, %v1172
  %v1270 = vpack.c.b16 %v1175, %v1174
  %v1271 = vpack.c.b16 %v1177, %v1176
  %v1272 = vpack.c.b16 %v1179, %v1178
  %v1273 = vpack.c.b16 %v1181, %v1180
  %v1274 = vpack.c.b16 %v1183, %v1182
  %v1275 = vpack.c.b16 %v1185, %v1184
  %v1276 = vpack.c.b16 %v1187, %v1186
  %v1277 = vpack.c.b16 %v1189, %v1188
  %v1278 = vpack.c.b16 %v1191, %v1190
  %v1279 = vpack.c.b16 %v1193, %v1192
  %v1280 = vpack.c.b16 %v1195, %v1194
  %v1281 = vpack.c.b16 %v1197, %v1196
  %v1282 = vpack.c.b16 %v1199, %v1198
  %v1283 = vpack.c.b16 %v1201, %v1200
  %v1284 = vpack.c.b16 %v1203, %v1202
  %v1285 = vpack.c.b16 %v1205, %v1204
  %v1286 = vpack.c.b16 %v1207, %v1206
  %v1287 = vpack.c.b16 %v1209, %v1208
  %v1288 = vpack.c.b16 %v1211, %v1210
  %v1289 = vpack.c.b16 %v1213, %v1212
  %v1290 = vpack.c.b16 %v1215, %v1214
  %v1291 = vpack.c.b16 %v1217, %v1216
  %v1292 = vpack.c.b16 %v1219, %v1218
  %v1293 = vpack.c.b16 %v1221, %v1220
  %v1294 = vpack.c.b16 %v1223, %v1222
  %v1295 = vpack.c.b16 %v1225, %v1224
  %v1296 = vpack.c.b16 %v1227, %v1226
  %v1297 = vpack.c.b16 %v1229, %v1228
  %v1298 = vpack.c.b16 %v1231, %v1230
  %v1299 = vpack.c.b16 %v1233, %v1232
  %v1300 = vpack.c.b16 %v1235, %v1234
  %v1301 = vpack.c.b16 %v1237, %v1236
  %vm1366 = vcmask 130052
  %vm1367 = vmor %vm1366, %vm366
  %1368 = vst.msk [vmem:[%s3] sm:$0xff] %vm1367, %v1238
  %1369 = vst.msk [vmem:[%s3 + $0x8] sm:$0xff] %vm1367, %v1239
  %1370 = vst.msk [vmem:[%s3 + $0x10] sm:$0xff] %vm1367, %v1240
  %1371 = vst.msk [vmem:[%s3 + $0x18] sm:$0xff] %vm1367, %v1241
  %1372 = vst.msk [vmem:[%s3 + $0x20] sm:$0xff] %vm1367, %v1242
  %1373 = vst.msk [vmem:[%s3 + $0x28] sm:$0xff] %vm1367, %v1243
  %1374 = vst.msk [vmem:[%s3 + $0x30] sm:$0xff] %vm1367, %v1244
  %1375 = vst.msk [vmem:[%s3 + $0x38] sm:$0xff] %vm1367, %v1245
  %1376 = vst.msk [vmem:[%s3 + $0x40] sm:$0xff] %vm1367, %v1246
  %1377 = vst.msk [vmem:[%s3 + $0x48] sm:$0xff] %vm1367, %v1247
  %1378 = vst.msk [vmem:[%s3 + $0x50] sm:$0xff] %vm1367, %v1248
  %1379 = vst.msk [vmem:[%s3 + $0x58] sm:$0xff] %vm1367, %v1249
  %1380 = vst.msk [vmem:[%s3 + $0x60] sm:$0xff] %vm1367, %v1250
  %1381 = vst.msk [vmem:[%s3 + $0x68] sm:$0xff] %vm1367, %v1251
  %1382 = vst.msk [vmem:[%s3 + $0x70] sm:$0xff] %vm1367, %v1252
  %1383 = vst.msk [vmem:[%s3 + $0x78] sm:$0xff] %vm1367, %v1253
  %1384 = vst.msk [vmem:[%s3 + $0x80] sm:$0xff] %vm1367, %v1254
  %1385 = vst.msk [vmem:[%s3 + $0x88] sm:$0xff] %vm1367, %v1255
  %1386 = vst.msk [vmem:[%s3 + $0x90] sm:$0xff] %vm1367, %v1256
  %1387 = vst.msk [vmem:[%s3 + $0x98] sm:$0xff] %vm1367, %v1257
  %1388 = vst.msk [vmem:[%s3 + $0xa0] sm:$0xff] %vm1367, %v1258
  %1389 = vst.msk [vmem:[%s3 + $0xa8] sm:$0xff] %vm1367, %v1259
  %1390 = vst.msk [vmem:[%s3 + $0xb0] sm:$0xff] %vm1367, %v1260
  %1391 = vst.msk [vmem:[%s3 + $0xb8] sm:$0xff] %vm1367, %v1261
  %1392 = vst.msk [vmem:[%s3 + $0xc0] sm:$0xff] %vm1367, %v1262
  %1393 = vst.msk [vmem:[%s3 + $0xc8] sm:$0xff] %vm1367, %v1263
  %1394 = vst.msk [vmem:[%s3 + $0xd0] sm:$0xff] %vm1367, %v1264
  %1395 = vst.msk [vmem:[%s3 + $0xd8] sm:$0xff] %vm1367, %v1265
  %1396 = vst.msk [vmem:[%s3 + $0xe0] sm:$0xff] %vm1367, %v1266
  %1397 = vst.msk [vmem:[%s3 + $0xe8] sm:$0xff] %vm1367, %v1267
  %1398 = vst.msk [vmem:[%s3 + $0xf0] sm:$0xff] %vm1367, %v1268
  %1399 = vst.msk [vmem:[%s3 + $0xf8] sm:$0xff] %vm1367, %v1269
  %1400 = vst.msk [vmem:[%s3 + $0x100] sm:$0xff] %vm1367, %v1270
  %1401 = vst.msk [vmem:[%s3 + $0x108] sm:$0xff] %vm1367, %v1271
  %1402 = vst.msk [vmem:[%s3 + $0x110] sm:$0xff] %vm1367, %v1272
  %1403 = vst.msk [vmem:[%s3 + $0x118] sm:$0xff] %vm1367, %v1273
  %1404 = vst.msk [vmem:[%s3 + $0x120] sm:$0xff] %vm1367, %v1274
  %1405 = vst.msk [vmem:[%s3 + $0x128] sm:$0xff] %vm1367, %v1275
  %1406 = vst.msk [vmem:[%s3 + $0x130] sm:$0xff] %vm1367, %v1276
  %1407 = vst.msk [vmem:[%s3 + $0x138] sm:$0xff] %vm1367, %v1277
  %1408 = vst.msk [vmem:[%s3 + $0x140] sm:$0xff] %vm1367, %v1278
  %1409 = vst.msk [vmem:[%s3 + $0x148] sm:$0xff] %vm1367, %v1279
  %1410 = vst.msk [vmem:[%s3 + $0x150] sm:$0xff] %vm1367, %v1280
  %1411 = vst.msk [vmem:[%s3 + $0x158] sm:$0xff] %vm1367, %v1281
  %1412 = vst.msk [vmem:[%s3 + $0x160] sm:$0xff] %vm1367, %v1282
  %1413 = vst.msk [vmem:[%s3 + $0x168] sm:$0xff] %vm1367, %v1283
  %1414 = vst.msk [vmem:[%s3 + $0x170] sm:$0xff] %vm1367, %v1284
  %1415 = vst.msk [vmem:[%s3 + $0x178] sm:$0xff] %vm1367, %v1285
  %1416 = vst.msk [vmem:[%s3 + $0x180] sm:$0xff] %vm1367, %v1286
  %1417 = vst.msk [vmem:[%s3 + $0x188] sm:$0xff] %vm1367, %v1287
  %1418 = vst.msk [vmem:[%s3 + $0x190] sm:$0xff] %vm1367, %v1288
  %1419 = vst.msk [vmem:[%s3 + $0x198] sm:$0xff] %vm1367, %v1289
  %1420 = vst.msk [vmem:[%s3 + $0x1a0] sm:$0xff] %vm1367, %v1290
  %1421 = vst.msk [vmem:[%s3 + $0x1a8] sm:$0xff] %vm1367, %v1291
  %1422 = vst.msk [vmem:[%s3 + $0x1b0] sm:$0xff] %vm1367, %v1292
  %1423 = vst.msk [vmem:[%s3 + $0x1b8] sm:$0xff] %vm1367, %v1293
  %1424 = vst.msk [vmem:[%s3 + $0x1c0] sm:$0xff] %vm1367, %v1294
  %1425 = vst.msk [vmem:[%s3 + $0x1c8] sm:$0xff] %vm1367, %v1295
  %1426 = vst.msk [vmem:[%s3 + $0x1d0] sm:$0xff] %vm1367, %v1296
  %1427 = vst.msk [vmem:[%s3 + $0x1d8] sm:$0xff] %vm1367, %v1297
  %1428 = vst.msk [vmem:[%s3 + $0x1e0] sm:$0xff] %vm1367, %v1298
  %1429 = vst.msk [vmem:[%s3 + $0x1e8] sm:$0xff] %vm1367, %v1299
  %1430 = vst.msk [vmem:[%s3 + $0x1f0] sm:$0xff] %vm1367, %v1300
  %1431 = vst.msk [vmem:[%s3 + $0x1f8] sm:$0xff] %vm1367, %v1301
  // Predicated region
  $region14: #{_lambda_.10} parent=0 // pred_check
    _
  $region15: #{_lambda_.10} parent=0 // pred_check_branch
    %1433 = sbr.rel (0) target = $region17
  $region16: #{_lambda_.10} parent=0 // pred_region
    _
  $region17: #{_lambda_.10} parent=0 // pred_fallthru
    _
  // Predicated region
  $region18: #{_lambda_.10} parent=0 // pred_check
    _
  $region19: #{_lambda_.10} parent=0 // pred_check_branch
    %1435 = sbr.rel (0) target = $region21
  $region20: #{_lambda_.10} parent=0 // pred_region
    _
  $region21: #{_lambda_.10} parent=0 // pred_fallthru
    _

// kernel: _lambda_.11
$region0: #{_lambda_.11}
  #allocation0 [shape = 'u32[]', space=smem, size = 0x4, offset = 0x4, fixed_abs, tag = 'smem constant byte address 0x4 - core index']
  #allocation1 [shape = 'u32[144,128]{1,0:T(1,128)}', space=vmem, size = 0x12000, scoped, tag = 'internal scratch']
  %s0 = inlined_call_operand.vmem [shape: bf16[512,144], index: 0, kind: input, shape index: {}]
  %s1 = inlined_call_operand.vmem [shape: bf16[144,24], index: 1, kind: input, shape index: {}]
  %s2 = inlined_call_operand.vmem [shape: f32[1,24], index: 2, kind: input, shape index: {}]
  %s3 = inlined_call_operand.vmem [shape: bf16[512,24], index: 3, kind: input, shape index: {}]
  %s4 = inlined_call_operand.vmem [shape: bf16[512,24], index: 4, kind: output, shape index: {}]
  %s5 = sld [smem:[#allocation0]]
  $region26: #{_lambda_.11} parent=0
    _
  %s7 = ssub.s32 1, %s5
  %s8 = scalar_select 0, %s7, %s5
  // Predicated region
  $region2: #{_lambda_.11} parent=0 // pred_check
    _
  $region3: #{_lambda_.11} parent=0 // pred_check_branch
    %10 = sbr.rel (0) target = $region5
  $region4: #{_lambda_.11} parent=0 // pred_region
    _
  $region5: #{_lambda_.11} parent=0 // pred_fallthru
    _
  // Predicated region
  $region6: #{_lambda_.11} parent=0 // pred_check
    _
  $region7: #{_lambda_.11} parent=0 // pred_check_branch
    %12 = sbr.rel (0) target = $region9
  $region8: #{_lambda_.11} parent=0 // pred_region
    _
  $region9: #{_lambda_.11} parent=0 // pred_fallthru
    _
  // Predicated region
  $region10: #{_lambda_.11} parent=0 // pred_check
    _
  $region11: #{_lambda_.11} parent=0 // pred_check_branch
    %14 = sbr.rel (0) target = $region13
  $region12: #{_lambda_.11} parent=0 // pred_region
    _
  $region13: #{_lambda_.11} parent=0 // pred_fallthru
    _
  // Predicated region
  $region14: #{_lambda_.11} parent=0 // pred_check
    _
  $region15: #{_lambda_.11} parent=0 // pred_check_branch
    %16 = sbr.rel (0) target = $region17
  $region16: #{_lambda_.11} parent=0 // pred_region
    _
  $region17: #{_lambda_.11} parent=0 // pred_fallthru
    _
  %v18 = vld [vmem:[%s0] sm:$0xff]
  %v19 = vld [vmem:[%s0 + $0x8] sm:$0xff]
  %v20 = vld [vmem:[%s0 + $0x10] sm:$0xff]
  %v21 = vld [vmem:[%s0 + $0x18] sm:$0xff]
  %v22 = vld [vmem:[%s0 + $0x20] sm:$0xff]
  %v23 = vld [vmem:[%s0 + $0x28] sm:$0xff]
  %v24 = vld [vmem:[%s0 + $0x30] sm:$0xff]
  %v25 = vld [vmem:[%s0 + $0x38] sm:$0xff]
  %v26 = vld [vmem:[%s0 + $0x40] sm:$0xff]
  %v27 = vld [vmem:[%s0 + $0x48] sm:$0xff]
  %v28 = vld [vmem:[%s0 + $0x50] sm:$0xff]
  %v29 = vld [vmem:[%s0 + $0x58] sm:$0xff]
  %v30 = vld [vmem:[%s0 + $0x60] sm:$0xff]
  %v31 = vld [vmem:[%s0 + $0x68] sm:$0xff]
  %v32 = vld [vmem:[%s0 + $0x70] sm:$0xff]
  %v33 = vld [vmem:[%s0 + $0x78] sm:$0xff]
  %v34 = vld [vmem:[%s0 + $0x80] sm:$0xff]
  %v35 = vld [vmem:[%s0 + $0x88] sm:$0xff]
  %v36 = vld [vmem:[%s0 + $0x90] sm:$0xff]
  %v37 = vld [vmem:[%s0 + $0x98] sm:$0xff]
  %v38 = vld [vmem:[%s0 + $0xa0] sm:$0xff]
  %v39 = vld [vmem:[%s0 + $0xa8] sm:$0xff]
  %v40 = vld [vmem:[%s0 + $0xb0] sm:$0xff]
  %v41 = vld [vmem:[%s0 + $0xb8] sm:$0xff]
  %v42 = vld [vmem:[%s0 + $0xc0] sm:$0xff]
  %v43 = vld [vmem:[%s0 + $0xc8] sm:$0xff]
  %v44 = vld [vmem:[%s0 + $0xd0] sm:$0xff]
  %v45 = vld [vmem:[%s0 + $0xd8] sm:$0xff]
  %v46 = vld [vmem:[%s0 + $0xe0] sm:$0xff]
  %v47 = vld [vmem:[%s0 + $0xe8] sm:$0xff]
  %v48 = vld [vmem:[%s0 + $0xf0] sm:$0xff]
  %v49 = vld [vmem:[%s0 + $0xf8] sm:$0xff]
  %v50 = vld [vmem:[%s0 + $0x100] sm:$0xff]
  %v51 = vld [vmem:[%s0 + $0x108] sm:$0xff]
  %v52 = vld [vmem:[%s0 + $0x110] sm:$0xff]
  %v53 = vld [vmem:[%s0 + $0x118] sm:$0xff]
  %v54 = vld [vmem:[%s0 + $0x120] sm:$0xff]
  %v55 = vld [vmem:[%s0 + $0x128] sm:$0xff]
  %v56 = vld [vmem:[%s0 + $0x130] sm:$0xff]
  %v57 = vld [vmem:[%s0 + $0x138] sm:$0xff]
  %v58 = vld [vmem:[%s0 + $0x140] sm:$0xff]
  %v59 = vld [vmem:[%s0 + $0x148] sm:$0xff]
  %v60 = vld [vmem:[%s0 + $0x150] sm:$0xff]
  %v61 = vld [vmem:[%s0 + $0x158] sm:$0xff]
  %v62 = vld [vmem:[%s0 + $0x160] sm:$0xff]
  %v63 = vld [vmem:[%s0 + $0x168] sm:$0xff]
  %v64 = vld [vmem:[%s0 + $0x170] sm:$0xff]
  %v65 = vld [vmem:[%s0 + $0x178] sm:$0xff]
  %v66 = vld [vmem:[%s0 + $0x180] sm:$0xff]
  %v67 = vld [vmem:[%s0 + $0x188] sm:$0xff]
  %v68 = vld [vmem:[%s0 + $0x190] sm:$0xff]
  %v69 = vld [vmem:[%s0 + $0x198] sm:$0xff]
  %v70 = vld [vmem:[%s0 + $0x1a0] sm:$0xff]
  %v71 = vld [vmem:[%s0 + $0x1a8] sm:$0xff]
  %v72 = vld [vmem:[%s0 + $0x1b0] sm:$0xff]
  %v73 = vld [vmem:[%s0 + $0x1b8] sm:$0xff]
  %v74 = vld [vmem:[%s0 + $0x1c0] sm:$0xff]
  %v75 = vld [vmem:[%s0 + $0x1c8] sm:$0xff]
  %v76 = vld [vmem:[%s0 + $0x1d0] sm:$0xff]
  %v77 = vld [vmem:[%s0 + $0x1d8] sm:$0xff]
  %v78 = vld [vmem:[%s0 + $0x1e0] sm:$0xff]
  %v79 = vld [vmem:[%s0 + $0x1e8] sm:$0xff]
  %v80 = vld [vmem:[%s0 + $0x1f0] sm:$0xff]
  %v81 = vld [vmem:[%s0 + $0x1f8] sm:$0xff]
  %v82 = vld [vmem:[%s1] sm:$0xf]
  %v83 = vld [vmem:[%s1 + $0x4] sm:$0xf]
  %v84 = vld [vmem:[%s1 + $0x8] sm:$0xf]
  %v85 = vld [vmem:[%s1 + $0xc] sm:$0xf]
  %v86 = vld [vmem:[%s1 + $0x10] sm:$0xf]
  %v87 = vld [vmem:[%s1 + $0x14] sm:$0xf]
  %v88 = vld [vmem:[%s1 + $0x18] sm:$0xf]
  %v89 = vld [vmem:[%s1 + $0x1c] sm:$0xf]
  %v90 = vld [vmem:[%s1 + $0x20] sm:$0xf]
  %v91 = vld [vmem:[%s1 + $0x24] sm:$0xf]
  %v92 = vld [vmem:[%s1 + $0x28] sm:$0xf]
  %v93 = vld [vmem:[%s1 + $0x2c] sm:$0xf]
  %v94 = vld [vmem:[%s1 + $0x30] sm:$0xf]
  %v95 = vld [vmem:[%s1 + $0x34] sm:$0xf]
  %v96 = vld [vmem:[%s1 + $0x38] sm:$0xf]
  %v97 = vld [vmem:[%s1 + $0x3c] sm:$0xf]
  %v98 = vld [vmem:[%s1 + $0x40] sm:$0xf]
  %v99 = vld [vmem:[%s1 + $0x44] sm:$0xf]
  %v100 = vld [vmem:[%s2] sm:$0x1]
  %v102 = vlaneseq
  %v103 = vshrl.u32 %v102, 7
  %v104 = vsub.s32 0, %v103
  %v105 = vrot.slane %v100, %v104
  %v171 = vunpack.c.l.b16 %v18
  %v172 = vunpack.c.h.b16 %v18
  %v173 = vunpack.c.l.b16 %v19
  %v174 = vunpack.c.h.b16 %v19
  %v175 = vunpack.c.l.b16 %v20
  %v176 = vunpack.c.h.b16 %v20
  %v177 = vunpack.c.l.b16 %v21
  %v178 = vunpack.c.h.b16 %v21
  %v179 = vunpack.c.l.b16 %v22
  %v180 = vunpack.c.h.b16 %v22
  %v181 = vunpack.c.l.b16 %v23
  %v182 = vunpack.c.h.b16 %v23
  %v183 = vunpack.c.l.b16 %v24
  %v184 = vunpack.c.h.b16 %v24
  %v185 = vunpack.c.l.b16 %v25
  %v186 = vunpack.c.h.b16 %v25
  %v187 = vunpack.c.l.b16 %v26
  %v188 = vunpack.c.h.b16 %v26
  %v189 = vunpack.c.l.b16 %v27
  %v190 = vunpack.c.h.b16 %v27
  %v191 = vunpack.c.l.b16 %v28
  %v192 = vunpack.c.h.b16 %v28
  %v193 = vunpack.c.l.b16 %v29
  %v194 = vunpack.c.h.b16 %v29
  %v195 = vunpack.c.l.b16 %v30
  %v196 = vunpack.c.h.b16 %v30
  %v197 = vunpack.c.l.b16 %v31
  %v198 = vunpack.c.h.b16 %v31
  %v199 = vunpack.c.l.b16 %v32
  %v200 = vunpack.c.h.b16 %v32
  %v201 = vunpack.c.l.b16 %v33
  %v202 = vunpack.c.h.b16 %v33
  %v203 = vunpack.c.l.b16 %v34
  %v204 = vunpack.c.h.b16 %v34
  %v205 = vunpack.c.l.b16 %v35
  %v206 = vunpack.c.h.b16 %v35
  %v207 = vunpack.c.l.b16 %v36
  %v208 = vunpack.c.h.b16 %v36
  %v209 = vunpack.c.l.b16 %v37
  %v210 = vunpack.c.h.b16 %v37
  %v211 = vunpack.c.l.b16 %v38
  %v212 = vunpack.c.h.b16 %v38
  %v213 = vunpack.c.l.b16 %v39
  %v214 = vunpack.c.h.b16 %v39
  %v215 = vunpack.c.l.b16 %v40
  %v216 = vunpack.c.h.b16 %v40
  %v217 = vunpack.c.l.b16 %v41
  %v218 = vunpack.c.h.b16 %v41
  %v219 = vunpack.c.l.b16 %v42
  %v220 = vunpack.c.h.b16 %v42
  %v221 = vunpack.c.l.b16 %v43
  %v222 = vunpack.c.h.b16 %v43
  %v223 = vunpack.c.l.b16 %v44
  %v224 = vunpack.c.h.b16 %v44
  %v225 = vunpack.c.l.b16 %v45
  %v226 = vunpack.c.h.b16 %v45
  %v227 = vunpack.c.l.b16 %v46
  %v228 = vunpack.c.h.b16 %v46
  %v229 = vunpack.c.l.b16 %v47
  %v230 = vunpack.c.h.b16 %v47
  %v231 = vunpack.c.l.b16 %v48
  %v232 = vunpack.c.h.b16 %v48
  %v233 = vunpack.c.l.b16 %v49
  %v234 = vunpack.c.h.b16 %v49
  %v235 = vunpack.c.l.b16 %v50
  %v236 = vunpack.c.h.b16 %v50
  %v237 = vunpack.c.l.b16 %v51
  %v238 = vunpack.c.h.b16 %v51
  %v239 = vunpack.c.l.b16 %v52
  %v240 = vunpack.c.h.b16 %v52
  %v241 = vunpack.c.l.b16 %v53
  %v242 = vunpack.c.h.b16 %v53
  %v243 = vunpack.c.l.b16 %v54
  %v244 = vunpack.c.h.b16 %v54
  %v245 = vunpack.c.l.b16 %v55
  %v246 = vunpack.c.h.b16 %v55
  %v247 = vunpack.c.l.b16 %v56
  %v248 = vunpack.c.h.b16 %v56
  %v249 = vunpack.c.l.b16 %v57
  %v250 = vunpack.c.h.b16 %v57
  %v251 = vunpack.c.l.b16 %v58
  %v252 = vunpack.c.h.b16 %v58
  %v253 = vunpack.c.l.b16 %v59
  %v254 = vunpack.c.h.b16 %v59
  %v255 = vunpack.c.l.b16 %v60
  %v256 = vunpack.c.h.b16 %v60
  %v257 = vunpack.c.l.b16 %v61
  %v258 = vunpack.c.h.b16 %v61
  %v259 = vunpack.c.l.b16 %v62
  %v260 = vunpack.c.h.b16 %v62
  %v261 = vunpack.c.l.b16 %v63
  %v262 = vunpack.c.h.b16 %v63
  %v263 = vunpack.c.l.b16 %v64
  %v264 = vunpack.c.h.b16 %v64
  %v265 = vunpack.c.l.b16 %v65
  %v266 = vunpack.c.h.b16 %v65
  %v267 = vunpack.c.l.b16 %v66
  %v268 = vunpack.c.h.b16 %v66
  %v269 = vunpack.c.l.b16 %v67
  %v270 = vunpack.c.h.b16 %v67
  %v271 = vunpack.c.l.b16 %v68
  %v272 = vunpack.c.h.b16 %v68
  %v273 = vunpack.c.l.b16 %v69
  %v274 = vunpack.c.h.b16 %v69
  %v275 = vunpack.c.l.b16 %v70
  %v276 = vunpack.c.h.b16 %v70
  %v277 = vunpack.c.l.b16 %v71
  %v278 = vunpack.c.h.b16 %v71
  %v279 = vunpack.c.l.b16 %v72
  %v280 = vunpack.c.h.b16 %v72
  %v281 = vunpack.c.l.b16 %v73
  %v282 = vunpack.c.h.b16 %v73
  %v283 = vunpack.c.l.b16 %v74
  %v284 = vunpack.c.h.b16 %v74
  %v285 = vunpack.c.l.b16 %v75
  %v286 = vunpack.c.h.b16 %v75
  %v287 = vunpack.c.l.b16 %v76
  %v288 = vunpack.c.h.b16 %v76
  %v289 = vunpack.c.l.b16 %v77
  %v290 = vunpack.c.h.b16 %v77
  %v291 = vunpack.c.l.b16 %v78
  %v292 = vunpack.c.h.b16 %v78
  %v293 = vunpack.c.l.b16 %v79
  %v294 = vunpack.c.h.b16 %v79
  %v295 = vunpack.c.l.b16 %v80
  %v296 = vunpack.c.h.b16 %v80
  %v297 = vunpack.c.l.b16 %v81
  %v298 = vunpack.c.h.b16 %v81
  %v299 = vpack.c.b16 %v173, %v171
  %v300 = vpack.c.b16 %v174, %v172
  %v301 = vpack.c.b16 %v177, %v175
  %v302 = vpack.c.b16 %v178, %v176
  %v303 = vpack.c.b16 %v181, %v179
  %v304 = vpack.c.b16 %v182, %v180
  %v305 = vpack.c.b16 %v185, %v183
  %v306 = vpack.c.b16 %v186, %v184
  %v307 = vpack.c.b16 %v189, %v187
  %v308 = vpack.c.b16 %v190, %v188
  %v309 = vpack.c.b16 %v193, %v191
  %v310 = vpack.c.b16 %v194, %v192
  %v311 = vpack.c.b16 %v197, %v195
  %v312 = vpack.c.b16 %v198, %v196
  %v313 = vpack.c.b16 %v201, %v199
  %v314 = vpack.c.b16 %v202, %v200
  %v315 = vpack.c.b16 %v205, %v203
  %v316 = vpack.c.b16 %v206, %v204
  %v317 = vpack.c.b16 %v209, %v207
  %v318 = vpack.c.b16 %v210, %v208
  %v319 = vpack.c.b16 %v213, %v211
  %v320 = vpack.c.b16 %v214, %v212
  %v321 = vpack.c.b16 %v217, %v215
  %v322 = vpack.c.b16 %v218, %v216
  %v323 = vpack.c.b16 %v221, %v219
  %v324 = vpack.c.b16 %v222, %v220
  %v325 = vpack.c.b16 %v225, %v223
  %v326 = vpack.c.b16 %v226, %v224
  %v327 = vpack.c.b16 %v229, %v227
  %v328 = vpack.c.b16 %v230, %v228
  %v329 = vpack.c.b16 %v233, %v231
  %v330 = vpack.c.b16 %v234, %v232
  %v331 = vpack.c.b16 %v237, %v235
  %v332 = vpack.c.b16 %v238, %v236
  %v333 = vpack.c.b16 %v241, %v239
  %v334 = vpack.c.b16 %v242, %v240
  %v335 = vpack.c.b16 %v245, %v243
  %v336 = vpack.c.b16 %v246, %v244
  %v337 = vpack.c.b16 %v249, %v247
  %v338 = vpack.c.b16 %v250, %v248
  %v339 = vpack.c.b16 %v253, %v251
  %v340 = vpack.c.b16 %v254, %v252
  %v341 = vpack.c.b16 %v257, %v255
  %v342 = vpack.c.b16 %v258, %v256
  %v343 = vpack.c.b16 %v261, %v259
  %v344 = vpack.c.b16 %v262, %v260
  %v345 = vpack.c.b16 %v265, %v263
  %v346 = vpack.c.b16 %v266, %v264
  %v347 = vpack.c.b16 %v269, %v267
  %v348 = vpack.c.b16 %v270, %v268
  %v349 = vpack.c.b16 %v273, %v271
  %v350 = vpack.c.b16 %v274, %v272
  %v351 = vpack.c.b16 %v277, %v275
  %v352 = vpack.c.b16 %v278, %v276
  %v353 = vpack.c.b16 %v281, %v279
  %v354 = vpack.c.b16 %v282, %v280
  %v355 = vpack.c.b16 %v285, %v283
  %v356 = vpack.c.b16 %v286, %v284
  %v357 = vpack.c.b16 %v289, %v287
  %v358 = vpack.c.b16 %v290, %v288
  %v359 = vpack.c.b16 %v293, %v291
  %v360 = vpack.c.b16 %v294, %v292
  %v361 = vpack.c.b16 %v297, %v295
  %v362 = vpack.c.b16 %v298, %v296
  %v413 = vunpack.c.l.b16 %v82
  %v414 = vunpack.c.l.b16 %v83
  %v415 = vunpack.c.l.b16 %v84
  %v416 = vunpack.c.l.b16 %v85
  %v417 = vunpack.c.l.b16 %v86
  %v418 = vunpack.c.l.b16 %v87
  %v419 = vunpack.c.l.b16 %v88
  %v420 = vunpack.c.l.b16 %v89
  %v421 = vunpack.c.l.b16 %v90
  %v422 = vunpack.c.l.b16 %v91
  %v423 = vunpack.c.l.b16 %v92
  %v424 = vunpack.c.l.b16 %v93
  %v425 = vunpack.c.l.b16 %v94
  %v426 = vunpack.c.l.b16 %v95
  %v427 = vunpack.c.l.b16 %v96
  %v428 = vunpack.c.l.b16 %v97
  %v429 = vunpack.c.l.b16 %v98
  %v430 = vunpack.c.l.b16 %v99
  %v431 = vpack.c.b16 %v414, %v413
  %v432 = vpack.c.b16 %v416, %v415
  %v433 = vpack.c.b16 %v418, %v417
  %v434 = vpack.c.b16 %v420, %v419
  %v435 = vpack.c.b16 %v422, %v421
  %v436 = vpack.c.b16 %v424, %v423
  %v437 = vpack.c.b16 %v426, %v425
  %v438 = vpack.c.b16 %v428, %v427
  %v439 = vpack.c.b16 %v430, %v429
  %vm449 = vcmask 130048
  %v451 = vsel %vm449, %v300, 0
  %v454 = vsel %vm449, %v302, 0
  %v457 = vsel %vm449, %v304, 0
  %v460 = vsel %vm449, %v306, 0
  %v463 = vsel %vm449, %v308, 0
  %v466 = vsel %vm449, %v310, 0
  %v469 = vsel %vm449, %v312, 0
  %v472 = vsel %vm449, %v314, 0
  %v475 = vsel %vm449, %v316, 0
  %v478 = vsel %vm449, %v318, 0
  %v481 = vsel %vm449, %v320, 0
  %v484 = vsel %vm449, %v322, 0
  %v487 = vsel %vm449, %v324, 0
  %v490 = vsel %vm449, %v326, 0
  %v493 = vsel %vm449, %v328, 0
  %v496 = vsel %vm449, %v330, 0
  %v499 = vsel %vm449, %v332, 0
  %v502 = vsel %vm449, %v334, 0
  %v505 = vsel %vm449, %v336, 0
  %v508 = vsel %vm449, %v338, 0
  %v511 = vsel %vm449, %v340, 0
  %v514 = vsel %vm449, %v342, 0
  %v517 = vsel %vm449, %v344, 0
  %v520 = vsel %vm449, %v346, 0
  %v523 = vsel %vm449, %v348, 0
  %v526 = vsel %vm449, %v350, 0
  %v529 = vsel %vm449, %v352, 0
  %v532 = vsel %vm449, %v354, 0
  %v535 = vsel %vm449, %v356, 0
  %v538 = vsel %vm449, %v358, 0
  %v541 = vsel %vm449, %v360, 0
  %v544 = vsel %vm449, %v362, 0
  %546 = vmatprep.subr.bf16.mxu0 0
  %547 = vmatpush1.bf16.msra.mxu0 %v431
  %548 = vmatprep.subr.bf16.mxu0 0
  %549 = vmatpush1.bf16.msra.mxu0 %v432
  %550 = vmatprep.subr.bf16.mxu0 0
  %551 = vmatpush1.bf16.msra.mxu0 %v433
  %552 = vmatprep.subr.bf16.mxu0 0
  %553 = vmatpush1.bf16.msra.mxu0 %v434
  %554 = vmatprep.subr.bf16.mxu0 0
  %555 = vmatpush1.bf16.msra.mxu0 %v435
  %556 = vmatprep.subr.bf16.mxu0 0
  %557 = vmatpush1.bf16.msra.mxu0 %v436
  %558 = vmatprep.subr.bf16.mxu0 0
  %559 = vmatpush1.bf16.msra.mxu0 %v437
  %560 = vmatprep.subr.bf16.mxu0 0
  %561 = vmatpush1.bf16.msra.mxu0 %v438
  %562 = vmatprep.subr.bf16.mxu0 0
  %563 = vmatpush1.bf16.msra.mxu0 %v439
  %564 = vmatprep.subr.bf16.mxu0 0
  %565 = vmatpush1.bf16.msra.mxu0 0
  %566 = vmatprep.subr.bf16.mxu0 0
  %567 = vmatpush1.bf16.msra.mxu0 0
  %568 = vmatprep.subr.bf16.mxu0 0
  %569 = vmatpush1.bf16.msra.mxu0 0
  %570 = vmatprep.subr.bf16.mxu0 0
  %571 = vmatpush1.bf16.msra.mxu0 0
  %572 = vmatprep.subr.bf16.mxu0 0
  %573 = vmatpush1.bf16.msra.mxu0 0
  %574 = vmatprep.subr.bf16.mxu0 0
  %575 = vmatpush1.bf16.msra.mxu0 0
  %576 = vmatprep.subr.bf16.mxu0 0
  %577 = vmatpush1.bf16.msra.mxu0 0
  %578 = vmatprep.mubr.bf16.mxu0 %v451
  %579 = vmatmul.mubr.bf16.gmra.mrb[0].mxu0 %v299
  %v580 = vpop.f32.mrb[0].mxu0
  %v581 = vadd.f32 %v105, %v580
  %v582 = vpop.f32.mrb[0].mxu0
  %v583 = vpop.f32.mrb[0].mxu0
  %v584 = vadd.f32 %v105, %v583
  %v585 = vpop.f32.mrb[0].mxu0
  %586 = vmatprep.mubr.bf16.mxu0 %v454
  %587 = vmatmul.mubr.bf16.gmra.mrb[0].mxu0 %v301
  %v588 = vpop.f32.mrb[0].mxu0
  %v589 = vadd.f32 %v105, %v588
  %v590 = vpop.f32.mrb[0].mxu0
  %v591 = vpop.f32.mrb[0].mxu0
  %v592 = vadd.f32 %v105, %v591
  %v593 = vpop.f32.mrb[0].mxu0
  %594 = vmatprep.mubr.bf16.mxu0 %v457
  %595 = vmatmul.mubr.bf16.gmra.mrb[0].mxu0 %v303
  %v596 = vpop.f32.mrb[0].mxu0
  %v597 = vadd.f32 %v105, %v596
  %v598 = vpop.f32.mrb[0].mxu0
  %v599 = vpop.f32.mrb[0].mxu0
  %v600 = vadd.f32 %v105, %v599
  %v601 = vpop.f32.mrb[0].mxu0
  %602 = vmatprep.mubr.bf16.mxu0 %v460
  %603 = vmatmul.mubr.bf16.gmra.mrb[0].mxu0 %v305
  %v604 = vpop.f32.mrb[0].mxu0
  %v605 = vadd.f32 %v105, %v604
  %v606 = vpop.f32.mrb[0].mxu0
  %v607 = vpop.f32.mrb[0].mxu0
  %v608 = vadd.f32 %v105, %v607
  %v609 = vpop.f32.mrb[0].mxu0
  %610 = vmatprep.mubr.bf16.mxu0 %v463
  %611 = vmatmul.mubr.bf16.gmra.mrb[0].mxu0 %v307
  %v612 = vpop.f32.mrb[0].mxu0
  %v613 = vadd.f32 %v105, %v612
  %v614 = vpop.f32.mrb[0].mxu0
  %v615 = vpop.f32.mrb[0].mxu0
  %v616 = vadd.f32 %v105, %v615
  %v617 = vpop.f32.mrb[0].mxu0
  %618 = vmatprep.mubr.bf16.mxu0 %v466
  %619 = vmatmul.mubr.bf16.gmra.mrb[0].mxu0 %v309
  %v620 = vpop.f32.mrb[0].mxu0
  %v621 = vadd.f32 %v105, %v620
  %v622 = vpop.f32.mrb[0].mxu0
  %v623 = vpop.f32.mrb[0].mxu0
  %v624 = vadd.f32 %v105, %v623
  %v625 = vpop.f32.mrb[0].mxu0
  %626 = vmatprep.mubr.bf16.mxu0 %v469
  %627 = vmatmul.mubr.bf16.gmra.mrb[0].mxu0 %v311
  %v628 = vpop.f32.mrb[0].mxu0
  %v629 = vadd.f32 %v105, %v628
  %v630 = vpop.f32.mrb[0].mxu0
  %v631 = vpop.f32.mrb[0].mxu0
  %v632 = vadd.f32 %v105, %v631
  %v633 = vpop.f32.mrb[0].mxu0
  %634 = vmatprep.mubr.bf16.mxu0 %v472
  %635 = vmatmul.mubr.bf16.gmra.mrb[0].mxu0 %v313
  %v636 = vpop.f32.mrb[0].mxu0
  %v637 = vadd.f32 %v105, %v636
  %v638 = vpop.f32.mrb[0].mxu0
  %v639 = vpop.f32.mrb[0].mxu0
  %v640 = vadd.f32 %v105, %v639
  %v641 = vpop.f32.mrb[0].mxu0
  %642 = vmatprep.mubr.bf16.mxu0 %v475
  %643 = vmatmul.mubr.bf16.gmra.mrb[0].mxu0 %v315
  %v644 = vpop.f32.mrb[0].mxu0
  %v645 = vadd.f32 %v105, %v644
  %v646 = vpop.f32.mrb[0].mxu0
  %v647 = vpop.f32.mrb[0].mxu0
  %v648 = vadd.f32 %v105, %v647
  %v649 = vpop.f32.mrb[0].mxu0
  %650 = vmatprep.mubr.bf16.mxu0 %v478
  %651 = vmatmul.mubr.bf16.gmra.mrb[0].mxu0 %v317
  %v652 = vpop.f32.mrb[0].mxu0
  %v653 = vadd.f32 %v105, %v652
  %v654 = vpop.f32.mrb[0].mxu0
  %v655 = vpop.f32.mrb[0].mxu0
  %v656 = vadd.f32 %v105, %v655
  %v657 = vpop.f32.mrb[0].mxu0
  %658 = vmatprep.mubr.bf16.mxu0 %v481
  %659 = vmatmul.mubr.bf16.gmra.mrb[0].mxu0 %v319
  %v660 = vpop.f32.mrb[0].mxu0
  %v661 = vadd.f32 %v105, %v660
  %v662 = vpop.f32.mrb[0].mxu0
  %v663 = vpop.f32.mrb[0].mxu0
  %v664 = vadd.f32 %v105, %v663
  %v665 = vpop.f32.mrb[0].mxu0
  %666 = vmatprep.mubr.bf16.mxu0 %v484
  %667 = vmatmul.mubr.bf16.gmra.mrb[0].mxu0 %v321
  %v668 = vpop.f32.mrb[0].mxu0
  %v669 = vadd.f32 %v105, %v668
  %v670 = vpop.f32.mrb[0].mxu0
  %v671 = vpop.f32.mrb[0].mxu0
  %v672 = vadd.f32 %v105, %v671
  %v673 = vpop.f32.mrb[0].mxu0
  %674 = vmatprep.mubr.bf16.mxu0 %v487
  %675 = vmatmul.mubr.bf16.gmra.mrb[0].mxu0 %v323
  %v676 = vpop.f32.mrb[0].mxu0
  %v677 = vadd.f32 %v105, %v676
  %v678 = vpop.f32.mrb[0].mxu0
  %v679 = vpop.f32.mrb[0].mxu0
  %v680 = vadd.f32 %v105, %v679
  %v681 = vpop.f32.mrb[0].mxu0
  %682 = vmatprep.mubr.bf16.mxu0 %v490
  %683 = vmatmul.mubr.bf16.gmra.mrb[0].mxu0 %v325
  %v684 = vpop.f32.mrb[0].mxu0
  %v685 = vadd.f32 %v105, %v684
  %v686 = vpop.f32.mrb[0].mxu0
  %v687 = vpop.f32.mrb[0].mxu0
  %v688 = vadd.f32 %v105, %v687
  %v689 = vpop.f32.mrb[0].mxu0
  %690 = vmatprep.mubr.bf16.mxu0 %v493
  %691 = vmatmul.mubr.bf16.gmra.mrb[0].mxu0 %v327
  %v692 = vpop.f32.mrb[0].mxu0
  %v693 = vadd.f32 %v105, %v692
  %v694 = vpop.f32.mrb[0].mxu0
  %v695 = vpop.f32.mrb[0].mxu0
  %v696 = vadd.f32 %v105, %v695
  %v697 = vpop.f32.mrb[0].mxu0
  %698 = vmatprep.mubr.bf16.mxu0 %v496
  %699 = vmatmul.mubr.bf16.gmra.mrb[0].mxu0 %v329
  %v700 = vpop.f32.mrb[0].mxu0
  %v701 = vadd.f32 %v105, %v700
  %v702 = vpop.f32.mrb[0].mxu0
  %v703 = vpop.f32.mrb[0].mxu0
  %v704 = vadd.f32 %v105, %v703
  %v705 = vpop.f32.mrb[0].mxu0
  %706 = vmatprep.mubr.bf16.mxu0 %v499
  %707 = vmatmul.mubr.bf16.gmra.mrb[0].mxu0 %v331
  %v708 = vpop.f32.mrb[0].mxu0
  %v709 = vadd.f32 %v105, %v708
  %v710 = vpop.f32.mrb[0].mxu0
  %v711 = vpop.f32.mrb[0].mxu0
  %v712 = vadd.f32 %v105, %v711
  %v713 = vpop.f32.mrb[0].mxu0
  %714 = vmatprep.mubr.bf16.mxu0 %v502
  %715 = vmatmul.mubr.bf16.gmra.mrb[0].mxu0 %v333
  %v716 = vpop.f32.mrb[0].mxu0
  %v717 = vadd.f32 %v105, %v716
  %v718 = vpop.f32.mrb[0].mxu0
  %v719 = vpop.f32.mrb[0].mxu0
  %v720 = vadd.f32 %v105, %v719
  %v721 = vpop.f32.mrb[0].mxu0
  %722 = vmatprep.mubr.bf16.mxu0 %v505
  %723 = vmatmul.mubr.bf16.gmra.mrb[0].mxu0 %v335
  %v724 = vpop.f32.mrb[0].mxu0
  %v725 = vadd.f32 %v105, %v724
  %v726 = vpop.f32.mrb[0].mxu0
  %v727 = vpop.f32.mrb[0].mxu0
  %v728 = vadd.f32 %v105, %v727
  %v729 = vpop.f32.mrb[0].mxu0
  %730 = vmatprep.mubr.bf16.mxu0 %v508
  %731 = vmatmul.mubr.bf16.gmra.mrb[0].mxu0 %v337
  %v732 = vpop.f32.mrb[0].mxu0
  %v733 = vadd.f32 %v105, %v732
  %v734 = vpop.f32.mrb[0].mxu0
  %v735 = vpop.f32.mrb[0].mxu0
  %v736 = vadd.f32 %v105, %v735
  %v737 = vpop.f32.mrb[0].mxu0
  %738 = vmatprep.mubr.bf16.mxu0 %v511
  %739 = vmatmul.mubr.bf16.gmra.mrb[0].mxu0 %v339
  %v740 = vpop.f32.mrb[0].mxu0
  %v741 = vadd.f32 %v105, %v740
  %v742 = vpop.f32.mrb[0].mxu0
  %v743 = vpop.f32.mrb[0].mxu0
  %v744 = vadd.f32 %v105, %v743
  %v745 = vpop.f32.mrb[0].mxu0
  %746 = vmatprep.mubr.bf16.mxu0 %v514
  %747 = vmatmul.mubr.bf16.gmra.mrb[0].mxu0 %v341
  %v748 = vpop.f32.mrb[0].mxu0
  %v749 = vadd.f32 %v105, %v748
  %v750 = vpop.f32.mrb[0].mxu0
  %v751 = vpop.f32.mrb[0].mxu0
  %v752 = vadd.f32 %v105, %v751
  %v753 = vpop.f32.mrb[0].mxu0
  %754 = vmatprep.mubr.bf16.mxu0 %v517
  %755 = vmatmul.mubr.bf16.gmra.mrb[0].mxu0 %v343
  %v756 = vpop.f32.mrb[0].mxu0
  %v757 = vadd.f32 %v105, %v756
  %v758 = vpop.f32.mrb[0].mxu0
  %v759 = vpop.f32.mrb[0].mxu0
  %v760 = vadd.f32 %v105, %v759
  %v761 = vpop.f32.mrb[0].mxu0
  %762 = vmatprep.mubr.bf16.mxu0 %v520
  %763 = vmatmul.mubr.bf16.gmra.mrb[0].mxu0 %v345
  %v764 = vpop.f32.mrb[0].mxu0
  %v765 = vadd.f32 %v105, %v764
  %v766 = vpop.f32.mrb[0].mxu0
  %v767 = vpop.f32.mrb[0].mxu0
  %v768 = vadd.f32 %v105, %v767
  %v769 = vpop.f32.mrb[0].mxu0
  %770 = vmatprep.mubr.bf16.mxu0 %v523
  %771 = vmatmul.mubr.bf16.gmra.mrb[0].mxu0 %v347
  %v772 = vpop.f32.mrb[0].mxu0
  %v773 = vadd.f32 %v105, %v772
  %v774 = vpop.f32.mrb[0].mxu0
  %v775 = vpop.f32.mrb[0].mxu0
  %v776 = vadd.f32 %v105, %v775
  %v777 = vpop.f32.mrb[0].mxu0
  %778 = vmatprep.mubr.bf16.mxu0 %v526
  %779 = vmatmul.mubr.bf16.gmra.mrb[0].mxu0 %v349
  %v780 = vpop.f32.mrb[0].mxu0
  %v781 = vadd.f32 %v105, %v780
  %v782 = vpop.f32.mrb[0].mxu0
  %v783 = vpop.f32.mrb[0].mxu0
  %v784 = vadd.f32 %v105, %v783
  %v785 = vpop.f32.mrb[0].mxu0
  %786 = vmatprep.mubr.bf16.mxu0 %v529
  %787 = vmatmul.mubr.bf16.gmra.mrb[0].mxu0 %v351
  %v788 = vpop.f32.mrb[0].mxu0
  %v789 = vadd.f32 %v105, %v788
  %v790 = vpop.f32.mrb[0].mxu0
  %v791 = vpop.f32.mrb[0].mxu0
  %v792 = vadd.f32 %v105, %v791
  %v793 = vpop.f32.mrb[0].mxu0
  %794 = vmatprep.mubr.bf16.mxu0 %v532
  %795 = vmatmul.mubr.bf16.gmra.mrb[0].mxu0 %v353
  %v796 = vpop.f32.mrb[0].mxu0
  %v797 = vadd.f32 %v105, %v796
  %v798 = vpop.f32.mrb[0].mxu0
  %v799 = vpop.f32.mrb[0].mxu0
  %v800 = vadd.f32 %v105, %v799
  %v801 = vpop.f32.mrb[0].mxu0
  %802 = vmatprep.mubr.bf16.mxu0 %v535
  %803 = vmatmul.mubr.bf16.gmra.mrb[0].mxu0 %v355
  %v804 = vpop.f32.mrb[0].mxu0
  %v805 = vadd.f32 %v105, %v804
  %v806 = vpop.f32.mrb[0].mxu0
  %v807 = vpop.f32.mrb[0].mxu0
  %v808 = vadd.f32 %v105, %v807
  %v809 = vpop.f32.mrb[0].mxu0
  %810 = vmatprep.mubr.bf16.mxu0 %v538
  %811 = vmatmul.mubr.bf16.gmra.mrb[0].mxu0 %v357
  %v812 = vpop.f32.mrb[0].mxu0
  %v813 = vadd.f32 %v105, %v812
  %v814 = vpop.f32.mrb[0].mxu0
  %v815 = vpop.f32.mrb[0].mxu0
  %v816 = vadd.f32 %v105, %v815
  %v817 = vpop.f32.mrb[0].mxu0
  %818 = vmatprep.mubr.bf16.mxu0 %v541
  %819 = vmatmul.mubr.bf16.gmra.mrb[0].mxu0 %v359
  %v820 = vpop.f32.mrb[0].mxu0
  %v821 = vadd.f32 %v105, %v820
  %v822 = vpop.f32.mrb[0].mxu0
  %v823 = vpop.f32.mrb[0].mxu0
  %v824 = vadd.f32 %v105, %v823
  %v825 = vpop.f32.mrb[0].mxu0
  %826 = vmatprep.mubr.bf16.mxu0 %v544
  %827 = vmatmul.mubr.bf16.gmra.mrb[0].mxu0 %v361
  %v828 = vpop.f32.mrb[0].mxu0
  %v829 = vadd.f32 %v105, %v828
  %v830 = vpop.f32.mrb[0].mxu0
  %v831 = vpop.f32.mrb[0].mxu0
  %v832 = vadd.f32 %v105, %v831
  %v833 = vpop.f32.mrb[0].mxu0
  %834 = vdwg.mxu0
  %v835 = vld [vmem:[%s3] sm:$0xf]
  %v836 = vld [vmem:[%s3 + $0x4] sm:$0xf]
  %v837 = vld [vmem:[%s3 + $0x8] sm:$0xf]
  %v838 = vld [vmem:[%s3 + $0xc] sm:$0xf]
  %v839 = vld [vmem:[%s3 + $0x10] sm:$0xf]
  %v840 = vld [vmem:[%s3 + $0x14] sm:$0xf]
  %v841 = vld [vmem:[%s3 + $0x18] sm:$0xf]
  %v842 = vld [vmem:[%s3 + $0x1c] sm:$0xf]
  %v843 = vld [vmem:[%s3 + $0x20] sm:$0xf]
  %v844 = vld [vmem:[%s3 + $0x24] sm:$0xf]
  %v845 = vld [vmem:[%s3 + $0x28] sm:$0xf]
  %v846 = vld [vmem:[%s3 + $0x2c] sm:$0xf]
  %v847 = vld [vmem:[%s3 + $0x30] sm:$0xf]
  %v848 = vld [vmem:[%s3 + $0x34] sm:$0xf]
  %v849 = vld [vmem:[%s3 + $0x38] sm:$0xf]
  %v850 = vld [vmem:[%s3 + $0x3c] sm:$0xf]
  %v851 = vld [vmem:[%s3 + $0x40] sm:$0xf]
  %v852 = vld [vmem:[%s3 + $0x44] sm:$0xf]
  %v853 = vld [vmem:[%s3 + $0x48] sm:$0xf]
  %v854 = vld [vmem:[%s3 + $0x4c] sm:$0xf]
  %v855 = vld [vmem:[%s3 + $0x50] sm:$0xf]
  %v856 = vld [vmem:[%s3 + $0x54] sm:$0xf]
  %v857 = vld [vmem:[%s3 + $0x58] sm:$0xf]
  %v858 = vld [vmem:[%s3 + $0x5c] sm:$0xf]
  %v859 = vld [vmem:[%s3 + $0x60] sm:$0xf]
  %v860 = vld [vmem:[%s3 + $0x64] sm:$0xf]
  %v861 = vld [vmem:[%s3 + $0x68] sm:$0xf]
  %v862 = vld [vmem:[%s3 + $0x6c] sm:$0xf]
  %v863 = vld [vmem:[%s3 + $0x70] sm:$0xf]
  %v864 = vld [vmem:[%s3 + $0x74] sm:$0xf]
  %v865 = vld [vmem:[%s3 + $0x78] sm:$0xf]
  %v866 = vld [vmem:[%s3 + $0x7c] sm:$0xf]
  %v867 = vld [vmem:[%s3 + $0x80] sm:$0xf]
  %v868 = vld [vmem:[%s3 + $0x84] sm:$0xf]
  %v869 = vld [vmem:[%s3 + $0x88] sm:$0xf]
  %v870 = vld [vmem:[%s3 + $0x8c] sm:$0xf]
  %v871 = vld [vmem:[%s3 + $0x90] sm:$0xf]
  %v872 = vld [vmem:[%s3 + $0x94] sm:$0xf]
  %v873 = vld [vmem:[%s3 + $0x98] sm:$0xf]
  %v874 = vld [vmem:[%s3 + $0x9c] sm:$0xf]
  %v875 = vld [vmem:[%s3 + $0xa0] sm:$0xf]
  %v876 = vld [vmem:[%s3 + $0xa4] sm:$0xf]
  %v877 = vld [vmem:[%s3 + $0xa8] sm:$0xf]
  %v878 = vld [vmem:[%s3 + $0xac] sm:$0xf]
  %v879 = vld [vmem:[%s3 + $0xb0] sm:$0xf]
  %v880 = vld [vmem:[%s3 + $0xb4] sm:$0xf]
  %v881 = vld [vmem:[%s3 + $0xb8] sm:$0xf]
  %v882 = vld [vmem:[%s3 + $0xbc] sm:$0xf]
  %v883 = vld [vmem:[%s3 + $0xc0] sm:$0xf]
  %v884 = vld [vmem:[%s3 + $0xc4] sm:$0xf]
  %v885 = vld [vmem:[%s3 + $0xc8] sm:$0xf]
  %v886 = vld [vmem:[%s3 + $0xcc] sm:$0xf]
  %v887 = vld [vmem:[%s3 + $0xd0] sm:$0xf]
  %v888 = vld [vmem:[%s3 + $0xd4] sm:$0xf]
  %v889 = vld [vmem:[%s3 + $0xd8] sm:$0xf]
  %v890 = vld [vmem:[%s3 + $0xdc] sm:$0xf]
  %v891 = vld [vmem:[%s3 + $0xe0] sm:$0xf]
  %v892 = vld [vmem:[%s3 + $0xe4] sm:$0xf]
  %v893 = vld [vmem:[%s3 + $0xe8] sm:$0xf]
  %v894 = vld [vmem:[%s3 + $0xec] sm:$0xf]
  %v895 = vld [vmem:[%s3 + $0xf0] sm:$0xf]
  %v896 = vld [vmem:[%s3 + $0xf4] sm:$0xf]
  %v897 = vld [vmem:[%s3 + $0xf8] sm:$0xf]
  %v898 = vld [vmem:[%s3 + $0xfc] sm:$0xf]
  %v899 = vunpack.c.l.bf16 %v835
  %v900 = vunpack.c.l.bf16 %v836
  %v901 = vunpack.c.l.bf16 %v837
  %v902 = vunpack.c.l.bf16 %v838
  %v903 = vunpack.c.l.bf16 %v839
  %v904 = vunpack.c.l.bf16 %v840
  %v905 = vunpack.c.l.bf16 %v841
  %v906 = vunpack.c.l.bf16 %v842
  %v907 = vunpack.c.l.bf16 %v843
  %v908 = vunpack.c.l.bf16 %v844
  %v909 = vunpack.c.l.bf16 %v845
  %v910 = vunpack.c.l.bf16 %v846
  %v911 = vunpack.c.l.bf16 %v847
  %v912 = vunpack.c.l.bf16 %v848
  %v913 = vunpack.c.l.bf16 %v849
  %v914 = vunpack.c.l.bf16 %v850
  %v915 = vunpack.c.l.bf16 %v851
  %v916 = vunpack.c.l.bf16 %v852
  %v917 = vunpack.c.l.bf16 %v853
  %v918 = vunpack.c.l.bf16 %v854
  %v919 = vunpack.c.l.bf16 %v855
  %v920 = vunpack.c.l.bf16 %v856
  %v921 = vunpack.c.l.bf16 %v857
  %v922 = vunpack.c.l.bf16 %v858
  %v923 = vunpack.c.l.bf16 %v859
  %v924 = vunpack.c.l.bf16 %v860
  %v925 = vunpack.c.l.bf16 %v861
  %v926 = vunpack.c.l.bf16 %v862
  %v927 = vunpack.c.l.bf16 %v863
  %v928 = vunpack.c.l.bf16 %v864
  %v929 = vunpack.c.l.bf16 %v865
  %v930 = vunpack.c.l.bf16 %v866
  %v931 = vunpack.c.l.bf16 %v867
  %v932 = vunpack.c.l.bf16 %v868
  %v933 = vunpack.c.l.bf16 %v869
  %v934 = vunpack.c.l.bf16 %v870
  %v935 = vunpack.c.l.bf16 %v871
  %v936 = vunpack.c.l.bf16 %v872
  %v937 = vunpack.c.l.bf16 %v873
  %v938 = vunpack.c.l.bf16 %v874
  %v939 = vunpack.c.l.bf16 %v875
  %v940 = vunpack.c.l.bf16 %v876
  %v941 = vunpack.c.l.bf16 %v877
  %v942 = vunpack.c.l.bf16 %v878
  %v943 = vunpack.c.l.bf16 %v879
  %v944 = vunpack.c.l.bf16 %v880
  %v945 = vunpack.c.l.bf16 %v881
  %v946 = vunpack.c.l.bf16 %v882
  %v947 = vunpack.c.l.bf16 %v883
  %v948 = vunpack.c.l.bf16 %v884
  %v949 = vunpack.c.l.bf16 %v885
  %v950 = vunpack.c.l.bf16 %v886
  %v951 = vunpack.c.l.bf16 %v887
  %v952 = vunpack.c.l.bf16 %v888
  %v953 = vunpack.c.l.bf16 %v889
  %v954 = vunpack.c.l.bf16 %v890
  %v955 = vunpack.c.l.bf16 %v891
  %v956 = vunpack.c.l.bf16 %v892
  %v957 = vunpack.c.l.bf16 %v893
  %v958 = vunpack.c.l.bf16 %v894
  %v959 = vunpack.c.l.bf16 %v895
  %v960 = vunpack.c.l.bf16 %v896
  %v961 = vunpack.c.l.bf16 %v897
  %v962 = vunpack.c.l.bf16 %v898
  %v963 = vadd.f32 %v581, %v899
  %v964 = vadd.f32 %v584, %v900
  %v965 = vadd.f32 %v589, %v901
  %v966 = vadd.f32 %v592, %v902
  %v967 = vadd.f32 %v597, %v903
  %v968 = vadd.f32 %v600, %v904
  %v969 = vadd.f32 %v605, %v905
  %v970 = vadd.f32 %v608, %v906
  %v971 = vadd.f32 %v613, %v907
  %v972 = vadd.f32 %v616, %v908
  %v973 = vadd.f32 %v621, %v909
  %v974 = vadd.f32 %v624, %v910
  %v975 = vadd.f32 %v629, %v911
  %v976 = vadd.f32 %v632, %v912
  %v977 = vadd.f32 %v637, %v913
  %v978 = vadd.f32 %v640, %v914
  %v979 = vadd.f32 %v645, %v915
  %v980 = vadd.f32 %v648, %v916
  %v981 = vadd.f32 %v653, %v917
  %v982 = vadd.f32 %v656, %v918
  %v983 = vadd.f32 %v661, %v919
  %v984 = vadd.f32 %v664, %v920
  %v985 = vadd.f32 %v669, %v921
  %v986 = vadd.f32 %v672, %v922
  %v987 = vadd.f32 %v677, %v923
  %v988 = vadd.f32 %v680, %v924
  %v989 = vadd.f32 %v685, %v925
  %v990 = vadd.f32 %v688, %v926
  %v991 = vadd.f32 %v693, %v927
  %v992 = vadd.f32 %v696, %v928
  %v993 = vadd.f32 %v701, %v929
  %v994 = vadd.f32 %v704, %v930
  %v995 = vadd.f32 %v709, %v931
  %v996 = vadd.f32 %v712, %v932
  %v997 = vadd.f32 %v717, %v933
  %v998 = vadd.f32 %v720, %v934
  %v999 = vadd.f32 %v725, %v935
  %v1000 = vadd.f32 %v728, %v936
  %v1001 = vadd.f32 %v733, %v937
  %v1002 = vadd.f32 %v736, %v938
  %v1003 = vadd.f32 %v741, %v939
  %v1004 = vadd.f32 %v744, %v940
  %v1005 = vadd.f32 %v749, %v941
  %v1006 = vadd.f32 %v752, %v942
  %v1007 = vadd.f32 %v757, %v943
  %v1008 = vadd.f32 %v760, %v944
  %v1009 = vadd.f32 %v765, %v945
  %v1010 = vadd.f32 %v768, %v946
  %v1011 = vadd.f32 %v773, %v947
  %v1012 = vadd.f32 %v776, %v948
  %v1013 = vadd.f32 %v781, %v949
  %v1014 = vadd.f32 %v784, %v950
  %v1015 = vadd.f32 %v789, %v951
  %v1016 = vadd.f32 %v792, %v952
  %v1017 = vadd.f32 %v797, %v953
  %v1018 = vadd.f32 %v800, %v954
  %v1019 = vadd.f32 %v805, %v955
  %v1020 = vadd.f32 %v808, %v956
  %v1021 = vadd.f32 %v813, %v957
  %v1022 = vadd.f32 %v816, %v958
  %v1023 = vadd.f32 %v821, %v959
  %v1024 = vadd.f32 %v824, %v960
  %v1025 = vadd.f32 %v829, %v961
  %v1026 = vadd.f32 %v832, %v962
  %v1027 = vpack.c.bf16 %v964, %v963
  %v1028 = vpack.c.bf16 %v966, %v965
  %v1029 = vpack.c.bf16 %v968, %v967
  %v1030 = vpack.c.bf16 %v970, %v969
  %v1031 = vpack.c.bf16 %v972, %v971
  %v1032 = vpack.c.bf16 %v974, %v973
  %v1033 = vpack.c.bf16 %v976, %v975
  %v1034 = vpack.c.bf16 %v978, %v977
  %v1035 = vpack.c.bf16 %v980, %v979
  %v1036 = vpack.c.bf16 %v982, %v981
  %v1037 = vpack.c.bf16 %v984, %v983
  %v1038 = vpack.c.bf16 %v986, %v985
  %v1039 = vpack.c.bf16 %v988, %v987
  %v1040 = vpack.c.bf16 %v990, %v989
  %v1041 = vpack.c.bf16 %v992, %v991
  %v1042 = vpack.c.bf16 %v994, %v993
  %v1043 = vpack.c.bf16 %v996, %v995
  %v1044 = vpack.c.bf16 %v998, %v997
  %v1045 = vpack.c.bf16 %v1000, %v999
  %v1046 = vpack.c.bf16 %v1002, %v1001
  %v1047 = vpack.c.bf16 %v1004, %v1003
  %v1048 = vpack.c.bf16 %v1006, %v1005
  %v1049 = vpack.c.bf16 %v1008, %v1007
  %v1050 = vpack.c.bf16 %v1010, %v1009
  %v1051 = vpack.c.bf16 %v1012, %v1011
  %v1052 = vpack.c.bf16 %v1014, %v1013
  %v1053 = vpack.c.bf16 %v1016, %v1015
  %v1054 = vpack.c.bf16 %v1018, %v1017
  %v1055 = vpack.c.bf16 %v1020, %v1019
  %v1056 = vpack.c.bf16 %v1022, %v1021
  %v1057 = vpack.c.bf16 %v1024, %v1023
  %v1058 = vpack.c.bf16 %v1026, %v1025
  %v1091 = vunpack.c.l.b16 %v1027
  %v1092 = vunpack.c.h.b16 %v1027
  %v1093 = vunpack.c.l.b16 %v1028
  %v1094 = vunpack.c.h.b16 %v1028
  %v1095 = vunpack.c.l.b16 %v1029
  %v1096 = vunpack.c.h.b16 %v1029
  %v1097 = vunpack.c.l.b16 %v1030
  %v1098 = vunpack.c.h.b16 %v1030
  %v1099 = vunpack.c.l.b16 %v1031
  %v1100 = vunpack.c.h.b16 %v1031
  %v1101 = vunpack.c.l.b16 %v1032
  %v1102 = vunpack.c.h.b16 %v1032
  %v1103 = vunpack.c.l.b16 %v1033
  %v1104 = vunpack.c.h.b16 %v1033
  %v1105 = vunpack.c.l.b16 %v1034
  %v1106 = vunpack.c.h.b16 %v1034
  %v1107 = vunpack.c.l.b16 %v1035
  %v1108 = vunpack.c.h.b16 %v1035
  %v1109 = vunpack.c.l.b16 %v1036
  %v1110 = vunpack.c.h.b16 %v1036
  %v1111 = vunpack.c.l.b16 %v1037
  %v1112 = vunpack.c.h.b16 %v1037
  %v1113 = vunpack.c.l.b16 %v1038
  %v1114 = vunpack.c.h.b16 %v1038
  %v1115 = vunpack.c.l.b16 %v1039
  %v1116 = vunpack.c.h.b16 %v1039
  %v1117 = vunpack.c.l.b16 %v1040
  %v1118 = vunpack.c.h.b16 %v1040
  %v1119 = vunpack.c.l.b16 %v1041
  %v1120 = vunpack.c.h.b16 %v1041
  %v1121 = vunpack.c.l.b16 %v1042
  %v1122 = vunpack.c.h.b16 %v1042
  %v1123 = vunpack.c.l.b16 %v1043
  %v1124 = vunpack.c.h.b16 %v1043
  %v1125 = vunpack.c.l.b16 %v1044
  %v1126 = vunpack.c.h.b16 %v1044
  %v1127 = vunpack.c.l.b16 %v1045
  %v1128 = vunpack.c.h.b16 %v1045
  %v1129 = vunpack.c.l.b16 %v1046
  %v1130 = vunpack.c.h.b16 %v1046
  %v1131 = vunpack.c.l.b16 %v1047
  %v1132 = vunpack.c.h.b16 %v1047
  %v1133 = vunpack.c.l.b16 %v1048
  %v1134 = vunpack.c.h.b16 %v1048
  %v1135 = vunpack.c.l.b16 %v1049
  %v1136 = vunpack.c.h.b16 %v1049
  %v1137 = vunpack.c.l.b16 %v1050
  %v1138 = vunpack.c.h.b16 %v1050
  %v1139 = vunpack.c.l.b16 %v1051
  %v1140 = vunpack.c.h.b16 %v1051
  %v1141 = vunpack.c.l.b16 %v1052
  %v1142 = vunpack.c.h.b16 %v1052
  %v1143 = vunpack.c.l.b16 %v1053
  %v1144 = vunpack.c.h.b16 %v1053
  %v1145 = vunpack.c.l.b16 %v1054
  %v1146 = vunpack.c.h.b16 %v1054
  %v1147 = vunpack.c.l.b16 %v1055
  %v1148 = vunpack.c.h.b16 %v1055
  %v1149 = vunpack.c.l.b16 %v1056
  %v1150 = vunpack.c.h.b16 %v1056
  %v1151 = vunpack.c.l.b16 %v1057
  %v1152 = vunpack.c.h.b16 %v1057
  %v1153 = vunpack.c.l.b16 %v1058
  %v1154 = vunpack.c.h.b16 %v1058
  %v1155 = vpack.c.b16 %v1091, %v1091
  %v1156 = vpack.c.b16 %v1092, %v1092
  %v1157 = vpack.c.b16 %v1093, %v1093
  %v1158 = vpack.c.b16 %v1094, %v1094
  %v1159 = vpack.c.b16 %v1095, %v1095
  %v1160 = vpack.c.b16 %v1096, %v1096
  %v1161 = vpack.c.b16 %v1097, %v1097
  %v1162 = vpack.c.b16 %v1098, %v1098
  %v1163 = vpack.c.b16 %v1099, %v1099
  %v1164 = vpack.c.b16 %v1100, %v1100
  %v1165 = vpack.c.b16 %v1101, %v1101
  %v1166 = vpack.c.b16 %v1102, %v1102
  %v1167 = vpack.c.b16 %v1103, %v1103
  %v1168 = vpack.c.b16 %v1104, %v1104
  %v1169 = vpack.c.b16 %v1105, %v1105
  %v1170 = vpack.c.b16 %v1106, %v1106
  %v1171 = vpack.c.b16 %v1107, %v1107
  %v1172 = vpack.c.b16 %v1108, %v1108
  %v1173 = vpack.c.b16 %v1109, %v1109
  %v1174 = vpack.c.b16 %v1110, %v1110
  %v1175 = vpack.c.b16 %v1111, %v1111
  %v1176 = vpack.c.b16 %v1112, %v1112
  %v1177 = vpack.c.b16 %v1113, %v1113
  %v1178 = vpack.c.b16 %v1114, %v1114
  %v1179 = vpack.c.b16 %v1115, %v1115
  %v1180 = vpack.c.b16 %v1116, %v1116
  %v1181 = vpack.c.b16 %v1117, %v1117
  %v1182 = vpack.c.b16 %v1118, %v1118
  %v1183 = vpack.c.b16 %v1119, %v1119
  %v1184 = vpack.c.b16 %v1120, %v1120
  %v1185 = vpack.c.b16 %v1121, %v1121
  %v1186 = vpack.c.b16 %v1122, %v1122
  %v1187 = vpack.c.b16 %v1123, %v1123
  %v1188 = vpack.c.b16 %v1124, %v1124
  %v1189 = vpack.c.b16 %v1125, %v1125
  %v1190 = vpack.c.b16 %v1126, %v1126
  %v1191 = vpack.c.b16 %v1127, %v1127
  %v1192 = vpack.c.b16 %v1128, %v1128
  %v1193 = vpack.c.b16 %v1129, %v1129
  %v1194 = vpack.c.b16 %v1130, %v1130
  %v1195 = vpack.c.b16 %v1131, %v1131
  %v1196 = vpack.c.b16 %v1132, %v1132
  %v1197 = vpack.c.b16 %v1133, %v1133
  %v1198 = vpack.c.b16 %v1134, %v1134
  %v1199 = vpack.c.b16 %v1135, %v1135
  %v1200 = vpack.c.b16 %v1136, %v1136
  %v1201 = vpack.c.b16 %v1137, %v1137
  %v1202 = vpack.c.b16 %v1138, %v1138
  %v1203 = vpack.c.b16 %v1139, %v1139
  %v1204 = vpack.c.b16 %v1140, %v1140
  %v1205 = vpack.c.b16 %v1141, %v1141
  %v1206 = vpack.c.b16 %v1142, %v1142
  %v1207 = vpack.c.b16 %v1143, %v1143
  %v1208 = vpack.c.b16 %v1144, %v1144
  %v1209 = vpack.c.b16 %v1145, %v1145
  %v1210 = vpack.c.b16 %v1146, %v1146
  %v1211 = vpack.c.b16 %v1147, %v1147
  %v1212 = vpack.c.b16 %v1148, %v1148
  %v1213 = vpack.c.b16 %v1149, %v1149
  %v1214 = vpack.c.b16 %v1150, %v1150
  %v1215 = vpack.c.b16 %v1151, %v1151
  %v1216 = vpack.c.b16 %v1152, %v1152
  %v1217 = vpack.c.b16 %v1153, %v1153
  %v1218 = vpack.c.b16 %v1154, %v1154
  %vm1283 = vcmask 191488
  %1284 = vst.msk [vmem:[%s4] sm:$0xf] %vm1283, %v1155
  %1285 = vst.msk [vmem:[%s4 + $0x4] sm:$0xf] %vm1283, %v1156
  %1286 = vst.msk [vmem:[%s4 + $0x8] sm:$0xf] %vm1283, %v1157
  %1287 = vst.msk [vmem:[%s4 + $0xc] sm:$0xf] %vm1283, %v1158
  %1288 = vst.msk [vmem:[%s4 + $0x10] sm:$0xf] %vm1283, %v1159
  %1289 = vst.msk [vmem:[%s4 + $0x14] sm:$0xf] %vm1283, %v1160
  %1290 = vst.msk [vmem:[%s4 + $0x18] sm:$0xf] %vm1283, %v1161
  %1291 = vst.msk [vmem:[%s4 + $0x1c] sm:$0xf] %vm1283, %v1162
  %1292 = vst.msk [vmem:[%s4 + $0x20] sm:$0xf] %vm1283, %v1163
  %1293 = vst.msk [vmem:[%s4 + $0x24] sm:$0xf] %vm1283, %v1164
  %1294 = vst.msk [vmem:[%s4 + $0x28] sm:$0xf] %vm1283, %v1165
  %1295 = vst.msk [vmem:[%s4 + $0x2c] sm:$0xf] %vm1283, %v1166
  %1296 = vst.msk [vmem:[%s4 + $0x30] sm:$0xf] %vm1283, %v1167
  %1297 = vst.msk [vmem:[%s4 + $0x34] sm:$0xf] %vm1283, %v1168
  %1298 = vst.msk [vmem:[%s4 + $0x38] sm:$0xf] %vm1283, %v1169
  %1299 = vst.msk [vmem:[%s4 + $0x3c] sm:$0xf] %vm1283, %v1170
  %1300 = vst.msk [vmem:[%s4 + $0x40] sm:$0xf] %vm1283, %v1171
  %1301 = vst.msk [vmem:[%s4 + $0x44] sm:$0xf] %vm1283, %v1172
  %1302 = vst.msk [vmem:[%s4 + $0x48] sm:$0xf] %vm1283, %v1173
  %1303 = vst.msk [vmem:[%s4 + $0x4c] sm:$0xf] %vm1283, %v1174
  %1304 = vst.msk [vmem:[%s4 + $0x50] sm:$0xf] %vm1283, %v1175
  %1305 = vst.msk [vmem:[%s4 + $0x54] sm:$0xf] %vm1283, %v1176
  %1306 = vst.msk [vmem:[%s4 + $0x58] sm:$0xf] %vm1283, %v1177
  %1307 = vst.msk [vmem:[%s4 + $0x5c] sm:$0xf] %vm1283, %v1178
  %1308 = vst.msk [vmem:[%s4 + $0x60] sm:$0xf] %vm1283, %v1179
  %1309 = vst.msk [vmem:[%s4 + $0x64] sm:$0xf] %vm1283, %v1180
  %1310 = vst.msk [vmem:[%s4 + $0x68] sm:$0xf] %vm1283, %v1181
  %1311 = vst.msk [vmem:[%s4 + $0x6c] sm:$0xf] %vm1283, %v1182
  %1312 = vst.msk [vmem:[%s4 + $0x70] sm:$0xf] %vm1283, %v1183
  %1313 = vst.msk [vmem:[%s4 + $0x74] sm:$0xf] %vm1283, %v1184
  %1314 = vst.msk [vmem:[%s4 + $0x78] sm:$0xf] %vm1283, %v1185
  %1315 = vst.msk [vmem:[%s4 + $0x7c] sm:$0xf] %vm1283, %v1186
  %1316 = vst.msk [vmem:[%s4 + $0x80] sm:$0xf] %vm1283, %v1187
  %1317 = vst.msk [vmem:[%s4 + $0x84] sm:$0xf] %vm1283, %v1188
  %1318 = vst.msk [vmem:[%s4 + $0x88] sm:$0xf] %vm1283, %v1189
  %1319 = vst.msk [vmem:[%s4 + $0x8c] sm:$0xf] %vm1283, %v1190
  %1320 = vst.msk [vmem:[%s4 + $0x90] sm:$0xf] %vm1283, %v1191
  %1321 = vst.msk [vmem:[%s4 + $0x94] sm:$0xf] %vm1283, %v1192
  %1322 = vst.msk [vmem:[%s4 + $0x98] sm:$0xf] %vm1283, %v1193
  %1323 = vst.msk [vmem:[%s4 + $0x9c] sm:$0xf] %vm1283, %v1194
  %1324 = vst.msk [vmem:[%s4 + $0xa0] sm:$0xf] %vm1283, %v1195
  %1325 = vst.msk [vmem:[%s4 + $0xa4] sm:$0xf] %vm1283, %v1196
  %1326 = vst.msk [vmem:[%s4 + $0xa8] sm:$0xf] %vm1283, %v1197
  %1327 = vst.msk [vmem:[%s4 + $0xac] sm:$0xf] %vm1283, %v1198
  %1328 = vst.msk [vmem:[%s4 + $0xb0] sm:$0xf] %vm1283, %v1199
  %1329 = vst.msk [vmem:[%s4 + $0xb4] sm:$0xf] %vm1283, %v1200
  %1330 = vst.msk [vmem:[%s4 + $0xb8] sm:$0xf] %vm1283, %v1201
  %1331 = vst.msk [vmem:[%s4 + $0xbc] sm:$0xf] %vm1283, %v1202
  %1332 = vst.msk [vmem:[%s4 + $0xc0] sm:$0xf] %vm1283, %v1203
  %1333 = vst.msk [vmem:[%s4 + $0xc4] sm:$0xf] %vm1283, %v1204
  %1334 = vst.msk [vmem:[%s4 + $0xc8] sm:$0xf] %vm1283, %v1205
  %1335 = vst.msk [vmem:[%s4 + $0xcc] sm:$0xf] %vm1283, %v1206
  %1336 = vst.msk [vmem:[%s4 + $0xd0] sm:$0xf] %vm1283, %v1207
  %1337 = vst.msk [vmem:[%s4 + $0xd4] sm:$0xf] %vm1283, %v1208
  %1338 = vst.msk [vmem:[%s4 + $0xd8] sm:$0xf] %vm1283, %v1209
  %1339 = vst.msk [vmem:[%s4 + $0xdc] sm:$0xf] %vm1283, %v1210
  %1340 = vst.msk [vmem:[%s4 + $0xe0] sm:$0xf] %vm1283, %v1211
  %1341 = vst.msk [vmem:[%s4 + $0xe4] sm:$0xf] %vm1283, %v1212
  %1342 = vst.msk [vmem:[%s4 + $0xe8] sm:$0xf] %vm1283, %v1213
  %1343 = vst.msk [vmem:[%s4 + $0xec] sm:$0xf] %vm1283, %v1214
  %1344 = vst.msk [vmem:[%s4 + $0xf0] sm:$0xf] %vm1283, %v1215
  %1345 = vst.msk [vmem:[%s4 + $0xf4] sm:$0xf] %vm1283, %v1216
  %1346 = vst.msk [vmem:[%s4 + $0xf8] sm:$0xf] %vm1283, %v1217
  %1347 = vst.msk [vmem:[%s4 + $0xfc] sm:$0xf] %vm1283, %v1218
  // Predicated region
  $region18: #{_lambda_.11} parent=0 // pred_check
    _
  $region19: #{_lambda_.11} parent=0 // pred_check_branch
    %1349 = sbr.rel (0) target = $region21
  $region20: #{_lambda_.11} parent=0 // pred_region
    _
  $region21: #{_lambda_.11} parent=0 // pred_fallthru
    _
  // Predicated region
  $region22: #{_lambda_.11} parent=0 // pred_check
    _
  $region23: #{_lambda_.11} parent=0 // pred_check_branch
    %1351 = sbr.rel (0) target = $region25
  $region24: #{_lambda_.11} parent=0 // pred_region
    _
  $region25: #{_lambda_.11} parent=0 // pred_fallthru
    _

// kernel: _lambda_.13
$region0: #{_lambda_.13}
  #allocation0 [shape = 'u32[]', space=smem, size = 0x4, offset = 0x4, fixed_abs, tag = 'smem constant byte address 0x4 - core index']
  #allocation1 [shape = 'u32[144,128]{1,0:T(1,128)}', space=vmem, size = 0x12000, scoped, tag = 'internal scratch']
  %s0 = inlined_call_operand.vmem [shape: bf16[8,320], index: 0, kind: input, shape index: {}]
  %s1 = inlined_call_operand.vmem [shape: f32[2,8], index: 1, kind: input, shape index: {}]
  %s2 = inlined_call_operand.vmem [shape: bf16[320,1280], index: 2, kind: input, shape index: {}]
  %s3 = inlined_call_operand.vmem [shape: f32[1,1280], index: 3, kind: input, shape index: {}]
  %s4 = inlined_call_operand.vmem [shape: bf16[1280,128], index: 4, kind: input, shape index: {}]
  %s5 = inlined_call_operand.vmem [shape: f32[1,128], index: 5, kind: input, shape index: {}]
  %s6 = inlined_call_operand.vmem [shape: f32[2,128], index: 6, kind: output, shape index: {}]
  %s7 = sld [smem:[#allocation0]]
  $region34: #{_lambda_.13} parent=0
    _
  %s9 = ssub.s32 1, %s7
  %s10 = scalar_select 0, %s9, %s7
  // Predicated region
  $region2: #{_lambda_.13} parent=0 // pred_check
    _
  $region3: #{_lambda_.13} parent=0 // pred_check_branch
    %12 = sbr.rel (0) target = $region5
  $region4: #{_lambda_.13} parent=0 // pred_region
    _
  $region5: #{_lambda_.13} parent=0 // pred_fallthru
    _
  // Predicated region
  $region6: #{_lambda_.13} parent=0 // pred_check
    _
  $region7: #{_lambda_.13} parent=0 // pred_check_branch
    %14 = sbr.rel (0) target = $region9
  $region8: #{_lambda_.13} parent=0 // pred_region
    _
  $region9: #{_lambda_.13} parent=0 // pred_fallthru
    _
  // Predicated region
  $region10: #{_lambda_.13} parent=0 // pred_check
    _
  $region11: #{_lambda_.13} parent=0 // pred_check_branch
    %16 = sbr.rel (0) target = $region13
  $region12: #{_lambda_.13} parent=0 // pred_region
    _
  $region13: #{_lambda_.13} parent=0 // pred_fallthru
    _
  // Predicated region
  $region14: #{_lambda_.13} parent=0 // pred_check
    _
  $region15: #{_lambda_.13} parent=0 // pred_check_branch
    %18 = sbr.rel (0) target = $region17
  $region16: #{_lambda_.13} parent=0 // pred_region
    _
  $region17: #{_lambda_.13} parent=0 // pred_fallthru
    _
  // Predicated region
  $region18: #{_lambda_.13} parent=0 // pred_check
    _
  $region19: #{_lambda_.13} parent=0 // pred_check_branch
    %20 = sbr.rel (0) target = $region21
  $region20: #{_lambda_.13} parent=0 // pred_region
    _
  $region21: #{_lambda_.13} parent=0 // pred_fallthru
    _
  // Predicated region
  $region22: #{_lambda_.13} parent=0 // pred_check
    _
  $region23: #{_lambda_.13} parent=0 // pred_check_branch
    %22 = sbr.rel (0) target = $region25
  $region24: #{_lambda_.13} parent=0 // pred_region
    _
  $region25: #{_lambda_.13} parent=0 // pred_fallthru
    _
  %v24 = vld [vmem:[%s0] sm:$0xff]
  %v25 = vld [vmem:[%s0 + $0x8] sm:$0xf]
  %v26 = vld [vmem:[%s2] sm:$0xff]
  %v27 = vld [vmem:[%s2 + $0x8] sm:$0xff]
  %v28 = vld [vmem:[%s2 + $0x10] sm:$0xff]
  %v29 = vld [vmem:[%s2 + $0x18] sm:$0xff]
  %v30 = vld [vmem:[%s2 + $0x20] sm:$0xff]
  %v31 = vld [vmem:[%s2 + $0x28] sm:$0xff]
  %v32 = vld [vmem:[%s2 + $0x30] sm:$0xff]
  %v33 = vld [vmem:[%s2 + $0x38] sm:$0xff]
  %v34 = vld [vmem:[%s2 + $0x40] sm:$0xff]
  %v35 = vld [vmem:[%s2 + $0x48] sm:$0xff]
  %v36 = vld [vmem:[%s2 + $0x50] sm:$0xff]
  %v37 = vld [vmem:[%s2 + $0x58] sm:$0xff]
  %v38 = vld [vmem:[%s2 + $0x60] sm:$0xff]
  %v39 = vld [vmem:[%s2 + $0x68] sm:$0xff]
  %v40 = vld [vmem:[%s2 + $0x70] sm:$0xff]
  %v41 = vld [vmem:[%s2 + $0x78] sm:$0xff]
  %v42 = vld [vmem:[%s2 + $0x80] sm:$0xff]
  %v43 = vld [vmem:[%s2 + $0x88] sm:$0xff]
  %v44 = vld [vmem:[%s2 + $0x90] sm:$0xff]
  %v45 = vld [vmem:[%s2 + $0x98] sm:$0xff]
  %v46 = vld [vmem:[%s2 + $0xa0] sm:$0xff]
  %v47 = vld [vmem:[%s2 + $0xa8] sm:$0xff]
  %v48 = vld [vmem:[%s2 + $0xb0] sm:$0xff]
  %v49 = vld [vmem:[%s2 + $0xb8] sm:$0xff]
  %v50 = vld [vmem:[%s2 + $0xc0] sm:$0xff]
  %v51 = vld [vmem:[%s2 + $0xc8] sm:$0xff]
  %v52 = vld [vmem:[%s2 + $0xd0] sm:$0xff]
  %v53 = vld [vmem:[%s2 + $0xd8] sm:$0xff]
  %v54 = vld [vmem:[%s2 + $0xe0] sm:$0xff]
  %v55 = vld [vmem:[%s2 + $0xe8] sm:$0xff]
  %v56 = vld [vmem:[%s2 + $0xf0] sm:$0xff]
  %v57 = vld [vmem:[%s2 + $0xf8] sm:$0xff]
  %v58 = vld [vmem:[%s2 + $0x100] sm:$0xff]
  %v59 = vld [vmem:[%s2 + $0x108] sm:$0xff]
  %v60 = vld [vmem:[%s2 + $0x110] sm:$0xff]
  %v61 = vld [vmem:[%s2 + $0x118] sm:$0xff]
  %v62 = vld [vmem:[%s2 + $0x120] sm:$0xff]
  %v63 = vld [vmem:[%s2 + $0x128] sm:$0xff]
  %v64 = vld [vmem:[%s2 + $0x130] sm:$0xff]
  %v65 = vld [vmem:[%s2 + $0x138] sm:$0xff]
  %v66 = vld [vmem:[%s2 + $0x140] sm:$0xff]
  %v67 = vld [vmem:[%s2 + $0x148] sm:$0xff]
  %v68 = vld [vmem:[%s2 + $0x150] sm:$0xff]
  %v69 = vld [vmem:[%s2 + $0x158] sm:$0xff]
  %v70 = vld [vmem:[%s2 + $0x160] sm:$0xff]
  %v71 = vld [vmem:[%s2 + $0x168] sm:$0xff]
  %v72 = vld [vmem:[%s2 + $0x170] sm:$0xff]
  %v73 = vld [vmem:[%s2 + $0x178] sm:$0xff]
  %v74 = vld [vmem:[%s2 + $0x180] sm:$0xff]
  %v75 = vld [vmem:[%s2 + $0x188] sm:$0xff]
  %v76 = vld [vmem:[%s2 + $0x190] sm:$0xff]
  %v77 = vld [vmem:[%s2 + $0x198] sm:$0xff]
  %v78 = vld [vmem:[%s2 + $0x1a0] sm:$0xff]
  %v79 = vld [vmem:[%s2 + $0x1a8] sm:$0xff]
  %v80 = vld [vmem:[%s2 + $0x1b0] sm:$0xff]
  %v81 = vld [vmem:[%s2 + $0x1b8] sm:$0xff]
  %v82 = vld [vmem:[%s2 + $0x1c0] sm:$0xff]
  %v83 = vld [vmem:[%s2 + $0x1c8] sm:$0xff]
  %v84 = vld [vmem:[%s2 + $0x1d0] sm:$0xff]
  %v85 = vld [vmem:[%s2 + $0x1d8] sm:$0xff]
  %v86 = vld [vmem:[%s2 + $0x1e0] sm:$0xff]
  %v87 = vld [vmem:[%s2 + $0x1e8] sm:$0xff]
  %v88 = vld [vmem:[%s2 + $0x1f0] sm:$0xff]
  %v89 = vld [vmem:[%s2 + $0x1f8] sm:$0xff]
  %v90 = vld [vmem:[%s2 + $0x200] sm:$0xff]
  %v91 = vld [vmem:[%s2 + $0x208] sm:$0xff]
  %v92 = vld [vmem:[%s2 + $0x210] sm:$0xff]
  %v93 = vld [vmem:[%s2 + $0x218] sm:$0xff]
  %v94 = vld [vmem:[%s2 + $0x220] sm:$0xff]
  %v95 = vld [vmem:[%s2 + $0x228] sm:$0xff]
  %v96 = vld [vmem:[%s2 + $0x230] sm:$0xff]
  %v97 = vld [vmem:[%s2 + $0x238] sm:$0xff]
  %v98 = vld [vmem:[%s2 + $0x240] sm:$0xff]
  %v99 = vld [vmem:[%s2 + $0x248] sm:$0xff]
  %v100 = vld [vmem:[%s2 + $0x250] sm:$0xff]
  %v101 = vld [vmem:[%s2 + $0x258] sm:$0xff]
  %v102 = vld [vmem:[%s2 + $0x260] sm:$0xff]
  %v103 = vld [vmem:[%s2 + $0x268] sm:$0xff]
  %v104 = vld [vmem:[%s2 + $0x270] sm:$0xff]
  %v105 = vld [vmem:[%s2 + $0x278] sm:$0xff]
  %v106 = vld [vmem:[%s2 + $0x280] sm:$0xff]
  %v107 = vld [vmem:[%s2 + $0x288] sm:$0xff]
  %v108 = vld [vmem:[%s2 + $0x290] sm:$0xff]
  %v109 = vld [vmem:[%s2 + $0x298] sm:$0xff]
  %v110 = vld [vmem:[%s2 + $0x2a0] sm:$0xff]
  %v111 = vld [vmem:[%s2 + $0x2a8] sm:$0xff]
  %v112 = vld [vmem:[%s2 + $0x2b0] sm:$0xff]
  %v113 = vld [vmem:[%s2 + $0x2b8] sm:$0xff]
  %v114 = vld [vmem:[%s2 + $0x2c0] sm:$0xff]
  %v115 = vld [vmem:[%s2 + $0x2c8] sm:$0xff]
  %v116 = vld [vmem:[%s2 + $0x2d0] sm:$0xff]
  %v117 = vld [vmem:[%s2 + $0x2d8] sm:$0xff]
  %v118 = vld [vmem:[%s2 + $0x2e0] sm:$0xff]
  %v119 = vld [vmem:[%s2 + $0x2e8] sm:$0xff]
  %v120 = vld [vmem:[%s2 + $0x2f0] sm:$0xff]
  %v121 = vld [vmem:[%s2 + $0x2f8] sm:$0xff]
  %v122 = vld [vmem:[%s2 + $0x300] sm:$0xff]
  %v123 = vld [vmem:[%s2 + $0x308] sm:$0xff]
  %v124 = vld [vmem:[%s2 + $0x310] sm:$0xff]
  %v125 = vld [vmem:[%s2 + $0x318] sm:$0xff]
  %v126 = vld [vmem:[%s2 + $0x320] sm:$0xff]
  %v127 = vld [vmem:[%s2 + $0x328] sm:$0xff]
  %v128 = vld [vmem:[%s2 + $0x330] sm:$0xff]
  %v129 = vld [vmem:[%s2 + $0x338] sm:$0xff]
  %v130 = vld [vmem:[%s2 + $0x340] sm:$0xff]
  %v131 = vld [vmem:[%s2 + $0x348] sm:$0xff]
  %v132 = vld [vmem:[%s2 + $0x350] sm:$0xff]
  %v133 = vld [vmem:[%s2 + $0x358] sm:$0xff]
  %v134 = vld [vmem:[%s2 + $0x360] sm:$0xff]
  %v135 = vld [vmem:[%s2 + $0x368] sm:$0xff]
  %v136 = vld [vmem:[%s2 + $0x370] sm:$0xff]
  %v137 = vld [vmem:[%s2 + $0x378] sm:$0xff]
  %v138 = vld [vmem:[%s2 + $0x380] sm:$0xff]
  %v139 = vld [vmem:[%s2 + $0x388] sm:$0xff]
  %v140 = vld [vmem:[%s2 + $0x390] sm:$0xff]
  %v141 = vld [vmem:[%s2 + $0x398] sm:$0xff]
  %v142 = vld [vmem:[%s2 + $0x3a0] sm:$0xff]
  %v143 = vld [vmem:[%s2 + $0x3a8] sm:$0xff]
  %v144 = vld [vmem:[%s2 + $0x3b0] sm:$0xff]
  %v145 = vld [vmem:[%s2 + $0x3b8] sm:$0xff]
  %v146 = vld [vmem:[%s2 + $0x3c0] sm:$0xff]
  %v147 = vld [vmem:[%s2 + $0x3c8] sm:$0xff]
  %v148 = vld [vmem:[%s2 + $0x3d0] sm:$0xff]
  %v149 = vld [vmem:[%s2 + $0x3d8] sm:$0xff]
  %v150 = vld [vmem:[%s2 + $0x3e0] sm:$0xff]
  %v151 = vld [vmem:[%s2 + $0x3e8] sm:$0xff]
  %v152 = vld [vmem:[%s2 + $0x3f0] sm:$0xff]
  %v153 = vld [vmem:[%s2 + $0x3f8] sm:$0xff]
  %v154 = vld [vmem:[%s2 + $0x400] sm:$0xff]
  %v155 = vld [vmem:[%s2 + $0x408] sm:$0xff]
  %v156 = vld [vmem:[%s2 + $0x410] sm:$0xff]
  %v157 = vld [vmem:[%s2 + $0x418] sm:$0xff]
  %v158 = vld [vmem:[%s2 + $0x420] sm:$0xff]
  %v159 = vld [vmem:[%s2 + $0x428] sm:$0xff]
  %v160 = vld [vmem:[%s2 + $0x430] sm:$0xff]
  %v161 = vld [vmem:[%s2 + $0x438] sm:$0xff]
  %v162 = vld [vmem:[%s2 + $0x440] sm:$0xff]
  %v163 = vld [vmem:[%s2 + $0x448] sm:$0xff]
  %v164 = vld [vmem:[%s2 + $0x450] sm:$0xff]
  %v165 = vld [vmem:[%s2 + $0x458] sm:$0xff]
  %v166 = vld [vmem:[%s2 + $0x460] sm:$0xff]
  %v167 = vld [vmem:[%s2 + $0x468] sm:$0xff]
  %v168 = vld [vmem:[%s2 + $0x470] sm:$0xff]
  %v169 = vld [vmem:[%s2 + $0x478] sm:$0xff]
  %v170 = vld [vmem:[%s2 + $0x480] sm:$0xff]
  %v171 = vld [vmem:[%s2 + $0x488] sm:$0xff]
  %v172 = vld [vmem:[%s2 + $0x490] sm:$0xff]
  %v173 = vld [vmem:[%s2 + $0x498] sm:$0xff]
  %v174 = vld [vmem:[%s2 + $0x4a0] sm:$0xff]
  %v175 = vld [vmem:[%s2 + $0x4a8] sm:$0xff]
  %v176 = vld [vmem:[%s2 + $0x4b0] sm:$0xff]
  %v177 = vld [vmem:[%s2 + $0x4b8] sm:$0xff]
  %v178 = vld [vmem:[%s2 + $0x4c0] sm:$0xff]
  %v179 = vld [vmem:[%s2 + $0x4c8] sm:$0xff]
  %v180 = vld [vmem:[%s2 + $0x4d0] sm:$0xff]
  %v181 = vld [vmem:[%s2 + $0x4d8] sm:$0xff]
  %v182 = vld [vmem:[%s2 + $0x4e0] sm:$0xff]
  %v183 = vld [vmem:[%s2 + $0x4e8] sm:$0xff]
  %v184 = vld [vmem:[%s2 + $0x4f0] sm:$0xff]
  %v185 = vld [vmem:[%s2 + $0x4f8] sm:$0xff]
  %v186 = vld [vmem:[%s2 + $0x500] sm:$0xff]
  %v187 = vld [vmem:[%s2 + $0x508] sm:$0xff]
  %v188 = vld [vmem:[%s2 + $0x510] sm:$0xff]
  %v189 = vld [vmem:[%s2 + $0x518] sm:$0xff]
  %v190 = vld [vmem:[%s2 + $0x520] sm:$0xff]
  %v191 = vld [vmem:[%s2 + $0x528] sm:$0xff]
  %v192 = vld [vmem:[%s2 + $0x530] sm:$0xff]
  %v193 = vld [vmem:[%s2 + $0x538] sm:$0xff]
  %v194 = vld [vmem:[%s2 + $0x540] sm:$0xff]
  %v195 = vld [vmem:[%s2 + $0x548] sm:$0xff]
  %v196 = vld [vmem:[%s2 + $0x550] sm:$0xff]
  %v197 = vld [vmem:[%s2 + $0x558] sm:$0xff]
  %v198 = vld [vmem:[%s2 + $0x560] sm:$0xff]
  %v199 = vld [vmem:[%s2 + $0x568] sm:$0xff]
  %v200 = vld [vmem:[%s2 + $0x570] sm:$0xff]
  %v201 = vld [vmem:[%s2 + $0x578] sm:$0xff]
  %v202 = vld [vmem:[%s2 + $0x580] sm:$0xff]
  %v203 = vld [vmem:[%s2 + $0x588] sm:$0xff]
  %v204 = vld [vmem:[%s2 + $0x590] sm:$0xff]
  %v205 = vld [vmem:[%s2 + $0x598] sm:$0xff]
  %v206 = vld [vmem:[%s2 + $0x5a0] sm:$0xff]
  %v207 = vld [vmem:[%s2 + $0x5a8] sm:$0xff]
  %v208 = vld [vmem:[%s2 + $0x5b0] sm:$0xff]
  %v209 = vld [vmem:[%s2 + $0x5b8] sm:$0xff]
  %v210 = vld [vmem:[%s2 + $0x5c0] sm:$0xff]
  %v211 = vld [vmem:[%s2 + $0x5c8] sm:$0xff]
  %v212 = vld [vmem:[%s2 + $0x5d0] sm:$0xff]
  %v213 = vld [vmem:[%s2 + $0x5d8] sm:$0xff]
  %v214 = vld [vmem:[%s2 + $0x5e0] sm:$0xff]
  %v215 = vld [vmem:[%s2 + $0x5e8] sm:$0xff]
  %v216 = vld [vmem:[%s2 + $0x5f0] sm:$0xff]
  %v217 = vld [vmem:[%s2 + $0x5f8] sm:$0xff]
  %v218 = vld [vmem:[%s2 + $0x600] sm:$0xff]
  %v219 = vld [vmem:[%s2 + $0x608] sm:$0xff]
  %v220 = vld [vmem:[%s2 + $0x610] sm:$0xff]
  %v221 = vld [vmem:[%s2 + $0x618] sm:$0xff]
  %v222 = vld [vmem:[%s2 + $0x620] sm:$0xff]
  %v223 = vld [vmem:[%s2 + $0x628] sm:$0xff]
  %v224 = vld [vmem:[%s2 + $0x630] sm:$0xff]
  %v225 = vld [vmem:[%s2 + $0x638] sm:$0xff]
  %v226 = vld [vmem:[%s3] sm:$0xff]
  %v227 = vld [vmem:[%s3 + $0x8] sm:$0x3]
  %v230 = vlaneseq
  %v231 = vshrl.u32 %v230, 7
  %v232 = vsub.s32 0, %v231
  %v233 = vrot.slane %v226, %v232
  %v234 = vlaneseq
  %v235 = vshrl.u32 %v234, 7
  %v236 = vsub.s32 1, %v235
  %v237 = vrot.slane %v226, %v236
  %v238 = vlaneseq
  %v239 = vshrl.u32 %v238, 7
  %v240 = vsub.s32 2, %v239
  %v241 = vrot.slane %v226, %v240
  %v242 = vlaneseq
  %v243 = vshrl.u32 %v242, 7
  %v244 = vsub.s32 3, %v243
  %v245 = vrot.slane %v226, %v244
  %v246 = vlaneseq
  %v247 = vshrl.u32 %v246, 7
  %v248 = vsub.s32 4, %v247
  %v249 = vrot.slane %v226, %v248
  %v250 = vlaneseq
  %v251 = vshrl.u32 %v250, 7
  %v252 = vsub.s32 5, %v251
  %v253 = vrot.slane %v226, %v252
  %v254 = vlaneseq
  %v255 = vshrl.u32 %v254, 7
  %v256 = vsub.s32 6, %v255
  %v257 = vrot.slane %v226, %v256
  %v258 = vlaneseq
  %v259 = vshrl.u32 %v258, 7
  %v260 = vsub.s32 7, %v259
  %v261 = vrot.slane %v226, %v260
  %v262 = vlaneseq
  %v263 = vshrl.u32 %v262, 7
  %v264 = vsub.s32 0, %v263
  %v265 = vrot.slane %v227, %v264
  %v266 = vlaneseq
  %v267 = vshrl.u32 %v266, 7
  %v268 = vsub.s32 1, %v267
  %v269 = vrot.slane %v227, %v268
  %v282 = vunpack.c.l.b16 %v24
  %v283 = vunpack.c.h.b16 %v24
  %v284 = vunpack.c.l.b16 %v25
  %v285 = vpack.c.b16 %v282, %v282
  %v286 = vpack.c.b16 %v283, %v283
  %v287 = vpack.c.b16 %v284, %v284
  %v490 = vunpack.c.l.b16 %v26
  %v491 = vunpack.c.h.b16 %v26
  %v492 = vunpack.c.l.b16 %v27
  %v493 = vunpack.c.h.b16 %v27
  %v494 = vunpack.c.l.b16 %v28
  %v495 = vunpack.c.h.b16 %v28
  %v496 = vunpack.c.l.b16 %v29
  %v497 = vunpack.c.h.b16 %v29
  %v498 = vunpack.c.l.b16 %v30
  %v499 = vunpack.c.h.b16 %v30
  %v500 = vunpack.c.l.b16 %v31
  %v501 = vunpack.c.h.b16 %v31
  %v502 = vunpack.c.l.b16 %v32
  %v503 = vunpack.c.h.b16 %v32
  %v504 = vunpack.c.l.b16 %v33
  %v505 = vunpack.c.h.b16 %v33
  %v506 = vunpack.c.l.b16 %v34
  %v507 = vunpack.c.h.b16 %v34
  %v508 = vunpack.c.l.b16 %v35
  %v509 = vunpack.c.h.b16 %v35
  %v510 = vunpack.c.l.b16 %v36
  %v511 = vunpack.c.h.b16 %v36
  %v512 = vunpack.c.l.b16 %v37
  %v513 = vunpack.c.h.b16 %v37
  %v514 = vunpack.c.l.b16 %v38
  %v515 = vunpack.c.h.b16 %v38
  %v516 = vunpack.c.l.b16 %v39
  %v517 = vunpack.c.h.b16 %v39
  %v518 = vunpack.c.l.b16 %v40
  %v519 = vunpack.c.h.b16 %v40
  %v520 = vunpack.c.l.b16 %v41
  %v521 = vunpack.c.h.b16 %v41
  %v522 = vunpack.c.l.b16 %v42
  %v523 = vunpack.c.h.b16 %v42
  %v524 = vunpack.c.l.b16 %v43
  %v525 = vunpack.c.h.b16 %v43
  %v526 = vunpack.c.l.b16 %v44
  %v527 = vunpack.c.h.b16 %v44
  %v528 = vunpack.c.l.b16 %v45
  %v529 = vunpack.c.h.b16 %v45
  %v530 = vunpack.c.l.b16 %v46
  %v531 = vunpack.c.h.b16 %v46
  %v532 = vunpack.c.l.b16 %v47
  %v533 = vunpack.c.h.b16 %v47
  %v534 = vunpack.c.l.b16 %v48
  %v535 = vunpack.c.h.b16 %v48
  %v536 = vunpack.c.l.b16 %v49
  %v537 = vunpack.c.h.b16 %v49
  %v538 = vunpack.c.l.b16 %v50
  %v539 = vunpack.c.h.b16 %v50
  %v540 = vunpack.c.l.b16 %v51
  %v541 = vunpack.c.h.b16 %v51
  %v542 = vunpack.c.l.b16 %v52
  %v543 = vunpack.c.h.b16 %v52
  %v544 = vunpack.c.l.b16 %v53
  %v545 = vunpack.c.h.b16 %v53
  %v546 = vunpack.c.l.b16 %v54
  %v547 = vunpack.c.h.b16 %v54
  %v548 = vunpack.c.l.b16 %v55
  %v549 = vunpack.c.h.b16 %v55
  %v550 = vunpack.c.l.b16 %v56
  %v551 = vunpack.c.h.b16 %v56
  %v552 = vunpack.c.l.b16 %v57
  %v553 = vunpack.c.h.b16 %v57
  %v554 = vunpack.c.l.b16 %v58
  %v555 = vunpack.c.h.b16 %v58
  %v556 = vunpack.c.l.b16 %v59
  %v557 = vunpack.c.h.b16 %v59
  %v558 = vunpack.c.l.b16 %v60
  %v559 = vunpack.c.h.b16 %v60
  %v560 = vunpack.c.l.b16 %v61
  %v561 = vunpack.c.h.b16 %v61
  %v562 = vunpack.c.l.b16 %v62
  %v563 = vunpack.c.h.b16 %v62
  %v564 = vunpack.c.l.b16 %v63
  %v565 = vunpack.c.h.b16 %v63
  %v566 = vunpack.c.l.b16 %v64
  %v567 = vunpack.c.h.b16 %v64
  %v568 = vunpack.c.l.b16 %v65
  %v569 = vunpack.c.h.b16 %v65
  %v570 = vunpack.c.l.b16 %v66
  %v571 = vunpack.c.h.b16 %v66
  %v572 = vunpack.c.l.b16 %v67
  %v573 = vunpack.c.h.b16 %v67
  %v574 = vunpack.c.l.b16 %v68
  %v575 = vunpack.c.h.b16 %v68
  %v576 = vunpack.c.l.b16 %v69
  %v577 = vunpack.c.h.b16 %v69
  %v578 = vunpack.c.l.b16 %v70
  %v579 = vunpack.c.h.b16 %v70
  %v580 = vunpack.c.l.b16 %v71
  %v581 = vunpack.c.h.b16 %v71
  %v582 = vunpack.c.l.b16 %v72
  %v583 = vunpack.c.h.b16 %v72
  %v584 = vunpack.c.l.b16 %v73
  %v585 = vunpack.c.h.b16 %v73
  %v586 = vunpack.c.l.b16 %v74
  %v587 = vunpack.c.h.b16 %v74
  %v588 = vunpack.c.l.b16 %v75
  %v589 = vunpack.c.h.b16 %v75
  %v590 = vunpack.c.l.b16 %v76
  %v591 = vunpack.c.h.b16 %v76
  %v592 = vunpack.c.l.b16 %v77
  %v593 = vunpack.c.h.b16 %v77
  %v594 = vunpack.c.l.b16 %v78
  %v595 = vunpack.c.h.b16 %v78
  %v596 = vunpack.c.l.b16 %v79
  %v597 = vunpack.c.h.b16 %v79
  %v598 = vunpack.c.l.b16 %v80
  %v599 = vunpack.c.h.b16 %v80
  %v600 = vunpack.c.l.b16 %v81
  %v601 = vunpack.c.h.b16 %v81
  %v602 = vunpack.c.l.b16 %v82
  %v603 = vunpack.c.h.b16 %v82
  %v604 = vunpack.c.l.b16 %v83
  %v605 = vunpack.c.h.b16 %v83
  %v606 = vunpack.c.l.b16 %v84
  %v607 = vunpack.c.h.b16 %v84
  %v608 = vunpack.c.l.b16 %v85
  %v609 = vunpack.c.h.b16 %v85
  %v610 = vunpack.c.l.b16 %v86
  %v611 = vunpack.c.h.b16 %v86
  %v612 = vunpack.c.l.b16 %v87
  %v613 = vunpack.c.h.b16 %v87
  %v614 = vunpack.c.l.b16 %v88
  %v615 = vunpack.c.h.b16 %v88
  %v616 = vunpack.c.l.b16 %v89
  %v617 = vunpack.c.h.b16 %v89
  %v618 = vunpack.c.l.b16 %v90
  %v619 = vunpack.c.h.b16 %v90
  %v620 = vunpack.c.l.b16 %v91
  %v621 = vunpack.c.h.b16 %v91
  %v622 = vunpack.c.l.b16 %v92
  %v623 = vunpack.c.h.b16 %v92
  %v624 = vunpack.c.l.b16 %v93
  %v625 = vunpack.c.h.b16 %v93
  %v626 = vunpack.c.l.b16 %v94
  %v627 = vunpack.c.h.b16 %v94
  %v628 = vunpack.c.l.b16 %v95
  %v629 = vunpack.c.h.b16 %v95
  %v630 = vunpack.c.l.b16 %v96
  %v631 = vunpack.c.h.b16 %v96
  %v632 = vunpack.c.l.b16 %v97
  %v633 = vunpack.c.h.b16 %v97
  %v634 = vunpack.c.l.b16 %v98
  %v635 = vunpack.c.h.b16 %v98
  %v636 = vunpack.c.l.b16 %v99
  %v637 = vunpack.c.h.b16 %v99
  %v638 = vunpack.c.l.b16 %v100
  %v639 = vunpack.c.h.b16 %v100
  %v640 = vunpack.c.l.b16 %v101
  %v641 = vunpack.c.h.b16 %v101
  %v642 = vunpack.c.l.b16 %v102
  %v643 = vunpack.c.h.b16 %v102
  %v644 = vunpack.c.l.b16 %v103
  %v645 = vunpack.c.h.b16 %v103
  %v646 = vunpack.c.l.b16 %v104
  %v647 = vunpack.c.h.b16 %v104
  %v648 = vunpack.c.l.b16 %v105
  %v649 = vunpack.c.h.b16 %v105
  %v650 = vunpack.c.l.b16 %v106
  %v651 = vunpack.c.h.b16 %v106
  %v652 = vunpack.c.l.b16 %v107
  %v653 = vunpack.c.h.b16 %v107
  %v654 = vunpack.c.l.b16 %v108
  %v655 = vunpack.c.h.b16 %v108
  %v656 = vunpack.c.l.b16 %v109
  %v657 = vunpack.c.h.b16 %v109
  %v658 = vunpack.c.l.b16 %v110
  %v659 = vunpack.c.h.b16 %v110
  %v660 = vunpack.c.l.b16 %v111
  %v661 = vunpack.c.h.b16 %v111
  %v662 = vunpack.c.l.b16 %v112
  %v663 = vunpack.c.h.b16 %v112
  %v664 = vunpack.c.l.b16 %v113
  %v665 = vunpack.c.h.b16 %v113
  %v666 = vunpack.c.l.b16 %v114
  %v667 = vunpack.c.h.b16 %v114
  %v668 = vunpack.c.l.b16 %v115
  %v669 = vunpack.c.h.b16 %v115
  %v670 = vunpack.c.l.b16 %v116
  %v671 = vunpack.c.h.b16 %v116
  %v672 = vunpack.c.l.b16 %v117
  %v673 = vunpack.c.h.b16 %v117
  %v674 = vunpack.c.l.b16 %v118
  %v675 = vunpack.c.h.b16 %v118
  %v676 = vunpack.c.l.b16 %v119
  %v677 = vunpack.c.h.b16 %v119
  %v678 = vunpack.c.l.b16 %v120
  %v679 = vunpack.c.h.b16 %v120
  %v680 = vunpack.c.l.b16 %v121
  %v681 = vunpack.c.h.b16 %v121
  %v682 = vunpack.c.l.b16 %v122
  %v683 = vunpack.c.h.b16 %v122
  %v684 = vunpack.c.l.b16 %v123
  %v685 = vunpack.c.h.b16 %v123
  %v686 = vunpack.c.l.b16 %v124
  %v687 = vunpack.c.h.b16 %v124
  %v688 = vunpack.c.l.b16 %v125
  %v689 = vunpack.c.h.b16 %v125
  %v690 = vunpack.c.l.b16 %v126
  %v691 = vunpack.c.h.b16 %v126
  %v692 = vunpack.c.l.b16 %v127
  %v693 = vunpack.c.h.b16 %v127
  %v694 = vunpack.c.l.b16 %v128
  %v695 = vunpack.c.h.b16 %v128
  %v696 = vunpack.c.l.b16 %v129
  %v697 = vunpack.c.h.b16 %v129
  %v698 = vunpack.c.l.b16 %v130
  %v699 = vunpack.c.h.b16 %v130
  %v700 = vunpack.c.l.b16 %v131
  %v701 = vunpack.c.h.b16 %v131
  %v702 = vunpack.c.l.b16 %v132
  %v703 = vunpack.c.h.b16 %v132
  %v704 = vunpack.c.l.b16 %v133
  %v705 = vunpack.c.h.b16 %v133
  %v706 = vunpack.c.l.b16 %v134
  %v707 = vunpack.c.h.b16 %v134
  %v708 = vunpack.c.l.b16 %v135
  %v709 = vunpack.c.h.b16 %v135
  %v710 = vunpack.c.l.b16 %v136
  %v711 = vunpack.c.h.b16 %v136
  %v712 = vunpack.c.l.b16 %v137
  %v713 = vunpack.c.h.b16 %v137
  %v714 = vunpack.c.l.b16 %v138
  %v715 = vunpack.c.h.b16 %v138
  %v716 = vunpack.c.l.b16 %v139
  %v717 = vunpack.c.h.b16 %v139
  %v718 = vunpack.c.l.b16 %v140
  %v719 = vunpack.c.h.b16 %v140
  %v720 = vunpack.c.l.b16 %v141
  %v721 = vunpack.c.h.b16 %v141
  %v722 = vunpack.c.l.b16 %v142
  %v723 = vunpack.c.h.b16 %v142
  %v724 = vunpack.c.l.b16 %v143
  %v725 = vunpack.c.h.b16 %v143
  %v726 = vunpack.c.l.b16 %v144
  %v727 = vunpack.c.h.b16 %v144
  %v728 = vunpack.c.l.b16 %v145
  %v729 = vunpack.c.h.b16 %v145
  %v730 = vunpack.c.l.b16 %v146
  %v731 = vunpack.c.h.b16 %v146
  %v732 = vunpack.c.l.b16 %v147
  %v733 = vunpack.c.h.b16 %v147
  %v734 = vunpack.c.l.b16 %v148
  %v735 = vunpack.c.h.b16 %v148
  %v736 = vunpack.c.l.b16 %v149
  %v737 = vunpack.c.h.b16 %v149
  %v738 = vunpack.c.l.b16 %v150
  %v739 = vunpack.c.h.b16 %v150
  %v740 = vunpack.c.l.b16 %v151
  %v741 = vunpack.c.h.b16 %v151
  %v742 = vunpack.c.l.b16 %v152
  %v743 = vunpack.c.h.b16 %v152
  %v744 = vunpack.c.l.b16 %v153
  %v745 = vunpack.c.h.b16 %v153
  %v746 = vunpack.c.l.b16 %v154
  %v747 = vunpack.c.h.b16 %v154
  %v748 = vunpack.c.l.b16 %v155
  %v749 = vunpack.c.h.b16 %v155
  %v750 = vunpack.c.l.b16 %v156
  %v751 = vunpack.c.h.b16 %v156
  %v752 = vunpack.c.l.b16 %v157
  %v753 = vunpack.c.h.b16 %v157
  %v754 = vunpack.c.l.b16 %v158
  %v755 = vunpack.c.h.b16 %v158
  %v756 = vunpack.c.l.b16 %v159
  %v757 = vunpack.c.h.b16 %v159
  %v758 = vunpack.c.l.b16 %v160
  %v759 = vunpack.c.h.b16 %v160
  %v760 = vunpack.c.l.b16 %v161
  %v761 = vunpack.c.h.b16 %v161
  %v762 = vunpack.c.l.b16 %v162
  %v763 = vunpack.c.h.b16 %v162
  %v764 = vunpack.c.l.b16 %v163
  %v765 = vunpack.c.h.b16 %v163
  %v766 = vunpack.c.l.b16 %v164
  %v767 = vunpack.c.h.b16 %v164
  %v768 = vunpack.c.l.b16 %v165
  %v769 = vunpack.c.h.b16 %v165
  %v770 = vunpack.c.l.b16 %v166
  %v771 = vunpack.c.h.b16 %v166
  %v772 = vunpack.c.l.b16 %v167
  %v773 = vunpack.c.h.b16 %v167
  %v774 = vunpack.c.l.b16 %v168
  %v775 = vunpack.c.h.b16 %v168
  %v776 = vunpack.c.l.b16 %v169
  %v777 = vunpack.c.h.b16 %v169
  %v778 = vunpack.c.l.b16 %v170
  %v779 = vunpack.c.h.b16 %v170
  %v780 = vunpack.c.l.b16 %v171
  %v781 = vunpack.c.h.b16 %v171
  %v782 = vunpack.c.l.b16 %v172
  %v783 = vunpack.c.h.b16 %v172
  %v784 = vunpack.c.l.b16 %v173
  %v785 = vunpack.c.h.b16 %v173
  %v786 = vunpack.c.l.b16 %v174
  %v787 = vunpack.c.h.b16 %v174
  %v788 = vunpack.c.l.b16 %v175
  %v789 = vunpack.c.h.b16 %v175
  %v790 = vunpack.c.l.b16 %v176
  %v791 = vunpack.c.h.b16 %v176
  %v792 = vunpack.c.l.b16 %v177
  %v793 = vunpack.c.h.b16 %v177
  %v794 = vunpack.c.l.b16 %v178
  %v795 = vunpack.c.h.b16 %v178
  %v796 = vunpack.c.l.b16 %v179
  %v797 = vunpack.c.h.b16 %v179
  %v798 = vunpack.c.l.b16 %v180
  %v799 = vunpack.c.h.b16 %v180
  %v800 = vunpack.c.l.b16 %v181
  %v801 = vunpack.c.h.b16 %v181
  %v802 = vunpack.c.l.b16 %v182
  %v803 = vunpack.c.h.b16 %v182
  %v804 = vunpack.c.l.b16 %v183
  %v805 = vunpack.c.h.b16 %v183
  %v806 = vunpack.c.l.b16 %v184
  %v807 = vunpack.c.h.b16 %v184
  %v808 = vunpack.c.l.b16 %v185
  %v809 = vunpack.c.h.b16 %v185
  %v810 = vunpack.c.l.b16 %v186
  %v811 = vunpack.c.h.b16 %v186
  %v812 = vunpack.c.l.b16 %v187
  %v813 = vunpack.c.h.b16 %v187
  %v814 = vunpack.c.l.b16 %v188
  %v815 = vunpack.c.h.b16 %v188
  %v816 = vunpack.c.l.b16 %v189
  %v817 = vunpack.c.h.b16 %v189
  %v818 = vunpack.c.l.b16 %v190
  %v819 = vunpack.c.h.b16 %v190
  %v820 = vunpack.c.l.b16 %v191
  %v821 = vunpack.c.h.b16 %v191
  %v822 = vunpack.c.l.b16 %v192
  %v823 = vunpack.c.h.b16 %v192
  %v824 = vunpack.c.l.b16 %v193
  %v825 = vunpack.c.h.b16 %v193
  %v826 = vunpack.c.l.b16 %v194
  %v827 = vunpack.c.h.b16 %v194
  %v828 = vunpack.c.l.b16 %v195
  %v829 = vunpack.c.h.b16 %v195
  %v830 = vunpack.c.l.b16 %v196
  %v831 = vunpack.c.h.b16 %v196
  %v832 = vunpack.c.l.b16 %v197
  %v833 = vunpack.c.h.b16 %v197
  %v834 = vunpack.c.l.b16 %v198
  %v835 = vunpack.c.h.b16 %v198
  %v836 = vunpack.c.l.b16 %v199
  %v837 = vunpack.c.h.b16 %v199
  %v838 = vunpack.c.l.b16 %v200
  %v839 = vunpack.c.h.b16 %v200
  %v840 = vunpack.c.l.b16 %v201
  %v841 = vunpack.c.h.b16 %v201
  %v842 = vunpack.c.l.b16 %v202
  %v843 = vunpack.c.h.b16 %v202
  %v844 = vunpack.c.l.b16 %v203
  %v845 = vunpack.c.h.b16 %v203
  %v846 = vunpack.c.l.b16 %v204
  %v847 = vunpack.c.h.b16 %v204
  %v848 = vunpack.c.l.b16 %v205
  %v849 = vunpack.c.h.b16 %v205
  %v850 = vunpack.c.l.b16 %v206
  %v851 = vunpack.c.h.b16 %v206
  %v852 = vunpack.c.l.b16 %v207
  %v853 = vunpack.c.h.b16 %v207
  %v854 = vunpack.c.l.b16 %v208
  %v855 = vunpack.c.h.b16 %v208
  %v856 = vunpack.c.l.b16 %v209
  %v857 = vunpack.c.h.b16 %v209
  %v858 = vunpack.c.l.b16 %v210
  %v859 = vunpack.c.h.b16 %v210
  %v860 = vunpack.c.l.b16 %v211
  %v861 = vunpack.c.h.b16 %v211
  %v862 = vunpack.c.l.b16 %v212
  %v863 = vunpack.c.h.b16 %v212
  %v864 = vunpack.c.l.b16 %v213
  %v865 = vunpack.c.h.b16 %v213
  %v866 = vunpack.c.l.b16 %v214
  %v867 = vunpack.c.h.b16 %v214
  %v868 = vunpack.c.l.b16 %v215
  %v869 = vunpack.c.h.b16 %v215
  %v870 = vunpack.c.l.b16 %v216
  %v871 = vunpack.c.h.b16 %v216
  %v872 = vunpack.c.l.b16 %v217
  %v873 = vunpack.c.h.b16 %v217
  %v874 = vunpack.c.l.b16 %v218
  %v875 = vunpack.c.h.b16 %v218
  %v876 = vunpack.c.l.b16 %v219
  %v877 = vunpack.c.h.b16 %v219
  %v878 = vunpack.c.l.b16 %v220
  %v879 = vunpack.c.h.b16 %v220
  %v880 = vunpack.c.l.b16 %v221
  %v881 = vunpack.c.h.b16 %v221
  %v882 = vunpack.c.l.b16 %v222
  %v883 = vunpack.c.h.b16 %v222
  %v884 = vunpack.c.l.b16 %v223
  %v885 = vunpack.c.h.b16 %v223
  %v886 = vunpack.c.l.b16 %v224
  %v887 = vunpack.c.h.b16 %v224
  %v888 = vunpack.c.l.b16 %v225
  %v889 = vunpack.c.h.b16 %v225
  %v890 = vpack.c.b16 %v500, %v490
  %v891 = vpack.c.b16 %v501, %v491
  %v892 = vpack.c.b16 %v502, %v492
  %v893 = vpack.c.b16 %v503, %v493
  %v894 = vpack.c.b16 %v504, %v494
  %v895 = vpack.c.b16 %v505, %v495
  %v896 = vpack.c.b16 %v506, %v496
  %v897 = vpack.c.b16 %v507, %v497
  %v898 = vpack.c.b16 %v508, %v498
  %v899 = vpack.c.b16 %v509, %v499
  %v900 = vpack.c.b16 %v520, %v510
  %v901 = vpack.c.b16 %v521, %v511
  %v902 = vpack.c.b16 %v522, %v512
  %v903 = vpack.c.b16 %v523, %v513
  %v904 = vpack.c.b16 %v524, %v514
  %v905 = vpack.c.b16 %v525, %v515
  %v906 = vpack.c.b16 %v526, %v516
  %v907 = vpack.c.b16 %v527, %v517
  %v908 = vpack.c.b16 %v528, %v518
  %v909 = vpack.c.b16 %v529, %v519
  %v910 = vpack.c.b16 %v540, %v530
  %v911 = vpack.c.b16 %v541, %v531
  %v912 = vpack.c.b16 %v542, %v532
  %v913 = vpack.c.b16 %v543, %v533
  %v914 = vpack.c.b16 %v544, %v534
  %v915 = vpack.c.b16 %v545, %v535
  %v916 = vpack.c.b16 %v546, %v536
  %v917 = vpack.c.b16 %v547, %v537
  %v918 = vpack.c.b16 %v548, %v538
  %v919 = vpack.c.b16 %v549, %v539
  %v920 = vpack.c.b16 %v560, %v550
  %v921 = vpack.c.b16 %v561, %v551
  %v922 = vpack.c.b16 %v562, %v552
  %v923 = vpack.c.b16 %v563, %v553
  %v924 = vpack.c.b16 %v564, %v554
  %v925 = vpack.c.b16 %v565, %v555
  %v926 = vpack.c.b16 %v566, %v556
  %v927 = vpack.c.b16 %v567, %v557
  %v928 = vpack.c.b16 %v568, %v558
  %v929 = vpack.c.b16 %v569, %v559
  %v930 = vpack.c.b16 %v580, %v570
  %v931 = vpack.c.b16 %v581, %v571
  %v932 = vpack.c.b16 %v582, %v572
  %v933 = vpack.c.b16 %v583, %v573
  %v934 = vpack.c.b16 %v584, %v574
  %v935 = vpack.c.b16 %v585, %v575
  %v936 = vpack.c.b16 %v586, %v576
  %v937 = vpack.c.b16 %v587, %v577
  %v938 = vpack.c.b16 %v588, %v578
  %v939 = vpack.c.b16 %v589, %v579
  %v940 = vpack.c.b16 %v600, %v590
  %v941 = vpack.c.b16 %v601, %v591
  %v942 = vpack.c.b16 %v602, %v592
  %v943 = vpack.c.b16 %v603, %v593
  %v944 = vpack.c.b16 %v604, %v594
  %v945 = vpack.c.b16 %v605, %v595
  %v946 = vpack.c.b16 %v606, %v596
  %v947 = vpack.c.b16 %v607, %v597
  %v948 = vpack.c.b16 %v608, %v598
  %v949 = vpack.c.b16 %v609, %v599
  %v950 = vpack.c.b16 %v620, %v610
  %v951 = vpack.c.b16 %v621, %v611
  %v952 = vpack.c.b16 %v622, %v612
  %v953 = vpack.c.b16 %v623, %v613
  %v954 = vpack.c.b16 %v624, %v614
  %v955 = vpack.c.b16 %v625, %v615
  %v956 = vpack.c.b16 %v626, %v616
  %v957 = vpack.c.b16 %v627, %v617
  %v958 = vpack.c.b16 %v628, %v618
  %v959 = vpack.c.b16 %v629, %v619
  %v960 = vpack.c.b16 %v640, %v630
  %v961 = vpack.c.b16 %v641, %v631
  %v962 = vpack.c.b16 %v642, %v632
  %v963 = vpack.c.b16 %v643, %v633
  %v964 = vpack.c.b16 %v644, %v634
  %v965 = vpack.c.b16 %v645, %v635
  %v966 = vpack.c.b16 %v646, %v636
  %v967 = vpack.c.b16 %v647, %v637
  %v968 = vpack.c.b16 %v648, %v638
  %v969 = vpack.c.b16 %v649, %v639
  %v970 = vpack.c.b16 %v660, %v650
  %v971 = vpack.c.b16 %v661, %v651
  %v972 = vpack.c.b16 %v662, %v652
  %v973 = vpack.c.b16 %v663, %v653
  %v974 = vpack.c.b16 %v664, %v654
  %v975 = vpack.c.b16 %v665, %v655
  %v976 = vpack.c.b16 %v666, %v656
  %v977 = vpack.c.b16 %v667, %v657
  %v978 = vpack.c.b16 %v668, %v658
  %v979 = vpack.c.b16 %v669, %v659
  %v980 = vpack.c.b16 %v680, %v670
  %v981 = vpack.c.b16 %v681, %v671
  %v982 = vpack.c.b16 %v682, %v672
  %v983 = vpack.c.b16 %v683, %v673
  %v984 = vpack.c.b16 %v684, %v674
  %v985 = vpack.c.b16 %v685, %v675
  %v986 = vpack.c.b16 %v686, %v676
  %v987 = vpack.c.b16 %v687, %v677
  %v988 = vpack.c.b16 %v688, %v678
  %v989 = vpack.c.b16 %v689, %v679
  %v990 = vpack.c.b16 %v700, %v690
  %v991 = vpack.c.b16 %v701, %v691
  %v992 = vpack.c.b16 %v702, %v692
  %v993 = vpack.c.b16 %v703, %v693
  %v994 = vpack.c.b16 %v704, %v694
  %v995 = vpack.c.b16 %v705, %v695
  %v996 = vpack.c.b16 %v706, %v696
  %v997 = vpack.c.b16 %v707, %v697
  %v998 = vpack.c.b16 %v708, %v698
  %v999 = vpack.c.b16 %v709, %v699
  %v1000 = vpack.c.b16 %v720, %v710
  %v1001 = vpack.c.b16 %v721, %v711
  %v1002 = vpack.c.b16 %v722, %v712
  %v1003 = vpack.c.b16 %v723, %v713
  %v1004 = vpack.c.b16 %v724, %v714
  %v1005 = vpack.c.b16 %v725, %v715
  %v1006 = vpack.c.b16 %v726, %v716
  %v1007 = vpack.c.b16 %v727, %v717
  %v1008 = vpack.c.b16 %v728, %v718
  %v1009 = vpack.c.b16 %v729, %v719
  %v1010 = vpack.c.b16 %v740, %v730
  %v1011 = vpack.c.b16 %v741, %v731
  %v1012 = vpack.c.b16 %v742, %v732
  %v1013 = vpack.c.b16 %v743, %v733
  %v1014 = vpack.c.b16 %v744, %v734
  %v1015 = vpack.c.b16 %v745, %v735
  %v1016 = vpack.c.b16 %v746, %v736
  %v1017 = vpack.c.b16 %v747, %v737
  %v1018 = vpack.c.b16 %v748, %v738
  %v1019 = vpack.c.b16 %v749, %v739
  %v1020 = vpack.c.b16 %v760, %v750
  %v1021 = vpack.c.b16 %v761, %v751
  %v1022 = vpack.c.b16 %v762, %v752
  %v1023 = vpack.c.b16 %v763, %v753
  %v1024 = vpack.c.b16 %v764, %v754
  %v1025 = vpack.c.b16 %v765, %v755
  %v1026 = vpack.c.b16 %v766, %v756
  %v1027 = vpack.c.b16 %v767, %v757
  %v1028 = vpack.c.b16 %v768, %v758
  %v1029 = vpack.c.b16 %v769, %v759
  %v1030 = vpack.c.b16 %v780, %v770
  %v1031 = vpack.c.b16 %v781, %v771
  %v1032 = vpack.c.b16 %v782, %v772
  %v1033 = vpack.c.b16 %v783, %v773
  %v1034 = vpack.c.b16 %v784, %v774
  %v1035 = vpack.c.b16 %v785, %v775
  %v1036 = vpack.c.b16 %v786, %v776
  %v1037 = vpack.c.b16 %v787, %v777
  %v1038 = vpack.c.b16 %v788, %v778
  %v1039 = vpack.c.b16 %v789, %v779
  %v1040 = vpack.c.b16 %v800, %v790
  %v1041 = vpack.c.b16 %v801, %v791
  %v1042 = vpack.c.b16 %v802, %v792
  %v1043 = vpack.c.b16 %v803, %v793
  %v1044 = vpack.c.b16 %v804, %v794
  %v1045 = vpack.c.b16 %v805, %v795
  %v1046 = vpack.c.b16 %v806, %v796
  %v1047 = vpack.c.b16 %v807, %v797
  %v1048 = vpack.c.b16 %v808, %v798
  %v1049 = vpack.c.b16 %v809, %v799
  %v1050 = vpack.c.b16 %v820, %v810
  %v1051 = vpack.c.b16 %v821, %v811
  %v1052 = vpack.c.b16 %v822, %v812
  %v1053 = vpack.c.b16 %v823, %v813
  %v1054 = vpack.c.b16 %v824, %v814
  %v1055 = vpack.c.b16 %v825, %v815
  %v1056 = vpack.c.b16 %v826, %v816
  %v1057 = vpack.c.b16 %v827, %v817
  %v1058 = vpack.c.b16 %v828, %v818
  %v1059 = vpack.c.b16 %v829, %v819
  %v1060 = vpack.c.b16 %v840, %v830
  %v1061 = vpack.c.b16 %v841, %v831
  %v1062 = vpack.c.b16 %v842, %v832
  %v1063 = vpack.c.b16 %v843, %v833
  %v1064 = vpack.c.b16 %v844, %v834
  %v1065 = vpack.c.b16 %v845, %v835
  %v1066 = vpack.c.b16 %v846, %v836
  %v1067 = vpack.c.b16 %v847, %v837
  %v1068 = vpack.c.b16 %v848, %v838
  %v1069 = vpack.c.b16 %v849, %v839
  %v1070 = vpack.c.b16 %v860, %v850
  %v1071 = vpack.c.b16 %v861, %v851
  %v1072 = vpack.c.b16 %v862, %v852
  %v1073 = vpack.c.b16 %v863, %v853
  %v1074 = vpack.c.b16 %v864, %v854
  %v1075 = vpack.c.b16 %v865, %v855
  %v1076 = vpack.c.b16 %v866, %v856
  %v1077 = vpack.c.b16 %v867, %v857
  %v1078 = vpack.c.b16 %v868, %v858
  %v1079 = vpack.c.b16 %v869, %v859
  %v1080 = vpack.c.b16 %v880, %v870
  %v1081 = vpack.c.b16 %v881, %v871
  %v1082 = vpack.c.b16 %v882, %v872
  %v1083 = vpack.c.b16 %v883, %v873
  %v1084 = vpack.c.b16 %v884, %v874
  %v1085 = vpack.c.b16 %v885, %v875
  %v1086 = vpack.c.b16 %v886, %v876
  %v1087 = vpack.c.b16 %v887, %v877
  %v1088 = vpack.c.b16 %v888, %v878
  %v1089 = vpack.c.b16 %v889, %v879
  %vm1290 = vcmask 523264
  %v1292 = vsel %vm1290, %v287, 0
  %1294 = vmatprep.subr.bf16.mxu0 %v891
  %1295 = vmatpush1.bf16.msra.mxu0 %v890
  %1296 = vmatprep.subr.bf16.mxu0 %v901
  %1297 = vmatpush1.bf16.msra.mxu0 %v900
  %1298 = vmatprep.subr.bf16.mxu0 %v911
  %1299 = vmatpush1.bf16.msra.mxu0 %v910
  %1300 = vmatprep.subr.bf16.mxu0 %v921
  %1301 = vmatpush1.bf16.msra.mxu0 %v920
  %1302 = vmatprep.subr.bf16.mxu0 %v931
  %1303 = vmatpush1.bf16.msra.mxu0 %v930
  %1304 = vmatprep.subr.bf16.mxu0 %v941
  %1305 = vmatpush1.bf16.msra.mxu0 %v940
  %1306 = vmatprep.subr.bf16.mxu0 %v951
  %1307 = vmatpush1.bf16.msra.mxu0 %v950
  %1308 = vmatprep.subr.bf16.mxu0 %v961
  %1309 = vmatpush1.bf16.msra.mxu0 %v960
  %1310 = vmatprep.subr.bf16.mxu0 %v971
  %1311 = vmatpush1.bf16.msra.mxu0 %v970
  %1312 = vmatprep.subr.bf16.mxu0 %v981
  %1313 = vmatpush1.bf16.msra.mxu0 %v980
  %1314 = vmatprep.subr.bf16.mxu0 %v991
  %1315 = vmatpush1.bf16.msra.mxu0 %v990
  %1316 = vmatprep.subr.bf16.mxu0 %v1001
  %1317 = vmatpush1.bf16.msra.mxu0 %v1000
  %1318 = vmatprep.subr.bf16.mxu0 %v1011
  %1319 = vmatpush1.bf16.msra.mxu0 %v1010
  %1320 = vmatprep.subr.bf16.mxu0 %v1021
  %1321 = vmatpush1.bf16.msra.mxu0 %v1020
  %1322 = vmatprep.subr.bf16.mxu0 %v1031
  %1323 = vmatpush1.bf16.msra.mxu0 %v1030
  %1324 = vmatprep.subr.bf16.mxu0 %v1041
  %1325 = vmatpush1.bf16.msra.mxu0 %v1040
  %1326 = vmatprep.mubr.bf16.mxu0 %v286
  %1327 = vmatmul.mubr.bf16.gmra.mrb[0].mxu0 %v285
  %v1328 = vpop.f32.mrb[0].mxu0
  %v1329 = vadd.f32 %v233, %v1328
  %v1330 = vpop.f32.mrb[0].mxu0
  %v1331 = vadd.f32 %v237, %v1330
  %v1332 = vpop.f32.mrb[0].mxu0
  %v1333 = vpop.f32.mrb[0].mxu0
  %1334 = vdwg.mxu0
  %1335 = vmatprep.subr.bf16.mxu0 %v1051
  %1336 = vmatpush1.bf16.msra.mxu0 %v1050
  %1337 = vmatprep.subr.bf16.mxu0 %v1061
  %1338 = vmatpush1.bf16.msra.mxu0 %v1060
  %1339 = vmatprep.subr.bf16.mxu0 %v1071
  %1340 = vmatpush1.bf16.msra.mxu0 %v1070
  %1341 = vmatprep.subr.bf16.mxu0 %v1081
  %1342 = vmatpush1.bf16.msra.mxu0 %v1080
  %1343 = vmatprep.subr.bf16.mxu0 0
  %1344 = vmatpush1.bf16.msra.mxu0 0
  %1345 = vmatprep.subr.bf16.mxu0 0
  %1346 = vmatpush1.bf16.msra.mxu0 0
  %1347 = vmatprep.subr.bf16.mxu0 0
  %1348 = vmatpush1.bf16.msra.mxu0 0
  %1349 = vmatprep.subr.bf16.mxu0 0
  %1350 = vmatpush1.bf16.msra.mxu0 0
  %1351 = vmatprep.subr.bf16.mxu0 0
  %1352 = vmatpush1.bf16.msra.mxu0 0
  %1353 = vmatprep.subr.bf16.mxu0 0
  %1354 = vmatpush1.bf16.msra.mxu0 0
  %1355 = vmatprep.subr.bf16.mxu0 0
  %1356 = vmatpush1.bf16.msra.mxu0 0
  %1357 = vmatprep.subr.bf16.mxu0 0
  %1358 = vmatpush1.bf16.msra.mxu0 0
  %1359 = vmatprep.subr.bf16.mxu0 0
  %1360 = vmatpush1.bf16.msra.mxu0 0
  %1361 = vmatprep.subr.bf16.mxu0 0
  %1362 = vmatpush1.bf16.msra.mxu0 0
  %1363 = vmatprep.subr.bf16.mxu0 0
  %1364 = vmatpush1.bf16.msra.mxu0 0
  %1365 = vmatprep.subr.bf16.mxu0 0
  %1366 = vmatpush1.bf16.msra.mxu0 0
  %1367 = vmatprep.mubr.bf16.mxu0 0
  %1368 = vmatmul.mubr.bf16.gmra.mrb[0].mxu0 %v1292
  %v1369 = vpop.f32.mrb[0].mxu0
  %v1370 = vadd.f32 %v1329, %v1369
  %v1371 = vpop.f32.mrb[0].mxu0
  %v1372 = vadd.f32 %v1331, %v1371
  %v1373 = vpop.f32.mrb[0].mxu0
  %v1374 = vpop.f32.mrb[0].mxu0
  %1375 = vdwg.mxu0
  %1376 = vmatprep.subr.bf16.mxu0 %v893
  %1377 = vmatpush1.bf16.msra.mxu0 %v892
  %1378 = vmatprep.subr.bf16.mxu0 %v903
  %1379 = vmatpush1.bf16.msra.mxu0 %v902
  %1380 = vmatprep.subr.bf16.mxu0 %v913
  %1381 = vmatpush1.bf16.msra.mxu0 %v912
  %1382 = vmatprep.subr.bf16.mxu0 %v923
  %1383 = vmatpush1.bf16.msra.mxu0 %v922
  %1384 = vmatprep.subr.bf16.mxu0 %v933
  %1385 = vmatpush1.bf16.msra.mxu0 %v932
  %1386 = vmatprep.subr.bf16.mxu0 %v943
  %1387 = vmatpush1.bf16.msra.mxu0 %v942
  %1388 = vmatprep.subr.bf16.mxu0 %v953
  %1389 = vmatpush1.bf16.msra.mxu0 %v952
  %1390 = vmatprep.subr.bf16.mxu0 %v963
  %1391 = vmatpush1.bf16.msra.mxu0 %v962
  %1392 = vmatprep.subr.bf16.mxu0 %v973
  %1393 = vmatpush1.bf16.msra.mxu0 %v972
  %1394 = vmatprep.subr.bf16.mxu0 %v983
  %1395 = vmatpush1.bf16.msra.mxu0 %v982
  %1396 = vmatprep.subr.bf16.mxu0 %v993
  %1397 = vmatpush1.bf16.msra.mxu0 %v992
  %1398 = vmatprep.subr.bf16.mxu0 %v1003
  %1399 = vmatpush1.bf16.msra.mxu0 %v1002
  %1400 = vmatprep.subr.bf16.mxu0 %v1013
  %1401 = vmatpush1.bf16.msra.mxu0 %v1012
  %1402 = vmatprep.subr.bf16.mxu0 %v1023
  %1403 = vmatpush1.bf16.msra.mxu0 %v1022
  %1404 = vmatprep.subr.bf16.mxu0 %v1033
  %1405 = vmatpush1.bf16.msra.mxu0 %v1032
  %1406 = vmatprep.subr.bf16.mxu0 %v1043
  %1407 = vmatpush1.bf16.msra.mxu0 %v1042
  %1408 = vmatprep.mubr.bf16.mxu0 %v286
  %1409 = vmatmul.mubr.bf16.gmra.mrb[0].mxu0 %v285
  %v1410 = vpop.f32.mrb[0].mxu0
  %v1411 = vadd.f32 %v241, %v1410
  %v1412 = vpop.f32.mrb[0].mxu0
  %v1413 = vadd.f32 %v245, %v1412
  %v1414 = vpop.f32.mrb[0].mxu0
  %v1415 = vpop.f32.mrb[0].mxu0
  %1416 = vdwg.mxu0
  %1417 = vmatprep.subr.bf16.mxu0 %v1053
  %1418 = vmatpush1.bf16.msra.mxu0 %v1052
  %1419 = vmatprep.subr.bf16.mxu0 %v1063
  %1420 = vmatpush1.bf16.msra.mxu0 %v1062
  %1421 = vmatprep.subr.bf16.mxu0 %v1073
  %1422 = vmatpush1.bf16.msra.mxu0 %v1072
  %1423 = vmatprep.subr.bf16.mxu0 %v1083
  %1424 = vmatpush1.bf16.msra.mxu0 %v1082
  %1425 = vmatprep.subr.bf16.mxu0 0
  %1426 = vmatpush1.bf16.msra.mxu0 0
  %1427 = vmatprep.subr.bf16.mxu0 0
  %1428 = vmatpush1.bf16.msra.mxu0 0
  %1429 = vmatprep.subr.bf16.mxu0 0
  %1430 = vmatpush1.bf16.msra.mxu0 0
  %1431 = vmatprep.subr.bf16.mxu0 0
  %1432 = vmatpush1.bf16.msra.mxu0 0
  %1433 = vmatprep.subr.bf16.mxu0 0
  %1434 = vmatpush1.bf16.msra.mxu0 0
  %1435 = vmatprep.subr.bf16.mxu0 0
  %1436 = vmatpush1.bf16.msra.mxu0 0
  %1437 = vmatprep.subr.bf16.mxu0 0
  %1438 = vmatpush1.bf16.msra.mxu0 0
  %1439 = vmatprep.subr.bf16.mxu0 0
  %1440 = vmatpush1.bf16.msra.mxu0 0
  %1441 = vmatprep.subr.bf16.mxu0 0
  %1442 = vmatpush1.bf16.msra.mxu0 0
  %1443 = vmatprep.subr.bf16.mxu0 0
  %1444 = vmatpush1.bf16.msra.mxu0 0
  %1445 = vmatprep.subr.bf16.mxu0 0
  %1446 = vmatpush1.bf16.msra.mxu0 0
  %1447 = vmatprep.subr.bf16.mxu0 0
  %1448 = vmatpush1.bf16.msra.mxu0 0
  %1449 = vmatprep.mubr.bf16.mxu0 0
  %1450 = vmatmul.mubr.bf16.gmra.mrb[0].mxu0 %v1292
  %v1451 = vpop.f32.mrb[0].mxu0
  %v1452 = vadd.f32 %v1411, %v1451
  %v1453 = vpop.f32.mrb[0].mxu0
  %v1454 = vadd.f32 %v1413, %v1453
  %v1455 = vpop.f32.mrb[0].mxu0
  %v1456 = vpop.f32.mrb[0].mxu0
  %1457 = vdwg.mxu0
  %1458 = vmatprep.subr.bf16.mxu0 %v895
  %1459 = vmatpush1.bf16.msra.mxu0 %v894
  %1460 = vmatprep.subr.bf16.mxu0 %v905
  %1461 = vmatpush1.bf16.msra.mxu0 %v904
  %1462 = vmatprep.subr.bf16.mxu0 %v915
  %1463 = vmatpush1.bf16.msra.mxu0 %v914
  %1464 = vmatprep.subr.bf16.mxu0 %v925
  %1465 = vmatpush1.bf16.msra.mxu0 %v924
  %1466 = vmatprep.subr.bf16.mxu0 %v935
  %1467 = vmatpush1.bf16.msra.mxu0 %v934
  %1468 = vmatprep.subr.bf16.mxu0 %v945
  %1469 = vmatpush1.bf16.msra.mxu0 %v944
  %1470 = vmatprep.subr.bf16.mxu0 %v955
  %1471 = vmatpush1.bf16.msra.mxu0 %v954
  %1472 = vmatprep.subr.bf16.mxu0 %v965
  %1473 = vmatpush1.bf16.msra.mxu0 %v964
  %1474 = vmatprep.subr.bf16.mxu0 %v975
  %1475 = vmatpush1.bf16.msra.mxu0 %v974
  %1476 = vmatprep.subr.bf16.mxu0 %v985
  %1477 = vmatpush1.bf16.msra.mxu0 %v984
  %1478 = vmatprep.subr.bf16.mxu0 %v995
  %1479 = vmatpush1.bf16.msra.mxu0 %v994
  %1480 = vmatprep.subr.bf16.mxu0 %v1005
  %1481 = vmatpush1.bf16.msra.mxu0 %v1004
  %1482 = vmatprep.subr.bf16.mxu0 %v1015
  %1483 = vmatpush1.bf16.msra.mxu0 %v1014
  %1484 = vmatprep.subr.bf16.mxu0 %v1025
  %1485 = vmatpush1.bf16.msra.mxu0 %v1024
  %1486 = vmatprep.subr.bf16.mxu0 %v1035
  %1487 = vmatpush1.bf16.msra.mxu0 %v1034
  %1488 = vmatprep.subr.bf16.mxu0 %v1045
  %1489 = vmatpush1.bf16.msra.mxu0 %v1044
  %1490 = vmatprep.mubr.bf16.mxu0 %v286
  %1491 = vmatmul.mubr.bf16.gmra.mrb[0].mxu0 %v285
  %v1492 = vpop.f32.mrb[0].mxu0
  %v1493 = vadd.f32 %v249, %v1492
  %v1494 = vpop.f32.mrb[0].mxu0
  %v1495 = vadd.f32 %v253, %v1494
  %v1496 = vpop.f32.mrb[0].mxu0
  %v1497 = vpop.f32.mrb[0].mxu0
  %1498 = vdwg.mxu0
  %1499 = vmatprep.subr.bf16.mxu0 %v1055
  %1500 = vmatpush1.bf16.msra.mxu0 %v1054
  %1501 = vmatprep.subr.bf16.mxu0 %v1065
  %1502 = vmatpush1.bf16.msra.mxu0 %v1064
  %1503 = vmatprep.subr.bf16.mxu0 %v1075
  %1504 = vmatpush1.bf16.msra.mxu0 %v1074
  %1505 = vmatprep.subr.bf16.mxu0 %v1085
  %1506 = vmatpush1.bf16.msra.mxu0 %v1084
  %1507 = vmatprep.subr.bf16.mxu0 0
  %1508 = vmatpush1.bf16.msra.mxu0 0
  %1509 = vmatprep.subr.bf16.mxu0 0
  %1510 = vmatpush1.bf16.msra.mxu0 0
  %1511 = vmatprep.subr.bf16.mxu0 0
  %1512 = vmatpush1.bf16.msra.mxu0 0
  %1513 = vmatprep.subr.bf16.mxu0 0
  %1514 = vmatpush1.bf16.msra.mxu0 0
  %1515 = vmatprep.subr.bf16.mxu0 0
  %1516 = vmatpush1.bf16.msra.mxu0 0
  %1517 = vmatprep.subr.bf16.mxu0 0
  %1518 = vmatpush1.bf16.msra.mxu0 0
  %1519 = vmatprep.subr.bf16.mxu0 0
  %1520 = vmatpush1.bf16.msra.mxu0 0
  %1521 = vmatprep.subr.bf16.mxu0 0
  %1522 = vmatpush1.bf16.msra.mxu0 0
  %1523 = vmatprep.subr.bf16.mxu0 0
  %1524 = vmatpush1.bf16.msra.mxu0 0
  %1525 = vmatprep.subr.bf16.mxu0 0
  %1526 = vmatpush1.bf16.msra.mxu0 0
  %1527 = vmatprep.subr.bf16.mxu0 0
  %1528 = vmatpush1.bf16.msra.mxu0 0
  %1529 = vmatprep.subr.bf16.mxu0 0
  %1530 = vmatpush1.bf16.msra.mxu0 0
  %1531 = vmatprep.mubr.bf16.mxu0 0
  %1532 = vmatmul.mubr.bf16.gmra.mrb[0].mxu0 %v1292
  %v1533 = vpop.f32.mrb[0].mxu0
  %v1534 = vadd.f32 %v1493, %v1533
  %v1535 = vpop.f32.mrb[0].mxu0
  %v1536 = vadd.f32 %v1495, %v1535
  %v1537 = vpop.f32.mrb[0].mxu0
  %v1538 = vpop.f32.mrb[0].mxu0
  %1539 = vdwg.mxu0
  %1540 = vmatprep.subr.bf16.mxu0 %v897
  %1541 = vmatpush1.bf16.msra.mxu0 %v896
  %1542 = vmatprep.subr.bf16.mxu0 %v907
  %1543 = vmatpush1.bf16.msra.mxu0 %v906
  %1544 = vmatprep.subr.bf16.mxu0 %v917
  %1545 = vmatpush1.bf16.msra.mxu0 %v916
  %1546 = vmatprep.subr.bf16.mxu0 %v927
  %1547 = vmatpush1.bf16.msra.mxu0 %v926
  %1548 = vmatprep.subr.bf16.mxu0 %v937
  %1549 = vmatpush1.bf16.msra.mxu0 %v936
  %1550 = vmatprep.subr.bf16.mxu0 %v947
  %1551 = vmatpush1.bf16.msra.mxu0 %v946
  %1552 = vmatprep.subr.bf16.mxu0 %v957
  %1553 = vmatpush1.bf16.msra.mxu0 %v956
  %1554 = vmatprep.subr.bf16.mxu0 %v967
  %1555 = vmatpush1.bf16.msra.mxu0 %v966
  %1556 = vmatprep.subr.bf16.mxu0 %v977
  %1557 = vmatpush1.bf16.msra.mxu0 %v976
  %1558 = vmatprep.subr.bf16.mxu0 %v987
  %1559 = vmatpush1.bf16.msra.mxu0 %v986
  %1560 = vmatprep.subr.bf16.mxu0 %v997
  %1561 = vmatpush1.bf16.msra.mxu0 %v996
  %1562 = vmatprep.subr.bf16.mxu0 %v1007
  %1563 = vmatpush1.bf16.msra.mxu0 %v1006
  %1564 = vmatprep.subr.bf16.mxu0 %v1017
  %1565 = vmatpush1.bf16.msra.mxu0 %v1016
  %1566 = vmatprep.subr.bf16.mxu0 %v1027
  %1567 = vmatpush1.bf16.msra.mxu0 %v1026
  %1568 = vmatprep.subr.bf16.mxu0 %v1037
  %1569 = vmatpush1.bf16.msra.mxu0 %v1036
  %1570 = vmatprep.subr.bf16.mxu0 %v1047
  %1571 = vmatpush1.bf16.msra.mxu0 %v1046
  %1572 = vmatprep.mubr.bf16.mxu0 %v286
  %1573 = vmatmul.mubr.bf16.gmra.mrb[0].mxu0 %v285
  %v1574 = vpop.f32.mrb[0].mxu0
  %v1575 = vadd.f32 %v257, %v1574
  %v1576 = vpop.f32.mrb[0].mxu0
  %v1577 = vadd.f32 %v261, %v1576
  %v1578 = vpop.f32.mrb[0].mxu0
  %v1579 = vpop.f32.mrb[0].mxu0
  %1580 = vdwg.mxu0
  %1581 = vmatprep.subr.bf16.mxu0 %v1057
  %1582 = vmatpush1.bf16.msra.mxu0 %v1056
  %1583 = vmatprep.subr.bf16.mxu0 %v1067
  %1584 = vmatpush1.bf16.msra.mxu0 %v1066
  %1585 = vmatprep.subr.bf16.mxu0 %v1077
  %1586 = vmatpush1.bf16.msra.mxu0 %v1076
  %1587 = vmatprep.subr.bf16.mxu0 %v1087
  %1588 = vmatpush1.bf16.msra.mxu0 %v1086
  %1589 = vmatprep.subr.bf16.mxu0 0
  %1590 = vmatpush1.bf16.msra.mxu0 0
  %1591 = vmatprep.subr.bf16.mxu0 0
  %1592 = vmatpush1.bf16.msra.mxu0 0
  %1593 = vmatprep.subr.bf16.mxu0 0
  %1594 = vmatpush1.bf16.msra.mxu0 0
  %1595 = vmatprep.subr.bf16.mxu0 0
  %1596 = vmatpush1.bf16.msra.mxu0 0
  %1597 = vmatprep.subr.bf16.mxu0 0
  %1598 = vmatpush1.bf16.msra.mxu0 0
  %1599 = vmatprep.subr.bf16.mxu0 0
  %1600 = vmatpush1.bf16.msra.mxu0 0
  %1601 = vmatprep.subr.bf16.mxu0 0
  %1602 = vmatpush1.bf16.msra.mxu0 0
  %1603 = vmatprep.subr.bf16.mxu0 0
  %1604 = vmatpush1.bf16.msra.mxu0 0
  %1605 = vmatprep.subr.bf16.mxu0 0
  %1606 = vmatpush1.bf16.msra.mxu0 0
  %1607 = vmatprep.subr.bf16.mxu0 0
  %1608 = vmatpush1.bf16.msra.mxu0 0
  %1609 = vmatprep.subr.bf16.mxu0 0
  %1610 = vmatpush1.bf16.msra.mxu0 0
  %1611 = vmatprep.subr.bf16.mxu0 0
  %1612 = vmatpush1.bf16.msra.mxu0 0
  %1613 = vmatprep.mubr.bf16.mxu0 0
  %1614 = vmatmul.mubr.bf16.gmra.mrb[0].mxu0 %v1292
  %v1615 = vpop.f32.mrb[0].mxu0
  %v1616 = vadd.f32 %v1575, %v1615
  %v1617 = vpop.f32.mrb[0].mxu0
  %v1618 = vadd.f32 %v1577, %v1617
  %v1619 = vpop.f32.mrb[0].mxu0
  %v1620 = vpop.f32.mrb[0].mxu0
  %1621 = vdwg.mxu0
  %1622 = vmatprep.subr.bf16.mxu0 %v899
  %1623 = vmatpush1.bf16.msra.mxu0 %v898
  %1624 = vmatprep.subr.bf16.mxu0 %v909
  %1625 = vmatpush1.bf16.msra.mxu0 %v908
  %1626 = vmatprep.subr.bf16.mxu0 %v919
  %1627 = vmatpush1.bf16.msra.mxu0 %v918
  %1628 = vmatprep.subr.bf16.mxu0 %v929
  %1629 = vmatpush1.bf16.msra.mxu0 %v928
  %1630 = vmatprep.subr.bf16.mxu0 %v939
  %1631 = vmatpush1.bf16.msra.mxu0 %v938
  %1632 = vmatprep.subr.bf16.mxu0 %v949
  %1633 = vmatpush1.bf16.msra.mxu0 %v948
  %1634 = vmatprep.subr.bf16.mxu0 %v959
  %1635 = vmatpush1.bf16.msra.mxu0 %v958
  %1636 = vmatprep.subr.bf16.mxu0 %v969
  %1637 = vmatpush1.bf16.msra.mxu0 %v968
  %1638 = vmatprep.subr.bf16.mxu0 %v979
  %1639 = vmatpush1.bf16.msra.mxu0 %v978
  %1640 = vmatprep.subr.bf16.mxu0 %v989
  %1641 = vmatpush1.bf16.msra.mxu0 %v988
  %1642 = vmatprep.subr.bf16.mxu0 %v999
  %1643 = vmatpush1.bf16.msra.mxu0 %v998
  %1644 = vmatprep.subr.bf16.mxu0 %v1009
  %1645 = vmatpush1.bf16.msra.mxu0 %v1008
  %1646 = vmatprep.subr.bf16.mxu0 %v1019
  %1647 = vmatpush1.bf16.msra.mxu0 %v1018
  %1648 = vmatprep.subr.bf16.mxu0 %v1029
  %1649 = vmatpush1.bf16.msra.mxu0 %v1028
  %1650 = vmatprep.subr.bf16.mxu0 %v1039
  %1651 = vmatpush1.bf16.msra.mxu0 %v1038
  %1652 = vmatprep.subr.bf16.mxu0 %v1049
  %1653 = vmatpush1.bf16.msra.mxu0 %v1048
  %1654 = vmatprep.mubr.bf16.mxu0 %v286
  %1655 = vmatmul.mubr.bf16.gmra.mrb[0].mxu0 %v285
  %v1656 = vpop.f32.mrb[0].mxu0
  %v1657 = vadd.f32 %v265, %v1656
  %v1658 = vpop.f32.mrb[0].mxu0
  %v1659 = vadd.f32 %v269, %v1658
  %v1660 = vpop.f32.mrb[0].mxu0
  %v1661 = vpop.f32.mrb[0].mxu0
  %1662 = vdwg.mxu0
  %1663 = vmatprep.subr.bf16.mxu0 %v1059
  %1664 = vmatpush1.bf16.msra.mxu0 %v1058
  %1665 = vmatprep.subr.bf16.mxu0 %v1069
  %1666 = vmatpush1.bf16.msra.mxu0 %v1068
  %1667 = vmatprep.subr.bf16.mxu0 %v1079
  %1668 = vmatpush1.bf16.msra.mxu0 %v1078
  %1669 = vmatprep.subr.bf16.mxu0 %v1089
  %1670 = vmatpush1.bf16.msra.mxu0 %v1088
  %1671 = vmatprep.subr.bf16.mxu0 0
  %1672 = vmatpush1.bf16.msra.mxu0 0
  %1673 = vmatprep.subr.bf16.mxu0 0
  %1674 = vmatpush1.bf16.msra.mxu0 0
  %1675 = vmatprep.subr.bf16.mxu0 0
  %1676 = vmatpush1.bf16.msra.mxu0 0
  %1677 = vmatprep.subr.bf16.mxu0 0
  %1678 = vmatpush1.bf16.msra.mxu0 0
  %1679 = vmatprep.subr.bf16.mxu0 0
  %1680 = vmatpush1.bf16.msra.mxu0 0
  %1681 = vmatprep.subr.bf16.mxu0 0
  %1682 = vmatpush1.bf16.msra.mxu0 0
  %1683 = vmatprep.subr.bf16.mxu0 0
  %1684 = vmatpush1.bf16.msra.mxu0 0
  %1685 = vmatprep.subr.bf16.mxu0 0
  %1686 = vmatpush1.bf16.msra.mxu0 0
  %1687 = vmatprep.subr.bf16.mxu0 0
  %1688 = vmatpush1.bf16.msra.mxu0 0
  %1689 = vmatprep.subr.bf16.mxu0 0
  %1690 = vmatpush1.bf16.msra.mxu0 0
  %1691 = vmatprep.subr.bf16.mxu0 0
  %1692 = vmatpush1.bf16.msra.mxu0 0
  %1693 = vmatprep.subr.bf16.mxu0 0
  %1694 = vmatpush1.bf16.msra.mxu0 0
  %1695 = vmatprep.mubr.bf16.mxu0 0
  %1696 = vmatmul.mubr.bf16.gmra.mrb[0].mxu0 %v1292
  %v1697 = vpop.f32.mrb[0].mxu0
  %v1698 = vadd.f32 %v1657, %v1697
  %v1699 = vpop.f32.mrb[0].mxu0
  %v1700 = vadd.f32 %v1659, %v1699
  %v1701 = vpop.f32.mrb[0].mxu0
  %v1702 = vpop.f32.mrb[0].mxu0
  %1703 = vdwg.mxu0
  %v1704 = vmax.f32 %v1370, 0.0
  %v1705 = vmax.f32 %v1372, 0.0
  %v1706 = vmax.f32 %v1452, 0.0
  %v1707 = vmax.f32 %v1454, 0.0
  %v1708 = vmax.f32 %v1534, 0.0
  %v1709 = vmax.f32 %v1536, 0.0
  %v1710 = vmax.f32 %v1616, 0.0
  %v1711 = vmax.f32 %v1618, 0.0
  %v1712 = vmax.f32 %v1698, 0.0
  %v1713 = vmax.f32 %v1700, 0.0
  %v1714 = vmin.f32 %v1704, 6.0
  %v1715 = vmin.f32 %v1705, 6.0
  %v1716 = vmin.f32 %v1706, 6.0
  %v1717 = vmin.f32 %v1707, 6.0
  %v1718 = vmin.f32 %v1708, 6.0
  %v1719 = vmin.f32 %v1709, 6.0
  %v1720 = vmin.f32 %v1710, 6.0
  %v1721 = vmin.f32 %v1711, 6.0
  %v1722 = vmin.f32 %v1712, 6.0
  %v1723 = vmin.f32 %v1713, 6.0
  %v1724 = vld [vmem:[%s1] sm:$0x3]
  %vm1725 = vcmask 64512
  %v1727 = vsel %vm1725, %v1724, 0
  %1729 = vmatprep.subr.mxu0 %v1715
  %1730 = vmatpush1.msra.mxu0 %v1714
  %1731 = vmatprep.subr.mxu0 0.0
  %1732 = vmatpush1.msra.mxu0 0.0
  %1733 = vmatprep.subr.mxu0 0.0
  %1734 = vmatpush1.msra.mxu0 0.0
  %1735 = vmatprep.subr.mxu0 0.0
  %1736 = vmatpush1.msra.mxu0 0.0
  %1737 = vmatprep.subr.mxu0 0.0
  %1738 = vmatpush1.msra.mxu0 0.0
  %1739 = vmatprep.subr.mxu0 0.0
  %1740 = vmatpush1.msra.mxu0 0.0
  %1741 = vmatprep.subr.mxu0 0.0
  %1742 = vmatpush1.msra.mxu0 0.0
  %1743 = vmatprep.subr.mxu0 0.0
  %1744 = vmatpush1.msra.mxu0 0.0
  %1745 = vmatprep.subr.mxu0 0.0
  %1746 = vmatpush1.msra.mxu0 0.0
  %1747 = vmatprep.subr.mxu0 0.0
  %1748 = vmatpush1.msra.mxu0 0.0
  %1749 = vmatprep.subr.mxu0 0.0
  %1750 = vmatpush1.msra.mxu0 0.0
  %1751 = vmatprep.subr.mxu0 0.0
  %1752 = vmatpush1.msra.mxu0 0.0
  %1753 = vmatprep.subr.mxu0 0.0
  %1754 = vmatpush1.msra.mxu0 0.0
  %1755 = vmatprep.subr.mxu0 0.0
  %1756 = vmatpush1.msra.mxu0 0.0
  %1757 = vmatprep.subr.mxu0 0.0
  %1758 = vmatpush1.msra.mxu0 0.0
  %1759 = vmatprep.subr.mxu0 0.0
  %1760 = vmatpush1.msra.mxu0 0.0
  %1761 = vmatprep.subr.mxu0 0.0
  %1762 = vmatpush1.msra.mxu0 0.0
  %1763 = vmatprep.subr.mxu0 0.0
  %1764 = vmatpush1.msra.mxu0 0.0
  %1765 = vmatprep.subr.mxu0 0.0
  %1766 = vmatpush1.msra.mxu0 0.0
  %1767 = vmatprep.subr.mxu0 0.0
  %1768 = vmatpush1.msra.mxu0 0.0
  %1769 = vmatprep.subr.mxu0 0.0
  %1770 = vmatpush1.msra.mxu0 0.0
  %1771 = vmatprep.subr.mxu0 0.0
  %1772 = vmatpush1.msra.mxu0 0.0
  %1773 = vmatprep.subr.mxu0 0.0
  %1774 = vmatpush1.msra.mxu0 0.0
  %1775 = vmatprep.subr.mxu0 0.0
  %1776 = vmatpush1.msra.mxu0 0.0
  %1777 = vmatprep.subr.mxu0 0.0
  %1778 = vmatpush1.msra.mxu0 0.0
  %1779 = vmatprep.subr.mxu0 0.0
  %1780 = vmatpush1.msra.mxu0 0.0
  %1781 = vmatprep.subr.mxu0 0.0
  %1782 = vmatpush1.msra.mxu0 0.0
  %1783 = vmatprep.subr.mxu0 0.0
  %1784 = vmatpush1.msra.mxu0 0.0
  %1785 = vmatprep.subr.mxu0 0.0
  %1786 = vmatpush1.msra.mxu0 0.0
  %1787 = vmatprep.subr.mxu0 0.0
  %1788 = vmatpush1.msra.mxu0 0.0
  %1789 = vmatprep.subr.mxu0 0.0
  %1790 = vmatpush1.msra.mxu0 0.0
  %1791 = vmatprep.subr.mxu0 0.0
  %1792 = vmatpush1.msra.mxu0 0.0
  %1793 = vmatprep.mubr.f32.mxu0 0.0
  %1794 = vmatmul.mubr.f32.gmra.mrb[0].mxu0 %v1727
  %v1795 = vpop.f32.mrb[0].mxu0
  %v1796 = vadd.f32 0.0, %v1795
  %v1797 = vpop.f32.mrb[0].mxu0
  %v1798 = vadd.f32 0.0, %v1797
  %1799 = vdwg.mxu0
  %1800 = vmatprep.subr.mxu0 %v1717
  %1801 = vmatpush1.msra.mxu0 %v1716
  %1802 = vmatprep.subr.mxu0 0.0
  %1803 = vmatpush1.msra.mxu0 0.0
  %1804 = vmatprep.subr.mxu0 0.0
  %1805 = vmatpush1.msra.mxu0 0.0
  %1806 = vmatprep.subr.mxu0 0.0
  %1807 = vmatpush1.msra.mxu0 0.0
  %1808 = vmatprep.subr.mxu0 0.0
  %1809 = vmatpush1.msra.mxu0 0.0
  %1810 = vmatprep.subr.mxu0 0.0
  %1811 = vmatpush1.msra.mxu0 0.0
  %1812 = vmatprep.subr.mxu0 0.0
  %1813 = vmatpush1.msra.mxu0 0.0
  %1814 = vmatprep.subr.mxu0 0.0
  %1815 = vmatpush1.msra.mxu0 0.0
  %1816 = vmatprep.subr.mxu0 0.0
  %1817 = vmatpush1.msra.mxu0 0.0
  %1818 = vmatprep.subr.mxu0 0.0
  %1819 = vmatpush1.msra.mxu0 0.0
  %1820 = vmatprep.subr.mxu0 0.0
  %1821 = vmatpush1.msra.mxu0 0.0
  %1822 = vmatprep.subr.mxu0 0.0
  %1823 = vmatpush1.msra.mxu0 0.0
  %1824 = vmatprep.subr.mxu0 0.0
  %1825 = vmatpush1.msra.mxu0 0.0
  %1826 = vmatprep.subr.mxu0 0.0
  %1827 = vmatpush1.msra.mxu0 0.0
  %1828 = vmatprep.subr.mxu0 0.0
  %1829 = vmatpush1.msra.mxu0 0.0
  %1830 = vmatprep.subr.mxu0 0.0
  %1831 = vmatpush1.msra.mxu0 0.0
  %1832 = vmatprep.subr.mxu0 0.0
  %1833 = vmatpush1.msra.mxu0 0.0
  %1834 = vmatprep.subr.mxu0 0.0
  %1835 = vmatpush1.msra.mxu0 0.0
  %1836 = vmatprep.subr.mxu0 0.0
  %1837 = vmatpush1.msra.mxu0 0.0
  %1838 = vmatprep.subr.mxu0 0.0
  %1839 = vmatpush1.msra.mxu0 0.0
  %1840 = vmatprep.subr.mxu0 0.0
  %1841 = vmatpush1.msra.mxu0 0.0
  %1842 = vmatprep.subr.mxu0 0.0
  %1843 = vmatpush1.msra.mxu0 0.0
  %1844 = vmatprep.subr.mxu0 0.0
  %1845 = vmatpush1.msra.mxu0 0.0
  %1846 = vmatprep.subr.mxu0 0.0
  %1847 = vmatpush1.msra.mxu0 0.0
  %1848 = vmatprep.subr.mxu0 0.0
  %1849 = vmatpush1.msra.mxu0 0.0
  %1850 = vmatprep.subr.mxu0 0.0
  %1851 = vmatpush1.msra.mxu0 0.0
  %1852 = vmatprep.subr.mxu0 0.0
  %1853 = vmatpush1.msra.mxu0 0.0
  %1854 = vmatprep.subr.mxu0 0.0
  %1855 = vmatpush1.msra.mxu0 0.0
  %1856 = vmatprep.subr.mxu0 0.0
  %1857 = vmatpush1.msra.mxu0 0.0
  %1858 = vmatprep.subr.mxu0 0.0
  %1859 = vmatpush1.msra.mxu0 0.0
  %1860 = vmatprep.subr.mxu0 0.0
  %1861 = vmatpush1.msra.mxu0 0.0
  %1862 = vmatprep.subr.mxu0 0.0
  %1863 = vmatpush1.msra.mxu0 0.0
  %1864 = vmatprep.mubr.f32.mxu0 0.0
  %1865 = vmatmul.mubr.f32.gmra.mrb[0].mxu0 %v1727
  %v1866 = vpop.f32.mrb[0].mxu0
  %v1867 = vadd.f32 0.0, %v1866
  %v1868 = vpop.f32.mrb[0].mxu0
  %v1869 = vadd.f32 0.0, %v1868
  %1870 = vdwg.mxu0
  %1871 = vmatprep.subr.mxu0 %v1719
  %1872 = vmatpush1.msra.mxu0 %v1718
  %1873 = vmatprep.subr.mxu0 0.0
  %1874 = vmatpush1.msra.mxu0 0.0
  %1875 = vmatprep.subr.mxu0 0.0
  %1876 = vmatpush1.msra.mxu0 0.0
  %1877 = vmatprep.subr.mxu0 0.0
  %1878 = vmatpush1.msra.mxu0 0.0
  %1879 = vmatprep.subr.mxu0 0.0
  %1880 = vmatpush1.msra.mxu0 0.0
  %1881 = vmatprep.subr.mxu0 0.0
  %1882 = vmatpush1.msra.mxu0 0.0
  %1883 = vmatprep.subr.mxu0 0.0
  %1884 = vmatpush1.msra.mxu0 0.0
  %1885 = vmatprep.subr.mxu0 0.0
  %1886 = vmatpush1.msra.mxu0 0.0
  %1887 = vmatprep.subr.mxu0 0.0
  %1888 = vmatpush1.msra.mxu0 0.0
  %1889 = vmatprep.subr.mxu0 0.0
  %1890 = vmatpush1.msra.mxu0 0.0
  %1891 = vmatprep.subr.mxu0 0.0
  %1892 = vmatpush1.msra.mxu0 0.0
  %1893 = vmatprep.subr.mxu0 0.0
  %1894 = vmatpush1.msra.mxu0 0.0
  %1895 = vmatprep.subr.mxu0 0.0
  %1896 = vmatpush1.msra.mxu0 0.0
  %1897 = vmatprep.subr.mxu0 0.0
  %1898 = vmatpush1.msra.mxu0 0.0
  %1899 = vmatprep.subr.mxu0 0.0
  %1900 = vmatpush1.msra.mxu0 0.0
  %1901 = vmatprep.subr.mxu0 0.0
  %1902 = vmatpush1.msra.mxu0 0.0
  %1903 = vmatprep.subr.mxu0 0.0
  %1904 = vmatpush1.msra.mxu0 0.0
  %1905 = vmatprep.subr.mxu0 0.0
  %1906 = vmatpush1.msra.mxu0 0.0
  %1907 = vmatprep.subr.mxu0 0.0
  %1908 = vmatpush1.msra.mxu0 0.0
  %1909 = vmatprep.subr.mxu0 0.0
  %1910 = vmatpush1.msra.mxu0 0.0
  %1911 = vmatprep.subr.mxu0 0.0
  %1912 = vmatpush1.msra.mxu0 0.0
  %1913 = vmatprep.subr.mxu0 0.0
  %1914 = vmatpush1.msra.mxu0 0.0
  %1915 = vmatprep.subr.mxu0 0.0
  %1916 = vmatpush1.msra.mxu0 0.0
  %1917 = vmatprep.subr.mxu0 0.0
  %1918 = vmatpush1.msra.mxu0 0.0
  %1919 = vmatprep.subr.mxu0 0.0
  %1920 = vmatpush1.msra.mxu0 0.0
  %1921 = vmatprep.subr.mxu0 0.0
  %1922 = vmatpush1.msra.mxu0 0.0
  %1923 = vmatprep.subr.mxu0 0.0
  %1924 = vmatpush1.msra.mxu0 0.0
  %1925 = vmatprep.subr.mxu0 0.0
  %1926 = vmatpush1.msra.mxu0 0.0
  %1927 = vmatprep.subr.mxu0 0.0
  %1928 = vmatpush1.msra.mxu0 0.0
  %1929 = vmatprep.subr.mxu0 0.0
  %1930 = vmatpush1.msra.mxu0 0.0
  %1931 = vmatprep.subr.mxu0 0.0
  %1932 = vmatpush1.msra.mxu0 0.0
  %1933 = vmatprep.subr.mxu0 0.0
  %1934 = vmatpush1.msra.mxu0 0.0
  %1935 = vmatprep.mubr.f32.mxu0 0.0
  %1936 = vmatmul.mubr.f32.gmra.mrb[0].mxu0 %v1727
  %v1937 = vpop.f32.mrb[0].mxu0
  %v1938 = vadd.f32 0.0, %v1937
  %v1939 = vpop.f32.mrb[0].mxu0
  %v1940 = vadd.f32 0.0, %v1939
  %1941 = vdwg.mxu0
  %1942 = vmatprep.subr.mxu0 %v1721
  %1943 = vmatpush1.msra.mxu0 %v1720
  %1944 = vmatprep.subr.mxu0 0.0
  %1945 = vmatpush1.msra.mxu0 0.0
  %1946 = vmatprep.subr.mxu0 0.0
  %1947 = vmatpush1.msra.mxu0 0.0
  %1948 = vmatprep.subr.mxu0 0.0
  %1949 = vmatpush1.msra.mxu0 0.0
  %1950 = vmatprep.subr.mxu0 0.0
  %1951 = vmatpush1.msra.mxu0 0.0
  %1952 = vmatprep.subr.mxu0 0.0
  %1953 = vmatpush1.msra.mxu0 0.0
  %1954 = vmatprep.subr.mxu0 0.0
  %1955 = vmatpush1.msra.mxu0 0.0
  %1956 = vmatprep.subr.mxu0 0.0
  %1957 = vmatpush1.msra.mxu0 0.0
  %1958 = vmatprep.subr.mxu0 0.0
  %1959 = vmatpush1.msra.mxu0 0.0
  %1960 = vmatprep.subr.mxu0 0.0
  %1961 = vmatpush1.msra.mxu0 0.0
  %1962 = vmatprep.subr.mxu0 0.0
  %1963 = vmatpush1.msra.mxu0 0.0
  %1964 = vmatprep.subr.mxu0 0.0
  %1965 = vmatpush1.msra.mxu0 0.0
  %1966 = vmatprep.subr.mxu0 0.0
  %1967 = vmatpush1.msra.mxu0 0.0
  %1968 = vmatprep.subr.mxu0 0.0
  %1969 = vmatpush1.msra.mxu0 0.0
  %1970 = vmatprep.subr.mxu0 0.0
  %1971 = vmatpush1.msra.mxu0 0.0
  %1972 = vmatprep.subr.mxu0 0.0
  %1973 = vmatpush1.msra.mxu0 0.0
  %1974 = vmatprep.subr.mxu0 0.0
  %1975 = vmatpush1.msra.mxu0 0.0
  %1976 = vmatprep.subr.mxu0 0.0
  %1977 = vmatpush1.msra.mxu0 0.0
  %1978 = vmatprep.subr.mxu0 0.0
  %1979 = vmatpush1.msra.mxu0 0.0
  %1980 = vmatprep.subr.mxu0 0.0
  %1981 = vmatpush1.msra.mxu0 0.0
  %1982 = vmatprep.subr.mxu0 0.0
  %1983 = vmatpush1.msra.mxu0 0.0
  %1984 = vmatprep.subr.mxu0 0.0
  %1985 = vmatpush1.msra.mxu0 0.0
  %1986 = vmatprep.subr.mxu0 0.0
  %1987 = vmatpush1.msra.mxu0 0.0
  %1988 = vmatprep.subr.mxu0 0.0
  %1989 = vmatpush1.msra.mxu0 0.0
  %1990 = vmatprep.subr.mxu0 0.0
  %1991 = vmatpush1.msra.mxu0 0.0
  %1992 = vmatprep.subr.mxu0 0.0
  %1993 = vmatpush1.msra.mxu0 0.0
  %1994 = vmatprep.subr.mxu0 0.0
  %1995 = vmatpush1.msra.mxu0 0.0
  %1996 = vmatprep.subr.mxu0 0.0
  %1997 = vmatpush1.msra.mxu0 0.0
  %1998 = vmatprep.subr.mxu0 0.0
  %1999 = vmatpush1.msra.mxu0 0.0
  %2000 = vmatprep.subr.mxu0 0.0
  %2001 = vmatpush1.msra.mxu0 0.0
  %2002 = vmatprep.subr.mxu0 0.0
  %2003 = vmatpush1.msra.mxu0 0.0
  %2004 = vmatprep.subr.mxu0 0.0
  %2005 = vmatpush1.msra.mxu0 0.0
  %2006 = vmatprep.mubr.f32.mxu0 0.0
  %2007 = vmatmul.mubr.f32.gmra.mrb[0].mxu0 %v1727
  %v2008 = vpop.f32.mrb[0].mxu0
  %v2009 = vadd.f32 0.0, %v2008
  %v2010 = vpop.f32.mrb[0].mxu0
  %v2011 = vadd.f32 0.0, %v2010
  %2012 = vdwg.mxu0
  %2013 = vmatprep.subr.mxu0 %v1723
  %2014 = vmatpush1.msra.mxu0 %v1722
  %2015 = vmatprep.subr.mxu0 0.0
  %2016 = vmatpush1.msra.mxu0 0.0
  %2017 = vmatprep.subr.mxu0 0.0
  %2018 = vmatpush1.msra.mxu0 0.0
  %2019 = vmatprep.subr.mxu0 0.0
  %2020 = vmatpush1.msra.mxu0 0.0
  %2021 = vmatprep.subr.mxu0 0.0
  %2022 = vmatpush1.msra.mxu0 0.0
  %2023 = vmatprep.subr.mxu0 0.0
  %2024 = vmatpush1.msra.mxu0 0.0
  %2025 = vmatprep.subr.mxu0 0.0
  %2026 = vmatpush1.msra.mxu0 0.0
  %2027 = vmatprep.subr.mxu0 0.0
  %2028 = vmatpush1.msra.mxu0 0.0
  %2029 = vmatprep.subr.mxu0 0.0
  %2030 = vmatpush1.msra.mxu0 0.0
  %2031 = vmatprep.subr.mxu0 0.0
  %2032 = vmatpush1.msra.mxu0 0.0
  %2033 = vmatprep.subr.mxu0 0.0
  %2034 = vmatpush1.msra.mxu0 0.0
  %2035 = vmatprep.subr.mxu0 0.0
  %2036 = vmatpush1.msra.mxu0 0.0
  %2037 = vmatprep.subr.mxu0 0.0
  %2038 = vmatpush1.msra.mxu0 0.0
  %2039 = vmatprep.subr.mxu0 0.0
  %2040 = vmatpush1.msra.mxu0 0.0
  %2041 = vmatprep.subr.mxu0 0.0
  %2042 = vmatpush1.msra.mxu0 0.0
  %2043 = vmatprep.subr.mxu0 0.0
  %2044 = vmatpush1.msra.mxu0 0.0
  %2045 = vmatprep.subr.mxu0 0.0
  %2046 = vmatpush1.msra.mxu0 0.0
  %2047 = vmatprep.subr.mxu0 0.0
  %2048 = vmatpush1.msra.mxu0 0.0
  %2049 = vmatprep.subr.mxu0 0.0
  %2050 = vmatpush1.msra.mxu0 0.0
  %2051 = vmatprep.subr.mxu0 0.0
  %2052 = vmatpush1.msra.mxu0 0.0
  %2053 = vmatprep.subr.mxu0 0.0
  %2054 = vmatpush1.msra.mxu0 0.0
  %2055 = vmatprep.subr.mxu0 0.0
  %2056 = vmatpush1.msra.mxu0 0.0
  %2057 = vmatprep.subr.mxu0 0.0
  %2058 = vmatpush1.msra.mxu0 0.0
  %2059 = vmatprep.subr.mxu0 0.0
  %2060 = vmatpush1.msra.mxu0 0.0
  %2061 = vmatprep.subr.mxu0 0.0
  %2062 = vmatpush1.msra.mxu0 0.0
  %2063 = vmatprep.subr.mxu0 0.0
  %2064 = vmatpush1.msra.mxu0 0.0
  %2065 = vmatprep.subr.mxu0 0.0
  %2066 = vmatpush1.msra.mxu0 0.0
  %2067 = vmatprep.subr.mxu0 0.0
  %2068 = vmatpush1.msra.mxu0 0.0
  %2069 = vmatprep.subr.mxu0 0.0
  %2070 = vmatpush1.msra.mxu0 0.0
  %2071 = vmatprep.subr.mxu0 0.0
  %2072 = vmatpush1.msra.mxu0 0.0
  %2073 = vmatprep.subr.mxu0 0.0
  %2074 = vmatpush1.msra.mxu0 0.0
  %2075 = vmatprep.subr.mxu0 0.0
  %2076 = vmatpush1.msra.mxu0 0.0
  %2077 = vmatprep.mubr.f32.mxu0 0.0
  %2078 = vmatmul.mubr.f32.gmra.mrb[0].mxu0 %v1727
  %v2079 = vpop.f32.mrb[0].mxu0
  %v2080 = vadd.f32 0.0, %v2079
  %v2081 = vpop.f32.mrb[0].mxu0
  %v2082 = vadd.f32 0.0, %v2081
  %2083 = vdwg.mxu0
  %v2084 = vpack.c.bf16 %v1796, %v1796
  %v2085 = vpack.c.bf16 %v1798, %v1798
  %v2086 = vpack.c.bf16 %v1867, %v1867
  %v2087 = vpack.c.bf16 %v1869, %v1869
  %v2088 = vpack.c.bf16 %v1938, %v1938
  %v2089 = vpack.c.bf16 %v1940, %v1940
  %v2090 = vpack.c.bf16 %v2009, %v2009
  %v2091 = vpack.c.bf16 %v2011, %v2011
  %v2092 = vpack.c.bf16 %v2080, %v2080
  %v2093 = vpack.c.bf16 %v2082, %v2082
  %v2094 = vld [vmem:[%s4] sm:$0xf]
  %v2095 = vld [vmem:[%s4 + $0x4] sm:$0xf]
  %v2096 = vld [vmem:[%s4 + $0x8] sm:$0xf]
  %v2097 = vld [vmem:[%s4 + $0xc] sm:$0xf]
  %v2098 = vld [vmem:[%s4 + $0x10] sm:$0xf]
  %v2099 = vld [vmem:[%s4 + $0x14] sm:$0xf]
  %v2100 = vld [vmem:[%s4 + $0x18] sm:$0xf]
  %v2101 = vld [vmem:[%s4 + $0x1c] sm:$0xf]
  %v2102 = vld [vmem:[%s4 + $0x20] sm:$0xf]
  %v2103 = vld [vmem:[%s4 + $0x24] sm:$0xf]
  %v2104 = vld [vmem:[%s4 + $0x28] sm:$0xf]
  %v2105 = vld [vmem:[%s4 + $0x2c] sm:$0xf]
  %v2106 = vld [vmem:[%s4 + $0x30] sm:$0xf]
  %v2107 = vld [vmem:[%s4 + $0x34] sm:$0xf]
  %v2108 = vld [vmem:[%s4 + $0x38] sm:$0xf]
  %v2109 = vld [vmem:[%s4 + $0x3c] sm:$0xf]
  %v2110 = vld [vmem:[%s4 + $0x40] sm:$0xf]
  %v2111 = vld [vmem:[%s4 + $0x44] sm:$0xf]
  %v2112 = vld [vmem:[%s4 + $0x48] sm:$0xf]
  %v2113 = vld [vmem:[%s4 + $0x4c] sm:$0xf]
  %v2114 = vld [vmem:[%s4 + $0x50] sm:$0xf]
  %v2115 = vld [vmem:[%s4 + $0x54] sm:$0xf]
  %v2116 = vld [vmem:[%s4 + $0x58] sm:$0xf]
  %v2117 = vld [vmem:[%s4 + $0x5c] sm:$0xf]
  %v2118 = vld [vmem:[%s4 + $0x60] sm:$0xf]
  %v2119 = vld [vmem:[%s4 + $0x64] sm:$0xf]
  %v2120 = vld [vmem:[%s4 + $0x68] sm:$0xf]
  %v2121 = vld [vmem:[%s4 + $0x6c] sm:$0xf]
  %v2122 = vld [vmem:[%s4 + $0x70] sm:$0xf]
  %v2123 = vld [vmem:[%s4 + $0x74] sm:$0xf]
  %v2124 = vld [vmem:[%s4 + $0x78] sm:$0xf]
  %v2125 = vld [vmem:[%s4 + $0x7c] sm:$0xf]
  %v2126 = vld [vmem:[%s4 + $0x80] sm:$0xf]
  %v2127 = vld [vmem:[%s4 + $0x84] sm:$0xf]
  %v2128 = vld [vmem:[%s4 + $0x88] sm:$0xf]
  %v2129 = vld [vmem:[%s4 + $0x8c] sm:$0xf]
  %v2130 = vld [vmem:[%s4 + $0x90] sm:$0xf]
  %v2131 = vld [vmem:[%s4 + $0x94] sm:$0xf]
  %v2132 = vld [vmem:[%s4 + $0x98] sm:$0xf]
  %v2133 = vld [vmem:[%s4 + $0x9c] sm:$0xf]
  %v2134 = vld [vmem:[%s4 + $0xa0] sm:$0xf]
  %v2135 = vld [vmem:[%s4 + $0xa4] sm:$0xf]
  %v2136 = vld [vmem:[%s4 + $0xa8] sm:$0xf]
  %v2137 = vld [vmem:[%s4 + $0xac] sm:$0xf]
  %v2138 = vld [vmem:[%s4 + $0xb0] sm:$0xf]
  %v2139 = vld [vmem:[%s4 + $0xb4] sm:$0xf]
  %v2140 = vld [vmem:[%s4 + $0xb8] sm:$0xf]
  %v2141 = vld [vmem:[%s4 + $0xbc] sm:$0xf]
  %v2142 = vld [vmem:[%s4 + $0xc0] sm:$0xf]
  %v2143 = vld [vmem:[%s4 + $0xc4] sm:$0xf]
  %v2144 = vld [vmem:[%s4 + $0xc8] sm:$0xf]
  %v2145 = vld [vmem:[%s4 + $0xcc] sm:$0xf]
  %v2146 = vld [vmem:[%s4 + $0xd0] sm:$0xf]
  %v2147 = vld [vmem:[%s4 + $0xd4] sm:$0xf]
  %v2148 = vld [vmem:[%s4 + $0xd8] sm:$0xf]
  %v2149 = vld [vmem:[%s4 + $0xdc] sm:$0xf]
  %v2150 = vld [vmem:[%s4 + $0xe0] sm:$0xf]
  %v2151 = vld [vmem:[%s4 + $0xe4] sm:$0xf]
  %v2152 = vld [vmem:[%s4 + $0xe8] sm:$0xf]
  %v2153 = vld [vmem:[%s4 + $0xec] sm:$0xf]
  %v2154 = vld [vmem:[%s4 + $0xf0] sm:$0xf]
  %v2155 = vld [vmem:[%s4 + $0xf4] sm:$0xf]
  %v2156 = vld [vmem:[%s4 + $0xf8] sm:$0xf]
  %v2157 = vld [vmem:[%s4 + $0xfc] sm:$0xf]
  %v2158 = vld [vmem:[%s4 + $0x100] sm:$0xf]
  %v2159 = vld [vmem:[%s4 + $0x104] sm:$0xf]
  %v2160 = vld [vmem:[%s4 + $0x108] sm:$0xf]
  %v2161 = vld [vmem:[%s4 + $0x10c] sm:$0xf]
  %v2162 = vld [vmem:[%s4 + $0x110] sm:$0xf]
  %v2163 = vld [vmem:[%s4 + $0x114] sm:$0xf]
  %v2164 = vld [vmem:[%s4 + $0x118] sm:$0xf]
  %v2165 = vld [vmem:[%s4 + $0x11c] sm:$0xf]
  %v2166 = vld [vmem:[%s4 + $0x120] sm:$0xf]
  %v2167 = vld [vmem:[%s4 + $0x124] sm:$0xf]
  %v2168 = vld [vmem:[%s4 + $0x128] sm:$0xf]
  %v2169 = vld [vmem:[%s4 + $0x12c] sm:$0xf]
  %v2170 = vld [vmem:[%s4 + $0x130] sm:$0xf]
  %v2171 = vld [vmem:[%s4 + $0x134] sm:$0xf]
  %v2172 = vld [vmem:[%s4 + $0x138] sm:$0xf]
  %v2173 = vld [vmem:[%s4 + $0x13c] sm:$0xf]
  %v2174 = vld [vmem:[%s4 + $0x140] sm:$0xf]
  %v2175 = vld [vmem:[%s4 + $0x144] sm:$0xf]
  %v2176 = vld [vmem:[%s4 + $0x148] sm:$0xf]
  %v2177 = vld [vmem:[%s4 + $0x14c] sm:$0xf]
  %v2178 = vld [vmem:[%s4 + $0x150] sm:$0xf]
  %v2179 = vld [vmem:[%s4 + $0x154] sm:$0xf]
  %v2180 = vld [vmem:[%s4 + $0x158] sm:$0xf]
  %v2181 = vld [vmem:[%s4 + $0x15c] sm:$0xf]
  %v2182 = vld [vmem:[%s4 + $0x160] sm:$0xf]
  %v2183 = vld [vmem:[%s4 + $0x164] sm:$0xf]
  %v2184 = vld [vmem:[%s4 + $0x168] sm:$0xf]
  %v2185 = vld [vmem:[%s4 + $0x16c] sm:$0xf]
  %v2186 = vld [vmem:[%s4 + $0x170] sm:$0xf]
  %v2187 = vld [vmem:[%s4 + $0x174] sm:$0xf]
  %v2188 = vld [vmem:[%s4 + $0x178] sm:$0xf]
  %v2189 = vld [vmem:[%s4 + $0x17c] sm:$0xf]
  %v2190 = vld [vmem:[%s4 + $0x180] sm:$0xf]
  %v2191 = vld [vmem:[%s4 + $0x184] sm:$0xf]
  %v2192 = vld [vmem:[%s4 + $0x188] sm:$0xf]
  %v2193 = vld [vmem:[%s4 + $0x18c] sm:$0xf]
  %v2194 = vld [vmem:[%s4 + $0x190] sm:$0xf]
  %v2195 = vld [vmem:[%s4 + $0x194] sm:$0xf]
  %v2196 = vld [vmem:[%s4 + $0x198] sm:$0xf]
  %v2197 = vld [vmem:[%s4 + $0x19c] sm:$0xf]
  %v2198 = vld [vmem:[%s4 + $0x1a0] sm:$0xf]
  %v2199 = vld [vmem:[%s4 + $0x1a4] sm:$0xf]
  %v2200 = vld [vmem:[%s4 + $0x1a8] sm:$0xf]
  %v2201 = vld [vmem:[%s4 + $0x1ac] sm:$0xf]
  %v2202 = vld [vmem:[%s4 + $0x1b0] sm:$0xf]
  %v2203 = vld [vmem:[%s4 + $0x1b4] sm:$0xf]
  %v2204 = vld [vmem:[%s4 + $0x1b8] sm:$0xf]
  %v2205 = vld [vmem:[%s4 + $0x1bc] sm:$0xf]
  %v2206 = vld [vmem:[%s4 + $0x1c0] sm:$0xf]
  %v2207 = vld [vmem:[%s4 + $0x1c4] sm:$0xf]
  %v2208 = vld [vmem:[%s4 + $0x1c8] sm:$0xf]
  %v2209 = vld [vmem:[%s4 + $0x1cc] sm:$0xf]
  %v2210 = vld [vmem:[%s4 + $0x1d0] sm:$0xf]
  %v2211 = vld [vmem:[%s4 + $0x1d4] sm:$0xf]
  %v2212 = vld [vmem:[%s4 + $0x1d8] sm:$0xf]
  %v2213 = vld [vmem:[%s4 + $0x1dc] sm:$0xf]
  %v2214 = vld [vmem:[%s4 + $0x1e0] sm:$0xf]
  %v2215 = vld [vmem:[%s4 + $0x1e4] sm:$0xf]
  %v2216 = vld [vmem:[%s4 + $0x1e8] sm:$0xf]
  %v2217 = vld [vmem:[%s4 + $0x1ec] sm:$0xf]
  %v2218 = vld [vmem:[%s4 + $0x1f0] sm:$0xf]
  %v2219 = vld [vmem:[%s4 + $0x1f4] sm:$0xf]
  %v2220 = vld [vmem:[%s4 + $0x1f8] sm:$0xf]
  %v2221 = vld [vmem:[%s4 + $0x1fc] sm:$0xf]
  %v2222 = vld [vmem:[%s4 + $0x200] sm:$0xf]
  %v2223 = vld [vmem:[%s4 + $0x204] sm:$0xf]
  %v2224 = vld [vmem:[%s4 + $0x208] sm:$0xf]
  %v2225 = vld [vmem:[%s4 + $0x20c] sm:$0xf]
  %v2226 = vld [vmem:[%s4 + $0x210] sm:$0xf]
  %v2227 = vld [vmem:[%s4 + $0x214] sm:$0xf]
  %v2228 = vld [vmem:[%s4 + $0x218] sm:$0xf]
  %v2229 = vld [vmem:[%s4 + $0x21c] sm:$0xf]
  %v2230 = vld [vmem:[%s4 + $0x220] sm:$0xf]
  %v2231 = vld [vmem:[%s4 + $0x224] sm:$0xf]
  %v2232 = vld [vmem:[%s4 + $0x228] sm:$0xf]
  %v2233 = vld [vmem:[%s4 + $0x22c] sm:$0xf]
  %v2234 = vld [vmem:[%s4 + $0x230] sm:$0xf]
  %v2235 = vld [vmem:[%s4 + $0x234] sm:$0xf]
  %v2236 = vld [vmem:[%s4 + $0x238] sm:$0xf]
  %v2237 = vld [vmem:[%s4 + $0x23c] sm:$0xf]
  %v2238 = vld [vmem:[%s4 + $0x240] sm:$0xf]
  %v2239 = vld [vmem:[%s4 + $0x244] sm:$0xf]
  %v2240 = vld [vmem:[%s4 + $0x248] sm:$0xf]
  %v2241 = vld [vmem:[%s4 + $0x24c] sm:$0xf]
  %v2242 = vld [vmem:[%s4 + $0x250] sm:$0xf]
  %v2243 = vld [vmem:[%s4 + $0x254] sm:$0xf]
  %v2244 = vld [vmem:[%s4 + $0x258] sm:$0xf]
  %v2245 = vld [vmem:[%s4 + $0x25c] sm:$0xf]
  %v2246 = vld [vmem:[%s4 + $0x260] sm:$0xf]
  %v2247 = vld [vmem:[%s4 + $0x264] sm:$0xf]
  %v2248 = vld [vmem:[%s4 + $0x268] sm:$0xf]
  %v2249 = vld [vmem:[%s4 + $0x26c] sm:$0xf]
  %v2250 = vld [vmem:[%s4 + $0x270] sm:$0xf]
  %v2251 = vld [vmem:[%s4 + $0x274] sm:$0xf]
  %v2252 = vld [vmem:[%s4 + $0x278] sm:$0xf]
  %v2253 = vld [vmem:[%s4 + $0x27c] sm:$0xf]
  %v2254 = vld [vmem:[%s5] sm:$0x1]
  %v2256 = vlaneseq
  %v2257 = vshrl.u32 %v2256, 7
  %v2258 = vsub.s32 0, %v2257
  %v2259 = vrot.slane %v2254, %v2258
  %v2421 = vunpack.c.l.b16 %v2094
  %v2422 = vunpack.c.l.b16 %v2095
  %v2423 = vunpack.c.l.b16 %v2096
  %v2424 = vunpack.c.l.b16 %v2097
  %v2425 = vunpack.c.l.b16 %v2098
  %v2426 = vunpack.c.l.b16 %v2099
  %v2427 = vunpack.c.l.b16 %v2100
  %v2428 = vunpack.c.l.b16 %v2101
  %v2429 = vunpack.c.l.b16 %v2102
  %v2430 = vunpack.c.l.b16 %v2103
  %v2431 = vunpack.c.l.b16 %v2104
  %v2432 = vunpack.c.l.b16 %v2105
  %v2433 = vunpack.c.l.b16 %v2106
  %v2434 = vunpack.c.l.b16 %v2107
  %v2435 = vunpack.c.l.b16 %v2108
  %v2436 = vunpack.c.l.b16 %v2109
  %v2437 = vunpack.c.l.b16 %v2110
  %v2438 = vunpack.c.l.b16 %v2111
  %v2439 = vunpack.c.l.b16 %v2112
  %v2440 = vunpack.c.l.b16 %v2113
  %v2441 = vunpack.c.l.b16 %v2114
  %v2442 = vunpack.c.l.b16 %v2115
  %v2443 = vunpack.c.l.b16 %v2116
  %v2444 = vunpack.c.l.b16 %v2117
  %v2445 = vunpack.c.l.b16 %v2118
  %v2446 = vunpack.c.l.b16 %v2119
  %v2447 = vunpack.c.l.b16 %v2120
  %v2448 = vunpack.c.l.b16 %v2121
  %v2449 = vunpack.c.l.b16 %v2122
  %v2450 = vunpack.c.l.b16 %v2123
  %v2451 = vunpack.c.l.b16 %v2124
  %v2452 = vunpack.c.l.b16 %v2125
  %v2453 = vunpack.c.l.b16 %v2126
  %v2454 = vunpack.c.l.b16 %v2127
  %v2455 = vunpack.c.l.b16 %v2128
  %v2456 = vunpack.c.l.b16 %v2129
  %v2457 = vunpack.c.l.b16 %v2130
  %v2458 = vunpack.c.l.b16 %v2131
  %v2459 = vunpack.c.l.b16 %v2132
  %v2460 = vunpack.c.l.b16 %v2133
  %v2461 = vunpack.c.l.b16 %v2134
  %v2462 = vunpack.c.l.b16 %v2135
  %v2463 = vunpack.c.l.b16 %v2136
  %v2464 = vunpack.c.l.b16 %v2137
  %v2465 = vunpack.c.l.b16 %v2138
  %v2466 = vunpack.c.l.b16 %v2139
  %v2467 = vunpack.c.l.b16 %v2140
  %v2468 = vunpack.c.l.b16 %v2141
  %v2469 = vunpack.c.l.b16 %v2142
  %v2470 = vunpack.c.l.b16 %v2143
  %v2471 = vunpack.c.l.b16 %v2144
  %v2472 = vunpack.c.l.b16 %v2145
  %v2473 = vunpack.c.l.b16 %v2146
  %v2474 = vunpack.c.l.b16 %v2147
  %v2475 = vunpack.c.l.b16 %v2148
  %v2476 = vunpack.c.l.b16 %v2149
  %v2477 = vunpack.c.l.b16 %v2150
  %v2478 = vunpack.c.l.b16 %v2151
  %v2479 = vunpack.c.l.b16 %v2152
  %v2480 = vunpack.c.l.b16 %v2153
  %v2481 = vunpack.c.l.b16 %v2154
  %v2482 = vunpack.c.l.b16 %v2155
  %v2483 = vunpack.c.l.b16 %v2156
  %v2484 = vunpack.c.l.b16 %v2157
  %v2485 = vunpack.c.l.b16 %v2158
  %v2486 = vunpack.c.l.b16 %v2159
  %v2487 = vunpack.c.l.b16 %v2160
  %v2488 = vunpack.c.l.b16 %v2161
  %v2489 = vunpack.c.l.b16 %v2162
  %v2490 = vunpack.c.l.b16 %v2163
  %v2491 = vunpack.c.l.b16 %v2164
  %v2492 = vunpack.c.l.b16 %v2165
  %v2493 = vunpack.c.l.b16 %v2166
  %v2494 = vunpack.c.l.b16 %v2167
  %v2495 = vunpack.c.l.b16 %v2168
  %v2496 = vunpack.c.l.b16 %v2169
  %v2497 = vunpack.c.l.b16 %v2170
  %v2498 = vunpack.c.l.b16 %v2171
  %v2499 = vunpack.c.l.b16 %v2172
  %v2500 = vunpack.c.l.b16 %v2173
  %v2501 = vunpack.c.l.b16 %v2174
  %v2502 = vunpack.c.l.b16 %v2175
  %v2503 = vunpack.c.l.b16 %v2176
  %v2504 = vunpack.c.l.b16 %v2177
  %v2505 = vunpack.c.l.b16 %v2178
  %v2506 = vunpack.c.l.b16 %v2179
  %v2507 = vunpack.c.l.b16 %v2180
  %v2508 = vunpack.c.l.b16 %v2181
  %v2509 = vunpack.c.l.b16 %v2182
  %v2510 = vunpack.c.l.b16 %v2183
  %v2511 = vunpack.c.l.b16 %v2184
  %v2512 = vunpack.c.l.b16 %v2185
  %v2513 = vunpack.c.l.b16 %v2186
  %v2514 = vunpack.c.l.b16 %v2187
  %v2515 = vunpack.c.l.b16 %v2188
  %v2516 = vunpack.c.l.b16 %v2189
  %v2517 = vunpack.c.l.b16 %v2190
  %v2518 = vunpack.c.l.b16 %v2191
  %v2519 = vunpack.c.l.b16 %v2192
  %v2520 = vunpack.c.l.b16 %v2193
  %v2521 = vunpack.c.l.b16 %v2194
  %v2522 = vunpack.c.l.b16 %v2195
  %v2523 = vunpack.c.l.b16 %v2196
  %v2524 = vunpack.c.l.b16 %v2197
  %v2525 = vunpack.c.l.b16 %v2198
  %v2526 = vunpack.c.l.b16 %v2199
  %v2527 = vunpack.c.l.b16 %v2200
  %v2528 = vunpack.c.l.b16 %v2201
  %v2529 = vunpack.c.l.b16 %v2202
  %v2530 = vunpack.c.l.b16 %v2203
  %v2531 = vunpack.c.l.b16 %v2204
  %v2532 = vunpack.c.l.b16 %v2205
  %v2533 = vunpack.c.l.b16 %v2206
  %v2534 = vunpack.c.l.b16 %v2207
  %v2535 = vunpack.c.l.b16 %v2208
  %v2536 = vunpack.c.l.b16 %v2209
  %v2537 = vunpack.c.l.b16 %v2210
  %v2538 = vunpack.c.l.b16 %v2211
  %v2539 = vunpack.c.l.b16 %v2212
  %v2540 = vunpack.c.l.b16 %v2213
  %v2541 = vunpack.c.l.b16 %v2214
  %v2542 = vunpack.c.l.b16 %v2215
  %v2543 = vunpack.c.l.b16 %v2216
  %v2544 = vunpack.c.l.b16 %v2217
  %v2545 = vunpack.c.l.b16 %v2218
  %v2546 = vunpack.c.l.b16 %v2219
  %v2547 = vunpack.c.l.b16 %v2220
  %v2548 = vunpack.c.l.b16 %v2221
  %v2549 = vunpack.c.l.b16 %v2222
  %v2550 = vunpack.c.l.b16 %v2223
  %v2551 = vunpack.c.l.b16 %v2224
  %v2552 = vunpack.c.l.b16 %v2225
  %v2553 = vunpack.c.l.b16 %v2226
  %v2554 = vunpack.c.l.b16 %v2227
  %v2555 = vunpack.c.l.b16 %v2228
  %v2556 = vunpack.c.l.b16 %v2229
  %v2557 = vunpack.c.l.b16 %v2230
  %v2558 = vunpack.c.l.b16 %v2231
  %v2559 = vunpack.c.l.b16 %v2232
  %v2560 = vunpack.c.l.b16 %v2233
  %v2561 = vunpack.c.l.b16 %v2234
  %v2562 = vunpack.c.l.b16 %v2235
  %v2563 = vunpack.c.l.b16 %v2236
  %v2564 = vunpack.c.l.b16 %v2237
  %v2565 = vunpack.c.l.b16 %v2238
  %v2566 = vunpack.c.l.b16 %v2239
  %v2567 = vunpack.c.l.b16 %v2240
  %v2568 = vunpack.c.l.b16 %v2241
  %v2569 = vunpack.c.l.b16 %v2242
  %v2570 = vunpack.c.l.b16 %v2243
  %v2571 = vunpack.c.l.b16 %v2244
  %v2572 = vunpack.c.l.b16 %v2245
  %v2573 = vunpack.c.l.b16 %v2246
  %v2574 = vunpack.c.l.b16 %v2247
  %v2575 = vunpack.c.l.b16 %v2248
  %v2576 = vunpack.c.l.b16 %v2249
  %v2577 = vunpack.c.l.b16 %v2250
  %v2578 = vunpack.c.l.b16 %v2251
  %v2579 = vunpack.c.l.b16 %v2252
  %v2580 = vunpack.c.l.b16 %v2253
  %v2581 = vpack.c.b16 %v2422, %v2421
  %v2582 = vpack.c.b16 %v2424, %v2423
  %v2583 = vpack.c.b16 %v2426, %v2425
  %v2584 = vpack.c.b16 %v2428, %v2427
  %v2585 = vpack.c.b16 %v2430, %v2429
  %v2586 = vpack.c.b16 %v2432, %v2431
  %v2587 = vpack.c.b16 %v2434, %v2433
  %v2588 = vpack.c.b16 %v2436, %v2435
  %v2589 = vpack.c.b16 %v2438, %v2437
  %v2590 = vpack.c.b16 %v2440, %v2439
  %v2591 = vpack.c.b16 %v2442, %v2441
  %v2592 = vpack.c.b16 %v2444, %v2443
  %v2593 = vpack.c.b16 %v2446, %v2445
  %v2594 = vpack.c.b16 %v2448, %v2447
  %v2595 = vpack.c.b16 %v2450, %v2449
  %v2596 = vpack.c.b16 %v2452, %v2451
  %v2597 = vpack.c.b16 %v2454, %v2453
  %v2598 = vpack.c.b16 %v2456, %v2455
  %v2599 = vpack.c.b16 %v2458, %v2457
  %v2600 = vpack.c.b16 %v2460, %v2459
  %v2601 = vpack.c.b16 %v2462, %v2461
  %v2602 = vpack.c.b16 %v2464, %v2463
  %v2603 = vpack.c.b16 %v2466, %v2465
  %v2604 = vpack.c.b16 %v2468, %v2467
  %v2605 = vpack.c.b16 %v2470, %v2469
  %v2606 = vpack.c.b16 %v2472, %v2471
  %v2607 = vpack.c.b16 %v2474, %v2473
  %v2608 = vpack.c.b16 %v2476, %v2475
  %v2609 = vpack.c.b16 %v2478, %v2477
  %v2610 = vpack.c.b16 %v2480, %v2479
  %v2611 = vpack.c.b16 %v2482, %v2481
  %v2612 = vpack.c.b16 %v2484, %v2483
  %v2613 = vpack.c.b16 %v2486, %v2485
  %v2614 = vpack.c.b16 %v2488, %v2487
  %v2615 = vpack.c.b16 %v2490, %v2489
  %v2616 = vpack.c.b16 %v2492, %v2491
  %v2617 = vpack.c.b16 %v2494, %v2493
  %v2618 = vpack.c.b16 %v2496, %v2495
  %v2619 = vpack.c.b16 %v2498, %v2497
  %v2620 = vpack.c.b16 %v2500, %v2499
  %v2621 = vpack.c.b16 %v2502, %v2501
  %v2622 = vpack.c.b16 %v2504, %v2503
  %v2623 = vpack.c.b16 %v2506, %v2505
  %v2624 = vpack.c.b16 %v2508, %v2507
  %v2625 = vpack.c.b16 %v2510, %v2509
  %v2626 = vpack.c.b16 %v2512, %v2511
  %v2627 = vpack.c.b16 %v2514, %v2513
  %v2628 = vpack.c.b16 %v2516, %v2515
  %v2629 = vpack.c.b16 %v2518, %v2517
  %v2630 = vpack.c.b16 %v2520, %v2519
  %v2631 = vpack.c.b16 %v2522, %v2521
  %v2632 = vpack.c.b16 %v2524, %v2523
  %v2633 = vpack.c.b16 %v2526, %v2525
  %v2634 = vpack.c.b16 %v2528, %v2527
  %v2635 = vpack.c.b16 %v2530, %v2529
  %v2636 = vpack.c.b16 %v2532, %v2531
  %v2637 = vpack.c.b16 %v2534, %v2533
  %v2638 = vpack.c.b16 %v2536, %v2535
  %v2639 = vpack.c.b16 %v2538, %v2537
  %v2640 = vpack.c.b16 %v2540, %v2539
  %v2641 = vpack.c.b16 %v2542, %v2541
  %v2642 = vpack.c.b16 %v2544, %v2543
  %v2643 = vpack.c.b16 %v2546, %v2545
  %v2644 = vpack.c.b16 %v2548, %v2547
  %v2645 = vpack.c.b16 %v2550, %v2549
  %v2646 = vpack.c.b16 %v2552, %v2551
  %v2647 = vpack.c.b16 %v2554, %v2553
  %v2648 = vpack.c.b16 %v2556, %v2555
  %v2649 = vpack.c.b16 %v2558, %v2557
  %v2650 = vpack.c.b16 %v2560, %v2559
  %v2651 = vpack.c.b16 %v2562, %v2561
  %v2652 = vpack.c.b16 %v2564, %v2563
  %v2653 = vpack.c.b16 %v2566, %v2565
  %v2654 = vpack.c.b16 %v2568, %v2567
  %v2655 = vpack.c.b16 %v2570, %v2569
  %v2656 = vpack.c.b16 %v2572, %v2571
  %v2657 = vpack.c.b16 %v2574, %v2573
  %v2658 = vpack.c.b16 %v2576, %v2575
  %v2659 = vpack.c.b16 %v2578, %v2577
  %v2660 = vpack.c.b16 %v2580, %v2579
  %2741 = vmatprep.subr.bf16.mxu0 0
  %2742 = vmatpush1.bf16.msra.mxu0 %v2581
  %2743 = vmatprep.subr.bf16.mxu0 0
  %2744 = vmatpush1.bf16.msra.mxu0 %v2582
  %2745 = vmatprep.subr.bf16.mxu0 0
  %2746 = vmatpush1.bf16.msra.mxu0 %v2583
  %2747 = vmatprep.subr.bf16.mxu0 0
  %2748 = vmatpush1.bf16.msra.mxu0 %v2584
  %2749 = vmatprep.subr.bf16.mxu0 0
  %2750 = vmatpush1.bf16.msra.mxu0 %v2585
  %2751 = vmatprep.subr.bf16.mxu0 0
  %2752 = vmatpush1.bf16.msra.mxu0 %v2586
  %2753 = vmatprep.subr.bf16.mxu0 0
  %2754 = vmatpush1.bf16.msra.mxu0 %v2587
  %2755 = vmatprep.subr.bf16.mxu0 0
  %2756 = vmatpush1.bf16.msra.mxu0 %v2588
  %2757 = vmatprep.subr.bf16.mxu0 0
  %2758 = vmatpush1.bf16.msra.mxu0 %v2589
  %2759 = vmatprep.subr.bf16.mxu0 0
  %2760 = vmatpush1.bf16.msra.mxu0 %v2590
  %2761 = vmatprep.subr.bf16.mxu0 0
  %2762 = vmatpush1.bf16.msra.mxu0 %v2591
  %2763 = vmatprep.subr.bf16.mxu0 0
  %2764 = vmatpush1.bf16.msra.mxu0 %v2592
  %2765 = vmatprep.subr.bf16.mxu0 0
  %2766 = vmatpush1.bf16.msra.mxu0 %v2593
  %2767 = vmatprep.subr.bf16.mxu0 0
  %2768 = vmatpush1.bf16.msra.mxu0 %v2594
  %2769 = vmatprep.subr.bf16.mxu0 0
  %2770 = vmatpush1.bf16.msra.mxu0 %v2595
  %2771 = vmatprep.subr.bf16.mxu0 0
  %2772 = vmatpush1.bf16.msra.mxu0 %v2596
  %2773 = vmatprep.mubr.bf16.mxu0 %v2085
  %2774 = vmatmul.mubr.bf16.gmra.mrb[0].mxu0 %v2084
  %v2775 = vpop.f32.mrb[0].mxu0
  %v2776 = vadd.f32 %v2259, %v2775
  %v2777 = vpop.f32.mrb[0].mxu0
  %v2778 = vpop.f32.mrb[0].mxu0
  %v2779 = vpop.f32.mrb[0].mxu0
  %2780 = vdwg.mxu0
  %2781 = vmatprep.subr.bf16.mxu0 0
  %2782 = vmatpush1.bf16.msra.mxu0 %v2597
  %2783 = vmatprep.subr.bf16.mxu0 0
  %2784 = vmatpush1.bf16.msra.mxu0 %v2598
  %2785 = vmatprep.subr.bf16.mxu0 0
  %2786 = vmatpush1.bf16.msra.mxu0 %v2599
  %2787 = vmatprep.subr.bf16.mxu0 0
  %2788 = vmatpush1.bf16.msra.mxu0 %v2600
  %2789 = vmatprep.subr.bf16.mxu0 0
  %2790 = vmatpush1.bf16.msra.mxu0 %v2601
  %2791 = vmatprep.subr.bf16.mxu0 0
  %2792 = vmatpush1.bf16.msra.mxu0 %v2602
  %2793 = vmatprep.subr.bf16.mxu0 0
  %2794 = vmatpush1.bf16.msra.mxu0 %v2603
  %2795 = vmatprep.subr.bf16.mxu0 0
  %2796 = vmatpush1.bf16.msra.mxu0 %v2604
  %2797 = vmatprep.subr.bf16.mxu0 0
  %2798 = vmatpush1.bf16.msra.mxu0 %v2605
  %2799 = vmatprep.subr.bf16.mxu0 0
  %2800 = vmatpush1.bf16.msra.mxu0 %v2606
  %2801 = vmatprep.subr.bf16.mxu0 0
  %2802 = vmatpush1.bf16.msra.mxu0 %v2607
  %2803 = vmatprep.subr.bf16.mxu0 0
  %2804 = vmatpush1.bf16.msra.mxu0 %v2608
  %2805 = vmatprep.subr.bf16.mxu0 0
  %2806 = vmatpush1.bf16.msra.mxu0 %v2609
  %2807 = vmatprep.subr.bf16.mxu0 0
  %2808 = vmatpush1.bf16.msra.mxu0 %v2610
  %2809 = vmatprep.subr.bf16.mxu0 0
  %2810 = vmatpush1.bf16.msra.mxu0 %v2611
  %2811 = vmatprep.subr.bf16.mxu0 0
  %2812 = vmatpush1.bf16.msra.mxu0 %v2612
  %2813 = vmatprep.mubr.bf16.mxu0 %v2087
  %2814 = vmatmul.mubr.bf16.gmra.mrb[0].mxu0 %v2086
  %v2815 = vpop.f32.mrb[0].mxu0
  %v2816 = vadd.f32 %v2776, %v2815
  %v2817 = vpop.f32.mrb[0].mxu0
  %v2818 = vpop.f32.mrb[0].mxu0
  %v2819 = vpop.f32.mrb[0].mxu0
  %2820 = vdwg.mxu0
  %2821 = vmatprep.subr.bf16.mxu0 0
  %2822 = vmatpush1.bf16.msra.mxu0 %v2613
  %2823 = vmatprep.subr.bf16.mxu0 0
  %2824 = vmatpush1.bf16.msra.mxu0 %v2614
  %2825 = vmatprep.subr.bf16.mxu0 0
  %2826 = vmatpush1.bf16.msra.mxu0 %v2615
  %2827 = vmatprep.subr.bf16.mxu0 0
  %2828 = vmatpush1.bf16.msra.mxu0 %v2616
  %2829 = vmatprep.subr.bf16.mxu0 0
  %2830 = vmatpush1.bf16.msra.mxu0 %v2617
  %2831 = vmatprep.subr.bf16.mxu0 0
  %2832 = vmatpush1.bf16.msra.mxu0 %v2618
  %2833 = vmatprep.subr.bf16.mxu0 0
  %2834 = vmatpush1.bf16.msra.mxu0 %v2619
  %2835 = vmatprep.subr.bf16.mxu0 0
  %2836 = vmatpush1.bf16.msra.mxu0 %v2620
  %2837 = vmatprep.subr.bf16.mxu0 0
  %2838 = vmatpush1.bf16.msra.mxu0 %v2621
  %2839 = vmatprep.subr.bf16.mxu0 0
  %2840 = vmatpush1.bf16.msra.mxu0 %v2622
  %2841 = vmatprep.subr.bf16.mxu0 0
  %2842 = vmatpush1.bf16.msra.mxu0 %v2623
  %2843 = vmatprep.subr.bf16.mxu0 0
  %2844 = vmatpush1.bf16.msra.mxu0 %v2624
  %2845 = vmatprep.subr.bf16.mxu0 0
  %2846 = vmatpush1.bf16.msra.mxu0 %v2625
  %2847 = vmatprep.subr.bf16.mxu0 0
  %2848 = vmatpush1.bf16.msra.mxu0 %v2626
  %2849 = vmatprep.subr.bf16.mxu0 0
  %2850 = vmatpush1.bf16.msra.mxu0 %v2627
  %2851 = vmatprep.subr.bf16.mxu0 0
  %2852 = vmatpush1.bf16.msra.mxu0 %v2628
  %2853 = vmatprep.mubr.bf16.mxu0 %v2089
  %2854 = vmatmul.mubr.bf16.gmra.mrb[0].mxu0 %v2088
  %v2855 = vpop.f32.mrb[0].mxu0
  %v2856 = vadd.f32 %v2816, %v2855
  %v2857 = vpop.f32.mrb[0].mxu0
  %v2858 = vpop.f32.mrb[0].mxu0
  %v2859 = vpop.f32.mrb[0].mxu0
  %2860 = vdwg.mxu0
  %2861 = vmatprep.subr.bf16.mxu0 0
  %2862 = vmatpush1.bf16.msra.mxu0 %v2629
  %2863 = vmatprep.subr.bf16.mxu0 0
  %2864 = vmatpush1.bf16.msra.mxu0 %v2630
  %2865 = vmatprep.subr.bf16.mxu0 0
  %2866 = vmatpush1.bf16.msra.mxu0 %v2631
  %2867 = vmatprep.subr.bf16.mxu0 0
  %2868 = vmatpush1.bf16.msra.mxu0 %v2632
  %2869 = vmatprep.subr.bf16.mxu0 0
  %2870 = vmatpush1.bf16.msra.mxu0 %v2633
  %2871 = vmatprep.subr.bf16.mxu0 0
  %2872 = vmatpush1.bf16.msra.mxu0 %v2634
  %2873 = vmatprep.subr.bf16.mxu0 0
  %2874 = vmatpush1.bf16.msra.mxu0 %v2635
  %2875 = vmatprep.subr.bf16.mxu0 0
  %2876 = vmatpush1.bf16.msra.mxu0 %v2636
  %2877 = vmatprep.subr.bf16.mxu0 0
  %2878 = vmatpush1.bf16.msra.mxu0 %v2637
  %2879 = vmatprep.subr.bf16.mxu0 0
  %2880 = vmatpush1.bf16.msra.mxu0 %v2638
  %2881 = vmatprep.subr.bf16.mxu0 0
  %2882 = vmatpush1.bf16.msra.mxu0 %v2639
  %2883 = vmatprep.subr.bf16.mxu0 0
  %2884 = vmatpush1.bf16.msra.mxu0 %v2640
  %2885 = vmatprep.subr.bf16.mxu0 0
  %2886 = vmatpush1.bf16.msra.mxu0 %v2641
  %2887 = vmatprep.subr.bf16.mxu0 0
  %2888 = vmatpush1.bf16.msra.mxu0 %v2642
  %2889 = vmatprep.subr.bf16.mxu0 0
  %2890 = vmatpush1.bf16.msra.mxu0 %v2643
  %2891 = vmatprep.subr.bf16.mxu0 0
  %2892 = vmatpush1.bf16.msra.mxu0 %v2644
  %2893 = vmatprep.mubr.bf16.mxu0 %v2091
  %2894 = vmatmul.mubr.bf16.gmra.mrb[0].mxu0 %v2090
  %v2895 = vpop.f32.mrb[0].mxu0
  %v2896 = vadd.f32 %v2856, %v2895
  %v2897 = vpop.f32.mrb[0].mxu0
  %v2898 = vpop.f32.mrb[0].mxu0
  %v2899 = vpop.f32.mrb[0].mxu0
  %2900 = vdwg.mxu0
  %2901 = vmatprep.subr.bf16.mxu0 0
  %2902 = vmatpush1.bf16.msra.mxu0 %v2645
  %2903 = vmatprep.subr.bf16.mxu0 0
  %2904 = vmatpush1.bf16.msra.mxu0 %v2646
  %2905 = vmatprep.subr.bf16.mxu0 0
  %2906 = vmatpush1.bf16.msra.mxu0 %v2647
  %2907 = vmatprep.subr.bf16.mxu0 0
  %2908 = vmatpush1.bf16.msra.mxu0 %v2648
  %2909 = vmatprep.subr.bf16.mxu0 0
  %2910 = vmatpush1.bf16.msra.mxu0 %v2649
  %2911 = vmatprep.subr.bf16.mxu0 0
  %2912 = vmatpush1.bf16.msra.mxu0 %v2650
  %2913 = vmatprep.subr.bf16.mxu0 0
  %2914 = vmatpush1.bf16.msra.mxu0 %v2651
  %2915 = vmatprep.subr.bf16.mxu0 0
  %2916 = vmatpush1.bf16.msra.mxu0 %v2652
  %2917 = vmatprep.subr.bf16.mxu0 0
  %2918 = vmatpush1.bf16.msra.mxu0 %v2653
  %2919 = vmatprep.subr.bf16.mxu0 0
  %2920 = vmatpush1.bf16.msra.mxu0 %v2654
  %2921 = vmatprep.subr.bf16.mxu0 0
  %2922 = vmatpush1.bf16.msra.mxu0 %v2655
  %2923 = vmatprep.subr.bf16.mxu0 0
  %2924 = vmatpush1.bf16.msra.mxu0 %v2656
  %2925 = vmatprep.subr.bf16.mxu0 0
  %2926 = vmatpush1.bf16.msra.mxu0 %v2657
  %2927 = vmatprep.subr.bf16.mxu0 0
  %2928 = vmatpush1.bf16.msra.mxu0 %v2658
  %2929 = vmatprep.subr.bf16.mxu0 0
  %2930 = vmatpush1.bf16.msra.mxu0 %v2659
  %2931 = vmatprep.subr.bf16.mxu0 0
  %2932 = vmatpush1.bf16.msra.mxu0 %v2660
  %2933 = vmatprep.mubr.bf16.mxu0 %v2093
  %2934 = vmatmul.mubr.bf16.gmra.mrb[0].mxu0 %v2092
  %v2935 = vpop.f32.mrb[0].mxu0
  %v2936 = vadd.f32 %v2896, %v2935
  %v2937 = vpop.f32.mrb[0].mxu0
  %v2938 = vpop.f32.mrb[0].mxu0
  %v2939 = vpop.f32.mrb[0].mxu0
  %2940 = vdwg.mxu0
  %2941 = vst [vmem:[%s6] sm:$0x3] %v2936
  // Predicated region
  $region26: #{_lambda_.13} parent=0 // pred_check
    _
  $region27: #{_lambda_.13} parent=0 // pred_check_branch
    %2943 = sbr.rel (0) target = $region29
  $region28: #{_lambda_.13} parent=0 // pred_region
    _
  $region29: #{_lambda_.13} parent=0 // pred_fallthru
    _
  // Predicated region
  $region30: #{_lambda_.13} parent=0 // pred_check
    _
  $region31: #{_lambda_.13} parent=0 // pred_check_branch
    %2945 = sbr.rel (0) target = $region33
  $region32: #{_lambda_.13} parent=0 // pred_region
    _
  $region33: #{_lambda_.13} parent=0 // pred_fallthru
    _

</llo_original>
